<compile_context>
chip_gen: v6e
topology: v6e:2x2x1
jax: 0.10.0
libtpu: 0.0.40
codegen_flags: <defaults>
</compile_context>

<pallas_src>
import functools

import jax
import jax.numpy as jnp
from jax import lax
from jax.experimental import pallas as pl
from jax.experimental.pallas import tpu as pltpu

WS_EPS = 1e-6   # StdConv2d (weight standardization) epsilon, timm default
GN_EPS = 1e-5   # nn.GroupNorm epsilon, PyTorch default


def make_div(v, divisor=8):
    min_value = divisor
    new_v = max(min_value, int(v + divisor / 2) // divisor * divisor)
    if new_v < 0.9 * v:
        new_v += divisor
    return new_v


# ---------------------------------------------------------------------------
# In-kernel helpers (traced inside the Pallas kernel body)
# ---------------------------------------------------------------------------
def _group_norm_1pass(y, gamma, beta, gmap, gmapT, cnt, relu):
    """One-pass per-sample GroupNorm, biased variance.
    y: (B, HW, C) f32; gamma/beta: (1, C); gmap: (C, G) one-hot; gmapT: (G, C)."""
    B = y.shape[0]
    s = jnp.sum(y, axis=1)                                              # (B, C)
    ss = jnp.sum(y * y, axis=1)                                         # (B, C)
    red = jnp.dot(jnp.concatenate([s, ss], axis=0), gmap,
                  preferred_element_type=jnp.float32)                   # (2B, G)
    inv = 1.0 / cnt
    mean_g = red[:B] * inv
    var_g = jnp.maximum(red[B:] * inv - mean_g * mean_g, 0.0)
    rstd_g = lax.rsqrt(var_g + GN_EPS)
    bc = jnp.dot(jnp.concatenate([mean_g, rstd_g], axis=0), gmapT,
                 preferred_element_type=jnp.float32)                    # (2B, C)
    mean_c = bc[:B][:, None, :]                                         # (B, 1, C)
    rstd_c = bc[B:][:, None, :]
    scale = rstd_c * gamma
    bias = beta - mean_c * scale
    out = y * scale + bias
    if relu:
        out = jnp.maximum(out, 0.0)
    return out


# ---------------------------------------------------------------------------
# Fused Bottleneck kernel.  Grid = (N // B_blk,), B_blk samples per grid step.
# ---------------------------------------------------------------------------
def bottleneck_kernel(x_ref, w1_ref, w2_ref, w3_ref,
                      g1_ref, b1_ref, g2_ref, b2_ref, g3_ref, b3_ref,
                      gm_m_ref, gmT_m_ref, gm_o_ref, gmT_o_ref, mask_ref,
                      o_ref, *, img_w, cnt_m, cnt_o):
    B, HW, Cin = x_ref.shape
    Cmp = w1_ref.shape[1]              # padded mid channels (multiple of 128)
    Cout = w3_ref.shape[1]
    rows = B * HW

    x16 = x_ref[...]                                                    # (B, HW, Cin) bf16

    # ---- conv1: 1x1 (pre-standardized bf16 weights)  +  GN(32) + ReLU ----
    y = jnp.dot(x16.reshape(rows, Cin), w1_ref[...],
                preferred_element_type=jnp.float32)                     # (rows, Cmp) f32
    y = _group_norm_1pass(y.reshape(B, HW, Cmp), g1_ref[...], b1_ref[...],
                          gm_m_ref[...], gmT_m_ref[...], cnt_m, relu=True)
    y16 = y.reshape(rows, Cmp).astype(jnp.bfloat16)

    # ---- conv2: 3x3, stride 1, pad 1 -> 9 shifted dots accumulated in fp32 ----
    # t[i] = y[i + dy*W + dx]; out-of-image (and cross-sample) rows are zeroed by the mask.
    mask = mask_ref[...]                                                # (rows, 9) 0/1 bf16
    acc = jnp.zeros((rows, Cmp), jnp.float32)
    tap = 0
    for dy in (-1, 0, 1):
        for dx in (-1, 0, 1):
            off = dy * img_w + dx
            if off == 0:
                t = y16
            else:
                t = jnp.roll(y16, -off, axis=0) * mask[:, tap:tap + 1]
            acc = acc + jnp.dot(t, w2_ref[tap * Cmp:(tap + 1) * Cmp, :],
                                preferred_element_type=jnp.float32)
            tap += 1
    z = _group_norm_1pass(acc.reshape(B, HW, Cmp), g2_ref[...], b2_ref[...],
                          gm_m_ref[...], gmT_m_ref[...], cnt_m, relu=True)

    # ---- conv3: 1x1  +  GN(32) (apply_act=False) ----
    y3 = jnp.dot(z.reshape(rows, Cmp).astype(jnp.bfloat16), w3_ref[...],
                 preferred_element_type=jnp.float32)                    # (rows, Cout)
    y3 = _group_norm_1pass(y3.reshape(B, HW, Cout), g3_ref[...], b3_ref[...],
                           gm_o_ref[...], gmT_o_ref[...], cnt_o, relu=False)

    # ---- drop_path = Identity; act3 = ReLU(y + shortcut); residual add in fp32 ----
    o_ref[...] = jnp.maximum(y3 + x16.astype(jnp.float32), 0.0).astype(o_ref.dtype)


# ---------------------------------------------------------------------------
# Wrapper (plain-JAX glue: weight standardization, padding, group maps, masks)
# ---------------------------------------------------------------------------
def _standardize_oihw(w):
    m = jnp.mean(w, axis=(1, 2, 3), keepdims=True)
    v = jnp.mean((w - m) ** 2, axis=(1, 2, 3), keepdims=True)
    return (w - m) * lax.rsqrt(v + WS_EPS)


def _vmem_cap_bytes():
    try:
        cap = getattr(pltpu.get_tpu_info(), "vmem_capacity_bytes", None)
        if cap:
            return int(cap)
    except Exception:
        pass
    return 64 << 20     # conservative fallback: v7x per-core VMEM


def _pick_batch_block(N, HW):
    """Samples per grid step: batch small-HW stages, keep >=2 grid steps (v7x 2 TCs),
    and only merge when HW is sublane-aligned so in-kernel reshapes are free."""
    if HW % 8 != 0:
        return 1
    bb = max(1, min(N, max(1, 1024 // HW)))
    while N % bb:
        bb -= 1
    while bb > 1 and N // bb < 2:
        bb -= 1
    while N % bb:
        bb -= 1
    return bb


def bottleneck_forward(x_nhwc, p, num_groups=32):
    """Fused Bottleneck forward.  x_nhwc: (N, H, W, Cin); returns (N, H, W, Cout) bf16.
    Pass a bf16 NHWC input to avoid an extra HBM cast pass (kernel is bf16 / f32-acc)."""
    N, H, W, Cin = x_nhwc.shape
    Cm = p["w1"].shape[0]
    Cout = p["w3"].shape[0]
    G = num_groups
    if Cin != Cout:
        raise ValueError("downsample=None (module default) requires in_chs == out_chs")
    if Cm % G or Cout % G:
        raise ValueError("channels must be divisible by num_groups")
    HW = H * W
    Cmp = -(-Cm // 128) * 128            # lane-dense padded mid channels
    B_blk = _pick_batch_block(N, HW)
    rows_blk = B_blk * HW

    # NHWC -> (N, HW, C): pure reshape (no transpose); bf16 activations on HBM.
    x = x_nhwc.reshape(N, HW, Cin).astype(jnp.bfloat16)

    # Weight standardization hoisted out of the kernel; standardized, padded bf16 weights.
    w1 = _standardize_oihw(p["w1"])[:, :, 0, 0]                          # (Cm, Cin)
    w1 = jnp.pad(w1.T, ((0, 0), (0, Cmp - Cm))).astype(jnp.bfloat16)     # (Cin, Cmp)
    w2 = jnp.transpose(_standardize_oihw(p["w2"]), (2, 3, 1, 0))         # (kh,kw,cin,cout)
    w2 = jnp.pad(w2, ((0, 0), (0, 0), (0, Cmp - Cm), (0, Cmp - Cm)))
    w2 = w2.reshape(9 * Cmp, Cmp).astype(jnp.bfloat16)                   # rows = (kh,kw,cin)
    w3 = _standardize_oihw(p["w3"])[:, :, 0, 0]                          # (Cout, Cm)
    w3 = jnp.pad(w3.T, ((0, Cmp - Cm), (0, 0))).astype(jnp.bfloat16)     # (Cmp, Cout)

    def pad1(a):                                                         # (Cm,) -> (1, Cmp)
        return jnp.pad(a.astype(jnp.float32), (0, Cmp - Cm)).reshape(1, Cmp)

    g1, b1 = pad1(p["g1"]), pad1(p["b1"])
    g2, b2 = pad1(p["g2"]), pad1(p["b2"])
    g3 = p["g3"].astype(jnp.float32).reshape(1, Cout)
    b3 = p["b3"].astype(jnp.float32).reshape(1, Cout)

    # One-hot channel->group maps; padded mid channels map to no group (zero rows),
    # so they come out of GroupNorm exactly zero and never pollute the statistics.
    gm_m = (jnp.arange(Cm)[:, None] // (Cm // G) == jnp.arange(G)[None, :]).astype(jnp.float32)
    gm_m = jnp.pad(gm_m, ((0, Cmp - Cm), (0, 0)))                        # (Cmp, G)
    gm_o = (jnp.arange(Cout)[:, None] // (Cout // G) == jnp.arange(G)[None, :]).astype(jnp.float32)

    # 0/1 validity masks for the 9 conv taps (flattened h*W+w, tiled over the block batch).
    hh = jnp.arange(HW) // W
    ww = jnp.arange(HW) % W
    cols = []
    for dy in (-1, 0, 1):
        for dx in (-1, 0, 1):
            cols.append((hh + dy >= 0) & (hh + dy < H) & (ww + dx >= 0) & (ww + dx < W))
    mask9 = jnp.tile(jnp.stack(cols, axis=1).astype(jnp.bfloat16), (B_blk, 1))  # (rows_blk, 9)

    args = (x, w1, w2, w3, g1, b1, g2, b2, g3, b3, gm_m, gm_m.T, gm_o, gm_o.T, mask9)

    # VMEM budget: double-buffered activation blocks, single-buffered constants, f32 temps.
    act_blk = rows_blk * (Cin + Cout) * 2
    const_bytes = (Cin * Cmp + 9 * Cmp * Cmp + Cmp * Cout) * 2 \
                  + (4 * Cmp + 2 * Cout) * 4 + (Cmp + Cout) * G * 8 + rows_blk * 9 * 2
    interm = rows_blk * (4 * Cmp + 2 * Cout + Cin) * 4
    est = 2 * act_blk + const_bytes + interm + (2 << 20)
    cap = _vmem_cap_bytes()
    vmem_limit = int(min(max(2 * est, 32 << 20), int(0.85 * cap)))       # generation-aware

    flops = int(2 * N * HW * (Cin * Cmp + 9 * Cmp * Cmp + Cmp * Cout))
    bytes_accessed = int((x.size + N * HW * Cout) * 2
                         + (Cin * Cmp + 9 * Cmp * Cmp + Cmp * Cout) * 2)

    kernel = functools.partial(bottleneck_kernel, img_w=W,
                               cnt_m=float(HW * (Cm // G)), cnt_o=float(HW * (Cout // G)))

    x_spec = pl.BlockSpec((B_blk, HW, Cin), lambda n: (n, 0, 0))
    out_specs = pl.BlockSpec((B_blk, HW, Cout), lambda n: (n, 0, 0))

    def run(single_buffer_consts):
        def const_spec(a):
            nd = a.ndim
            idx = lambda n, _nd=nd: (0,) * _nd
            if single_buffer_consts:
                return pl.BlockSpec(tuple(a.shape), idx, pipeline_mode=pl.Buffered(1))
            return pl.BlockSpec(tuple(a.shape), idx)
        in_specs = [x_spec] + [const_spec(a) for a in args[1:]]
        return pl.pallas_call(
            kernel,
            out_shape=jax.ShapeDtypeStruct((N, HW, Cout), jnp.bfloat16),
            grid=(N // B_blk,),
            in_specs=in_specs,
            out_specs=out_specs,
            compiler_params=pltpu.CompilerParams(
                dimension_semantics=("parallel",),
                vmem_limit_bytes=vmem_limit),
            cost_estimate=pl.CostEstimate(
                flops=flops, transcendentals=int(6 * N * G),
                bytes_accessed=bytes_accessed),
        )(*args)

    try:
        out = run(single_buffer_consts=True)
    except Exception:
        # Fallback if this JAX build rejects single-buffering constant inputs.
        out = run(single_buffer_consts=False)

    return out.reshape(N, H, W, Cout)      # NHWC, bf16


# ---------------------------------------------------------------------------
# Pure-JAX reference (NCHW, mirrors the PyTorch module) for a correctness check
# ---------------------------------------------------------------------------
def _std_conv2d_ref(x, w_oihw, stride=1, padding=0, dilation=1):
    m = jnp.mean(w_oihw, axis=(1, 2, 3), keepdims=True)
    v = jnp.mean((w_oihw - m) ** 2, axis=(1, 2, 3), keepdims=True)
    ws = (w_oihw - m) / jnp.sqrt(v + WS_EPS)
    return lax.conv_general_dilated(
        x, ws, (stride, stride), [(padding, padding)] * 2,
        rhs_dilation=(dilation, dilation),
        dimension_numbers=("NCHW", "OIHW", "NCHW"),
        precision=lax.Precision.HIGHEST)


def _group_norm_ref(x, gamma, beta, G):
    N, C, H, W = x.shape
    xg = x.reshape(N, G, -1)
    m = jnp.mean(xg, axis=2, keepdims=True)
    v = jnp.mean((xg - m) ** 2, axis=2, keepdims=True)
    xn = ((xg - m) / jnp.sqrt(v + GN_EPS)).reshape(N, C, H, W)
    return xn * gamma.reshape(1, C, 1, 1) + beta.reshape(1, C, 1, 1)


def bottleneck_ref(x, p, G=32):
    shortcut = x
    y = _std_conv2d_ref(x, p["w1"])
    y = jax.nn.relu(_group_norm_ref(y, p["g1"], p["b1"], G))
    y = _std_conv2d_ref(y, p["w2"], stride=1, padding=1, dilation=1)
    y = jax.nn.relu(_group_norm_ref(y, p["g2"], p["b2"], G))
    y = _std_conv2d_ref(y, p["w3"])
    y = _group_norm_ref(y, p["g3"], p["b3"], G)
    return jax.nn.relu(y + shortcut)


if __name__ == "__main__":
    # smallest channel counts compatible with GroupNorm(num_groups=32) + identity shortcut
    in_chs = out_chs = 128
    mid_chs = make_div(out_chs * 0.25)        # -> 32 (lane-padded to 128 inside the wrapper)
    N, H, W = 2, 8, 8

    key = jax.random.PRNGKey(0)
    ks = jax.random.split(key, 10)
    p = {
        "w1": 0.05 * jax.random.normal(ks[0], (mid_chs, in_chs, 1, 1), jnp.float32),
        "w2": 0.05 * jax.random.normal(ks[1], (mid_chs, mid_chs, 3, 3), jnp.float32),
        "w3": 0.05 * jax.random.normal(ks[2], (out_chs, mid_chs, 1, 1), jnp.float32),
        "g1": 1.0 + 0.1 * jax.random.normal(ks[3], (mid_chs,), jnp.float32),
        "b1": 0.1 * jax.random.normal(ks[4], (mid_chs,), jnp.float32),
        "g2": 1.0 + 0.1 * jax.random.normal(ks[5], (mid_chs,), jnp.float32),
        "b2": 0.1 * jax.random.normal(ks[6], (mid_chs,), jnp.float32),
        "g3": 1.0 + 0.1 * jax.random.normal(ks[7], (out_chs,), jnp.float32),
        "b3": 0.1 * jax.random.normal(ks[8], (out_chs,), jnp.float32),
    }
    x_nhwc = jax.random.normal(ks[9], (N, H, W, in_chs), jnp.float32)

    out = bottleneck_forward(x_nhwc, p)                     # (N, H, W, C) bf16
    out = jax.block_until_ready(out)

    ref = bottleneck_ref(jnp.transpose(x_nhwc, (0, 3, 1, 2)), p)        # NCHW fp32 reference
    out_nchw = jnp.transpose(out.astype(jnp.float32), (0, 3, 1, 2))
    err = float(jnp.max(jnp.abs(out_nchw - ref)))
    # bf16 activations / weights / output vs fp32 HIGHEST-precision reference
    if not (out_nchw.shape == ref.shape and err < 1e-1):
        raise AssertionError(f"Pallas Bottleneck mismatch: max abs err = {err}")
    print("KERNEL_OK")
</pallas_src>

<mosaic_0001>
module attributes {stable_mosaic.version = 11 : i64} {
  func.func @bottleneck_kernel(%arg0: i32, %arg1: memref<1x64x128xbf16, #tpu.memory_space<vmem>>, %arg2: memref<128x128xbf16, #tpu.memory_space<vmem>>, %arg3: memref<1152x128xbf16, #tpu.memory_space<vmem>>, %arg4: memref<128x128xbf16, #tpu.memory_space<vmem>>, %arg5: memref<1x128xf32, #tpu.memory_space<vmem>>, %arg6: memref<1x128xf32, #tpu.memory_space<vmem>>, %arg7: memref<1x128xf32, #tpu.memory_space<vmem>>, %arg8: memref<1x128xf32, #tpu.memory_space<vmem>>, %arg9: memref<1x128xf32, #tpu.memory_space<vmem>>, %arg10: memref<1x128xf32, #tpu.memory_space<vmem>>, %arg11: memref<128x32xf32, #tpu.memory_space<vmem>>, %arg12: memref<32x128xf32, #tpu.memory_space<vmem>>, %arg13: memref<128x32xf32, #tpu.memory_space<vmem>>, %arg14: memref<32x128xf32, #tpu.memory_space<vmem>>, %arg15: memref<64x9xbf16, #tpu.memory_space<vmem>>, %arg16: memref<1x64x128xbf16, #tpu.memory_space<vmem>>) attributes {dimension_semantics = [#tpu.dimension_semantics<parallel>], iteration_bounds = array<i64: 2>, scalar_prefetch = 0 : i64, scratch_operands = 0 : i64, tpu.core_type = #tpu.core_type<tc>, window_params = [{transform_indices = @transform_0, window_bounds = array<i64: 1, 64, 128>}, {pipeline_mode = #tpu.pipeline_mode<synchronous>, transform_indices = @transform_1, window_bounds = array<i64: 128, 128>}, {pipeline_mode = #tpu.pipeline_mode<synchronous>, transform_indices = @transform_2, window_bounds = array<i64: 1152, 128>}, {pipeline_mode = #tpu.pipeline_mode<synchronous>, transform_indices = @transform_3, window_bounds = array<i64: 128, 128>}, {pipeline_mode = #tpu.pipeline_mode<synchronous>, transform_indices = @transform_4, window_bounds = array<i64: 1, 128>}, {pipeline_mode = #tpu.pipeline_mode<synchronous>, transform_indices = @transform_5, window_bounds = array<i64: 1, 128>}, {pipeline_mode = #tpu.pipeline_mode<synchronous>, transform_indices = @transform_6, window_bounds = array<i64: 1, 128>}, {pipeline_mode = #tpu.pipeline_mode<synchronous>, transform_indices = @transform_7, window_bounds = array<i64: 1, 128>}, {pipeline_mode = #tpu.pipeline_mode<synchronous>, transform_indices = @transform_8, window_bounds = array<i64: 1, 128>}, {pipeline_mode = #tpu.pipeline_mode<synchronous>, transform_indices = @transform_9, window_bounds = array<i64: 1, 128>}, {pipeline_mode = #tpu.pipeline_mode<synchronous>, transform_indices = @transform_10, window_bounds = array<i64: 128, 32>}, {pipeline_mode = #tpu.pipeline_mode<synchronous>, transform_indices = @transform_11, window_bounds = array<i64: 32, 128>}, {pipeline_mode = #tpu.pipeline_mode<synchronous>, transform_indices = @transform_12, window_bounds = array<i64: 128, 32>}, {pipeline_mode = #tpu.pipeline_mode<synchronous>, transform_indices = @transform_13, window_bounds = array<i64: 32, 128>}, {pipeline_mode = #tpu.pipeline_mode<synchronous>, transform_indices = @transform_14, window_bounds = array<i64: 64, 9>}, {transform_indices = @transform_15, window_bounds = array<i64: 1, 64, 128>}]} {
    %c0 = arith.constant 0 : index
    %c0_0 = arith.constant 0 : index
    %c0_1 = arith.constant 0 : index
    %0 = vector.load %arg1[%c0, %c0_0, %c0_1] : memref<1x64x128xbf16, #tpu.memory_space<vmem>>, vector<1x64x128xbf16>
    %1 = vector.shape_cast %0 : vector<1x64x128xbf16> to vector<64x128xbf16>
    %c0_2 = arith.constant 0 : index
    %c0_3 = arith.constant 0 : index
    %2 = vector.load %arg2[%c0_2, %c0_3] : memref<128x128xbf16, #tpu.memory_space<vmem>>, vector<128x128xbf16>
    %cst = arith.constant dense<0.000000e+00> : vector<64x128xf32>
    %3 = tpu.matmul %1, %2, %cst {dimension_numbers = #tpu.dot_dimension_numbers<[1], [0], [0], [1], [0, 0, 1, 1], [], []>} : vector<64x128xbf16>, vector<128x128xbf16>, vector<64x128xf32> -> vector<64x128xf32>
    %4 = vector.shape_cast %3 : vector<64x128xf32> to vector<1x64x128xf32>
    %c0_4 = arith.constant 0 : index
    %c0_5 = arith.constant 0 : index
    %5 = vector.load %arg5[%c0_4, %c0_5] : memref<1x128xf32, #tpu.memory_space<vmem>>, vector<1x128xf32>
    %c0_6 = arith.constant 0 : index
    %c0_7 = arith.constant 0 : index
    %6 = vector.load %arg6[%c0_6, %c0_7] : memref<1x128xf32, #tpu.memory_space<vmem>>, vector<1x128xf32>
    %c0_8 = arith.constant 0 : index
    %c0_9 = arith.constant 0 : index
    %7 = vector.load %arg11[%c0_8, %c0_9] : memref<128x32xf32, #tpu.memory_space<vmem>>, vector<128x32xf32>
    %c0_10 = arith.constant 0 : index
    %c0_11 = arith.constant 0 : index
    %8 = vector.load %arg12[%c0_10, %c0_11] : memref<32x128xf32, #tpu.memory_space<vmem>>, vector<32x128xf32>
    %cst_12 = arith.constant dense<0.000000e+00> : vector<1x128xf32>
    %9 = vector.multi_reduction <add>, %4, %cst_12 [1] : vector<1x64x128xf32> to vector<1x128xf32>
    %10 = arith.mulf %4, %4 : vector<1x64x128xf32>
    %cst_13 = arith.constant dense<0.000000e+00> : vector<1x128xf32>
    %11 = vector.multi_reduction <add>, %10, %cst_13 [1] : vector<1x64x128xf32> to vector<1x128xf32>
    %12 = tpu.concatenate %9, %11 in 0 : vector<1x128xf32>, vector<1x128xf32> -> vector<2x128xf32>
    %cst_14 = arith.constant dense<0.000000e+00> : vector<2x32xf32>
    %13 = tpu.matmul %12, %7, %cst_14 {dimension_numbers = #tpu.dot_dimension_numbers<[1], [0], [0], [1], [0, 0, 1, 1], [], []>} : vector<2x128xf32>, vector<128x32xf32>, vector<2x32xf32> -> vector<2x32xf32>
    %14 = vector.extract_strided_slice %13 {offsets = [0, 0], sizes = [1, 32], strides = [1, 1]} : vector<2x32xf32> to vector<1x32xf32>
    %cst_15 = arith.constant 1.562500e-02 : f32
    %15 = vector.broadcast %cst_15 : f32 to vector<1x32xf32>
    %16 = arith.mulf %14, %15 : vector<1x32xf32>
    %17 = vector.extract_strided_slice %13 {offsets = [1, 0], sizes = [1, 32], strides = [1, 1]} : vector<2x32xf32> to vector<1x32xf32>
    %cst_16 = arith.constant 1.562500e-02 : f32
    %18 = vector.broadcast %cst_16 : f32 to vector<1x32xf32>
    %19 = arith.mulf %17, %18 : vector<1x32xf32>
    %20 = arith.mulf %16, %16 : vector<1x32xf32>
    %21 = arith.subf %19, %20 : vector<1x32xf32>
    %cst_17 = arith.constant 0.000000e+00 : f32
    %22 = vector.broadcast %cst_17 : f32 to vector<1x32xf32>
    %23 = arith.maximumf %21, %22 : vector<1x32xf32>
    %cst_18 = arith.constant 9.99999974E-6 : f32
    %24 = vector.broadcast %cst_18 : f32 to vector<1x32xf32>
    %25 = arith.addf %23, %24 : vector<1x32xf32>
    %26 = math.rsqrt %25 : vector<1x32xf32>
    %27 = tpu.concatenate %16, %26 in 0 : vector<1x32xf32>, vector<1x32xf32> -> vector<2x32xf32>
    %cst_19 = arith.constant dense<0.000000e+00> : vector<2x128xf32>
    %28 = tpu.matmul %27, %8, %cst_19 {dimension_numbers = #tpu.dot_dimension_numbers<[1], [0], [0], [1], [0, 0, 1, 1], [], []>} : vector<2x32xf32>, vector<32x128xf32>, vector<2x128xf32> -> vector<2x128xf32>
    %29 = vector.extract_strided_slice %28 {offsets = [0, 0], sizes = [1, 128], strides = [1, 1]} : vector<2x128xf32> to vector<1x128xf32>
    %30 = vector.shape_cast %29 : vector<1x128xf32> to vector<1x1x128xf32>
    %31 = vector.extract_strided_slice %28 {offsets = [1, 0], sizes = [1, 128], strides = [1, 1]} : vector<2x128xf32> to vector<1x128xf32>
    %32 = vector.shape_cast %31 : vector<1x128xf32> to vector<1x1x128xf32>
    %33 = vector.shape_cast %5 : vector<1x128xf32> to vector<1x1x128xf32>
    %34 = arith.mulf %32, %33 : vector<1x1x128xf32>
    %35 = arith.mulf %30, %34 : vector<1x1x128xf32>
    %36 = vector.shape_cast %6 : vector<1x128xf32> to vector<1x1x128xf32>
    %37 = arith.subf %36, %35 : vector<1x1x128xf32>
    %38 = vector.broadcast %34 : vector<1x1x128xf32> to vector<1x64x128xf32>
    %39 = arith.mulf %4, %38 : vector<1x64x128xf32>
    %40 = vector.broadcast %37 : vector<1x1x128xf32> to vector<1x64x128xf32>
    %41 = arith.addf %39, %40 : vector<1x64x128xf32>
    %cst_20 = arith.constant 0.000000e+00 : f32
    %42 = vector.broadcast %cst_20 : f32 to vector<1x64x128xf32>
    %43 = arith.maximumf %41, %42 : vector<1x64x128xf32>
    %44 = vector.shape_cast %43 : vector<1x64x128xf32> to vector<64x128xf32>
    %45 = arith.truncf %44 : vector<64x128xf32> to vector<64x128xbf16>
    %c0_21 = arith.constant 0 : index
    %c0_22 = arith.constant 0 : index
    %46 = vector.load %arg15[%c0_21, %c0_22] : memref<64x9xbf16, #tpu.memory_space<vmem>>, vector<64x9xbf16>
    %cst_23 = arith.constant 0.000000e+00 : f32
    %47 = vector.broadcast %cst_23 : f32 to vector<64x128xf32>
    %48 = vector.extract_strided_slice %45 {offsets = [55, 0], sizes = [9, 128], strides = [1, 1]} : vector<64x128xbf16> to vector<9x128xbf16>
    %49 = vector.extract_strided_slice %45 {offsets = [0, 0], sizes = [55, 128], strides = [1, 1]} : vector<64x128xbf16> to vector<55x128xbf16>
    %50 = tpu.concatenate %48, %49 in 0 : vector<9x128xbf16>, vector<55x128xbf16> -> vector<64x128xbf16>
    %51 = vector.extract_strided_slice %46 {offsets = [0, 0], sizes = [64, 1], strides = [1, 1]} : vector<64x9xbf16> to vector<64x1xbf16>
    %52 = vector.broadcast %51 : vector<64x1xbf16> to vector<64x128xbf16>
    %53 = arith.mulf %50, %52 : vector<64x128xbf16>
    %c0_24 = arith.constant 0 : index
    %c0_25 = arith.constant 0 : index
    %54 = vector.load %arg3[%c0_24, %c0_25] : memref<1152x128xbf16, #tpu.memory_space<vmem>>, vector<128x128xbf16>
    %cst_26 = arith.constant dense<0.000000e+00> : vector<64x128xf32>
    %55 = tpu.matmul %53, %54, %cst_26 {dimension_numbers = #tpu.dot_dimension_numbers<[1], [0], [0], [1], [0, 0, 1, 1], [], []>} : vector<64x128xbf16>, vector<128x128xbf16>, vector<64x128xf32> -> vector<64x128xf32>
    %56 = arith.addf %47, %55 : vector<64x128xf32>
    %57 = vector.extract_strided_slice %45 {offsets = [56, 0], sizes = [8, 128], strides = [1, 1]} : vector<64x128xbf16> to vector<8x128xbf16>
    %58 = vector.extract_strided_slice %45 {offsets = [0, 0], sizes = [56, 128], strides = [1, 1]} : vector<64x128xbf16> to vector<56x128xbf16>
    %59 = tpu.concatenate %57, %58 in 0 : vector<8x128xbf16>, vector<56x128xbf16> -> vector<64x128xbf16>
    %60 = vector.extract_strided_slice %46 {offsets = [0, 1], sizes = [64, 1], strides = [1, 1]} : vector<64x9xbf16> to vector<64x1xbf16>
    %61 = vector.broadcast %60 : vector<64x1xbf16> to vector<64x128xbf16>
    %62 = arith.mulf %59, %61 : vector<64x128xbf16>
    %c128 = arith.constant 128 : index
    %c0_27 = arith.constant 0 : index
    %63 = vector.load %arg3[%c128, %c0_27] : memref<1152x128xbf16, #tpu.memory_space<vmem>>, vector<128x128xbf16>
    %cst_28 = arith.constant dense<0.000000e+00> : vector<64x128xf32>
    %64 = tpu.matmul %62, %63, %cst_28 {dimension_numbers = #tpu.dot_dimension_numbers<[1], [0], [0], [1], [0, 0, 1, 1], [], []>} : vector<64x128xbf16>, vector<128x128xbf16>, vector<64x128xf32> -> vector<64x128xf32>
    %65 = arith.addf %56, %64 : vector<64x128xf32>
    %66 = vector.extract_strided_slice %45 {offsets = [57, 0], sizes = [7, 128], strides = [1, 1]} : vector<64x128xbf16> to vector<7x128xbf16>
    %67 = vector.extract_strided_slice %45 {offsets = [0, 0], sizes = [57, 128], strides = [1, 1]} : vector<64x128xbf16> to vector<57x128xbf16>
    %68 = tpu.concatenate %66, %67 in 0 : vector<7x128xbf16>, vector<57x128xbf16> -> vector<64x128xbf16>
    %69 = vector.extract_strided_slice %46 {offsets = [0, 2], sizes = [64, 1], strides = [1, 1]} : vector<64x9xbf16> to vector<64x1xbf16>
    %70 = vector.broadcast %69 : vector<64x1xbf16> to vector<64x128xbf16>
    %71 = arith.mulf %68, %70 : vector<64x128xbf16>
    %c256 = arith.constant 256 : index
    %c0_29 = arith.constant 0 : index
    %72 = vector.load %arg3[%c256, %c0_29] : memref<1152x128xbf16, #tpu.memory_space<vmem>>, vector<128x128xbf16>
    %cst_30 = arith.constant dense<0.000000e+00> : vector<64x128xf32>
    %73 = tpu.matmul %71, %72, %cst_30 {dimension_numbers = #tpu.dot_dimension_numbers<[1], [0], [0], [1], [0, 0, 1, 1], [], []>} : vector<64x128xbf16>, vector<128x128xbf16>, vector<64x128xf32> -> vector<64x128xf32>
    %74 = arith.addf %65, %73 : vector<64x128xf32>
    %75 = vector.extract_strided_slice %45 {offsets = [63, 0], sizes = [1, 128], strides = [1, 1]} : vector<64x128xbf16> to vector<1x128xbf16>
    %76 = vector.extract_strided_slice %45 {offsets = [0, 0], sizes = [63, 128], strides = [1, 1]} : vector<64x128xbf16> to vector<63x128xbf16>
    %77 = tpu.concatenate %75, %76 in 0 : vector<1x128xbf16>, vector<63x128xbf16> -> vector<64x128xbf16>
    %78 = vector.extract_strided_slice %46 {offsets = [0, 3], sizes = [64, 1], strides = [1, 1]} : vector<64x9xbf16> to vector<64x1xbf16>
    %79 = vector.broadcast %78 : vector<64x1xbf16> to vector<64x128xbf16>
    %80 = arith.mulf %77, %79 : vector<64x128xbf16>
    %c384 = arith.constant 384 : index
    %c0_31 = arith.constant 0 : index
    %81 = vector.load %arg3[%c384, %c0_31] : memref<1152x128xbf16, #tpu.memory_space<vmem>>, vector<128x128xbf16>
    %cst_32 = arith.constant dense<0.000000e+00> : vector<64x128xf32>
    %82 = tpu.matmul %80, %81, %cst_32 {dimension_numbers = #tpu.dot_dimension_numbers<[1], [0], [0], [1], [0, 0, 1, 1], [], []>} : vector<64x128xbf16>, vector<128x128xbf16>, vector<64x128xf32> -> vector<64x128xf32>
    %83 = arith.addf %74, %82 : vector<64x128xf32>
    %c512 = arith.constant 512 : index
    %c0_33 = arith.constant 0 : index
    %84 = vector.load %arg3[%c512, %c0_33] : memref<1152x128xbf16, #tpu.memory_space<vmem>>, vector<128x128xbf16>
    %cst_34 = arith.constant dense<0.000000e+00> : vector<64x128xf32>
    %85 = tpu.matmul %45, %84, %cst_34 {dimension_numbers = #tpu.dot_dimension_numbers<[1], [0], [0], [1], [0, 0, 1, 1], [], []>} : vector<64x128xbf16>, vector<128x128xbf16>, vector<64x128xf32> -> vector<64x128xf32>
    %86 = arith.addf %83, %85 : vector<64x128xf32>
    %87 = vector.extract_strided_slice %45 {offsets = [1, 0], sizes = [63, 128], strides = [1, 1]} : vector<64x128xbf16> to vector<63x128xbf16>
    %88 = vector.extract_strided_slice %45 {offsets = [0, 0], sizes = [1, 128], strides = [1, 1]} : vector<64x128xbf16> to vector<1x128xbf16>
    %89 = tpu.concatenate %87, %88 in 0 : vector<63x128xbf16>, vector<1x128xbf16> -> vector<64x128xbf16>
    %90 = vector.extract_strided_slice %46 {offsets = [0, 5], sizes = [64, 1], strides = [1, 1]} : vector<64x9xbf16> to vector<64x1xbf16>
    %91 = vector.broadcast %90 : vector<64x1xbf16> to vector<64x128xbf16>
    %92 = arith.mulf %89, %91 : vector<64x128xbf16>
    %c640 = arith.constant 640 : index
    %c0_35 = arith.constant 0 : index
    %93 = vector.load %arg3[%c640, %c0_35] : memref<1152x128xbf16, #tpu.memory_space<vmem>>, vector<128x128xbf16>
    %cst_36 = arith.constant dense<0.000000e+00> : vector<64x128xf32>
    %94 = tpu.matmul %92, %93, %cst_36 {dimension_numbers = #tpu.dot_dimension_numbers<[1], [0], [0], [1], [0, 0, 1, 1], [], []>} : vector<64x128xbf16>, vector<128x128xbf16>, vector<64x128xf32> -> vector<64x128xf32>
    %95 = arith.addf %86, %94 : vector<64x128xf32>
    %96 = vector.extract_strided_slice %45 {offsets = [7, 0], sizes = [57, 128], strides = [1, 1]} : vector<64x128xbf16> to vector<57x128xbf16>
    %97 = vector.extract_strided_slice %45 {offsets = [0, 0], sizes = [7, 128], strides = [1, 1]} : vector<64x128xbf16> to vector<7x128xbf16>
    %98 = tpu.concatenate %96, %97 in 0 : vector<57x128xbf16>, vector<7x128xbf16> -> vector<64x128xbf16>
    %99 = vector.extract_strided_slice %46 {offsets = [0, 6], sizes = [64, 1], strides = [1, 1]} : vector<64x9xbf16> to vector<64x1xbf16>
    %100 = vector.broadcast %99 : vector<64x1xbf16> to vector<64x128xbf16>
    %101 = arith.mulf %98, %100 : vector<64x128xbf16>
    %c768 = arith.constant 768 : index
    %c0_37 = arith.constant 0 : index
    %102 = vector.load %arg3[%c768, %c0_37] : memref<1152x128xbf16, #tpu.memory_space<vmem>>, vector<128x128xbf16>
    %cst_38 = arith.constant dense<0.000000e+00> : vector<64x128xf32>
    %103 = tpu.matmul %101, %102, %cst_38 {dimension_numbers = #tpu.dot_dimension_numbers<[1], [0], [0], [1], [0, 0, 1, 1], [], []>} : vector<64x128xbf16>, vector<128x128xbf16>, vector<64x128xf32> -> vector<64x128xf32>
    %104 = arith.addf %95, %103 : vector<64x128xf32>
    %105 = vector.extract_strided_slice %45 {offsets = [8, 0], sizes = [56, 128], strides = [1, 1]} : vector<64x128xbf16> to vector<56x128xbf16>
    %106 = vector.extract_strided_slice %45 {offsets = [0, 0], sizes = [8, 128], strides = [1, 1]} : vector<64x128xbf16> to vector<8x128xbf16>
    %107 = tpu.concatenate %105, %106 in 0 : vector<56x128xbf16>, vector<8x128xbf16> -> vector<64x128xbf16>
    %108 = vector.extract_strided_slice %46 {offsets = [0, 7], sizes = [64, 1], strides = [1, 1]} : vector<64x9xbf16> to vector<64x1xbf16>
    %109 = vector.broadcast %108 : vector<64x1xbf16> to vector<64x128xbf16>
    %110 = arith.mulf %107, %109 : vector<64x128xbf16>
    %c896 = arith.constant 896 : index
    %c0_39 = arith.constant 0 : index
    %111 = vector.load %arg3[%c896, %c0_39] : memref<1152x128xbf16, #tpu.memory_space<vmem>>, vector<128x128xbf16>
    %cst_40 = arith.constant dense<0.000000e+00> : vector<64x128xf32>
    %112 = tpu.matmul %110, %111, %cst_40 {dimension_numbers = #tpu.dot_dimension_numbers<[1], [0], [0], [1], [0, 0, 1, 1], [], []>} : vector<64x128xbf16>, vector<128x128xbf16>, vector<64x128xf32> -> vector<64x128xf32>
    %113 = arith.addf %104, %112 : vector<64x128xf32>
    %114 = vector.extract_strided_slice %45 {offsets = [9, 0], sizes = [55, 128], strides = [1, 1]} : vector<64x128xbf16> to vector<55x128xbf16>
    %115 = vector.extract_strided_slice %45 {offsets = [0, 0], sizes = [9, 128], strides = [1, 1]} : vector<64x128xbf16> to vector<9x128xbf16>
    %116 = tpu.concatenate %114, %115 in 0 : vector<55x128xbf16>, vector<9x128xbf16> -> vector<64x128xbf16>
    %117 = vector.extract_strided_slice %46 {offsets = [0, 8], sizes = [64, 1], strides = [1, 1]} : vector<64x9xbf16> to vector<64x1xbf16>
    %118 = vector.broadcast %117 : vector<64x1xbf16> to vector<64x128xbf16>
    %119 = arith.mulf %116, %118 : vector<64x128xbf16>
    %c1024 = arith.constant 1024 : index
    %c0_41 = arith.constant 0 : index
    %120 = vector.load %arg3[%c1024, %c0_41] : memref<1152x128xbf16, #tpu.memory_space<vmem>>, vector<128x128xbf16>
    %cst_42 = arith.constant dense<0.000000e+00> : vector<64x128xf32>
    %121 = tpu.matmul %119, %120, %cst_42 {dimension_numbers = #tpu.dot_dimension_numbers<[1], [0], [0], [1], [0, 0, 1, 1], [], []>} : vector<64x128xbf16>, vector<128x128xbf16>, vector<64x128xf32> -> vector<64x128xf32>
    %122 = arith.addf %113, %121 : vector<64x128xf32>
    %123 = vector.shape_cast %122 : vector<64x128xf32> to vector<1x64x128xf32>
    %c0_43 = arith.constant 0 : index
    %c0_44 = arith.constant 0 : index
    %124 = vector.load %arg7[%c0_43, %c0_44] : memref<1x128xf32, #tpu.memory_space<vmem>>, vector<1x128xf32>
    %c0_45 = arith.constant 0 : index
    %c0_46 = arith.constant 0 : index
    %125 = vector.load %arg8[%c0_45, %c0_46] : memref<1x128xf32, #tpu.memory_space<vmem>>, vector<1x128xf32>
    %c0_47 = arith.constant 0 : index
    %c0_48 = arith.constant 0 : index
    %126 = vector.load %arg11[%c0_47, %c0_48] : memref<128x32xf32, #tpu.memory_space<vmem>>, vector<128x32xf32>
    %c0_49 = arith.constant 0 : index
    %c0_50 = arith.constant 0 : index
    %127 = vector.load %arg12[%c0_49, %c0_50] : memref<32x128xf32, #tpu.memory_space<vmem>>, vector<32x128xf32>
    %cst_51 = arith.constant dense<0.000000e+00> : vector<1x128xf32>
    %128 = vector.multi_reduction <add>, %123, %cst_51 [1] : vector<1x64x128xf32> to vector<1x128xf32>
    %129 = arith.mulf %123, %123 : vector<1x64x128xf32>
    %cst_52 = arith.constant dense<0.000000e+00> : vector<1x128xf32>
    %130 = vector.multi_reduction <add>, %129, %cst_52 [1] : vector<1x64x128xf32> to vector<1x128xf32>
    %131 = tpu.concatenate %128, %130 in 0 : vector<1x128xf32>, vector<1x128xf32> -> vector<2x128xf32>
    %cst_53 = arith.constant dense<0.000000e+00> : vector<2x32xf32>
    %132 = tpu.matmul %131, %126, %cst_53 {dimension_numbers = #tpu.dot_dimension_numbers<[1], [0], [0], [1], [0, 0, 1, 1], [], []>} : vector<2x128xf32>, vector<128x32xf32>, vector<2x32xf32> -> vector<2x32xf32>
    %133 = vector.extract_strided_slice %132 {offsets = [0, 0], sizes = [1, 32], strides = [1, 1]} : vector<2x32xf32> to vector<1x32xf32>
    %cst_54 = arith.constant 1.562500e-02 : f32
    %134 = vector.broadcast %cst_54 : f32 to vector<1x32xf32>
    %135 = arith.mulf %133, %134 : vector<1x32xf32>
    %136 = vector.extract_strided_slice %132 {offsets = [1, 0], sizes = [1, 32], strides = [1, 1]} : vector<2x32xf32> to vector<1x32xf32>
    %cst_55 = arith.constant 1.562500e-02 : f32
    %137 = vector.broadcast %cst_55 : f32 to vector<1x32xf32>
    %138 = arith.mulf %136, %137 : vector<1x32xf32>
    %139 = arith.mulf %135, %135 : vector<1x32xf32>
    %140 = arith.subf %138, %139 : vector<1x32xf32>
    %cst_56 = arith.constant 0.000000e+00 : f32
    %141 = vector.broadcast %cst_56 : f32 to vector<1x32xf32>
    %142 = arith.maximumf %140, %141 : vector<1x32xf32>
    %cst_57 = arith.constant 9.99999974E-6 : f32
    %143 = vector.broadcast %cst_57 : f32 to vector<1x32xf32>
    %144 = arith.addf %142, %143 : vector<1x32xf32>
    %145 = math.rsqrt %144 : vector<1x32xf32>
    %146 = tpu.concatenate %135, %145 in 0 : vector<1x32xf32>, vector<1x32xf32> -> vector<2x32xf32>
    %cst_58 = arith.constant dense<0.000000e+00> : vector<2x128xf32>
    %147 = tpu.matmul %146, %127, %cst_58 {dimension_numbers = #tpu.dot_dimension_numbers<[1], [0], [0], [1], [0, 0, 1, 1], [], []>} : vector<2x32xf32>, vector<32x128xf32>, vector<2x128xf32> -> vector<2x128xf32>
    %148 = vector.extract_strided_slice %147 {offsets = [0, 0], sizes = [1, 128], strides = [1, 1]} : vector<2x128xf32> to vector<1x128xf32>
    %149 = vector.shape_cast %148 : vector<1x128xf32> to vector<1x1x128xf32>
    %150 = vector.extract_strided_slice %147 {offsets = [1, 0], sizes = [1, 128], strides = [1, 1]} : vector<2x128xf32> to vector<1x128xf32>
    %151 = vector.shape_cast %150 : vector<1x128xf32> to vector<1x1x128xf32>
    %152 = vector.shape_cast %124 : vector<1x128xf32> to vector<1x1x128xf32>
    %153 = arith.mulf %151, %152 : vector<1x1x128xf32>
    %154 = arith.mulf %149, %153 : vector<1x1x128xf32>
    %155 = vector.shape_cast %125 : vector<1x128xf32> to vector<1x1x128xf32>
    %156 = arith.subf %155, %154 : vector<1x1x128xf32>
    %157 = vector.broadcast %153 : vector<1x1x128xf32> to vector<1x64x128xf32>
    %158 = arith.mulf %123, %157 : vector<1x64x128xf32>
    %159 = vector.broadcast %156 : vector<1x1x128xf32> to vector<1x64x128xf32>
    %160 = arith.addf %158, %159 : vector<1x64x128xf32>
    %cst_59 = arith.constant 0.000000e+00 : f32
    %161 = vector.broadcast %cst_59 : f32 to vector<1x64x128xf32>
    %162 = arith.maximumf %160, %161 : vector<1x64x128xf32>
    %163 = vector.shape_cast %162 : vector<1x64x128xf32> to vector<64x128xf32>
    %164 = arith.truncf %163 : vector<64x128xf32> to vector<64x128xbf16>
    %c0_60 = arith.constant 0 : index
    %c0_61 = arith.constant 0 : index
    %165 = vector.load %arg4[%c0_60, %c0_61] : memref<128x128xbf16, #tpu.memory_space<vmem>>, vector<128x128xbf16>
    %cst_62 = arith.constant dense<0.000000e+00> : vector<64x128xf32>
    %166 = tpu.matmul %164, %165, %cst_62 {dimension_numbers = #tpu.dot_dimension_numbers<[1], [0], [0], [1], [0, 0, 1, 1], [], []>} : vector<64x128xbf16>, vector<128x128xbf16>, vector<64x128xf32> -> vector<64x128xf32>
    %167 = vector.shape_cast %166 : vector<64x128xf32> to vector<1x64x128xf32>
    %c0_63 = arith.constant 0 : index
    %c0_64 = arith.constant 0 : index
    %168 = vector.load %arg9[%c0_63, %c0_64] : memref<1x128xf32, #tpu.memory_space<vmem>>, vector<1x128xf32>
    %c0_65 = arith.constant 0 : index
    %c0_66 = arith.constant 0 : index
    %169 = vector.load %arg10[%c0_65, %c0_66] : memref<1x128xf32, #tpu.memory_space<vmem>>, vector<1x128xf32>
    %c0_67 = arith.constant 0 : index
    %c0_68 = arith.constant 0 : index
    %170 = vector.load %arg13[%c0_67, %c0_68] : memref<128x32xf32, #tpu.memory_space<vmem>>, vector<128x32xf32>
    %c0_69 = arith.constant 0 : index
    %c0_70 = arith.constant 0 : index
    %171 = vector.load %arg14[%c0_69, %c0_70] : memref<32x128xf32, #tpu.memory_space<vmem>>, vector<32x128xf32>
    %cst_71 = arith.constant dense<0.000000e+00> : vector<1x128xf32>
    %172 = vector.multi_reduction <add>, %167, %cst_71 [1] : vector<1x64x128xf32> to vector<1x128xf32>
    %173 = arith.mulf %167, %167 : vector<1x64x128xf32>
    %cst_72 = arith.constant dense<0.000000e+00> : vector<1x128xf32>
    %174 = vector.multi_reduction <add>, %173, %cst_72 [1] : vector<1x64x128xf32> to vector<1x128xf32>
    %175 = tpu.concatenate %172, %174 in 0 : vector<1x128xf32>, vector<1x128xf32> -> vector<2x128xf32>
    %cst_73 = arith.constant dense<0.000000e+00> : vector<2x32xf32>
    %176 = tpu.matmul %175, %170, %cst_73 {dimension_numbers = #tpu.dot_dimension_numbers<[1], [0], [0], [1], [0, 0, 1, 1], [], []>} : vector<2x128xf32>, vector<128x32xf32>, vector<2x32xf32> -> vector<2x32xf32>
    %177 = vector.extract_strided_slice %176 {offsets = [0, 0], sizes = [1, 32], strides = [1, 1]} : vector<2x32xf32> to vector<1x32xf32>
    %cst_74 = arith.constant 3.906250e-03 : f32
    %178 = vector.broadcast %cst_74 : f32 to vector<1x32xf32>
    %179 = arith.mulf %177, %178 : vector<1x32xf32>
    %180 = vector.extract_strided_slice %176 {offsets = [1, 0], sizes = [1, 32], strides = [1, 1]} : vector<2x32xf32> to vector<1x32xf32>
    %cst_75 = arith.constant 3.906250e-03 : f32
    %181 = vector.broadcast %cst_75 : f32 to vector<1x32xf32>
    %182 = arith.mulf %180, %181 : vector<1x32xf32>
    %183 = arith.mulf %179, %179 : vector<1x32xf32>
    %184 = arith.subf %182, %183 : vector<1x32xf32>
    %cst_76 = arith.constant 0.000000e+00 : f32
    %185 = vector.broadcast %cst_76 : f32 to vector<1x32xf32>
    %186 = arith.maximumf %184, %185 : vector<1x32xf32>
    %cst_77 = arith.constant 9.99999974E-6 : f32
    %187 = vector.broadcast %cst_77 : f32 to vector<1x32xf32>
    %188 = arith.addf %186, %187 : vector<1x32xf32>
    %189 = math.rsqrt %188 : vector<1x32xf32>
    %190 = tpu.concatenate %179, %189 in 0 : vector<1x32xf32>, vector<1x32xf32> -> vector<2x32xf32>
    %cst_78 = arith.constant dense<0.000000e+00> : vector<2x128xf32>
    %191 = tpu.matmul %190, %171, %cst_78 {dimension_numbers = #tpu.dot_dimension_numbers<[1], [0], [0], [1], [0, 0, 1, 1], [], []>} : vector<2x32xf32>, vector<32x128xf32>, vector<2x128xf32> -> vector<2x128xf32>
    %192 = vector.extract_strided_slice %191 {offsets = [0, 0], sizes = [1, 128], strides = [1, 1]} : vector<2x128xf32> to vector<1x128xf32>
    %193 = vector.shape_cast %192 : vector<1x128xf32> to vector<1x1x128xf32>
    %194 = vector.extract_strided_slice %191 {offsets = [1, 0], sizes = [1, 128], strides = [1, 1]} : vector<2x128xf32> to vector<1x128xf32>
    %195 = vector.shape_cast %194 : vector<1x128xf32> to vector<1x1x128xf32>
    %196 = vector.shape_cast %168 : vector<1x128xf32> to vector<1x1x128xf32>
    %197 = arith.mulf %195, %196 : vector<1x1x128xf32>
    %198 = arith.mulf %193, %197 : vector<1x1x128xf32>
    %199 = vector.shape_cast %169 : vector<1x128xf32> to vector<1x1x128xf32>
    %200 = arith.subf %199, %198 : vector<1x1x128xf32>
    %201 = vector.broadcast %197 : vector<1x1x128xf32> to vector<1x64x128xf32>
    %202 = arith.mulf %167, %201 : vector<1x64x128xf32>
    %203 = vector.broadcast %200 : vector<1x1x128xf32> to vector<1x64x128xf32>
    %204 = arith.addf %202, %203 : vector<1x64x128xf32>
    %205 = arith.extf %0 : vector<1x64x128xbf16> to vector<1x64x128xf32>
    %206 = arith.addf %204, %205 : vector<1x64x128xf32>
    %cst_79 = arith.constant 0.000000e+00 : f32
    %207 = vector.broadcast %cst_79 : f32 to vector<1x64x128xf32>
    %208 = arith.maximumf %206, %207 : vector<1x64x128xf32>
    %209 = arith.truncf %208 : vector<1x64x128xf32> to vector<1x64x128xbf16>
    %c0_80 = arith.constant 0 : index
    %c0_81 = arith.constant 0 : index
    %c0_82 = arith.constant 0 : index
    %210 = vector.load %arg16[%c0_80, %c0_81, %c0_82] : memref<1x64x128xbf16, #tpu.memory_space<vmem>>, vector<1x64x128xbf16>
    tpu.vector_store %arg16[%c0_80, %c0_81, %c0_82], %209 {strides = array<i32>} : memref<1x64x128xbf16, #tpu.memory_space<vmem>>, vector<1x64x128xbf16>,
    return
  }
  func.func @transform_0(%arg0: i32) -> (i32, i32, i32) {
    %c0_i32 = arith.constant 0 : i32
    %c0_i32_0 = arith.constant 0 : i32
    %c0_i32_1 = arith.constant 0 : i32
    return %arg0, %c0_i32, %c0_i32_0 : i32, i32, i32
  }
  func.func @transform_1(%arg0: i32) -> (i32, i32) {
    %c0_i32 = arith.constant 0 : i32
    %c0_i32_0 = arith.constant 0 : i32
    %c0_i32_1 = arith.constant 0 : i32
    return %c0_i32, %c0_i32_0 : i32, i32
  }
  func.func @transform_2(%arg0: i32) -> (i32, i32) {
    %c0_i32 = arith.constant 0 : i32
    %c0_i32_0 = arith.constant 0 : i32
    %c0_i32_1 = arith.constant 0 : i32
    return %c0_i32, %c0_i32_0 : i32, i32
  }
  func.func @transform_3(%arg0: i32) -> (i32, i32) {
    %c0_i32 = arith.constant 0 : i32
    %c0_i32_0 = arith.constant 0 : i32
    %c0_i32_1 = arith.constant 0 : i32
    return %c0_i32, %c0_i32_0 : i32, i32
  }
  func.func @transform_4(%arg0: i32) -> (i32, i32) {
    %c0_i32 = arith.constant 0 : i32
    %c0_i32_0 = arith.constant 0 : i32
    %c0_i32_1 = arith.constant 0 : i32
    return %c0_i32, %c0_i32_0 : i32, i32
  }
  func.func @transform_5(%arg0: i32) -> (i32, i32) {
    %c0_i32 = arith.constant 0 : i32
    %c0_i32_0 = arith.constant 0 : i32
    %c0_i32_1 = arith.constant 0 : i32
    return %c0_i32, %c0_i32_0 : i32, i32
  }
  func.func @transform_6(%arg0: i32) -> (i32, i32) {
    %c0_i32 = arith.constant 0 : i32
    %c0_i32_0 = arith.constant 0 : i32
    %c0_i32_1 = arith.constant 0 : i32
    return %c0_i32, %c0_i32_0 : i32, i32
  }
  func.func @transform_7(%arg0: i32) -> (i32, i32) {
    %c0_i32 = arith.constant 0 : i32
    %c0_i32_0 = arith.constant 0 : i32
    %c0_i32_1 = arith.constant 0 : i32
    return %c0_i32, %c0_i32_0 : i32, i32
  }
  func.func @transform_8(%arg0: i32) -> (i32, i32) {
    %c0_i32 = arith.constant 0 : i32
    %c0_i32_0 = arith.constant 0 : i32
    %c0_i32_1 = arith.constant 0 : i32
    return %c0_i32, %c0_i32_0 : i32, i32
  }
  func.func @transform_9(%arg0: i32) -> (i32, i32) {
    %c0_i32 = arith.constant 0 : i32
    %c0_i32_0 = arith.constant 0 : i32
    %c0_i32_1 = arith.constant 0 : i32
    return %c0_i32, %c0_i32_0 : i32, i32
  }
  func.func @transform_10(%arg0: i32) -> (i32, i32) {
    %c0_i32 = arith.constant 0 : i32
    %c0_i32_0 = arith.constant 0 : i32
    %c0_i32_1 = arith.constant 0 : i32
    return %c0_i32, %c0_i32_0 : i32, i32
  }
  func.func @transform_11(%arg0: i32) -> (i32, i32) {
    %c0_i32 = arith.constant 0 : i32
    %c0_i32_0 = arith.constant 0 : i32
    %c0_i32_1 = arith.constant 0 : i32
    return %c0_i32, %c0_i32_0 : i32, i32
  }
  func.func @transform_12(%arg0: i32) -> (i32, i32) {
    %c0_i32 = arith.constant 0 : i32
    %c0_i32_0 = arith.constant 0 : i32
    %c0_i32_1 = arith.constant 0 : i32
    return %c0_i32, %c0_i32_0 : i32, i32
  }
  func.func @transform_13(%arg0: i32) -> (i32, i32) {
    %c0_i32 = arith.constant 0 : i32
    %c0_i32_0 = arith.constant 0 : i32
    %c0_i32_1 = arith.constant 0 : i32
    return %c0_i32, %c0_i32_0 : i32, i32
  }
  func.func @transform_14(%arg0: i32) -> (i32, i32) {
    %c0_i32 = arith.constant 0 : i32
    %c0_i32_0 = arith.constant 0 : i32
    %c0_i32_1 = arith.constant 0 : i32
    return %c0_i32, %c0_i32_0 : i32, i32
  }
  func.func @transform_15(%arg0: i32) -> (i32, i32, i32) {
    %c0_i32 = arith.constant 0 : i32
    %c0_i32_0 = arith.constant 0 : i32
    %c0_i32_1 = arith.constant 0 : i32
    return %arg0, %c0_i32, %c0_i32_0 : i32, i32, i32
  }
}

module attributes {stable_mosaic.version = 11 : i64} {
  func.func @bottleneck_kernel(%arg0: i32, %arg1: memref<1x64x128xbf16, #tpu.memory_space<vmem>>, %arg2: memref<128x128xbf16, #tpu.memory_space<vmem>>, %arg3: memref<1152x128xbf16, #tpu.memory_space<vmem>>, %arg4: memref<128x128xbf16, #tpu.memory_space<vmem>>, %arg5: memref<1x128xf32, #tpu.memory_space<vmem>>, %arg6: memref<1x128xf32, #tpu.memory_space<vmem>>, %arg7: memref<1x128xf32, #tpu.memory_space<vmem>>, %arg8: memref<1x128xf32, #tpu.memory_space<vmem>>, %arg9: memref<1x128xf32, #tpu.memory_space<vmem>>, %arg10: memref<1x128xf32, #tpu.memory_space<vmem>>, %arg11: memref<128x32xf32, #tpu.memory_space<vmem>>, %arg12: memref<32x128xf32, #tpu.memory_space<vmem>>, %arg13: memref<128x32xf32, #tpu.memory_space<vmem>>, %arg14: memref<32x128xf32, #tpu.memory_space<vmem>>, %arg15: memref<64x9xbf16, #tpu.memory_space<vmem>>, %arg16: memref<1x64x128xbf16, #tpu.memory_space<vmem>>) attributes {dimension_semantics = [#tpu.dimension_semantics<parallel>], iteration_bounds = array<i64: 2>, scalar_prefetch = 0 : i64, scratch_operands = 0 : i64, tpu.core_type = #tpu.core_type<tc>, window_params = [{transform_indices = @transform_0, window_bounds = array<i64: 1, 64, 128>}, {pipeline_mode = #tpu.pipeline_mode<synchronous>, transform_indices = @transform_1, window_bounds = array<i64: 128, 128>}, {pipeline_mode = #tpu.pipeline_mode<synchronous>, transform_indices = @transform_2, window_bounds = array<i64: 1152, 128>}, {pipeline_mode = #tpu.pipeline_mode<synchronous>, transform_indices = @transform_3, window_bounds = array<i64: 128, 128>}, {pipeline_mode = #tpu.pipeline_mode<synchronous>, transform_indices = @transform_4, window_bounds = array<i64: 1, 128>}, {pipeline_mode = #tpu.pipeline_mode<synchronous>, transform_indices = @transform_5, window_bounds = array<i64: 1, 128>}, {pipeline_mode = #tpu.pipeline_mode<synchronous>, transform_indices = @transform_6, window_bounds = array<i64: 1, 128>}, {pipeline_mode = #tpu.pipeline_mode<synchronous>, transform_indices = @transform_7, window_bounds = array<i64: 1, 128>}, {pipeline_mode = #tpu.pipeline_mode<synchronous>, transform_indices = @transform_8, window_bounds = array<i64: 1, 128>}, {pipeline_mode = #tpu.pipeline_mode<synchronous>, transform_indices = @transform_9, window_bounds = array<i64: 1, 128>}, {pipeline_mode = #tpu.pipeline_mode<synchronous>, transform_indices = @transform_10, window_bounds = array<i64: 128, 32>}, {pipeline_mode = #tpu.pipeline_mode<synchronous>, transform_indices = @transform_11, window_bounds = array<i64: 32, 128>}, {pipeline_mode = #tpu.pipeline_mode<synchronous>, transform_indices = @transform_12, window_bounds = array<i64: 128, 32>}, {pipeline_mode = #tpu.pipeline_mode<synchronous>, transform_indices = @transform_13, window_bounds = array<i64: 32, 128>}, {pipeline_mode = #tpu.pipeline_mode<synchronous>, transform_indices = @transform_14, window_bounds = array<i64: 64, 9>}, {transform_indices = @transform_15, window_bounds = array<i64: 1, 64, 128>}]} {
    %c0 = arith.constant 0 : index
    %c0_0 = arith.constant 0 : index
    %c0_1 = arith.constant 0 : index
    %0 = vector.load %arg1[%c0, %c0_0, %c0_1] : memref<1x64x128xbf16, #tpu.memory_space<vmem>>, vector<1x64x128xbf16>
    %1 = vector.shape_cast %0 : vector<1x64x128xbf16> to vector<64x128xbf16>
    %c0_2 = arith.constant 0 : index
    %c0_3 = arith.constant 0 : index
    %2 = vector.load %arg2[%c0_2, %c0_3] : memref<128x128xbf16, #tpu.memory_space<vmem>>, vector<128x128xbf16>
    %cst = arith.constant dense<0.000000e+00> : vector<64x128xf32>
    %3 = tpu.matmul %1, %2, %cst {dimension_numbers = #tpu.dot_dimension_numbers<[1], [0], [0], [1], [0, 0, 1, 1], [], []>} : vector<64x128xbf16>, vector<128x128xbf16>, vector<64x128xf32> -> vector<64x128xf32>
    %4 = vector.shape_cast %3 : vector<64x128xf32> to vector<1x64x128xf32>
    %c0_4 = arith.constant 0 : index
    %c0_5 = arith.constant 0 : index
    %5 = vector.load %arg5[%c0_4, %c0_5] : memref<1x128xf32, #tpu.memory_space<vmem>>, vector<1x128xf32>
    %c0_6 = arith.constant 0 : index
    %c0_7 = arith.constant 0 : index
    %6 = vector.load %arg6[%c0_6, %c0_7] : memref<1x128xf32, #tpu.memory_space<vmem>>, vector<1x128xf32>
    %c0_8 = arith.constant 0 : index
    %c0_9 = arith.constant 0 : index
    %7 = vector.load %arg11[%c0_8, %c0_9] : memref<128x32xf32, #tpu.memory_space<vmem>>, vector<128x32xf32>
    %c0_10 = arith.constant 0 : index
    %c0_11 = arith.constant 0 : index
    %8 = vector.load %arg12[%c0_10, %c0_11] : memref<32x128xf32, #tpu.memory_space<vmem>>, vector<32x128xf32>
    %cst_12 = arith.constant dense<0.000000e+00> : vector<1x128xf32>
    %9 = vector.multi_reduction <add>, %4, %cst_12 [1] : vector<1x64x128xf32> to vector<1x128xf32>
    %10 = arith.mulf %4, %4 : vector<1x64x128xf32>
    %cst_13 = arith.constant dense<0.000000e+00> : vector<1x128xf32>
    %11 = vector.multi_reduction <add>, %10, %cst_13 [1] : vector<1x64x128xf32> to vector<1x128xf32>
    %12 = tpu.concatenate %9, %11 in 0 : vector<1x128xf32>, vector<1x128xf32> -> vector<2x128xf32>
    %cst_14 = arith.constant dense<0.000000e+00> : vector<2x32xf32>
    %13 = tpu.matmul %12, %7, %cst_14 {dimension_numbers = #tpu.dot_dimension_numbers<[1], [0], [0], [1], [0, 0, 1, 1], [], []>} : vector<2x128xf32>, vector<128x32xf32>, vector<2x32xf32> -> vector<2x32xf32>
    %14 = vector.extract_strided_slice %13 {offsets = [0, 0], sizes = [1, 32], strides = [1, 1]} : vector<2x32xf32> to vector<1x32xf32>
    %cst_15 = arith.constant 1.562500e-02 : f32
    %15 = vector.broadcast %cst_15 : f32 to vector<1x32xf32>
    %16 = arith.mulf %14, %15 : vector<1x32xf32>
    %17 = vector.extract_strided_slice %13 {offsets = [1, 0], sizes = [1, 32], strides = [1, 1]} : vector<2x32xf32> to vector<1x32xf32>
    %cst_16 = arith.constant 1.562500e-02 : f32
    %18 = vector.broadcast %cst_16 : f32 to vector<1x32xf32>
    %19 = arith.mulf %17, %18 : vector<1x32xf32>
    %20 = arith.mulf %16, %16 : vector<1x32xf32>
    %21 = arith.subf %19, %20 : vector<1x32xf32>
    %cst_17 = arith.constant 0.000000e+00 : f32
    %22 = vector.broadcast %cst_17 : f32 to vector<1x32xf32>
    %23 = arith.maximumf %21, %22 : vector<1x32xf32>
    %cst_18 = arith.constant 9.99999974E-6 : f32
    %24 = vector.broadcast %cst_18 : f32 to vector<1x32xf32>
    %25 = arith.addf %23, %24 : vector<1x32xf32>
    %26 = math.rsqrt %25 : vector<1x32xf32>
    %27 = tpu.concatenate %16, %26 in 0 : vector<1x32xf32>, vector<1x32xf32> -> vector<2x32xf32>
    %cst_19 = arith.constant dense<0.000000e+00> : vector<2x128xf32>
    %28 = tpu.matmul %27, %8, %cst_19 {dimension_numbers = #tpu.dot_dimension_numbers<[1], [0], [0], [1], [0, 0, 1, 1], [], []>} : vector<2x32xf32>, vector<32x128xf32>, vector<2x128xf32> -> vector<2x128xf32>
    %29 = vector.extract_strided_slice %28 {offsets = [0, 0], sizes = [1, 128], strides = [1, 1]} : vector<2x128xf32> to vector<1x128xf32>
    %30 = vector.shape_cast %29 : vector<1x128xf32> to vector<1x1x128xf32>
    %31 = vector.extract_strided_slice %28 {offsets = [1, 0], sizes = [1, 128], strides = [1, 1]} : vector<2x128xf32> to vector<1x128xf32>
    %32 = vector.shape_cast %31 : vector<1x128xf32> to vector<1x1x128xf32>
    %33 = vector.shape_cast %5 : vector<1x128xf32> to vector<1x1x128xf32>
    %34 = arith.mulf %32, %33 : vector<1x1x128xf32>
    %35 = arith.mulf %30, %34 : vector<1x1x128xf32>
    %36 = vector.shape_cast %6 : vector<1x128xf32> to vector<1x1x128xf32>
    %37 = arith.subf %36, %35 : vector<1x1x128xf32>
    %38 = vector.broadcast %34 : vector<1x1x128xf32> to vector<1x64x128xf32>
    %39 = arith.mulf %4, %38 : vector<1x64x128xf32>
    %40 = vector.broadcast %37 : vector<1x1x128xf32> to vector<1x64x128xf32>
    %41 = arith.addf %39, %40 : vector<1x64x128xf32>
    %cst_20 = arith.constant 0.000000e+00 : f32
    %42 = vector.broadcast %cst_20 : f32 to vector<1x64x128xf32>
    %43 = arith.maximumf %41, %42 : vector<1x64x128xf32>
    %44 = vector.shape_cast %43 : vector<1x64x128xf32> to vector<64x128xf32>
    %45 = arith.truncf %44 : vector<64x128xf32> to vector<64x128xbf16>
    %c0_21 = arith.constant 0 : index
    %c0_22 = arith.constant 0 : index
    %46 = vector.load %arg15[%c0_21, %c0_22] : memref<64x9xbf16, #tpu.memory_space<vmem>>, vector<64x9xbf16>
    %cst_23 = arith.constant 0.000000e+00 : f32
    %47 = vector.broadcast %cst_23 : f32 to vector<64x128xf32>
    %48 = vector.extract_strided_slice %45 {offsets = [55, 0], sizes = [9, 128], strides = [1, 1]} : vector<64x128xbf16> to vector<9x128xbf16>
    %49 = vector.extract_strided_slice %45 {offsets = [0, 0], sizes = [55, 128], strides = [1, 1]} : vector<64x128xbf16> to vector<55x128xbf16>
    %50 = tpu.concatenate %48, %49 in 0 : vector<9x128xbf16>, vector<55x128xbf16> -> vector<64x128xbf16>
    %51 = vector.extract_strided_slice %46 {offsets = [0, 0], sizes = [64, 1], strides = [1, 1]} : vector<64x9xbf16> to vector<64x1xbf16>
    %52 = vector.broadcast %51 : vector<64x1xbf16> to vector<64x128xbf16>
    %53 = arith.mulf %50, %52 : vector<64x128xbf16>
    %c0_24 = arith.constant 0 : index
    %c0_25 = arith.constant 0 : index
    %54 = vector.load %arg3[%c0_24, %c0_25] : memref<1152x128xbf16, #tpu.memory_space<vmem>>, vector<128x128xbf16>
    %cst_26 = arith.constant dense<0.000000e+00> : vector<64x128xf32>
    %55 = tpu.matmul %53, %54, %cst_26 {dimension_numbers = #tpu.dot_dimension_numbers<[1], [0], [0], [1], [0, 0, 1, 1], [], []>} : vector<64x128xbf16>, vector<128x128xbf16>, vector<64x128xf32> -> vector<64x128xf32>
    %56 = arith.addf %47, %55 : vector<64x128xf32>
    %57 = vector.extract_strided_slice %45 {offsets = [56, 0], sizes = [8, 128], strides = [1, 1]} : vector<64x128xbf16> to vector<8x128xbf16>
    %58 = vector.extract_strided_slice %45 {offsets = [0, 0], sizes = [56, 128], strides = [1, 1]} : vector<64x128xbf16> to vector<56x128xbf16>
    %59 = tpu.concatenate %57, %58 in 0 : vector<8x128xbf16>, vector<56x128xbf16> -> vector<64x128xbf16>
    %60 = vector.extract_strided_slice %46 {offsets = [0, 1], sizes = [64, 1], strides = [1, 1]} : vector<64x9xbf16> to vector<64x1xbf16>
    %61 = vector.broadcast %60 : vector<64x1xbf16> to vector<64x128xbf16>
    %62 = arith.mulf %59, %61 : vector<64x128xbf16>
    %c128 = arith.constant 128 : index
    %c0_27 = arith.constant 0 : index
    %63 = vector.load %arg3[%c128, %c0_27] : memref<1152x128xbf16, #tpu.memory_space<vmem>>, vector<128x128xbf16>
    %cst_28 = arith.constant dense<0.000000e+00> : vector<64x128xf32>
    %64 = tpu.matmul %62, %63, %cst_28 {dimension_numbers = #tpu.dot_dimension_numbers<[1], [0], [0], [1], [0, 0, 1, 1], [], []>} : vector<64x128xbf16>, vector<128x128xbf16>, vector<64x128xf32> -> vector<64x128xf32>
    %65 = arith.addf %56, %64 : vector<64x128xf32>
    %66 = vector.extract_strided_slice %45 {offsets = [57, 0], sizes = [7, 128], strides = [1, 1]} : vector<64x128xbf16> to vector<7x128xbf16>
    %67 = vector.extract_strided_slice %45 {offsets = [0, 0], sizes = [57, 128], strides = [1, 1]} : vector<64x128xbf16> to vector<57x128xbf16>
    %68 = tpu.concatenate %66, %67 in 0 : vector<7x128xbf16>, vector<57x128xbf16> -> vector<64x128xbf16>
    %69 = vector.extract_strided_slice %46 {offsets = [0, 2], sizes = [64, 1], strides = [1, 1]} : vector<64x9xbf16> to vector<64x1xbf16>
    %70 = vector.broadcast %69 : vector<64x1xbf16> to vector<64x128xbf16>
    %71 = arith.mulf %68, %70 : vector<64x128xbf16>
    %c256 = arith.constant 256 : index
    %c0_29 = arith.constant 0 : index
    %72 = vector.load %arg3[%c256, %c0_29] : memref<1152x128xbf16, #tpu.memory_space<vmem>>, vector<128x128xbf16>
    %cst_30 = arith.constant dense<0.000000e+00> : vector<64x128xf32>
    %73 = tpu.matmul %71, %72, %cst_30 {dimension_numbers = #tpu.dot_dimension_numbers<[1], [0], [0], [1], [0, 0, 1, 1], [], []>} : vector<64x128xbf16>, vector<128x128xbf16>, vector<64x128xf32> -> vector<64x128xf32>
    %74 = arith.addf %65, %73 : vector<64x128xf32>
    %75 = vector.extract_strided_slice %45 {offsets = [63, 0], sizes = [1, 128], strides = [1, 1]} : vector<64x128xbf16> to vector<1x128xbf16>
    %76 = vector.extract_strided_slice %45 {offsets = [0, 0], sizes = [63, 128], strides = [1, 1]} : vector<64x128xbf16> to vector<63x128xbf16>
    %77 = tpu.concatenate %75, %76 in 0 : vector<1x128xbf16>, vector<63x128xbf16> -> vector<64x128xbf16>
    %78 = vector.extract_strided_slice %46 {offsets = [0, 3], sizes = [64, 1], strides = [1, 1]} : vector<64x9xbf16> to vector<64x1xbf16>
    %79 = vector.broadcast %78 : vector<64x1xbf16> to vector<64x128xbf16>
    %80 = arith.mulf %77, %79 : vector<64x128xbf16>
    %c384 = arith.constant 384 : index
    %c0_31 = arith.constant 0 : index
    %81 = vector.load %arg3[%c384, %c0_31] : memref<1152x128xbf16, #tpu.memory_space<vmem>>, vector<128x128xbf16>
    %cst_32 = arith.constant dense<0.000000e+00> : vector<64x128xf32>
    %82 = tpu.matmul %80, %81, %cst_32 {dimension_numbers = #tpu.dot_dimension_numbers<[1], [0], [0], [1], [0, 0, 1, 1], [], []>} : vector<64x128xbf16>, vector<128x128xbf16>, vector<64x128xf32> -> vector<64x128xf32>
    %83 = arith.addf %74, %82 : vector<64x128xf32>
    %c512 = arith.constant 512 : index
    %c0_33 = arith.constant 0 : index
    %84 = vector.load %arg3[%c512, %c0_33] : memref<1152x128xbf16, #tpu.memory_space<vmem>>, vector<128x128xbf16>
    %cst_34 = arith.constant dense<0.000000e+00> : vector<64x128xf32>
    %85 = tpu.matmul %45, %84, %cst_34 {dimension_numbers = #tpu.dot_dimension_numbers<[1], [0], [0], [1], [0, 0, 1, 1], [], []>} : vector<64x128xbf16>, vector<128x128xbf16>, vector<64x128xf32> -> vector<64x128xf32>
    %86 = arith.addf %83, %85 : vector<64x128xf32>
    %87 = vector.extract_strided_slice %45 {offsets = [1, 0], sizes = [63, 128], strides = [1, 1]} : vector<64x128xbf16> to vector<63x128xbf16>
    %88 = vector.extract_strided_slice %45 {offsets = [0, 0], sizes = [1, 128], strides = [1, 1]} : vector<64x128xbf16> to vector<1x128xbf16>
    %89 = tpu.concatenate %87, %88 in 0 : vector<63x128xbf16>, vector<1x128xbf16> -> vector<64x128xbf16>
    %90 = vector.extract_strided_slice %46 {offsets = [0, 5], sizes = [64, 1], strides = [1, 1]} : vector<64x9xbf16> to vector<64x1xbf16>
    %91 = vector.broadcast %90 : vector<64x1xbf16> to vector<64x128xbf16>
    %92 = arith.mulf %89, %91 : vector<64x128xbf16>
    %c640 = arith.constant 640 : index
    %c0_35 = arith.constant 0 : index
    %93 = vector.load %arg3[%c640, %c0_35] : memref<1152x128xbf16, #tpu.memory_space<vmem>>, vector<128x128xbf16>
    %cst_36 = arith.constant dense<0.000000e+00> : vector<64x128xf32>
    %94 = tpu.matmul %92, %93, %cst_36 {dimension_numbers = #tpu.dot_dimension_numbers<[1], [0], [0], [1], [0, 0, 1, 1], [], []>} : vector<64x128xbf16>, vector<128x128xbf16>, vector<64x128xf32> -> vector<64x128xf32>
    %95 = arith.addf %86, %94 : vector<64x128xf32>
    %96 = vector.extract_strided_slice %45 {offsets = [7, 0], sizes = [57, 128], strides = [1, 1]} : vector<64x128xbf16> to vector<57x128xbf16>
    %97 = vector.extract_strided_slice %45 {offsets = [0, 0], sizes = [7, 128], strides = [1, 1]} : vector<64x128xbf16> to vector<7x128xbf16>
    %98 = tpu.concatenate %96, %97 in 0 : vector<57x128xbf16>, vector<7x128xbf16> -> vector<64x128xbf16>
    %99 = vector.extract_strided_slice %46 {offsets = [0, 6], sizes = [64, 1], strides = [1, 1]} : vector<64x9xbf16> to vector<64x1xbf16>
    %100 = vector.broadcast %99 : vector<64x1xbf16> to vector<64x128xbf16>
    %101 = arith.mulf %98, %100 : vector<64x128xbf16>
    %c768 = arith.constant 768 : index
    %c0_37 = arith.constant 0 : index
    %102 = vector.load %arg3[%c768, %c0_37] : memref<1152x128xbf16, #tpu.memory_space<vmem>>, vector<128x128xbf16>
    %cst_38 = arith.constant dense<0.000000e+00> : vector<64x128xf32>
    %103 = tpu.matmul %101, %102, %cst_38 {dimension_numbers = #tpu.dot_dimension_numbers<[1], [0], [0], [1], [0, 0, 1, 1], [], []>} : vector<64x128xbf16>, vector<128x128xbf16>, vector<64x128xf32> -> vector<64x128xf32>
    %104 = arith.addf %95, %103 : vector<64x128xf32>
    %105 = vector.extract_strided_slice %45 {offsets = [8, 0], sizes = [56, 128], strides = [1, 1]} : vector<64x128xbf16> to vector<56x128xbf16>
    %106 = vector.extract_strided_slice %45 {offsets = [0, 0], sizes = [8, 128], strides = [1, 1]} : vector<64x128xbf16> to vector<8x128xbf16>
    %107 = tpu.concatenate %105, %106 in 0 : vector<56x128xbf16>, vector<8x128xbf16> -> vector<64x128xbf16>
    %108 = vector.extract_strided_slice %46 {offsets = [0, 7], sizes = [64, 1], strides = [1, 1]} : vector<64x9xbf16> to vector<64x1xbf16>
    %109 = vector.broadcast %108 : vector<64x1xbf16> to vector<64x128xbf16>
    %110 = arith.mulf %107, %109 : vector<64x128xbf16>
    %c896 = arith.constant 896 : index
    %c0_39 = arith.constant 0 : index
    %111 = vector.load %arg3[%c896, %c0_39] : memref<1152x128xbf16, #tpu.memory_space<vmem>>, vector<128x128xbf16>
    %cst_40 = arith.constant dense<0.000000e+00> : vector<64x128xf32>
    %112 = tpu.matmul %110, %111, %cst_40 {dimension_numbers = #tpu.dot_dimension_numbers<[1], [0], [0], [1], [0, 0, 1, 1], [], []>} : vector<64x128xbf16>, vector<128x128xbf16>, vector<64x128xf32> -> vector<64x128xf32>
    %113 = arith.addf %104, %112 : vector<64x128xf32>
    %114 = vector.extract_strided_slice %45 {offsets = [9, 0], sizes = [55, 128], strides = [1, 1]} : vector<64x128xbf16> to vector<55x128xbf16>
    %115 = vector.extract_strided_slice %45 {offsets = [0, 0], sizes = [9, 128], strides = [1, 1]} : vector<64x128xbf16> to vector<9x128xbf16>
    %116 = tpu.concatenate %114, %115 in 0 : vector<55x128xbf16>, vector<9x128xbf16> -> vector<64x128xbf16>
    %117 = vector.extract_strided_slice %46 {offsets = [0, 8], sizes = [64, 1], strides = [1, 1]} : vector<64x9xbf16> to vector<64x1xbf16>
    %118 = vector.broadcast %117 : vector<64x1xbf16> to vector<64x128xbf16>
    %119 = arith.mulf %116, %118 : vector<64x128xbf16>
    %c1024 = arith.constant 1024 : index
    %c0_41 = arith.constant 0 : index
    %120 = vector.load %arg3[%c1024, %c0_41] : memref<1152x128xbf16, #tpu.memory_space<vmem>>, vector<128x128xbf16>
    %cst_42 = arith.constant dense<0.000000e+00> : vector<64x128xf32>
    %121 = tpu.matmul %119, %120, %cst_42 {dimension_numbers = #tpu.dot_dimension_numbers<[1], [0], [0], [1], [0, 0, 1, 1], [], []>} : vector<64x128xbf16>, vector<128x128xbf16>, vector<64x128xf32> -> vector<64x128xf32>
    %122 = arith.addf %113, %121 : vector<64x128xf32>
    %123 = vector.shape_cast %122 : vector<64x128xf32> to vector<1x64x128xf32>
    %c0_43 = arith.constant 0 : index
    %c0_44 = arith.constant 0 : index
    %124 = vector.load %arg7[%c0_43, %c0_44] : memref<1x128xf32, #tpu.memory_space<vmem>>, vector<1x128xf32>
    %c0_45 = arith.constant 0 : index
    %c0_46 = arith.constant 0 : index
    %125 = vector.load %arg8[%c0_45, %c0_46] : memref<1x128xf32, #tpu.memory_space<vmem>>, vector<1x128xf32>
    %c0_47 = arith.constant 0 : index
    %c0_48 = arith.constant 0 : index
    %126 = vector.load %arg11[%c0_47, %c0_48] : memref<128x32xf32, #tpu.memory_space<vmem>>, vector<128x32xf32>
    %c0_49 = arith.constant 0 : index
    %c0_50 = arith.constant 0 : index
    %127 = vector.load %arg12[%c0_49, %c0_50] : memref<32x128xf32, #tpu.memory_space<vmem>>, vector<32x128xf32>
    %cst_51 = arith.constant dense<0.000000e+00> : vector<1x128xf32>
    %128 = vector.multi_reduction <add>, %123, %cst_51 [1] : vector<1x64x128xf32> to vector<1x128xf32>
    %129 = arith.mulf %123, %123 : vector<1x64x128xf32>
    %cst_52 = arith.constant dense<0.000000e+00> : vector<1x128xf32>
    %130 = vector.multi_reduction <add>, %129, %cst_52 [1] : vector<1x64x128xf32> to vector<1x128xf32>
    %131 = tpu.concatenate %128, %130 in 0 : vector<1x128xf32>, vector<1x128xf32> -> vector<2x128xf32>
    %cst_53 = arith.constant dense<0.000000e+00> : vector<2x32xf32>
    %132 = tpu.matmul %131, %126, %cst_53 {dimension_numbers = #tpu.dot_dimension_numbers<[1], [0], [0], [1], [0, 0, 1, 1], [], []>} : vector<2x128xf32>, vector<128x32xf32>, vector<2x32xf32> -> vector<2x32xf32>
    %133 = vector.extract_strided_slice %132 {offsets = [0, 0], sizes = [1, 32], strides = [1, 1]} : vector<2x32xf32> to vector<1x32xf32>
    %cst_54 = arith.constant 1.562500e-02 : f32
    %134 = vector.broadcast %cst_54 : f32 to vector<1x32xf32>
    %135 = arith.mulf %133, %134 : vector<1x32xf32>
    %136 = vector.extract_strided_slice %132 {offsets = [1, 0], sizes = [1, 32], strides = [1, 1]} : vector<2x32xf32> to vector<1x32xf32>
    %cst_55 = arith.constant 1.562500e-02 : f32
    %137 = vector.broadcast %cst_55 : f32 to vector<1x32xf32>
    %138 = arith.mulf %136, %137 : vector<1x32xf32>
    %139 = arith.mulf %135, %135 : vector<1x32xf32>
    %140 = arith.subf %138, %139 : vector<1x32xf32>
    %cst_56 = arith.constant 0.000000e+00 : f32
    %141 = vector.broadcast %cst_56 : f32 to vector<1x32xf32>
    %142 = arith.maximumf %140, %141 : vector<1x32xf32>
    %cst_57 = arith.constant 9.99999974E-6 : f32
    %143 = vector.broadcast %cst_57 : f32 to vector<1x32xf32>
    %144 = arith.addf %142, %143 : vector<1x32xf32>
    %145 = math.rsqrt %144 : vector<1x32xf32>
    %146 = tpu.concatenate %135, %145 in 0 : vector<1x32xf32>, vector<1x32xf32> -> vector<2x32xf32>
    %cst_58 = arith.constant dense<0.000000e+00> : vector<2x128xf32>
    %147 = tpu.matmul %146, %127, %cst_58 {dimension_numbers = #tpu.dot_dimension_numbers<[1], [0], [0], [1], [0, 0, 1, 1], [], []>} : vector<2x32xf32>, vector<32x128xf32>, vector<2x128xf32> -> vector<2x128xf32>
    %148 = vector.extract_strided_slice %147 {offsets = [0, 0], sizes = [1, 128], strides = [1, 1]} : vector<2x128xf32> to vector<1x128xf32>
    %149 = vector.shape_cast %148 : vector<1x128xf32> to vector<1x1x128xf32>
    %150 = vector.extract_strided_slice %147 {offsets = [1, 0], sizes = [1, 128], strides = [1, 1]} : vector<2x128xf32> to vector<1x128xf32>
    %151 = vector.shape_cast %150 : vector<1x128xf32> to vector<1x1x128xf32>
    %152 = vector.shape_cast %124 : vector<1x128xf32> to vector<1x1x128xf32>
    %153 = arith.mulf %151, %152 : vector<1x1x128xf32>
    %154 = arith.mulf %149, %153 : vector<1x1x128xf32>
    %155 = vector.shape_cast %125 : vector<1x128xf32> to vector<1x1x128xf32>
    %156 = arith.subf %155, %154 : vector<1x1x128xf32>
    %157 = vector.broadcast %153 : vector<1x1x128xf32> to vector<1x64x128xf32>
    %158 = arith.mulf %123, %157 : vector<1x64x128xf32>
    %159 = vector.broadcast %156 : vector<1x1x128xf32> to vector<1x64x128xf32>
    %160 = arith.addf %158, %159 : vector<1x64x128xf32>
    %cst_59 = arith.constant 0.000000e+00 : f32
    %161 = vector.broadcast %cst_59 : f32 to vector<1x64x128xf32>
    %162 = arith.maximumf %160, %161 : vector<1x64x128xf32>
    %163 = vector.shape_cast %162 : vector<1x64x128xf32> to vector<64x128xf32>
    %164 = arith.truncf %163 : vector<64x128xf32> to vector<64x128xbf16>
    %c0_60 = arith.constant 0 : index
    %c0_61 = arith.constant 0 : index
    %165 = vector.load %arg4[%c0_60, %c0_61] : memref<128x128xbf16, #tpu.memory_space<vmem>>, vector<128x128xbf16>
    %cst_62 = arith.constant dense<0.000000e+00> : vector<64x128xf32>
    %166 = tpu.matmul %164, %165, %cst_62 {dimension_numbers = #tpu.dot_dimension_numbers<[1], [0], [0], [1], [0, 0, 1, 1], [], []>} : vector<64x128xbf16>, vector<128x128xbf16>, vector<64x128xf32> -> vector<64x128xf32>
    %167 = vector.shape_cast %166 : vector<64x128xf32> to vector<1x64x128xf32>
    %c0_63 = arith.constant 0 : index
    %c0_64 = arith.constant 0 : index
    %168 = vector.load %arg9[%c0_63, %c0_64] : memref<1x128xf32, #tpu.memory_space<vmem>>, vector<1x128xf32>
    %c0_65 = arith.constant 0 : index
    %c0_66 = arith.constant 0 : index
    %169 = vector.load %arg10[%c0_65, %c0_66] : memref<1x128xf32, #tpu.memory_space<vmem>>, vector<1x128xf32>
    %c0_67 = arith.constant 0 : index
    %c0_68 = arith.constant 0 : index
    %170 = vector.load %arg13[%c0_67, %c0_68] : memref<128x32xf32, #tpu.memory_space<vmem>>, vector<128x32xf32>
    %c0_69 = arith.constant 0 : index
    %c0_70 = arith.constant 0 : index
    %171 = vector.load %arg14[%c0_69, %c0_70] : memref<32x128xf32, #tpu.memory_space<vmem>>, vector<32x128xf32>
    %cst_71 = arith.constant dense<0.000000e+00> : vector<1x128xf32>
    %172 = vector.multi_reduction <add>, %167, %cst_71 [1] : vector<1x64x128xf32> to vector<1x128xf32>
    %173 = arith.mulf %167, %167 : vector<1x64x128xf32>
    %cst_72 = arith.constant dense<0.000000e+00> : vector<1x128xf32>
    %174 = vector.multi_reduction <add>, %173, %cst_72 [1] : vector<1x64x128xf32> to vector<1x128xf32>
    %175 = tpu.concatenate %172, %174 in 0 : vector<1x128xf32>, vector<1x128xf32> -> vector<2x128xf32>
    %cst_73 = arith.constant dense<0.000000e+00> : vector<2x32xf32>
    %176 = tpu.matmul %175, %170, %cst_73 {dimension_numbers = #tpu.dot_dimension_numbers<[1], [0], [0], [1], [0, 0, 1, 1], [], []>} : vector<2x128xf32>, vector<128x32xf32>, vector<2x32xf32> -> vector<2x32xf32>
    %177 = vector.extract_strided_slice %176 {offsets = [0, 0], sizes = [1, 32], strides = [1, 1]} : vector<2x32xf32> to vector<1x32xf32>
    %cst_74 = arith.constant 3.906250e-03 : f32
    %178 = vector.broadcast %cst_74 : f32 to vector<1x32xf32>
    %179 = arith.mulf %177, %178 : vector<1x32xf32>
    %180 = vector.extract_strided_slice %176 {offsets = [1, 0], sizes = [1, 32], strides = [1, 1]} : vector<2x32xf32> to vector<1x32xf32>
    %cst_75 = arith.constant 3.906250e-03 : f32
    %181 = vector.broadcast %cst_75 : f32 to vector<1x32xf32>
    %182 = arith.mulf %180, %181 : vector<1x32xf32>
    %183 = arith.mulf %179, %179 : vector<1x32xf32>
    %184 = arith.subf %182, %183 : vector<1x32xf32>
    %cst_76 = arith.constant 0.000000e+00 : f32
    %185 = vector.broadcast %cst_76 : f32 to vector<1x32xf32>
    %186 = arith.maximumf %184, %185 : vector<1x32xf32>
    %cst_77 = arith.constant 9.99999974E-6 : f32
    %187 = vector.broadcast %cst_77 : f32 to vector<1x32xf32>
    %188 = arith.addf %186, %187 : vector<1x32xf32>
    %189 = math.rsqrt %188 : vector<1x32xf32>
    %190 = tpu.concatenate %179, %189 in 0 : vector<1x32xf32>, vector<1x32xf32> -> vector<2x32xf32>
    %cst_78 = arith.constant dense<0.000000e+00> : vector<2x128xf32>
    %191 = tpu.matmul %190, %171, %cst_78 {dimension_numbers = #tpu.dot_dimension_numbers<[1], [0], [0], [1], [0, 0, 1, 1], [], []>} : vector<2x32xf32>, vector<32x128xf32>, vector<2x128xf32> -> vector<2x128xf32>
    %192 = vector.extract_strided_slice %191 {offsets = [0, 0], sizes = [1, 128], strides = [1, 1]} : vector<2x128xf32> to vector<1x128xf32>
    %193 = vector.shape_cast %192 : vector<1x128xf32> to vector<1x1x128xf32>
    %194 = vector.extract_strided_slice %191 {offsets = [1, 0], sizes = [1, 128], strides = [1, 1]} : vector<2x128xf32> to vector<1x128xf32>
    %195 = vector.shape_cast %194 : vector<1x128xf32> to vector<1x1x128xf32>
    %196 = vector.shape_cast %168 : vector<1x128xf32> to vector<1x1x128xf32>
    %197 = arith.mulf %195, %196 : vector<1x1x128xf32>
    %198 = arith.mulf %193, %197 : vector<1x1x128xf32>
    %199 = vector.shape_cast %169 : vector<1x128xf32> to vector<1x1x128xf32>
    %200 = arith.subf %199, %198 : vector<1x1x128xf32>
    %201 = vector.broadcast %197 : vector<1x1x128xf32> to vector<1x64x128xf32>
    %202 = arith.mulf %167, %201 : vector<1x64x128xf32>
    %203 = vector.broadcast %200 : vector<1x1x128xf32> to vector<1x64x128xf32>
    %204 = arith.addf %202, %203 : vector<1x64x128xf32>
    %205 = arith.extf %0 : vector<1x64x128xbf16> to vector<1x64x128xf32>
    %206 = arith.addf %204, %205 : vector<1x64x128xf32>
    %cst_79 = arith.constant 0.000000e+00 : f32
    %207 = vector.broadcast %cst_79 : f32 to vector<1x64x128xf32>
    %208 = arith.maximumf %206, %207 : vector<1x64x128xf32>
    %209 = arith.truncf %208 : vector<1x64x128xf32> to vector<1x64x128xbf16>
    %c0_80 = arith.constant 0 : index
    %c0_81 = arith.constant 0 : index
    %c0_82 = arith.constant 0 : index
    %210 = vector.load %arg16[%c0_80, %c0_81, %c0_82] : memref<1x64x128xbf16, #tpu.memory_space<vmem>>, vector<1x64x128xbf16>
    tpu.vector_store %arg16[%c0_80, %c0_81, %c0_82], %209 {strides = array<i32>} : memref<1x64x128xbf16, #tpu.memory_space<vmem>>, vector<1x64x128xbf16>,
    return
  }
  func.func @transform_0(%arg0: i32) -> (i32, i32, i32) {
    %c0_i32 = arith.constant 0 : i32
    %c0_i32_0 = arith.constant 0 : i32
    %c0_i32_1 = arith.constant 0 : i32
    return %arg0, %c0_i32, %c0_i32_0 : i32, i32, i32
  }
  func.func @transform_1(%arg0: i32) -> (i32, i32) {
    %c0_i32 = arith.constant 0 : i32
    %c0_i32_0 = arith.constant 0 : i32
    %c0_i32_1 = arith.constant 0 : i32
    return %c0_i32, %c0_i32_0 : i32, i32
  }
  func.func @transform_2(%arg0: i32) -> (i32, i32) {
    %c0_i32 = arith.constant 0 : i32
    %c0_i32_0 = arith.constant 0 : i32
    %c0_i32_1 = arith.constant 0 : i32
    return %c0_i32, %c0_i32_0 : i32, i32
  }
  func.func @transform_3(%arg0: i32) -> (i32, i32) {
    %c0_i32 = arith.constant 0 : i32
    %c0_i32_0 = arith.constant 0 : i32
    %c0_i32_1 = arith.constant 0 : i32
    return %c0_i32, %c0_i32_0 : i32, i32
  }
  func.func @transform_4(%arg0: i32) -> (i32, i32) {
    %c0_i32 = arith.constant 0 : i32
    %c0_i32_0 = arith.constant 0 : i32
    %c0_i32_1 = arith.constant 0 : i32
    return %c0_i32, %c0_i32_0 : i32, i32
  }
  func.func @transform_5(%arg0: i32) -> (i32, i32) {
    %c0_i32 = arith.constant 0 : i32
    %c0_i32_0 = arith.constant 0 : i32
    %c0_i32_1 = arith.constant 0 : i32
    return %c0_i32, %c0_i32_0 : i32, i32
  }
  func.func @transform_6(%arg0: i32) -> (i32, i32) {
    %c0_i32 = arith.constant 0 : i32
    %c0_i32_0 = arith.constant 0 : i32
    %c0_i32_1 = arith.constant 0 : i32
    return %c0_i32, %c0_i32_0 : i32, i32
  }
  func.func @transform_7(%arg0: i32) -> (i32, i32) {
    %c0_i32 = arith.constant 0 : i32
    %c0_i32_0 = arith.constant 0 : i32
    %c0_i32_1 = arith.constant 0 : i32
    return %c0_i32, %c0_i32_0 : i32, i32
  }
  func.func @transform_8(%arg0: i32) -> (i32, i32) {
    %c0_i32 = arith.constant 0 : i32
    %c0_i32_0 = arith.constant 0 : i32
    %c0_i32_1 = arith.constant 0 : i32
    return %c0_i32, %c0_i32_0 : i32, i32
  }
  func.func @transform_9(%arg0: i32) -> (i32, i32) {
    %c0_i32 = arith.constant 0 : i32
    %c0_i32_0 = arith.constant 0 : i32
    %c0_i32_1 = arith.constant 0 : i32
    return %c0_i32, %c0_i32_0 : i32, i32
  }
  func.func @transform_10(%arg0: i32) -> (i32, i32) {
    %c0_i32 = arith.constant 0 : i32
    %c0_i32_0 = arith.constant 0 : i32
    %c0_i32_1 = arith.constant 0 : i32
    return %c0_i32, %c0_i32_0 : i32, i32
  }
  func.func @transform_11(%arg0: i32) -> (i32, i32) {
    %c0_i32 = arith.constant 0 : i32
    %c0_i32_0 = arith.constant 0 : i32
    %c0_i32_1 = arith.constant 0 : i32
    return %c0_i32, %c0_i32_0 : i32, i32
  }
  func.func @transform_12(%arg0: i32) -> (i32, i32) {
    %c0_i32 = arith.constant 0 : i32
    %c0_i32_0 = arith.constant 0 : i32
    %c0_i32_1 = arith.constant 0 : i32
    return %c0_i32, %c0_i32_0 : i32, i32
  }
  func.func @transform_13(%arg0: i32) -> (i32, i32) {
    %c0_i32 = arith.constant 0 : i32
    %c0_i32_0 = arith.constant 0 : i32
    %c0_i32_1 = arith.constant 0 : i32
    return %c0_i32, %c0_i32_0 : i32, i32
  }
  func.func @transform_14(%arg0: i32) -> (i32, i32) {
    %c0_i32 = arith.constant 0 : i32
    %c0_i32_0 = arith.constant 0 : i32
    %c0_i32_1 = arith.constant 0 : i32
    return %c0_i32, %c0_i32_0 : i32, i32
  }
  func.func @transform_15(%arg0: i32) -> (i32, i32, i32) {
    %c0_i32 = arith.constant 0 : i32
    %c0_i32_0 = arith.constant 0 : i32
    %c0_i32_1 = arith.constant 0 : i32
    return %arg0, %c0_i32, %c0_i32_0 : i32, i32, i32
  }
}

</mosaic_0001>

<llo_original>
// kernel: tpu_custom_call.1
$region0: #{tpu_custom_call.1}
  #allocation0 [shape = 'u32[]', space=smem, size = 0x4, offset = 0x4, fixed_abs, tag = 'smem constant byte address 0x4 - core index']
  #allocation1 [shape = 'u32[144,128]{1,0:T(1,128)}', space=vmem, size = 0x12000, scoped, tag = 'internal scratch']
  %s0 = inlined_call_operand.vmem [shape: bf16[2,64,128], index: 0, kind: input, shape index: {}]
  %s1 = inlined_call_operand.vmem [shape: bf16[128,128], index: 1, kind: input, shape index: {}]
  %s2 = inlined_call_operand.hbm [shape: bf16[1152,128], index: 2, kind: input, shape index: {}]
  %s3 = inlined_call_operand.vmem [shape: bf16[128,128], index: 3, kind: input, shape index: {}]
  %s4 = inlined_call_operand.vmem [shape: f32[1,128], index: 4, kind: input, shape index: {}]
  %s5 = inlined_call_operand.vmem [shape: f32[1,128], index: 5, kind: input, shape index: {}]
  %s6 = inlined_call_operand.vmem [shape: f32[1,128], index: 6, kind: input, shape index: {}]
  %s7 = inlined_call_operand.vmem [shape: f32[1,128], index: 7, kind: input, shape index: {}]
  %s8 = inlined_call_operand.vmem [shape: f32[1,128], index: 8, kind: input, shape index: {}]
  %s9 = inlined_call_operand.vmem [shape: f32[1,128], index: 9, kind: input, shape index: {}]
  %s10 = inlined_call_operand.vmem [shape: f32[128,32], index: 10, kind: input, shape index: {}]
  %s11 = inlined_call_operand.vmem [shape: f32[32,128], index: 11, kind: input, shape index: {}]
  %s12 = inlined_call_operand.vmem [shape: f32[128,32], index: 12, kind: input, shape index: {}]
  %s13 = inlined_call_operand.vmem [shape: f32[32,128], index: 13, kind: input, shape index: {}]
  %s14 = inlined_call_operand.vmem [shape: bf16[64,9], index: 14, kind: input, shape index: {}]
  %s15 = inlined_call_operand.hbm [shape: bf16[2,64,128], index: 15, kind: output, shape index: {}]
  %s16 = sld [smem:[#allocation0]]
  $region97: #{tpu_custom_call.1} parent=0
    _
  %s18 = ssub.s32 1, %s16
  %s19 = scalar_select 0, %s18, %s16
  $region1: #{tpu_custom_call.1} parent=0
    #allocation2 [shape = 'u8[294912]{0}', space=vmem, size = 0x48000, scoped, tag = 'input window, operand 2, single buffered']
    #allocation3 [shape = 's32[2]{0}', space=sflag, size = 0x8, scoped, tag = 'scoped memory for tpu_custom_call.1']
    #allocation4 [shape = 's32[2]{0}', space=sflag, size = 0x8, scoped, tag = 'scoped memory for tpu_custom_call.1']
    #allocation5 [shape = 'u8[32768]{0}', space=vmem, size = 0x8000, scoped, tag = 'output window, operand 0']
    %20 = vsyncpa [#allocation3], 0
    %21 = vsyncpa [#allocation4], 0
    %s22 = scalar_lea.sflag [#allocation4], 1
    %23 = vsyncpa %s22, 0
    loop: start=0, step=1, limit=4
    $region2: #{tpu_custom_call.1} parent=1 // loop_pre_header
      _
    $region3: #{tpu_custom_call.1} parent=1 // loop_header
      %s25 = sphi 0, %s29
      %p26 = scmp.ge.s32.totalorder %s25, 4
      %s35 = sphi 0, %s37
      %s38 = sphi 0, %s35
      %s39 = sphi 0, %s38
      %s55 = sphi 0, %s39
      %s59 = sphi 0, %s59
      %s61 = sphi 0, %s59
      %s62 = sphi 0, %s61
      %s76 = sphi 0, %s62
      %s80 = sphi 0, %s80
      %s82 = sphi 0, %s80
      %s83 = sphi 0, %s82
      %s97 = sphi 0, %s83
      %s101 = sphi 0, %s101
      %s103 = sphi 0, %s101
      %s104 = sphi 0, %s103
      %s118 = sphi 0, %s104
      %s122 = sphi 0, %s122
      %s124 = sphi 0, %s122
      %s125 = sphi 0, %s124
      %s139 = sphi 0, %s125
      %s143 = sphi 0, %s143
      %s145 = sphi 0, %s143
      %s146 = sphi 0, %s145
      %s160 = sphi 0, %s146
      %s164 = sphi 0, %s164
      %s166 = sphi 0, %s164
      %s167 = sphi 0, %s166
      %s181 = sphi 0, %s167
      %s185 = sphi 0, %s185
      %s187 = sphi 0, %s185
      %s188 = sphi 0, %s187
      %s202 = sphi 0, %s188
      %s206 = sphi 0, %s206
      %s208 = sphi 0, %s206
      %s209 = sphi 0, %s208
      %s223 = sphi 0, %s209
      %s227 = sphi 0, %s227
      %s229 = sphi 0, %s227
      %s230 = sphi 0, %s229
      %s244 = sphi 0, %s230
      %s248 = sphi 0, %s248
      %s250 = sphi 0, %s248
      %s251 = sphi 0, %s250
      %s265 = sphi 0, %s251
      %s269 = sphi 0, %s269
      %s271 = sphi 0, %s269
      %s272 = sphi 0, %s271
      %s286 = sphi 0, %s272
      %s290 = sphi 0, %s290
      %s292 = sphi 0, %s290
      %s293 = sphi 0, %s292
      %s307 = sphi 0, %s293
      %s311 = sphi 0, %s311
      %s313 = sphi 0, %s311
      %s314 = sphi 0, %s313
      %s328 = sphi 0, %s314
      %s332 = sphi 0, %s332
      %s334 = sphi 0, %s332
      %s335 = sphi 0, %s334
      %s349 = sphi 0, %s335
      %s355 = sphi 0, %s357
      %s358 = sphi 0, %s355
      %s359 = sphi 0, %s358
      %s375 = sphi 0, %s359
    $region4: #{tpu_custom_call.1} parent=1 // loop_header_branch
      %28 = sbr.rel (%p26) target = $region8
    $region5: #{tpu_custom_call.1} parent=1 // loop_body
      %s30 = ssub.s32 %s25, 1
      %s31 = ssub.s32 %s25, 2
      %s32 = sadd.s32 %s25, 1
      %s33 = ssub.s32 %s25, %s32
      %p34 = scmp.eq.s32.totalorder %s33, 0
      %s36 = sadd.s32 %s35, 1
      %s37 = scalar_select %p34, %s35, %s36
      %p40 = pneg %p34
      %p41 = scmp.eq.s32.totalorder %s25, 1
      %p42 = por %p40, %p41
      %p43 = scmp.ne.s32.totalorder %s35, %s38
      %p44 = scmp.eq.s32.totalorder %s25, 0
      %p45 = por %p43, %p44
      %p46 = scmp.ne.s32.totalorder %s35, %s38
      %p47 = scmp.eq.s32.totalorder %s30, 1
      %p48 = por %p46, %p47
      %p49 = scmp.ne.s32.totalorder %s38, %s39
      %p50 = scmp.eq.s32.totalorder %s30, 0
      %p51 = por %p49, %p50
      %p52 = scmp.ne.s32.totalorder %s38, %s39
      %p53 = scmp.eq.s32.totalorder %s31, 1
      %p54 = por %p52, %p53
      %p56 = scmp.ne.s32.totalorder %s39, %s55
      %p57 = scmp.eq.s32.totalorder %s31, 0
      %p58 = por %p56, %p57
      %s60 = sadd.s32 %s59, 1
      %p63 = scmp.eq.s32.totalorder %s25, 1
      %p64 = scmp.ne.s32.totalorder %s59, %s61
      %p65 = scmp.eq.s32.totalorder %s25, 0
      %p66 = por %p64, %p65
      %p67 = scmp.ne.s32.totalorder %s59, %s61
      %p68 = scmp.eq.s32.totalorder %s30, 1
      %p69 = por %p67, %p68
      %p70 = scmp.ne.s32.totalorder %s61, %s62
      %p71 = scmp.eq.s32.totalorder %s30, 0
      %p72 = por %p70, %p71
      %p73 = scmp.ne.s32.totalorder %s61, %s62
      %p74 = scmp.eq.s32.totalorder %s31, 1
      %p75 = por %p73, %p74
      %p77 = scmp.ne.s32.totalorder %s62, %s76
      %p78 = scmp.eq.s32.totalorder %s31, 0
      %p79 = por %p77, %p78
      %s81 = sadd.s32 %s80, 1
      %p84 = scmp.eq.s32.totalorder %s25, 1
      %p85 = scmp.ne.s32.totalorder %s80, %s82
      %p86 = scmp.eq.s32.totalorder %s25, 0
      %p87 = por %p85, %p86
      %p88 = scmp.ne.s32.totalorder %s80, %s82
      %p89 = scmp.eq.s32.totalorder %s30, 1
      %p90 = por %p88, %p89
      %p91 = scmp.ne.s32.totalorder %s82, %s83
      %p92 = scmp.eq.s32.totalorder %s30, 0
      %p93 = por %p91, %p92
      %p94 = scmp.ne.s32.totalorder %s82, %s83
      %p95 = scmp.eq.s32.totalorder %s31, 1
      %p96 = por %p94, %p95
      %p98 = scmp.ne.s32.totalorder %s83, %s97
      %p99 = scmp.eq.s32.totalorder %s31, 0
      %p100 = por %p98, %p99
      %s102 = sadd.s32 %s101, 1
      %p105 = scmp.eq.s32.totalorder %s25, 1
      %p106 = scmp.ne.s32.totalorder %s101, %s103
      %p107 = scmp.eq.s32.totalorder %s25, 0
      %p108 = por %p106, %p107
      %p109 = scmp.ne.s32.totalorder %s101, %s103
      %p110 = scmp.eq.s32.totalorder %s30, 1
      %p111 = por %p109, %p110
      %p112 = scmp.ne.s32.totalorder %s103, %s104
      %p113 = scmp.eq.s32.totalorder %s30, 0
      %p114 = por %p112, %p113
      %p115 = scmp.ne.s32.totalorder %s103, %s104
      %p116 = scmp.eq.s32.totalorder %s31, 1
      %p117 = por %p115, %p116
      %p119 = scmp.ne.s32.totalorder %s104, %s118
      %p120 = scmp.eq.s32.totalorder %s31, 0
      %p121 = por %p119, %p120
      %s123 = sadd.s32 %s122, 1
      %p126 = scmp.eq.s32.totalorder %s25, 1
      %p127 = scmp.ne.s32.totalorder %s122, %s124
      %p128 = scmp.eq.s32.totalorder %s25, 0
      %p129 = por %p127, %p128
      %p130 = scmp.ne.s32.totalorder %s122, %s124
      %p131 = scmp.eq.s32.totalorder %s30, 1
      %p132 = por %p130, %p131
      %p133 = scmp.ne.s32.totalorder %s124, %s125
      %p134 = scmp.eq.s32.totalorder %s30, 0
      %p135 = por %p133, %p134
      %p136 = scmp.ne.s32.totalorder %s124, %s125
      %p137 = scmp.eq.s32.totalorder %s31, 1
      %p138 = por %p136, %p137
      %p140 = scmp.ne.s32.totalorder %s125, %s139
      %p141 = scmp.eq.s32.totalorder %s31, 0
      %p142 = por %p140, %p141
      %s144 = sadd.s32 %s143, 1
      %p147 = scmp.eq.s32.totalorder %s25, 1
      %p148 = scmp.ne.s32.totalorder %s143, %s145
      %p149 = scmp.eq.s32.totalorder %s25, 0
      %p150 = por %p148, %p149
      %p151 = scmp.ne.s32.totalorder %s143, %s145
      %p152 = scmp.eq.s32.totalorder %s30, 1
      %p153 = por %p151, %p152
      %p154 = scmp.ne.s32.totalorder %s145, %s146
      %p155 = scmp.eq.s32.totalorder %s30, 0
      %p156 = por %p154, %p155
      %p157 = scmp.ne.s32.totalorder %s145, %s146
      %p158 = scmp.eq.s32.totalorder %s31, 1
      %p159 = por %p157, %p158
      %p161 = scmp.ne.s32.totalorder %s146, %s160
      %p162 = scmp.eq.s32.totalorder %s31, 0
      %p163 = por %p161, %p162
      %s165 = sadd.s32 %s164, 1
      %p168 = scmp.eq.s32.totalorder %s25, 1
      %p169 = scmp.ne.s32.totalorder %s164, %s166
      %p170 = scmp.eq.s32.totalorder %s25, 0
      %p171 = por %p169, %p170
      %p172 = scmp.ne.s32.totalorder %s164, %s166
      %p173 = scmp.eq.s32.totalorder %s30, 1
      %p174 = por %p172, %p173
      %p175 = scmp.ne.s32.totalorder %s166, %s167
      %p176 = scmp.eq.s32.totalorder %s30, 0
      %p177 = por %p175, %p176
      %p178 = scmp.ne.s32.totalorder %s166, %s167
      %p179 = scmp.eq.s32.totalorder %s31, 1
      %p180 = por %p178, %p179
      %p182 = scmp.ne.s32.totalorder %s167, %s181
      %p183 = scmp.eq.s32.totalorder %s31, 0
      %p184 = por %p182, %p183
      %s186 = sadd.s32 %s185, 1
      %p189 = scmp.eq.s32.totalorder %s25, 1
      %p190 = scmp.ne.s32.totalorder %s185, %s187
      %p191 = scmp.eq.s32.totalorder %s25, 0
      %p192 = por %p190, %p191
      %p193 = scmp.ne.s32.totalorder %s185, %s187
      %p194 = scmp.eq.s32.totalorder %s30, 1
      %p195 = por %p193, %p194
      %p196 = scmp.ne.s32.totalorder %s187, %s188
      %p197 = scmp.eq.s32.totalorder %s30, 0
      %p198 = por %p196, %p197
      %p199 = scmp.ne.s32.totalorder %s187, %s188
      %p200 = scmp.eq.s32.totalorder %s31, 1
      %p201 = por %p199, %p200
      %p203 = scmp.ne.s32.totalorder %s188, %s202
      %p204 = scmp.eq.s32.totalorder %s31, 0
      %p205 = por %p203, %p204
      %s207 = sadd.s32 %s206, 1
      %p210 = scmp.eq.s32.totalorder %s25, 1
      %p211 = scmp.ne.s32.totalorder %s206, %s208
      %p212 = scmp.eq.s32.totalorder %s25, 0
      %p213 = por %p211, %p212
      %p214 = scmp.ne.s32.totalorder %s206, %s208
      %p215 = scmp.eq.s32.totalorder %s30, 1
      %p216 = por %p214, %p215
      %p217 = scmp.ne.s32.totalorder %s208, %s209
      %p218 = scmp.eq.s32.totalorder %s30, 0
      %p219 = por %p217, %p218
      %p220 = scmp.ne.s32.totalorder %s208, %s209
      %p221 = scmp.eq.s32.totalorder %s31, 1
      %p222 = por %p220, %p221
      %p224 = scmp.ne.s32.totalorder %s209, %s223
      %p225 = scmp.eq.s32.totalorder %s31, 0
      %p226 = por %p224, %p225
      %s228 = sadd.s32 %s227, 1
      %p231 = scmp.eq.s32.totalorder %s25, 1
      %p232 = scmp.ne.s32.totalorder %s227, %s229
      %p233 = scmp.eq.s32.totalorder %s25, 0
      %p234 = por %p232, %p233
      %p235 = scmp.ne.s32.totalorder %s227, %s229
      %p236 = scmp.eq.s32.totalorder %s30, 1
      %p237 = por %p235, %p236
      %p238 = scmp.ne.s32.totalorder %s229, %s230
      %p239 = scmp.eq.s32.totalorder %s30, 0
      %p240 = por %p238, %p239
      %p241 = scmp.ne.s32.totalorder %s229, %s230
      %p242 = scmp.eq.s32.totalorder %s31, 1
      %p243 = por %p241, %p242
      %p245 = scmp.ne.s32.totalorder %s230, %s244
      %p246 = scmp.eq.s32.totalorder %s31, 0
      %p247 = por %p245, %p246
      %s249 = sadd.s32 %s248, 1
      %p252 = scmp.eq.s32.totalorder %s25, 1
      %p253 = scmp.ne.s32.totalorder %s248, %s250
      %p254 = scmp.eq.s32.totalorder %s25, 0
      %p255 = por %p253, %p254
      %p256 = scmp.ne.s32.totalorder %s248, %s250
      %p257 = scmp.eq.s32.totalorder %s30, 1
      %p258 = por %p256, %p257
      %p259 = scmp.ne.s32.totalorder %s250, %s251
      %p260 = scmp.eq.s32.totalorder %s30, 0
      %p261 = por %p259, %p260
      %p262 = scmp.ne.s32.totalorder %s250, %s251
      %p263 = scmp.eq.s32.totalorder %s31, 1
      %p264 = por %p262, %p263
      %p266 = scmp.ne.s32.totalorder %s251, %s265
      %p267 = scmp.eq.s32.totalorder %s31, 0
      %p268 = por %p266, %p267
      %s270 = sadd.s32 %s269, 1
      %p273 = scmp.eq.s32.totalorder %s25, 1
      %p274 = scmp.ne.s32.totalorder %s269, %s271
      %p275 = scmp.eq.s32.totalorder %s25, 0
      %p276 = por %p274, %p275
      %p277 = scmp.ne.s32.totalorder %s269, %s271
      %p278 = scmp.eq.s32.totalorder %s30, 1
      %p279 = por %p277, %p278
      %p280 = scmp.ne.s32.totalorder %s271, %s272
      %p281 = scmp.eq.s32.totalorder %s30, 0
      %p282 = por %p280, %p281
      %p283 = scmp.ne.s32.totalorder %s271, %s272
      %p284 = scmp.eq.s32.totalorder %s31, 1
      %p285 = por %p283, %p284
      %p287 = scmp.ne.s32.totalorder %s272, %s286
      %p288 = scmp.eq.s32.totalorder %s31, 0
      %p289 = por %p287, %p288
      %s291 = sadd.s32 %s290, 1
      %p294 = scmp.eq.s32.totalorder %s25, 1
      %p295 = scmp.ne.s32.totalorder %s290, %s292
      %p296 = scmp.eq.s32.totalorder %s25, 0
      %p297 = por %p295, %p296
      %p298 = scmp.ne.s32.totalorder %s290, %s292
      %p299 = scmp.eq.s32.totalorder %s30, 1
      %p300 = por %p298, %p299
      %p301 = scmp.ne.s32.totalorder %s292, %s293
      %p302 = scmp.eq.s32.totalorder %s30, 0
      %p303 = por %p301, %p302
      %p304 = scmp.ne.s32.totalorder %s292, %s293
      %p305 = scmp.eq.s32.totalorder %s31, 1
      %p306 = por %p304, %p305
      %p308 = scmp.ne.s32.totalorder %s293, %s307
      %p309 = scmp.eq.s32.totalorder %s31, 0
      %p310 = por %p308, %p309
      %s312 = sadd.s32 %s311, 1
      %p315 = scmp.eq.s32.totalorder %s25, 1
      %p316 = scmp.ne.s32.totalorder %s311, %s313
      %p317 = scmp.eq.s32.totalorder %s25, 0
      %p318 = por %p316, %p317
      %p319 = scmp.ne.s32.totalorder %s311, %s313
      %p320 = scmp.eq.s32.totalorder %s30, 1
      %p321 = por %p319, %p320
      %p322 = scmp.ne.s32.totalorder %s313, %s314
      %p323 = scmp.eq.s32.totalorder %s30, 0
      %p324 = por %p322, %p323
      %p325 = scmp.ne.s32.totalorder %s313, %s314
      %p326 = scmp.eq.s32.totalorder %s31, 1
      %p327 = por %p325, %p326
      %p329 = scmp.ne.s32.totalorder %s314, %s328
      %p330 = scmp.eq.s32.totalorder %s31, 0
      %p331 = por %p329, %p330
      %s333 = sadd.s32 %s332, 1
      %p336 = scmp.eq.s32.totalorder %s25, 1
      %p337 = scmp.ne.s32.totalorder %s332, %s334
      %p338 = scmp.eq.s32.totalorder %s25, 0
      %p339 = por %p337, %p338
      %p340 = scmp.ne.s32.totalorder %s332, %s334
      %p341 = scmp.eq.s32.totalorder %s30, 1
      %p342 = por %p340, %p341
      %p343 = scmp.ne.s32.totalorder %s334, %s335
      %p344 = scmp.eq.s32.totalorder %s30, 0
      %p345 = por %p343, %p344
      %p346 = scmp.ne.s32.totalorder %s334, %s335
      %p347 = scmp.eq.s32.totalorder %s31, 1
      %p348 = por %p346, %p347
      %p350 = scmp.ne.s32.totalorder %s335, %s349
      %p351 = scmp.eq.s32.totalorder %s31, 0
      %p352 = por %p350, %p351
      %s353 = ssub.s32 %s25, %s32
      %p354 = scmp.eq.s32.totalorder %s353, 0
      %s356 = sadd.s32 %s355, 1
      %s357 = scalar_select %p354, %s355, %s356
      %p360 = pneg %p354
      %p361 = scmp.eq.s32.totalorder %s25, 1
      %p362 = por %p360, %p361
      %p363 = scmp.ne.s32.totalorder %s355, %s358
      %p364 = scmp.eq.s32.totalorder %s25, 0
      %p365 = por %p363, %p364
      %p366 = scmp.ne.s32.totalorder %s355, %s358
      %p367 = scmp.eq.s32.totalorder %s30, 1
      %p368 = por %p366, %p367
      %p369 = scmp.ne.s32.totalorder %s358, %s359
      %p370 = scmp.eq.s32.totalorder %s30, 0
      %p371 = por %p369, %p370
      %p372 = scmp.ne.s32.totalorder %s358, %s359
      %p373 = scmp.eq.s32.totalorder %s31, 1
      %p374 = por %p372, %p373
      %p376 = scmp.ne.s32.totalorder %s359, %s375
      %p377 = scmp.eq.s32.totalorder %s31, 0
      %p378 = por %p376, %p377
      %p379 = scmp.le.s32.totalorder 1, %s25
      %p380 = scmp.lt.s32.totalorder %s25, 3
      %p381 = pnand %p379, %p380
      %p382 = pneg %p381
      // Predicated region
      $region9: #{tpu_custom_call.1} parent=5 // pred_check
        _
      $region10: #{tpu_custom_call.1} parent=5 // pred_check_branch
        %384 = sbr.rel (%p381) target = $region12
      $region11: #{tpu_custom_call.1} parent=5 // pred_region
        %s385 = ssub.s32 %s25, 1
        // Predicated region
        $region13: #{tpu_custom_call.1} parent=11 // pred_check
          %p386 = pneg %p72
        $region14: #{tpu_custom_call.1} parent=11 // pred_check_branch
          %388 = sbr.rel (%p386) target = $region16
        $region15: #{tpu_custom_call.1} parent=11 // pred_region
          _
        $region16: #{tpu_custom_call.1} parent=11 // pred_fallthru
          _
        // Predicated region
        $region17: #{tpu_custom_call.1} parent=11 // pred_check
          %p389 = pneg %p93
        $region18: #{tpu_custom_call.1} parent=11 // pred_check_branch
          %391 = sbr.rel (%p389) target = $region20
        $region19: #{tpu_custom_call.1} parent=11 // pred_region
          %s393 = ssub.s32 9216, 9216
          %394 = vsyncadd [#allocation3], %s393
          %s395 = sshll.u32 [#allocation2], 4
          %s396 = int_to_ptr.vmem [resolvable:$true] %s395
          %401 = dma.hbm_to_vmem [thread:$0]  %s2, 9216, %s396, [#allocation3], 64, 64, 4
        $region20: #{tpu_custom_call.1} parent=11 // pred_fallthru
          _
        // Predicated region
        $region21: #{tpu_custom_call.1} parent=11 // pred_check
          %p402 = pneg %p114
        $region22: #{tpu_custom_call.1} parent=11 // pred_check_branch
          %404 = sbr.rel (%p402) target = $region24
        $region23: #{tpu_custom_call.1} parent=11 // pred_region
          _
        $region24: #{tpu_custom_call.1} parent=11 // pred_fallthru
          _
        // Predicated region
        $region25: #{tpu_custom_call.1} parent=11 // pred_check
          %p405 = pneg %p135
        $region26: #{tpu_custom_call.1} parent=11 // pred_check_branch
          %407 = sbr.rel (%p405) target = $region28
        $region27: #{tpu_custom_call.1} parent=11 // pred_region
          _
        $region28: #{tpu_custom_call.1} parent=11 // pred_fallthru
          _
        // Predicated region
        $region29: #{tpu_custom_call.1} parent=11 // pred_check
          %p408 = pneg %p156
        $region30: #{tpu_custom_call.1} parent=11 // pred_check_branch
          %410 = sbr.rel (%p408) target = $region32
        $region31: #{tpu_custom_call.1} parent=11 // pred_region
          _
        $region32: #{tpu_custom_call.1} parent=11 // pred_fallthru
          _
        // Predicated region
        $region33: #{tpu_custom_call.1} parent=11 // pred_check
          %p411 = pneg %p177
        $region34: #{tpu_custom_call.1} parent=11 // pred_check_branch
          %413 = sbr.rel (%p411) target = $region36
        $region35: #{tpu_custom_call.1} parent=11 // pred_region
          _
        $region36: #{tpu_custom_call.1} parent=11 // pred_fallthru
          _
        // Predicated region
        $region37: #{tpu_custom_call.1} parent=11 // pred_check
          %p414 = pneg %p198
        $region38: #{tpu_custom_call.1} parent=11 // pred_check_branch
          %416 = sbr.rel (%p414) target = $region40
        $region39: #{tpu_custom_call.1} parent=11 // pred_region
          _
        $region40: #{tpu_custom_call.1} parent=11 // pred_fallthru
          _
        // Predicated region
        $region41: #{tpu_custom_call.1} parent=11 // pred_check
          %p417 = pneg %p219
        $region42: #{tpu_custom_call.1} parent=11 // pred_check_branch
          %419 = sbr.rel (%p417) target = $region44
        $region43: #{tpu_custom_call.1} parent=11 // pred_region
          _
        $region44: #{tpu_custom_call.1} parent=11 // pred_fallthru
          _
        // Predicated region
        $region45: #{tpu_custom_call.1} parent=11 // pred_check
          %p420 = pneg %p240
        $region46: #{tpu_custom_call.1} parent=11 // pred_check_branch
          %422 = sbr.rel (%p420) target = $region48
        $region47: #{tpu_custom_call.1} parent=11 // pred_region
          _
        $region48: #{tpu_custom_call.1} parent=11 // pred_fallthru
          _
        // Predicated region
        $region49: #{tpu_custom_call.1} parent=11 // pred_check
          %p423 = pneg %p261
        $region50: #{tpu_custom_call.1} parent=11 // pred_check_branch
          %425 = sbr.rel (%p423) target = $region52
        $region51: #{tpu_custom_call.1} parent=11 // pred_region
          _
        $region52: #{tpu_custom_call.1} parent=11 // pred_fallthru
          _
        // Predicated region
        $region53: #{tpu_custom_call.1} parent=11 // pred_check
          %p426 = pneg %p282
        $region54: #{tpu_custom_call.1} parent=11 // pred_check_branch
          %428 = sbr.rel (%p426) target = $region56
        $region55: #{tpu_custom_call.1} parent=11 // pred_region
          _
        $region56: #{tpu_custom_call.1} parent=11 // pred_fallthru
          _
        // Predicated region
        $region57: #{tpu_custom_call.1} parent=11 // pred_check
          %p429 = pneg %p303
        $region58: #{tpu_custom_call.1} parent=11 // pred_check_branch
          %431 = sbr.rel (%p429) target = $region60
        $region59: #{tpu_custom_call.1} parent=11 // pred_region
          _
        $region60: #{tpu_custom_call.1} parent=11 // pred_fallthru
          _
        // Predicated region
        $region61: #{tpu_custom_call.1} parent=11 // pred_check
          %p432 = pneg %p324
        $region62: #{tpu_custom_call.1} parent=11 // pred_check_branch
          %434 = sbr.rel (%p432) target = $region64
        $region63: #{tpu_custom_call.1} parent=11 // pred_region
          _
        $region64: #{tpu_custom_call.1} parent=11 // pred_fallthru
          _
        // Predicated region
        $region65: #{tpu_custom_call.1} parent=11 // pred_check
          %p435 = pneg %p345
        $region66: #{tpu_custom_call.1} parent=11 // pred_check_branch
          %437 = sbr.rel (%p435) target = $region68
        $region67: #{tpu_custom_call.1} parent=11 // pred_region
          _
        $region68: #{tpu_custom_call.1} parent=11 // pred_fallthru
          _
      $region12: #{tpu_custom_call.1} parent=5 // pred_fallthru
        _
      %p438 = scmp.lt.s32.totalorder %s25, 2
      // Predicated region
      $region69: #{tpu_custom_call.1} parent=5 // pred_check
        %p439 = pneg %p438
      $region70: #{tpu_custom_call.1} parent=5 // pred_check_branch
        %441 = sbr.rel (%p439) target = $region72
      $region71: #{tpu_custom_call.1} parent=5 // pred_region
        // Predicated region
        $region73: #{tpu_custom_call.1} parent=71 // pred_check
          %p442 = pneg %p45
        $region74: #{tpu_custom_call.1} parent=71 // pred_check_branch
          %444 = sbr.rel (%p442) target = $region76
        $region75: #{tpu_custom_call.1} parent=71 // pred_region
          %p445 = scmp.lt.s32.totalorder %s25, 1
          %s446 = scalar_select %p445, %s25, 1
          %s447 = smul.addr %s446, 8
          %s448 = smul.addr %s447, 4
          %s449 = scalar_lea.vmem %s0, %s448
        $region76: #{tpu_custom_call.1} parent=71 // pred_fallthru
          _
      $region72: #{tpu_custom_call.1} parent=5 // pred_fallthru
        _
      %p450 = scmp.le.s32.totalorder 1, %s25
      %p451 = scmp.lt.s32.totalorder %s25, 3
      %p452 = pnand %p450, %p451
      %p453 = pneg %p452
      // Predicated region
      $region77: #{tpu_custom_call.1} parent=5 // pred_check
        _
      $region78: #{tpu_custom_call.1} parent=5 // pred_check_branch
        %455 = sbr.rel (%p452) target = $region80
      $region79: #{tpu_custom_call.1} parent=5 // pred_region
        %s456 = ssub.s32 %s25, 1
        // Predicated region
        $region81: #{tpu_custom_call.1} parent=79 // pred_check
          %p457 = pneg %p93
        $region82: #{tpu_custom_call.1} parent=79 // pred_check_branch
          %459 = sbr.rel (%p457) target = $region84
        $region83: #{tpu_custom_call.1} parent=79 // pred_region
          %460 = dma.done [#allocation3], 9216
        $region84: #{tpu_custom_call.1} parent=79 // pred_fallthru
          _
        %p461 = scmp.lt.s32.totalorder %s30, 1
        %s462 = scalar_select %p461, %s30, 1
        %s463 = smul.addr %s462, 8
        %s464 = smul.addr %s463, 4
        %s465 = scalar_lea.vmem %s0, %s464
        %p466 = pneg %p51
        %p467 = pneg %p48
        %p468 = pneg %p72
        %p469 = pneg %p69
        %p470 = pneg %p93
        %p471 = pneg %p90
        %p472 = pneg %p114
        %p473 = pneg %p111
        %p474 = pneg %p135
        %p475 = pneg %p132
        %p476 = pneg %p156
        %p477 = pneg %p153
        %p478 = pneg %p177
        %p479 = pneg %p174
        %p480 = pneg %p198
        %p481 = pneg %p195
        %p482 = pneg %p219
        %p483 = pneg %p216
        %p484 = pneg %p240
        %p485 = pneg %p237
        %p486 = pneg %p261
        %p487 = pneg %p258
        %p488 = pneg %p282
        %p489 = pneg %p279
        %p490 = pneg %p303
        %p491 = pneg %p300
        %p492 = pneg %p324
        %p493 = pneg %p321
        %p494 = pneg %p345
        %p495 = pneg %p342
        %p496 = pneg %p371
        %p497 = pneg %p368
        %s498 = sand.u32 %s358, 1
        %s499 = scalar_lea.sflag [#allocation4], %s498
        %s500 = sand.u32 %s358, 1
        %s501 = smul.addr %s500, 32
        %s502 = scalar_lea.vmem [#allocation5], %s501
        %p503 = scmp.lt.s32.totalorder %s30, 1
        %s504 = scalar_select %p503, %s30, 1
        %s505 = smul.addr %s504, 8
        %s506 = smul.addr %s505, 4
        %s507 = scalar_lea.vmem %s0, %s506
        %v509 = vld [vmem:[%s507] sm:$0xf]
        %v510 = vld [vmem:[%s507 + $0x4] sm:$0xf]
        %v511 = vld [vmem:[%s507 + $0x8] sm:$0xf]
        %v512 = vld [vmem:[%s507 + $0xc] sm:$0xf]
        %v513 = vld [vmem:[%s507 + $0x10] sm:$0xf]
        %v514 = vld [vmem:[%s507 + $0x14] sm:$0xf]
        %v515 = vld [vmem:[%s507 + $0x18] sm:$0xf]
        %v516 = vld [vmem:[%s507 + $0x1c] sm:$0xf]
        %v517 = vld [vmem:[%s1] sm:$0xf]
        %v518 = vld [vmem:[%s1 + $0x4] sm:$0xf]
        %v519 = vld [vmem:[%s1 + $0x8] sm:$0xf]
        %v520 = vld [vmem:[%s1 + $0xc] sm:$0xf]
        %v521 = vld [vmem:[%s1 + $0x10] sm:$0xf]
        %v522 = vld [vmem:[%s1 + $0x14] sm:$0xf]
        %v523 = vld [vmem:[%s1 + $0x18] sm:$0xf]
        %v524 = vld [vmem:[%s1 + $0x1c] sm:$0xf]
        %v525 = vld [vmem:[%s1 + $0x20] sm:$0xf]
        %v526 = vld [vmem:[%s1 + $0x24] sm:$0xf]
        %v527 = vld [vmem:[%s1 + $0x28] sm:$0xf]
        %v528 = vld [vmem:[%s1 + $0x2c] sm:$0xf]
        %v529 = vld [vmem:[%s1 + $0x30] sm:$0xf]
        %v530 = vld [vmem:[%s1 + $0x34] sm:$0xf]
        %v531 = vld [vmem:[%s1 + $0x38] sm:$0xf]
        %v532 = vld [vmem:[%s1 + $0x3c] sm:$0xf]
        %v541 = vunpack.c.l.b16 %v509
        %v542 = vunpack.c.l.b16 %v510
        %v543 = vunpack.c.l.b16 %v511
        %v544 = vunpack.c.l.b16 %v512
        %v545 = vunpack.c.l.b16 %v513
        %v546 = vunpack.c.l.b16 %v514
        %v547 = vunpack.c.l.b16 %v515
        %v548 = vunpack.c.l.b16 %v516
        %v549 = vpack.c.b16 %v542, %v541
        %v550 = vpack.c.b16 %v544, %v543
        %v551 = vpack.c.b16 %v546, %v545
        %v552 = vpack.c.b16 %v548, %v547
        %v573 = vunpack.c.l.b16 %v517
        %v574 = vunpack.c.l.b16 %v518
        %v575 = vunpack.c.l.b16 %v519
        %v576 = vunpack.c.l.b16 %v520
        %v577 = vunpack.c.l.b16 %v521
        %v578 = vunpack.c.l.b16 %v522
        %v579 = vunpack.c.l.b16 %v523
        %v580 = vunpack.c.l.b16 %v524
        %v581 = vunpack.c.l.b16 %v525
        %v582 = vunpack.c.l.b16 %v526
        %v583 = vunpack.c.l.b16 %v527
        %v584 = vunpack.c.l.b16 %v528
        %v585 = vunpack.c.l.b16 %v529
        %v586 = vunpack.c.l.b16 %v530
        %v587 = vunpack.c.l.b16 %v531
        %v588 = vunpack.c.l.b16 %v532
        %v589 = vpack.c.b16 %v574, %v573
        %v590 = vpack.c.b16 %v576, %v575
        %v591 = vpack.c.b16 %v578, %v577
        %v592 = vpack.c.b16 %v580, %v579
        %v593 = vpack.c.b16 %v582, %v581
        %v594 = vpack.c.b16 %v584, %v583
        %v595 = vpack.c.b16 %v586, %v585
        %v596 = vpack.c.b16 %v588, %v587
        %605 = vmatprep.subr.bf16.mxu0 0
        %606 = vmatpush1.bf16.msra.mxu0 %v596
        %607 = vmatprep.subr.bf16.mxu0 0
        %608 = vmatpush1.bf16.msra.mxu0 %v595
        %609 = vmatprep.subr.bf16.mxu0 0
        %610 = vmatpush1.bf16.msra.mxu0 %v594
        %611 = vmatprep.subr.bf16.mxu0 0
        %612 = vmatpush1.bf16.msra.mxu0 %v593
        %613 = vmatprep.subr.bf16.mxu0 0
        %614 = vmatpush1.bf16.msra.mxu0 %v592
        %615 = vmatprep.subr.bf16.mxu0 0
        %616 = vmatpush1.bf16.msra.mxu0 %v591
        %617 = vmatprep.subr.bf16.mxu0 0
        %618 = vmatpush1.bf16.msra.mxu0 %v590
        %619 = vmatprep.subr.bf16.mxu0 0
        %620 = vmatpush1.bf16.msra.mxu0 %v589
        %621 = vmatprep.subr.bf16.mxu0 0
        %622 = vmatpush2.bf16.msra.mxu0 0
        %623 = vmatprep.subr.bf16.mxu0 0
        %624 = vmatpush2.bf16.msra.mxu0 0
        %625 = vmatprep.subr.bf16.mxu0 0
        %626 = vmatpush2.bf16.msra.mxu0 0
        %627 = vmatprep.subr.bf16.mxu0 0
        %628 = vmatpush2.bf16.msra.mxu0 0
        %629 = vmatprep.subr.bf16.mxu0 0
        %630 = vmatpush2.bf16.msra.mxu0 0
        %631 = vmatprep.subr.bf16.mxu0 0
        %632 = vmatpush2.bf16.msra.mxu0 0
        %633 = vmatprep.subr.bf16.mxu0 0
        %634 = vmatpush2.bf16.msra.mxu0 0
        %635 = vmatprep.subr.bf16.mxu0 0
        %636 = vmatpush2.bf16.msra.mxu0 0
        %637 = vmatprep.mubr.bf16.mxu0 0
        %638 = vmatmul.mubr.bf16.gmra.mxu0 %v549
        %v639 = vpop.f32.mrf.mxu0
        %v640 = vadd.f32 0.0, %v639
        %v641 = vpop.f32.mrf.mxu0
        %v642 = vpop.f32.mrf.mxu0
        %v643 = vadd.f32 0.0, %v642
        %v644 = vpop.f32.mrf.mxu0
        %645 = vmatprep.mubr.bf16.mxu0 0
        %646 = vmatmul.mubr.bf16.gmra.mxu0 %v550
        %v647 = vpop.f32.mrf.mxu0
        %v648 = vadd.f32 0.0, %v647
        %v649 = vpop.f32.mrf.mxu0
        %v650 = vpop.f32.mrf.mxu0
        %v651 = vadd.f32 0.0, %v650
        %v652 = vpop.f32.mrf.mxu0
        %653 = vmatprep.mubr.bf16.mxu0 0
        %654 = vmatmul.mubr.bf16.gmra.mxu0 %v551
        %v655 = vpop.f32.mrf.mxu0
        %v656 = vadd.f32 0.0, %v655
        %v657 = vpop.f32.mrf.mxu0
        %v658 = vpop.f32.mrf.mxu0
        %v659 = vadd.f32 0.0, %v658
        %v660 = vpop.f32.mrf.mxu0
        %661 = vmatprep.mubr.bf16.mxu0 0
        %662 = vmatmul.mubr.bf16.gmra.mxu0 %v552
        %v663 = vpop.f32.mrf.mxu0
        %v664 = vadd.f32 0.0, %v663
        %v665 = vpop.f32.mrf.mxu0
        %v666 = vpop.f32.mrf.mxu0
        %v667 = vadd.f32 0.0, %v666
        %v668 = vpop.f32.mrf.mxu0
        %669 = vdwg.mxu0
        %v670 = vld [vmem:[%s4] sm:$0x1]
        %v671 = vld [vmem:[%s5] sm:$0x1]
        %v672 = vld [vmem:[%s10] sm:$0xff]
        %v673 = vld [vmem:[%s10 + $0x8] sm:$0xff]
        %v674 = vld [vmem:[%s10 + $0x10] sm:$0xff]
        %v675 = vld [vmem:[%s10 + $0x18] sm:$0xff]
        %v676 = vld [vmem:[%s10 + $0x20] sm:$0xff]
        %v677 = vld [vmem:[%s10 + $0x28] sm:$0xff]
        %v678 = vld [vmem:[%s10 + $0x30] sm:$0xff]
        %v679 = vld [vmem:[%s10 + $0x38] sm:$0xff]
        %v680 = vld [vmem:[%s10 + $0x40] sm:$0xff]
        %v681 = vld [vmem:[%s10 + $0x48] sm:$0xff]
        %v682 = vld [vmem:[%s10 + $0x50] sm:$0xff]
        %v683 = vld [vmem:[%s10 + $0x58] sm:$0xff]
        %v684 = vld [vmem:[%s10 + $0x60] sm:$0xff]
        %v685 = vld [vmem:[%s10 + $0x68] sm:$0xff]
        %v686 = vld [vmem:[%s10 + $0x70] sm:$0xff]
        %v687 = vld [vmem:[%s10 + $0x78] sm:$0xff]
        %v688 = vld [vmem:[%s11] sm:$0xff]
        %v689 = vld [vmem:[%s11 + $0x8] sm:$0xff]
        %v690 = vld [vmem:[%s11 + $0x10] sm:$0xff]
        %v691 = vld [vmem:[%s11 + $0x18] sm:$0xff]
        %v692 = vadd.f32 %v640, %v643
        %v693 = vadd.f32 %v692, %v648
        %v694 = vadd.f32 %v693, %v651
        %v695 = vadd.f32 %v694, %v656
        %v696 = vadd.f32 %v695, %v659
        %v697 = vadd.f32 %v696, %v664
        %v698 = vadd.f32 %v697, %v667
        %v699 = vrot.slane %v698, 4
        %v700 = vadd.f32 %v698, %v699
        %v701 = vrot.slane %v700, 2
        %v702 = vadd.f32 %v700, %v701
        %v703 = vrot.slane %v702, 1
        %v704 = vadd.f32 %v702, %v703
        %v705 = vmul.f32 %v640, %v640
        %v706 = vmul.f32 %v643, %v643
        %v707 = vmul.f32 %v648, %v648
        %v708 = vmul.f32 %v651, %v651
        %v709 = vmul.f32 %v656, %v656
        %v710 = vmul.f32 %v659, %v659
        %v711 = vmul.f32 %v664, %v664
        %v712 = vmul.f32 %v667, %v667
        %v713 = vadd.f32 %v705, %v706
        %v714 = vadd.f32 %v713, %v707
        %v715 = vadd.f32 %v714, %v708
        %v716 = vadd.f32 %v715, %v709
        %v717 = vadd.f32 %v716, %v710
        %v718 = vadd.f32 %v717, %v711
        %v719 = vadd.f32 %v718, %v712
        %v720 = vrot.slane %v719, 4
        %v721 = vadd.f32 %v719, %v720
        %v722 = vrot.slane %v721, 2
        %v723 = vadd.f32 %v721, %v722
        %v724 = vrot.slane %v723, 1
        %v725 = vadd.f32 %v723, %v724
        %vm726 = vcmask 1040384
        %v727 = vsel %vm726, %v704, %v725
        %728 = vmatprep.subr.mxu0 0.0
        %729 = vmatpush1.msra.mxu0 %v687
        %730 = vmatprep.subr.mxu0 0.0
        %731 = vmatpush1.msra.mxu0 %v686
        %732 = vmatprep.subr.mxu0 0.0
        %733 = vmatpush1.msra.mxu0 %v685
        %734 = vmatprep.subr.mxu0 0.0
        %735 = vmatpush1.msra.mxu0 %v684
        %736 = vmatprep.subr.mxu0 0.0
        %737 = vmatpush1.msra.mxu0 %v683
        %738 = vmatprep.subr.mxu0 0.0
        %739 = vmatpush1.msra.mxu0 %v682
        %740 = vmatprep.subr.mxu0 0.0
        %741 = vmatpush1.msra.mxu0 %v681
        %742 = vmatprep.subr.mxu0 0.0
        %743 = vmatpush1.msra.mxu0 %v680
        %744 = vmatprep.subr.mxu0 0.0
        %745 = vmatpush1.msra.mxu0 %v679
        %746 = vmatprep.subr.mxu0 0.0
        %747 = vmatpush1.msra.mxu0 %v678
        %748 = vmatprep.subr.mxu0 0.0
        %749 = vmatpush1.msra.mxu0 %v677
        %750 = vmatprep.subr.mxu0 0.0
        %751 = vmatpush1.msra.mxu0 %v676
        %752 = vmatprep.subr.mxu0 0.0
        %753 = vmatpush1.msra.mxu0 %v675
        %754 = vmatprep.subr.mxu0 0.0
        %755 = vmatpush1.msra.mxu0 %v674
        %756 = vmatprep.subr.mxu0 0.0
        %757 = vmatpush1.msra.mxu0 %v673
        %758 = vmatprep.subr.mxu0 0.0
        %759 = vmatpush1.msra.mxu0 %v672
        %760 = vmatprep.subr.mxu0 0.0
        %761 = vmatpush2.msra.mxu0 0.0
        %762 = vmatprep.subr.mxu0 0.0
        %763 = vmatpush2.msra.mxu0 0.0
        %764 = vmatprep.subr.mxu0 0.0
        %765 = vmatpush2.msra.mxu0 0.0
        %766 = vmatprep.subr.mxu0 0.0
        %767 = vmatpush2.msra.mxu0 0.0
        %768 = vmatprep.subr.mxu0 0.0
        %769 = vmatpush2.msra.mxu0 0.0
        %770 = vmatprep.subr.mxu0 0.0
        %771 = vmatpush2.msra.mxu0 0.0
        %772 = vmatprep.subr.mxu0 0.0
        %773 = vmatpush2.msra.mxu0 0.0
        %774 = vmatprep.subr.mxu0 0.0
        %775 = vmatpush2.msra.mxu0 0.0
        %776 = vmatprep.subr.mxu0 0.0
        %777 = vmatpush2.msra.mxu0 0.0
        %778 = vmatprep.subr.mxu0 0.0
        %779 = vmatpush2.msra.mxu0 0.0
        %780 = vmatprep.subr.mxu0 0.0
        %781 = vmatpush2.msra.mxu0 0.0
        %782 = vmatprep.subr.mxu0 0.0
        %783 = vmatpush2.msra.mxu0 0.0
        %784 = vmatprep.subr.mxu0 0.0
        %785 = vmatpush2.msra.mxu0 0.0
        %786 = vmatprep.subr.mxu0 0.0
        %787 = vmatpush2.msra.mxu0 0.0
        %788 = vmatprep.subr.mxu0 0.0
        %789 = vmatpush2.msra.mxu0 0.0
        %790 = vmatprep.subr.mxu0 0.0
        %791 = vmatpush2.msra.mxu0 0.0
        %792 = vmatprep.mubr.f32.mxu0 0.0
        %793 = vmatmul.mubr.f32.gmra.mxu0 %v727
        %v794 = vpop.f32.mrf.mxu0
        %v795 = vadd.f32 0.0, %v794
        %v796 = vpop.f32.mrf.mxu0
        %797 = vdwg.mxu0
        %v798 = vmul.f32 %v795, 0.015625
        %v799 = vmul.f32 %v798, %v798
        %v801 = vrot.slane %v799, 7
        %v803 = vsub.f32 %v798, %v801
        %v804 = vmax.f32 %v803, 0.0
        %v805 = vadd.f32 %v804, 1e-05
        %v806 = vrsqrt.pop %v805
        %v807 = vsel %vm726, %v798, %v806
        %vm808 = vcmask 261120
        %v810 = vsel %vm808, %v807, 0
        %812 = vmatprep.subr.mxu0 0.0
        %813 = vmatpush1.msra.mxu0 0.0
        %814 = vmatprep.subr.mxu0 0.0
        %815 = vmatpush1.msra.mxu0 0.0
        %816 = vmatprep.subr.mxu0 0.0
        %817 = vmatpush1.msra.mxu0 0.0
        %818 = vmatprep.subr.mxu0 0.0
        %819 = vmatpush1.msra.mxu0 0.0
        %820 = vmatprep.subr.mxu0 0.0
        %821 = vmatpush1.msra.mxu0 0.0
        %822 = vmatprep.subr.mxu0 0.0
        %823 = vmatpush1.msra.mxu0 0.0
        %824 = vmatprep.subr.mxu0 0.0
        %825 = vmatpush1.msra.mxu0 0.0
        %826 = vmatprep.subr.mxu0 0.0
        %827 = vmatpush1.msra.mxu0 0.0
        %828 = vmatprep.subr.mxu0 0.0
        %829 = vmatpush1.msra.mxu0 0.0
        %830 = vmatprep.subr.mxu0 0.0
        %831 = vmatpush1.msra.mxu0 0.0
        %832 = vmatprep.subr.mxu0 0.0
        %833 = vmatpush1.msra.mxu0 0.0
        %834 = vmatprep.subr.mxu0 0.0
        %835 = vmatpush1.msra.mxu0 0.0
        %836 = vmatprep.subr.mxu0 0.0
        %837 = vmatpush1.msra.mxu0 %v691
        %838 = vmatprep.subr.mxu0 0.0
        %839 = vmatpush1.msra.mxu0 %v690
        %840 = vmatprep.subr.mxu0 0.0
        %841 = vmatpush1.msra.mxu0 %v689
        %842 = vmatprep.subr.mxu0 0.0
        %843 = vmatpush1.msra.mxu0 %v688
        %844 = vmatprep.subr.mxu0 0.0
        %845 = vmatpush2.msra.mxu0 0.0
        %846 = vmatprep.subr.mxu0 0.0
        %847 = vmatpush2.msra.mxu0 0.0
        %848 = vmatprep.subr.mxu0 0.0
        %849 = vmatpush2.msra.mxu0 0.0
        %850 = vmatprep.subr.mxu0 0.0
        %851 = vmatpush2.msra.mxu0 0.0
        %852 = vmatprep.subr.mxu0 0.0
        %853 = vmatpush2.msra.mxu0 0.0
        %854 = vmatprep.subr.mxu0 0.0
        %855 = vmatpush2.msra.mxu0 0.0
        %856 = vmatprep.subr.mxu0 0.0
        %857 = vmatpush2.msra.mxu0 0.0
        %858 = vmatprep.subr.mxu0 0.0
        %859 = vmatpush2.msra.mxu0 0.0
        %860 = vmatprep.subr.mxu0 0.0
        %861 = vmatpush2.msra.mxu0 0.0
        %862 = vmatprep.subr.mxu0 0.0
        %863 = vmatpush2.msra.mxu0 0.0
        %864 = vmatprep.subr.mxu0 0.0
        %865 = vmatpush2.msra.mxu0 0.0
        %866 = vmatprep.subr.mxu0 0.0
        %867 = vmatpush2.msra.mxu0 0.0
        %868 = vmatprep.subr.mxu0 0.0
        %869 = vmatpush2.msra.mxu0 0.0
        %870 = vmatprep.subr.mxu0 0.0
        %871 = vmatpush2.msra.mxu0 0.0
        %872 = vmatprep.subr.mxu0 0.0
        %873 = vmatpush2.msra.mxu0 0.0
        %874 = vmatprep.subr.mxu0 0.0
        %875 = vmatpush2.msra.mxu0 0.0
        %876 = vmatprep.mubr.f32.mxu0 0.0
        %877 = vmatmul.mubr.f32.gmra.mxu0 %v810
        %v878 = vpop.f32.mrf.mxu0
        %v879 = vadd.f32 0.0, %v878
        %v880 = vpop.f32.mrf.mxu0
        %881 = vdwg.mxu0
        %v883 = vlaneseq
        %v884 = vshrl.u32 %v883, 7
        %v885 = vsub.s32 0, %v884
        %v886 = vrot.slane %v670, %v885
        %v888 = vmul.f32 %v879, %v886
        %v890 = vrot.slane %v888, 1
        %v892 = vmul.f32 %v879, %v890
        %v893 = vsub.f32 %v671, %v892
        %v894 = vlaneseq
        %v895 = vshrl.u32 %v894, 7
        %v896 = vsub.s32 1, %v895
        %v897 = vrot.slane %v888, %v896
        %v898 = vmul.f32 %v640, %v897
        %v899 = vmul.f32 %v643, %v897
        %v900 = vmul.f32 %v648, %v897
        %v901 = vmul.f32 %v651, %v897
        %v902 = vmul.f32 %v656, %v897
        %v903 = vmul.f32 %v659, %v897
        %v904 = vmul.f32 %v664, %v897
        %v905 = vmul.f32 %v667, %v897
        %v907 = vlaneseq
        %v908 = vshrl.u32 %v907, 7
        %v909 = vsub.s32 0, %v908
        %v910 = vrot.slane %v893, %v909
        %v912 = vadd.f32 %v898, %v910
        %v913 = vadd.f32 %v899, %v910
        %v914 = vadd.f32 %v900, %v910
        %v915 = vadd.f32 %v901, %v910
        %v916 = vadd.f32 %v902, %v910
        %v917 = vadd.f32 %v903, %v910
        %v918 = vadd.f32 %v904, %v910
        %v919 = vadd.f32 %v905, %v910
        %v920 = vmax.f32 %v912, 0.0
        %v921 = vmax.f32 %v913, 0.0
        %v922 = vmax.f32 %v914, 0.0
        %v923 = vmax.f32 %v915, 0.0
        %v924 = vmax.f32 %v916, 0.0
        %v925 = vmax.f32 %v917, 0.0
        %v926 = vmax.f32 %v918, 0.0
        %v927 = vmax.f32 %v919, 0.0
        %v928 = vpack.c.bf16 %v921, %v920
        %v929 = vpack.c.bf16 %v923, %v922
        %v930 = vpack.c.bf16 %v925, %v924
        %v931 = vpack.c.bf16 %v927, %v926
        %v932 = vld [vmem:[%s14] sm:$0xf]
        %v933 = vld [vmem:[%s14 + $0x4] sm:$0xf]
        %v934 = vld [vmem:[%s14 + $0x8] sm:$0xf]
        %v935 = vld [vmem:[%s14 + $0xc] sm:$0xf]
        %v936 = vld [vmem:[%s14 + $0x10] sm:$0xf]
        %v937 = vld [vmem:[%s14 + $0x14] sm:$0xf]
        %v938 = vld [vmem:[%s14 + $0x18] sm:$0xf]
        %v939 = vld [vmem:[%s14 + $0x1c] sm:$0xf]
        %v941 = vshrl.u32 %v931, 16
        %v943 = vrot.slane %v941, 3
        %v944 = vshll.u32 %v931, 16
        %v946 = vrot.slane %v944, 4
        %v947 = vor.u32 %v943, %v946
        %vm949 = vsmask.f32 4352
        %v951 = vshrl.u32 %v928, 16
        %v953 = vrot.slane %v951, 3
        %v954 = vshll.u32 %v928, 16
        %v956 = vrot.slane %v954, 4
        %v957 = vor.u32 %v953, %v956
        %v959 = vshrl.u32 %v929, 16
        %v961 = vrot.slane %v959, 3
        %v962 = vshll.u32 %v929, 16
        %v964 = vrot.slane %v962, 4
        %v965 = vor.u32 %v961, %v964
        %v966 = vsel %vm949, %v957, %v965
        %v968 = vshrl.u32 %v930, 16
        %v970 = vrot.slane %v968, 3
        %v971 = vshll.u32 %v930, 16
        %v973 = vrot.slane %v971, 4
        %v974 = vor.u32 %v970, %v973
        %v975 = vsel %vm949, %v965, %v974
        %v976 = vsel %vm949, %v974, %v947
        %vm981 = vcmask 1044480
        %vm982 = vmand %vm981, %vm949
        %v983 = vsel %vm982, %v947, %v957
        %985 = vset.pattern.permute.xlu0 0
        %986 = vperm.xlu0 %985, %v932
        %v987 = vpop.permute.xlu0 %986
        %v990 = vunpack.c.l.s4 839922192
        %v991 = vunpack.c.0.s8 %v990
        %v992 = vlaneseq
        %v993 = vshrl.u32 %v992, 7
        %v994 = vsub.s32 %v991, %v993
        %v995 = vrot.slane %v987, %v994
        %997 = vset.pattern.permute.xlu0 0
        %998 = vperm.xlu0 %997, %v933
        %v999 = vpop.permute.xlu0 %998
        %v1002 = vunpack.c.l.s4 839922192
        %v1003 = vunpack.c.0.s8 %v1002
        %v1004 = vlaneseq
        %v1005 = vshrl.u32 %v1004, 7
        %v1006 = vsub.s32 %v1003, %v1005
        %v1007 = vrot.slane %v999, %v1006
        %1009 = vset.pattern.permute.xlu0 0
        %1010 = vperm.xlu0 %1009, %v934
        %v1011 = vpop.permute.xlu0 %1010
        %v1014 = vunpack.c.l.s4 839922192
        %v1015 = vunpack.c.0.s8 %v1014
        %v1016 = vlaneseq
        %v1017 = vshrl.u32 %v1016, 7
        %v1018 = vsub.s32 %v1015, %v1017
        %v1019 = vrot.slane %v1011, %v1018
        %1021 = vset.pattern.permute.xlu0 0
        %1022 = vperm.xlu0 %1021, %v935
        %v1023 = vpop.permute.xlu0 %1022
        %v1026 = vunpack.c.l.s4 839922192
        %v1027 = vunpack.c.0.s8 %v1026
        %v1028 = vlaneseq
        %v1029 = vshrl.u32 %v1028, 7
        %v1030 = vsub.s32 %v1027, %v1029
        %v1031 = vrot.slane %v1023, %v1030
        %1033 = vset.pattern.permute.xlu0 0
        %1034 = vperm.xlu0 %1033, %v936
        %v1035 = vpop.permute.xlu0 %1034
        %v1038 = vunpack.c.l.s4 839922192
        %v1039 = vunpack.c.0.s8 %v1038
        %v1040 = vlaneseq
        %v1041 = vshrl.u32 %v1040, 7
        %v1042 = vsub.s32 %v1039, %v1041
        %v1043 = vrot.slane %v1035, %v1042
        %1045 = vset.pattern.permute.xlu0 0
        %1046 = vperm.xlu0 %1045, %v937
        %v1047 = vpop.permute.xlu0 %1046
        %v1050 = vunpack.c.l.s4 839922192
        %v1051 = vunpack.c.0.s8 %v1050
        %v1052 = vlaneseq
        %v1053 = vshrl.u32 %v1052, 7
        %v1054 = vsub.s32 %v1051, %v1053
        %v1055 = vrot.slane %v1047, %v1054
        %1057 = vset.pattern.permute.xlu0 0
        %1058 = vperm.xlu0 %1057, %v938
        %v1059 = vpop.permute.xlu0 %1058
        %v1062 = vunpack.c.l.s4 839922192
        %v1063 = vunpack.c.0.s8 %v1062
        %v1064 = vlaneseq
        %v1065 = vshrl.u32 %v1064, 7
        %v1066 = vsub.s32 %v1063, %v1065
        %v1067 = vrot.slane %v1059, %v1066
        %1069 = vset.pattern.permute.xlu0 0
        %1070 = vperm.xlu0 %1069, %v939
        %v1071 = vpop.permute.xlu0 %1070
        %v1074 = vunpack.c.l.s4 839922192
        %v1075 = vunpack.c.0.s8 %v1074
        %v1076 = vlaneseq
        %v1077 = vshrl.u32 %v1076, 7
        %v1078 = vsub.s32 %v1075, %v1077
        %v1079 = vrot.slane %v1071, %v1078
        %v1088 = vunpack.c.l.b16 %v995
        %v1089 = vunpack.c.l.b16 %v1007
        %v1090 = vunpack.c.l.b16 %v1019
        %v1091 = vunpack.c.l.b16 %v1031
        %v1092 = vunpack.c.l.b16 %v1043
        %v1093 = vunpack.c.l.b16 %v1055
        %v1094 = vunpack.c.l.b16 %v1067
        %v1095 = vunpack.c.l.b16 %v1079
        %v1096 = vpack.c.b16 %v1089, %v1088
        %v1097 = vpack.c.b16 %v1091, %v1090
        %v1098 = vpack.c.b16 %v1093, %v1092
        %v1099 = vpack.c.b16 %v1095, %v1094
        %v1104 = vmul.bf16 %v983, %v1096
        %v1105 = vmul.bf16 %v966, %v1097
        %v1106 = vmul.bf16 %v975, %v1098
        %v1107 = vmul.bf16 %v976, %v1099
        %v1108 = vld [vmem:[#allocation2] sm:$0xf]
        %v1109 = vld [vmem:[#allocation2 + $0x4] sm:$0xf]
        %v1110 = vld [vmem:[#allocation2 + $0x8] sm:$0xf]
        %v1111 = vld [vmem:[#allocation2 + $0xc] sm:$0xf]
        %v1112 = vld [vmem:[#allocation2 + $0x10] sm:$0xf]
        %v1113 = vld [vmem:[#allocation2 + $0x14] sm:$0xf]
        %v1114 = vld [vmem:[#allocation2 + $0x18] sm:$0xf]
        %v1115 = vld [vmem:[#allocation2 + $0x1c] sm:$0xf]
        %v1116 = vld [vmem:[#allocation2 + $0x20] sm:$0xf]
        %v1117 = vld [vmem:[#allocation2 + $0x24] sm:$0xf]
        %v1118 = vld [vmem:[#allocation2 + $0x28] sm:$0xf]
        %v1119 = vld [vmem:[#allocation2 + $0x2c] sm:$0xf]
        %v1120 = vld [vmem:[#allocation2 + $0x30] sm:$0xf]
        %v1121 = vld [vmem:[#allocation2 + $0x34] sm:$0xf]
        %v1122 = vld [vmem:[#allocation2 + $0x38] sm:$0xf]
        %v1123 = vld [vmem:[#allocation2 + $0x3c] sm:$0xf]
        %v1125 = vrot.slane %v931, 4
        %vm1129 = vcmask 1043456
        %v1130 = vrot.slane %v928, 4
        %v1131 = vrot.slane %v929, 4
        %v1132 = vsel %vm1129, %v1130, %v1131
        %v1133 = vrot.slane %v930, 4
        %v1134 = vsel %vm1129, %v1131, %v1133
        %v1135 = vsel %vm1129, %v1133, %v1125
        %vm1139 = vcmask 1043456
        %v1142 = vsel %vm1139, %v1125, %v1130
        %1144 = vset.pattern.permute.xlu0 1
        %1145 = vperm.xlu0 %1144, %v932
        %v1146 = vpop.permute.xlu0 %1145
        %v1149 = vunpack.c.l.s4 839922192
        %v1150 = vunpack.c.0.s8 %v1149
        %v1151 = vlaneseq
        %v1152 = vshrl.u32 %v1151, 7
        %v1153 = vsub.s32 %v1150, %v1152
        %v1154 = vrot.slane %v1146, %v1153
        %1155 = vset.pattern.permute.xlu0 1
        %1156 = vperm.xlu0 %1155, %v933
        %v1157 = vpop.permute.xlu0 %1156
        %v1160 = vunpack.c.l.s4 839922192
        %v1161 = vunpack.c.0.s8 %v1160
        %v1162 = vlaneseq
        %v1163 = vshrl.u32 %v1162, 7
        %v1164 = vsub.s32 %v1161, %v1163
        %v1165 = vrot.slane %v1157, %v1164
        %1166 = vset.pattern.permute.xlu0 1
        %1167 = vperm.xlu0 %1166, %v934
        %v1168 = vpop.permute.xlu0 %1167
        %v1171 = vunpack.c.l.s4 839922192
        %v1172 = vunpack.c.0.s8 %v1171
        %v1173 = vlaneseq
        %v1174 = vshrl.u32 %v1173, 7
        %v1175 = vsub.s32 %v1172, %v1174
        %v1176 = vrot.slane %v1168, %v1175
        %1177 = vset.pattern.permute.xlu0 1
        %1178 = vperm.xlu0 %1177, %v935
        %v1179 = vpop.permute.xlu0 %1178
        %v1182 = vunpack.c.l.s4 839922192
        %v1183 = vunpack.c.0.s8 %v1182
        %v1184 = vlaneseq
        %v1185 = vshrl.u32 %v1184, 7
        %v1186 = vsub.s32 %v1183, %v1185
        %v1187 = vrot.slane %v1179, %v1186
        %1188 = vset.pattern.permute.xlu0 1
        %1189 = vperm.xlu0 %1188, %v936
        %v1190 = vpop.permute.xlu0 %1189
        %v1193 = vunpack.c.l.s4 839922192
        %v1194 = vunpack.c.0.s8 %v1193
        %v1195 = vlaneseq
        %v1196 = vshrl.u32 %v1195, 7
        %v1197 = vsub.s32 %v1194, %v1196
        %v1198 = vrot.slane %v1190, %v1197
        %1199 = vset.pattern.permute.xlu0 1
        %1200 = vperm.xlu0 %1199, %v937
        %v1201 = vpop.permute.xlu0 %1200
        %v1204 = vunpack.c.l.s4 839922192
        %v1205 = vunpack.c.0.s8 %v1204
        %v1206 = vlaneseq
        %v1207 = vshrl.u32 %v1206, 7
        %v1208 = vsub.s32 %v1205, %v1207
        %v1209 = vrot.slane %v1201, %v1208
        %1210 = vset.pattern.permute.xlu0 1
        %1211 = vperm.xlu0 %1210, %v938
        %v1212 = vpop.permute.xlu0 %1211
        %v1215 = vunpack.c.l.s4 839922192
        %v1216 = vunpack.c.0.s8 %v1215
        %v1217 = vlaneseq
        %v1218 = vshrl.u32 %v1217, 7
        %v1219 = vsub.s32 %v1216, %v1218
        %v1220 = vrot.slane %v1212, %v1219
        %1221 = vset.pattern.permute.xlu0 1
        %1222 = vperm.xlu0 %1221, %v939
        %v1223 = vpop.permute.xlu0 %1222
        %v1226 = vunpack.c.l.s4 839922192
        %v1227 = vunpack.c.0.s8 %v1226
        %v1228 = vlaneseq
        %v1229 = vshrl.u32 %v1228, 7
        %v1230 = vsub.s32 %v1227, %v1229
        %v1231 = vrot.slane %v1223, %v1230
        %v1240 = vunpack.c.l.b16 %v1154
        %v1241 = vunpack.c.l.b16 %v1165
        %v1242 = vunpack.c.l.b16 %v1176
        %v1243 = vunpack.c.l.b16 %v1187
        %v1244 = vunpack.c.l.b16 %v1198
        %v1245 = vunpack.c.l.b16 %v1209
        %v1246 = vunpack.c.l.b16 %v1220
        %v1247 = vunpack.c.l.b16 %v1231
        %v1248 = vpack.c.b16 %v1241, %v1240
        %v1249 = vpack.c.b16 %v1243, %v1242
        %v1250 = vpack.c.b16 %v1245, %v1244
        %v1251 = vpack.c.b16 %v1247, %v1246
        %v1256 = vmul.bf16 %v1142, %v1248
        %v1257 = vmul.bf16 %v1132, %v1249
        %v1258 = vmul.bf16 %v1134, %v1250
        %v1259 = vmul.bf16 %v1135, %v1251
        %v1260 = vld [vmem:[#allocation2 + $0x40] sm:$0xf]
        %v1261 = vld [vmem:[#allocation2 + $0x44] sm:$0xf]
        %v1262 = vld [vmem:[#allocation2 + $0x48] sm:$0xf]
        %v1263 = vld [vmem:[#allocation2 + $0x4c] sm:$0xf]
        %v1264 = vld [vmem:[#allocation2 + $0x50] sm:$0xf]
        %v1265 = vld [vmem:[#allocation2 + $0x54] sm:$0xf]
        %v1266 = vld [vmem:[#allocation2 + $0x58] sm:$0xf]
        %v1267 = vld [vmem:[#allocation2 + $0x5c] sm:$0xf]
        %v1268 = vld [vmem:[#allocation2 + $0x60] sm:$0xf]
        %v1269 = vld [vmem:[#allocation2 + $0x64] sm:$0xf]
        %v1270 = vld [vmem:[#allocation2 + $0x68] sm:$0xf]
        %v1271 = vld [vmem:[#allocation2 + $0x6c] sm:$0xf]
        %v1272 = vld [vmem:[#allocation2 + $0x70] sm:$0xf]
        %v1273 = vld [vmem:[#allocation2 + $0x74] sm:$0xf]
        %v1274 = vld [vmem:[#allocation2 + $0x78] sm:$0xf]
        %v1275 = vld [vmem:[#allocation2 + $0x7c] sm:$0xf]
        %v1292 = vunpack.c.l.b16 %v1260
        %v1293 = vunpack.c.l.b16 %v1261
        %v1294 = vunpack.c.l.b16 %v1262
        %v1295 = vunpack.c.l.b16 %v1263
        %v1296 = vunpack.c.l.b16 %v1264
        %v1297 = vunpack.c.l.b16 %v1265
        %v1298 = vunpack.c.l.b16 %v1266
        %v1299 = vunpack.c.l.b16 %v1267
        %v1300 = vunpack.c.l.b16 %v1268
        %v1301 = vunpack.c.l.b16 %v1269
        %v1302 = vunpack.c.l.b16 %v1270
        %v1303 = vunpack.c.l.b16 %v1271
        %v1304 = vunpack.c.l.b16 %v1272
        %v1305 = vunpack.c.l.b16 %v1273
        %v1306 = vunpack.c.l.b16 %v1274
        %v1307 = vunpack.c.l.b16 %v1275
        %v1308 = vpack.c.b16 %v1293, %v1292
        %v1309 = vpack.c.b16 %v1295, %v1294
        %v1310 = vpack.c.b16 %v1297, %v1296
        %v1311 = vpack.c.b16 %v1299, %v1298
        %v1312 = vpack.c.b16 %v1301, %v1300
        %v1313 = vpack.c.b16 %v1303, %v1302
        %v1314 = vpack.c.b16 %v1305, %v1304
        %v1315 = vpack.c.b16 %v1307, %v1306
        %1324 = vmatprep.subr.bf16.mxu0 0
        %1325 = vmatpush1.bf16.msra.mxu0 %v1315
        %1326 = vmatprep.subr.bf16.mxu0 0
        %1327 = vmatpush1.bf16.msra.mxu0 %v1314
        %1328 = vmatprep.subr.bf16.mxu0 0
        %1329 = vmatpush1.bf16.msra.mxu0 %v1313
        %1330 = vmatprep.subr.bf16.mxu0 0
        %1331 = vmatpush1.bf16.msra.mxu0 %v1312
        %1332 = vmatprep.subr.bf16.mxu0 0
        %1333 = vmatpush1.bf16.msra.mxu0 %v1311
        %1334 = vmatprep.subr.bf16.mxu0 0
        %1335 = vmatpush1.bf16.msra.mxu0 %v1310
        %1336 = vmatprep.subr.bf16.mxu0 0
        %1337 = vmatpush1.bf16.msra.mxu0 %v1309
        %1338 = vmatprep.subr.bf16.mxu0 0
        %1339 = vmatpush1.bf16.msra.mxu0 %v1308
        %1340 = vmatprep.subr.bf16.mxu0 0
        %1341 = vmatpush2.bf16.msra.mxu0 0
        %1342 = vmatprep.subr.bf16.mxu0 0
        %1343 = vmatpush2.bf16.msra.mxu0 0
        %1344 = vmatprep.subr.bf16.mxu0 0
        %1345 = vmatpush2.bf16.msra.mxu0 0
        %1346 = vmatprep.subr.bf16.mxu0 0
        %1347 = vmatpush2.bf16.msra.mxu0 0
        %1348 = vmatprep.subr.bf16.mxu0 0
        %1349 = vmatpush2.bf16.msra.mxu0 0
        %1350 = vmatprep.subr.bf16.mxu0 0
        %1351 = vmatpush2.bf16.msra.mxu0 0
        %1352 = vmatprep.subr.bf16.mxu0 0
        %1353 = vmatpush2.bf16.msra.mxu0 0
        %1354 = vmatprep.subr.bf16.mxu0 0
        %1355 = vmatpush2.bf16.msra.mxu0 0
        %1356 = vmatprep.mubr.bf16.mxu0 0
        %1357 = vmatmul.mubr.bf16.gmra.mxu0 %v1256
        %v1358 = vpop.f32.mrf.mxu0
        %v1359 = vadd.f32 0.0, %v1358
        %v1360 = vpop.f32.mrf.mxu0
        %v1361 = vpop.f32.mrf.mxu0
        %v1362 = vadd.f32 0.0, %v1361
        %v1363 = vpop.f32.mrf.mxu0
        %1364 = vmatprep.mubr.bf16.mxu0 0
        %1365 = vmatmul.mubr.bf16.gmra.mxu0 %v1257
        %v1366 = vpop.f32.mrf.mxu0
        %v1367 = vadd.f32 0.0, %v1366
        %v1368 = vpop.f32.mrf.mxu0
        %v1369 = vpop.f32.mrf.mxu0
        %v1370 = vadd.f32 0.0, %v1369
        %v1371 = vpop.f32.mrf.mxu0
        %1372 = vmatprep.mubr.bf16.mxu0 0
        %1373 = vmatmul.mubr.bf16.gmra.mxu0 %v1258
        %v1374 = vpop.f32.mrf.mxu0
        %v1375 = vadd.f32 0.0, %v1374
        %v1376 = vpop.f32.mrf.mxu0
        %v1377 = vpop.f32.mrf.mxu0
        %v1378 = vadd.f32 0.0, %v1377
        %v1379 = vpop.f32.mrf.mxu0
        %1380 = vmatprep.mubr.bf16.mxu0 0
        %1381 = vmatmul.mubr.bf16.gmra.mxu0 %v1259
        %v1382 = vpop.f32.mrf.mxu0
        %v1383 = vadd.f32 0.0, %v1382
        %v1384 = vpop.f32.mrf.mxu0
        %v1385 = vpop.f32.mrf.mxu0
        %v1386 = vadd.f32 0.0, %v1385
        %v1387 = vpop.f32.mrf.mxu0
        %1388 = vdwg.mxu0
        %v1405 = vunpack.c.l.b16 %v1108
        %v1406 = vunpack.c.l.b16 %v1109
        %v1407 = vunpack.c.l.b16 %v1110
        %v1408 = vunpack.c.l.b16 %v1111
        %v1409 = vunpack.c.l.b16 %v1112
        %v1410 = vunpack.c.l.b16 %v1113
        %v1411 = vunpack.c.l.b16 %v1114
        %v1412 = vunpack.c.l.b16 %v1115
        %v1413 = vunpack.c.l.b16 %v1116
        %v1414 = vunpack.c.l.b16 %v1117
        %v1415 = vunpack.c.l.b16 %v1118
        %v1416 = vunpack.c.l.b16 %v1119
        %v1417 = vunpack.c.l.b16 %v1120
        %v1418 = vunpack.c.l.b16 %v1121
        %v1419 = vunpack.c.l.b16 %v1122
        %v1420 = vunpack.c.l.b16 %v1123
        %v1421 = vpack.c.b16 %v1406, %v1405
        %v1422 = vpack.c.b16 %v1408, %v1407
        %v1423 = vpack.c.b16 %v1410, %v1409
        %v1424 = vpack.c.b16 %v1412, %v1411
        %v1425 = vpack.c.b16 %v1414, %v1413
        %v1426 = vpack.c.b16 %v1416, %v1415
        %v1427 = vpack.c.b16 %v1418, %v1417
        %v1428 = vpack.c.b16 %v1420, %v1419
        %1437 = vmatprep.subr.bf16.mxu0 0
        %1438 = vmatpush1.bf16.msra.mxu0 %v1428
        %1439 = vmatprep.subr.bf16.mxu0 0
        %1440 = vmatpush1.bf16.msra.mxu0 %v1427
        %1441 = vmatprep.subr.bf16.mxu0 0
        %1442 = vmatpush1.bf16.msra.mxu0 %v1426
        %1443 = vmatprep.subr.bf16.mxu0 0
        %1444 = vmatpush1.bf16.msra.mxu0 %v1425
        %1445 = vmatprep.subr.bf16.mxu0 0
        %1446 = vmatpush1.bf16.msra.mxu0 %v1424
        %1447 = vmatprep.subr.bf16.mxu0 0
        %1448 = vmatpush1.bf16.msra.mxu0 %v1423
        %1449 = vmatprep.subr.bf16.mxu0 0
        %1450 = vmatpush1.bf16.msra.mxu0 %v1422
        %1451 = vmatprep.subr.bf16.mxu0 0
        %1452 = vmatpush1.bf16.msra.mxu0 %v1421
        %1453 = vmatprep.subr.bf16.mxu0 0
        %1454 = vmatpush2.bf16.msra.mxu0 0
        %1455 = vmatprep.subr.bf16.mxu0 0
        %1456 = vmatpush2.bf16.msra.mxu0 0
        %1457 = vmatprep.subr.bf16.mxu0 0
        %1458 = vmatpush2.bf16.msra.mxu0 0
        %1459 = vmatprep.subr.bf16.mxu0 0
        %1460 = vmatpush2.bf16.msra.mxu0 0
        %1461 = vmatprep.subr.bf16.mxu0 0
        %1462 = vmatpush2.bf16.msra.mxu0 0
        %1463 = vmatprep.subr.bf16.mxu0 0
        %1464 = vmatpush2.bf16.msra.mxu0 0
        %1465 = vmatprep.subr.bf16.mxu0 0
        %1466 = vmatpush2.bf16.msra.mxu0 0
        %1467 = vmatprep.subr.bf16.mxu0 0
        %1468 = vmatpush2.bf16.msra.mxu0 0
        %1469 = vmatprep.mubr.bf16.mxu0 0
        %1470 = vmatmul.mubr.bf16.gmra.mxu0 %v1104
        %v1471 = vpop.f32.mrf.mxu0
        %v1472 = vadd.f32 %v1359, %v1471
        %v1473 = vpop.f32.mrf.mxu0
        %v1474 = vpop.f32.mrf.mxu0
        %v1475 = vadd.f32 %v1362, %v1474
        %v1476 = vpop.f32.mrf.mxu0
        %1477 = vmatprep.mubr.bf16.mxu0 0
        %1478 = vmatmul.mubr.bf16.gmra.mxu0 %v1105
        %v1479 = vpop.f32.mrf.mxu0
        %v1480 = vadd.f32 %v1367, %v1479
        %v1481 = vpop.f32.mrf.mxu0
        %v1482 = vpop.f32.mrf.mxu0
        %v1483 = vadd.f32 %v1370, %v1482
        %v1484 = vpop.f32.mrf.mxu0
        %1485 = vmatprep.mubr.bf16.mxu0 0
        %1486 = vmatmul.mubr.bf16.gmra.mxu0 %v1106
        %v1487 = vpop.f32.mrf.mxu0
        %v1488 = vadd.f32 %v1375, %v1487
        %v1489 = vpop.f32.mrf.mxu0
        %v1490 = vpop.f32.mrf.mxu0
        %v1491 = vadd.f32 %v1378, %v1490
        %v1492 = vpop.f32.mrf.mxu0
        %1493 = vmatprep.mubr.bf16.mxu0 0
        %1494 = vmatmul.mubr.bf16.gmra.mxu0 %v1107
        %v1495 = vpop.f32.mrf.mxu0
        %v1496 = vadd.f32 %v1383, %v1495
        %v1497 = vpop.f32.mrf.mxu0
        %v1498 = vpop.f32.mrf.mxu0
        %v1499 = vadd.f32 %v1386, %v1498
        %v1500 = vpop.f32.mrf.mxu0
        %1501 = vdwg.mxu0
        %v1502 = vrot.slane %v941, 4
        %v1503 = vrot.slane %v944, 5
        %v1504 = vor.u32 %v1502, %v1503
        %vm1506 = vsmask.f32 3328
        %v1507 = vrot.slane %v951, 4
        %v1508 = vrot.slane %v954, 5
        %v1509 = vor.u32 %v1507, %v1508
        %v1510 = vrot.slane %v959, 4
        %v1511 = vrot.slane %v962, 5
        %v1512 = vor.u32 %v1510, %v1511
        %v1513 = vsel %vm1506, %v1509, %v1512
        %v1514 = vrot.slane %v968, 4
        %v1515 = vrot.slane %v971, 5
        %v1516 = vor.u32 %v1514, %v1515
        %v1517 = vsel %vm1506, %v1512, %v1516
        %v1518 = vsel %vm1506, %v1516, %v1504
        %vm1523 = vmand %vm1129, %vm1506
        %v1524 = vsel %vm1523, %v1504, %v1509
        %1525 = vset.pattern.permute.xlu0 2
        %1526 = vperm.xlu0 %1525, %v932
        %v1527 = vpop.permute.xlu0 %1526
        %v1530 = vunpack.c.l.s4 839922192
        %v1531 = vunpack.c.0.s8 %v1530
        %v1532 = vlaneseq
        %v1533 = vshrl.u32 %v1532, 7
        %v1534 = vsub.s32 %v1531, %v1533
        %v1535 = vrot.slane %v1527, %v1534
        %1536 = vset.pattern.permute.xlu0 2
        %1537 = vperm.xlu0 %1536, %v933
        %v1538 = vpop.permute.xlu0 %1537
        %v1541 = vunpack.c.l.s4 839922192
        %v1542 = vunpack.c.0.s8 %v1541
        %v1543 = vlaneseq
        %v1544 = vshrl.u32 %v1543, 7
        %v1545 = vsub.s32 %v1542, %v1544
        %v1546 = vrot.slane %v1538, %v1545
        %1547 = vset.pattern.permute.xlu0 2
        %1548 = vperm.xlu0 %1547, %v934
        %v1549 = vpop.permute.xlu0 %1548
        %v1552 = vunpack.c.l.s4 839922192
        %v1553 = vunpack.c.0.s8 %v1552
        %v1554 = vlaneseq
        %v1555 = vshrl.u32 %v1554, 7
        %v1556 = vsub.s32 %v1553, %v1555
        %v1557 = vrot.slane %v1549, %v1556
        %1558 = vset.pattern.permute.xlu0 2
        %1559 = vperm.xlu0 %1558, %v935
        %v1560 = vpop.permute.xlu0 %1559
        %v1563 = vunpack.c.l.s4 839922192
        %v1564 = vunpack.c.0.s8 %v1563
        %v1565 = vlaneseq
        %v1566 = vshrl.u32 %v1565, 7
        %v1567 = vsub.s32 %v1564, %v1566
        %v1568 = vrot.slane %v1560, %v1567
        %1569 = vset.pattern.permute.xlu0 2
        %1570 = vperm.xlu0 %1569, %v936
        %v1571 = vpop.permute.xlu0 %1570
        %v1574 = vunpack.c.l.s4 839922192
        %v1575 = vunpack.c.0.s8 %v1574
        %v1576 = vlaneseq
        %v1577 = vshrl.u32 %v1576, 7
        %v1578 = vsub.s32 %v1575, %v1577
        %v1579 = vrot.slane %v1571, %v1578
        %1580 = vset.pattern.permute.xlu0 2
        %1581 = vperm.xlu0 %1580, %v937
        %v1582 = vpop.permute.xlu0 %1581
        %v1585 = vunpack.c.l.s4 839922192
        %v1586 = vunpack.c.0.s8 %v1585
        %v1587 = vlaneseq
        %v1588 = vshrl.u32 %v1587, 7
        %v1589 = vsub.s32 %v1586, %v1588
        %v1590 = vrot.slane %v1582, %v1589
        %1591 = vset.pattern.permute.xlu0 2
        %1592 = vperm.xlu0 %1591, %v938
        %v1593 = vpop.permute.xlu0 %1592
        %v1596 = vunpack.c.l.s4 839922192
        %v1597 = vunpack.c.0.s8 %v1596
        %v1598 = vlaneseq
        %v1599 = vshrl.u32 %v1598, 7
        %v1600 = vsub.s32 %v1597, %v1599
        %v1601 = vrot.slane %v1593, %v1600
        %1602 = vset.pattern.permute.xlu0 2
        %1603 = vperm.xlu0 %1602, %v939
        %v1604 = vpop.permute.xlu0 %1603
        %v1607 = vunpack.c.l.s4 839922192
        %v1608 = vunpack.c.0.s8 %v1607
        %v1609 = vlaneseq
        %v1610 = vshrl.u32 %v1609, 7
        %v1611 = vsub.s32 %v1608, %v1610
        %v1612 = vrot.slane %v1604, %v1611
        %v1621 = vunpack.c.l.b16 %v1535
        %v1622 = vunpack.c.l.b16 %v1546
        %v1623 = vunpack.c.l.b16 %v1557
        %v1624 = vunpack.c.l.b16 %v1568
        %v1625 = vunpack.c.l.b16 %v1579
        %v1626 = vunpack.c.l.b16 %v1590
        %v1627 = vunpack.c.l.b16 %v1601
        %v1628 = vunpack.c.l.b16 %v1612
        %v1629 = vpack.c.b16 %v1622, %v1621
        %v1630 = vpack.c.b16 %v1624, %v1623
        %v1631 = vpack.c.b16 %v1626, %v1625
        %v1632 = vpack.c.b16 %v1628, %v1627
        %v1637 = vmul.bf16 %v1524, %v1629
        %v1638 = vmul.bf16 %v1513, %v1630
        %v1639 = vmul.bf16 %v1517, %v1631
        %v1640 = vmul.bf16 %v1518, %v1632
        %v1641 = vld [vmem:[#allocation2 + $0x80] sm:$0xf]
        %v1642 = vld [vmem:[#allocation2 + $0x84] sm:$0xf]
        %v1643 = vld [vmem:[#allocation2 + $0x88] sm:$0xf]
        %v1644 = vld [vmem:[#allocation2 + $0x8c] sm:$0xf]
        %v1645 = vld [vmem:[#allocation2 + $0x90] sm:$0xf]
        %v1646 = vld [vmem:[#allocation2 + $0x94] sm:$0xf]
        %v1647 = vld [vmem:[#allocation2 + $0x98] sm:$0xf]
        %v1648 = vld [vmem:[#allocation2 + $0x9c] sm:$0xf]
        %v1649 = vld [vmem:[#allocation2 + $0xa0] sm:$0xf]
        %v1650 = vld [vmem:[#allocation2 + $0xa4] sm:$0xf]
        %v1651 = vld [vmem:[#allocation2 + $0xa8] sm:$0xf]
        %v1652 = vld [vmem:[#allocation2 + $0xac] sm:$0xf]
        %v1653 = vld [vmem:[#allocation2 + $0xb0] sm:$0xf]
        %v1654 = vld [vmem:[#allocation2 + $0xb4] sm:$0xf]
        %v1655 = vld [vmem:[#allocation2 + $0xb8] sm:$0xf]
        %v1656 = vld [vmem:[#allocation2 + $0xbc] sm:$0xf]
        %v1673 = vunpack.c.l.b16 %v1641
        %v1674 = vunpack.c.l.b16 %v1642
        %v1675 = vunpack.c.l.b16 %v1643
        %v1676 = vunpack.c.l.b16 %v1644
        %v1677 = vunpack.c.l.b16 %v1645
        %v1678 = vunpack.c.l.b16 %v1646
        %v1679 = vunpack.c.l.b16 %v1647
        %v1680 = vunpack.c.l.b16 %v1648
        %v1681 = vunpack.c.l.b16 %v1649
        %v1682 = vunpack.c.l.b16 %v1650
        %v1683 = vunpack.c.l.b16 %v1651
        %v1684 = vunpack.c.l.b16 %v1652
        %v1685 = vunpack.c.l.b16 %v1653
        %v1686 = vunpack.c.l.b16 %v1654
        %v1687 = vunpack.c.l.b16 %v1655
        %v1688 = vunpack.c.l.b16 %v1656
        %v1689 = vpack.c.b16 %v1674, %v1673
        %v1690 = vpack.c.b16 %v1676, %v1675
        %v1691 = vpack.c.b16 %v1678, %v1677
        %v1692 = vpack.c.b16 %v1680, %v1679
        %v1693 = vpack.c.b16 %v1682, %v1681
        %v1694 = vpack.c.b16 %v1684, %v1683
        %v1695 = vpack.c.b16 %v1686, %v1685
        %v1696 = vpack.c.b16 %v1688, %v1687
        %1705 = vmatprep.subr.bf16.mxu0 0
        %1706 = vmatpush1.bf16.msra.mxu0 %v1696
        %1707 = vmatprep.subr.bf16.mxu0 0
        %1708 = vmatpush1.bf16.msra.mxu0 %v1695
        %1709 = vmatprep.subr.bf16.mxu0 0
        %1710 = vmatpush1.bf16.msra.mxu0 %v1694
        %1711 = vmatprep.subr.bf16.mxu0 0
        %1712 = vmatpush1.bf16.msra.mxu0 %v1693
        %1713 = vmatprep.subr.bf16.mxu0 0
        %1714 = vmatpush1.bf16.msra.mxu0 %v1692
        %1715 = vmatprep.subr.bf16.mxu0 0
        %1716 = vmatpush1.bf16.msra.mxu0 %v1691
        %1717 = vmatprep.subr.bf16.mxu0 0
        %1718 = vmatpush1.bf16.msra.mxu0 %v1690
        %1719 = vmatprep.subr.bf16.mxu0 0
        %1720 = vmatpush1.bf16.msra.mxu0 %v1689
        %1721 = vmatprep.subr.bf16.mxu0 0
        %1722 = vmatpush2.bf16.msra.mxu0 0
        %1723 = vmatprep.subr.bf16.mxu0 0
        %1724 = vmatpush2.bf16.msra.mxu0 0
        %1725 = vmatprep.subr.bf16.mxu0 0
        %1726 = vmatpush2.bf16.msra.mxu0 0
        %1727 = vmatprep.subr.bf16.mxu0 0
        %1728 = vmatpush2.bf16.msra.mxu0 0
        %1729 = vmatprep.subr.bf16.mxu0 0
        %1730 = vmatpush2.bf16.msra.mxu0 0
        %1731 = vmatprep.subr.bf16.mxu0 0
        %1732 = vmatpush2.bf16.msra.mxu0 0
        %1733 = vmatprep.subr.bf16.mxu0 0
        %1734 = vmatpush2.bf16.msra.mxu0 0
        %1735 = vmatprep.subr.bf16.mxu0 0
        %1736 = vmatpush2.bf16.msra.mxu0 0
        %1737 = vmatprep.mubr.bf16.mxu0 0
        %1738 = vmatmul.mubr.bf16.gmra.mxu0 %v1637
        %v1739 = vpop.f32.mrf.mxu0
        %v1740 = vadd.f32 0.0, %v1739
        %v1741 = vpop.f32.mrf.mxu0
        %v1742 = vpop.f32.mrf.mxu0
        %v1743 = vadd.f32 0.0, %v1742
        %v1744 = vpop.f32.mrf.mxu0
        %1745 = vmatprep.mubr.bf16.mxu0 0
        %1746 = vmatmul.mubr.bf16.gmra.mxu0 %v1638
        %v1747 = vpop.f32.mrf.mxu0
        %v1748 = vadd.f32 0.0, %v1747
        %v1749 = vpop.f32.mrf.mxu0
        %v1750 = vpop.f32.mrf.mxu0
        %v1751 = vadd.f32 0.0, %v1750
        %v1752 = vpop.f32.mrf.mxu0
        %1753 = vmatprep.mubr.bf16.mxu0 0
        %1754 = vmatmul.mubr.bf16.gmra.mxu0 %v1639
        %v1755 = vpop.f32.mrf.mxu0
        %v1756 = vadd.f32 0.0, %v1755
        %v1757 = vpop.f32.mrf.mxu0
        %v1758 = vpop.f32.mrf.mxu0
        %v1759 = vadd.f32 0.0, %v1758
        %v1760 = vpop.f32.mrf.mxu0
        %1761 = vmatprep.mubr.bf16.mxu0 0
        %1762 = vmatmul.mubr.bf16.gmra.mxu0 %v1640
        %v1763 = vpop.f32.mrf.mxu0
        %v1764 = vadd.f32 0.0, %v1763
        %v1765 = vpop.f32.mrf.mxu0
        %v1766 = vpop.f32.mrf.mxu0
        %v1767 = vadd.f32 0.0, %v1766
        %v1768 = vpop.f32.mrf.mxu0
        %1769 = vdwg.mxu0
        %v1770 = vadd.f32 %v1472, %v1740
        %v1771 = vadd.f32 %v1475, %v1743
        %v1772 = vadd.f32 %v1480, %v1748
        %v1773 = vadd.f32 %v1483, %v1751
        %v1774 = vadd.f32 %v1488, %v1756
        %v1775 = vadd.f32 %v1491, %v1759
        %v1776 = vadd.f32 %v1496, %v1764
        %v1777 = vadd.f32 %v1499, %v1767
        %v1778 = vrot.slane %v941, 7
        %vm1780 = vsmask.f32 256
        %v1781 = vrot.slane %v951, 7
        %v1782 = vor.u32 %v1781, %v954
        %v1783 = vrot.slane %v959, 7
        %v1784 = vor.u32 %v1783, %v962
        %v1785 = vsel %vm1780, %v1781, %v1784
        %v1786 = vrot.slane %v968, 7
        %v1787 = vor.u32 %v1786, %v971
        %v1788 = vsel %vm1780, %v1783, %v1787
        %v1789 = vor.u32 %v1778, %v944
        %v1790 = vsel %vm1780, %v1786, %v1789
        %vm1795 = vcmask 1040384
        %vm1796 = vmand %vm1795, %vm1780
        %v1797 = vsel %vm1796, %v1778, %v1782
        %1798 = vset.pattern.permute.xlu0 3
        %1799 = vperm.xlu0 %1798, %v932
        %v1800 = vpop.permute.xlu0 %1799
        %v1803 = vunpack.c.l.s4 839922192
        %v1804 = vunpack.c.0.s8 %v1803
        %v1805 = vlaneseq
        %v1806 = vshrl.u32 %v1805, 7
        %v1807 = vsub.s32 %v1804, %v1806
        %v1808 = vrot.slane %v1800, %v1807
        %1809 = vset.pattern.permute.xlu0 3
        %1810 = vperm.xlu0 %1809, %v933
        %v1811 = vpop.permute.xlu0 %1810
        %v1814 = vunpack.c.l.s4 839922192
        %v1815 = vunpack.c.0.s8 %v1814
        %v1816 = vlaneseq
        %v1817 = vshrl.u32 %v1816, 7
        %v1818 = vsub.s32 %v1815, %v1817
        %v1819 = vrot.slane %v1811, %v1818
        %1820 = vset.pattern.permute.xlu0 3
        %1821 = vperm.xlu0 %1820, %v934
        %v1822 = vpop.permute.xlu0 %1821
        %v1825 = vunpack.c.l.s4 839922192
        %v1826 = vunpack.c.0.s8 %v1825
        %v1827 = vlaneseq
        %v1828 = vshrl.u32 %v1827, 7
        %v1829 = vsub.s32 %v1826, %v1828
        %v1830 = vrot.slane %v1822, %v1829
        %1831 = vset.pattern.permute.xlu0 3
        %1832 = vperm.xlu0 %1831, %v935
        %v1833 = vpop.permute.xlu0 %1832
        %v1836 = vunpack.c.l.s4 839922192
        %v1837 = vunpack.c.0.s8 %v1836
        %v1838 = vlaneseq
        %v1839 = vshrl.u32 %v1838, 7
        %v1840 = vsub.s32 %v1837, %v1839
        %v1841 = vrot.slane %v1833, %v1840
        %1842 = vset.pattern.permute.xlu0 3
        %1843 = vperm.xlu0 %1842, %v936
        %v1844 = vpop.permute.xlu0 %1843
        %v1847 = vunpack.c.l.s4 839922192
        %v1848 = vunpack.c.0.s8 %v1847
        %v1849 = vlaneseq
        %v1850 = vshrl.u32 %v1849, 7
        %v1851 = vsub.s32 %v1848, %v1850
        %v1852 = vrot.slane %v1844, %v1851
        %1853 = vset.pattern.permute.xlu0 3
        %1854 = vperm.xlu0 %1853, %v937
        %v1855 = vpop.permute.xlu0 %1854
        %v1858 = vunpack.c.l.s4 839922192
        %v1859 = vunpack.c.0.s8 %v1858
        %v1860 = vlaneseq
        %v1861 = vshrl.u32 %v1860, 7
        %v1862 = vsub.s32 %v1859, %v1861
        %v1863 = vrot.slane %v1855, %v1862
        %1864 = vset.pattern.permute.xlu0 3
        %1865 = vperm.xlu0 %1864, %v938
        %v1866 = vpop.permute.xlu0 %1865
        %v1869 = vunpack.c.l.s4 839922192
        %v1870 = vunpack.c.0.s8 %v1869
        %v1871 = vlaneseq
        %v1872 = vshrl.u32 %v1871, 7
        %v1873 = vsub.s32 %v1870, %v1872
        %v1874 = vrot.slane %v1866, %v1873
        %1875 = vset.pattern.permute.xlu0 3
        %1876 = vperm.xlu0 %1875, %v939
        %v1877 = vpop.permute.xlu0 %1876
        %v1880 = vunpack.c.l.s4 839922192
        %v1881 = vunpack.c.0.s8 %v1880
        %v1882 = vlaneseq
        %v1883 = vshrl.u32 %v1882, 7
        %v1884 = vsub.s32 %v1881, %v1883
        %v1885 = vrot.slane %v1877, %v1884
        %v1894 = vunpack.c.l.b16 %v1808
        %v1895 = vunpack.c.l.b16 %v1819
        %v1896 = vunpack.c.l.b16 %v1830
        %v1897 = vunpack.c.l.b16 %v1841
        %v1898 = vunpack.c.l.b16 %v1852
        %v1899 = vunpack.c.l.b16 %v1863
        %v1900 = vunpack.c.l.b16 %v1874
        %v1901 = vunpack.c.l.b16 %v1885
        %v1902 = vpack.c.b16 %v1895, %v1894
        %v1903 = vpack.c.b16 %v1897, %v1896
        %v1904 = vpack.c.b16 %v1899, %v1898
        %v1905 = vpack.c.b16 %v1901, %v1900
        %v1910 = vmul.bf16 %v1797, %v1902
        %v1911 = vmul.bf16 %v1785, %v1903
        %v1912 = vmul.bf16 %v1788, %v1904
        %v1913 = vmul.bf16 %v1790, %v1905
        %v1914 = vld [vmem:[#allocation2 + $0xc0] sm:$0xf]
        %v1915 = vld [vmem:[#allocation2 + $0xc4] sm:$0xf]
        %v1916 = vld [vmem:[#allocation2 + $0xc8] sm:$0xf]
        %v1917 = vld [vmem:[#allocation2 + $0xcc] sm:$0xf]
        %v1918 = vld [vmem:[#allocation2 + $0xd0] sm:$0xf]
        %v1919 = vld [vmem:[#allocation2 + $0xd4] sm:$0xf]
        %v1920 = vld [vmem:[#allocation2 + $0xd8] sm:$0xf]
        %v1921 = vld [vmem:[#allocation2 + $0xdc] sm:$0xf]
        %v1922 = vld [vmem:[#allocation2 + $0xe0] sm:$0xf]
        %v1923 = vld [vmem:[#allocation2 + $0xe4] sm:$0xf]
        %v1924 = vld [vmem:[#allocation2 + $0xe8] sm:$0xf]
        %v1925 = vld [vmem:[#allocation2 + $0xec] sm:$0xf]
        %v1926 = vld [vmem:[#allocation2 + $0xf0] sm:$0xf]
        %v1927 = vld [vmem:[#allocation2 + $0xf4] sm:$0xf]
        %v1928 = vld [vmem:[#allocation2 + $0xf8] sm:$0xf]
        %v1929 = vld [vmem:[#allocation2 + $0xfc] sm:$0xf]
        %v1946 = vunpack.c.l.b16 %v1914
        %v1947 = vunpack.c.l.b16 %v1915
        %v1948 = vunpack.c.l.b16 %v1916
        %v1949 = vunpack.c.l.b16 %v1917
        %v1950 = vunpack.c.l.b16 %v1918
        %v1951 = vunpack.c.l.b16 %v1919
        %v1952 = vunpack.c.l.b16 %v1920
        %v1953 = vunpack.c.l.b16 %v1921
        %v1954 = vunpack.c.l.b16 %v1922
        %v1955 = vunpack.c.l.b16 %v1923
        %v1956 = vunpack.c.l.b16 %v1924
        %v1957 = vunpack.c.l.b16 %v1925
        %v1958 = vunpack.c.l.b16 %v1926
        %v1959 = vunpack.c.l.b16 %v1927
        %v1960 = vunpack.c.l.b16 %v1928
        %v1961 = vunpack.c.l.b16 %v1929
        %v1962 = vpack.c.b16 %v1947, %v1946
        %v1963 = vpack.c.b16 %v1949, %v1948
        %v1964 = vpack.c.b16 %v1951, %v1950
        %v1965 = vpack.c.b16 %v1953, %v1952
        %v1966 = vpack.c.b16 %v1955, %v1954
        %v1967 = vpack.c.b16 %v1957, %v1956
        %v1968 = vpack.c.b16 %v1959, %v1958
        %v1969 = vpack.c.b16 %v1961, %v1960
        %1978 = vmatprep.subr.bf16.mxu0 0
        %1979 = vmatpush1.bf16.msra.mxu0 %v1969
        %1980 = vmatprep.subr.bf16.mxu0 0
        %1981 = vmatpush1.bf16.msra.mxu0 %v1968
        %1982 = vmatprep.subr.bf16.mxu0 0
        %1983 = vmatpush1.bf16.msra.mxu0 %v1967
        %1984 = vmatprep.subr.bf16.mxu0 0
        %1985 = vmatpush1.bf16.msra.mxu0 %v1966
        %1986 = vmatprep.subr.bf16.mxu0 0
        %1987 = vmatpush1.bf16.msra.mxu0 %v1965
        %1988 = vmatprep.subr.bf16.mxu0 0
        %1989 = vmatpush1.bf16.msra.mxu0 %v1964
        %1990 = vmatprep.subr.bf16.mxu0 0
        %1991 = vmatpush1.bf16.msra.mxu0 %v1963
        %1992 = vmatprep.subr.bf16.mxu0 0
        %1993 = vmatpush1.bf16.msra.mxu0 %v1962
        %1994 = vmatprep.subr.bf16.mxu0 0
        %1995 = vmatpush2.bf16.msra.mxu0 0
        %1996 = vmatprep.subr.bf16.mxu0 0
        %1997 = vmatpush2.bf16.msra.mxu0 0
        %1998 = vmatprep.subr.bf16.mxu0 0
        %1999 = vmatpush2.bf16.msra.mxu0 0
        %2000 = vmatprep.subr.bf16.mxu0 0
        %2001 = vmatpush2.bf16.msra.mxu0 0
        %2002 = vmatprep.subr.bf16.mxu0 0
        %2003 = vmatpush2.bf16.msra.mxu0 0
        %2004 = vmatprep.subr.bf16.mxu0 0
        %2005 = vmatpush2.bf16.msra.mxu0 0
        %2006 = vmatprep.subr.bf16.mxu0 0
        %2007 = vmatpush2.bf16.msra.mxu0 0
        %2008 = vmatprep.subr.bf16.mxu0 0
        %2009 = vmatpush2.bf16.msra.mxu0 0
        %2010 = vmatprep.mubr.bf16.mxu0 0
        %2011 = vmatmul.mubr.bf16.gmra.mxu0 %v1910
        %v2012 = vpop.f32.mrf.mxu0
        %v2013 = vadd.f32 0.0, %v2012
        %v2014 = vpop.f32.mrf.mxu0
        %v2015 = vpop.f32.mrf.mxu0
        %v2016 = vadd.f32 0.0, %v2015
        %v2017 = vpop.f32.mrf.mxu0
        %2018 = vmatprep.mubr.bf16.mxu0 0
        %2019 = vmatmul.mubr.bf16.gmra.mxu0 %v1911
        %v2020 = vpop.f32.mrf.mxu0
        %v2021 = vadd.f32 0.0, %v2020
        %v2022 = vpop.f32.mrf.mxu0
        %v2023 = vpop.f32.mrf.mxu0
        %v2024 = vadd.f32 0.0, %v2023
        %v2025 = vpop.f32.mrf.mxu0
        %2026 = vmatprep.mubr.bf16.mxu0 0
        %2027 = vmatmul.mubr.bf16.gmra.mxu0 %v1912
        %v2028 = vpop.f32.mrf.mxu0
        %v2029 = vadd.f32 0.0, %v2028
        %v2030 = vpop.f32.mrf.mxu0
        %v2031 = vpop.f32.mrf.mxu0
        %v2032 = vadd.f32 0.0, %v2031
        %v2033 = vpop.f32.mrf.mxu0
        %2034 = vmatprep.mubr.bf16.mxu0 0
        %2035 = vmatmul.mubr.bf16.gmra.mxu0 %v1913
        %v2036 = vpop.f32.mrf.mxu0
        %v2037 = vadd.f32 0.0, %v2036
        %v2038 = vpop.f32.mrf.mxu0
        %v2039 = vpop.f32.mrf.mxu0
        %v2040 = vadd.f32 0.0, %v2039
        %v2041 = vpop.f32.mrf.mxu0
        %2042 = vdwg.mxu0
        %v2043 = vadd.f32 %v1770, %v2013
        %v2044 = vadd.f32 %v1771, %v2016
        %v2045 = vadd.f32 %v1772, %v2021
        %v2046 = vadd.f32 %v1773, %v2024
        %v2047 = vadd.f32 %v1774, %v2029
        %v2048 = vadd.f32 %v1775, %v2032
        %v2049 = vadd.f32 %v1776, %v2037
        %v2050 = vadd.f32 %v1777, %v2040
        %v2051 = vld [vmem:[#allocation2 + $0x100] sm:$0xf]
        %v2052 = vld [vmem:[#allocation2 + $0x104] sm:$0xf]
        %v2053 = vld [vmem:[#allocation2 + $0x108] sm:$0xf]
        %v2054 = vld [vmem:[#allocation2 + $0x10c] sm:$0xf]
        %v2055 = vld [vmem:[#allocation2 + $0x110] sm:$0xf]
        %v2056 = vld [vmem:[#allocation2 + $0x114] sm:$0xf]
        %v2057 = vld [vmem:[#allocation2 + $0x118] sm:$0xf]
        %v2058 = vld [vmem:[#allocation2 + $0x11c] sm:$0xf]
        %v2059 = vld [vmem:[#allocation2 + $0x120] sm:$0xf]
        %v2060 = vld [vmem:[#allocation2 + $0x124] sm:$0xf]
        %v2061 = vld [vmem:[#allocation2 + $0x128] sm:$0xf]
        %v2062 = vld [vmem:[#allocation2 + $0x12c] sm:$0xf]
        %v2063 = vld [vmem:[#allocation2 + $0x130] sm:$0xf]
        %v2064 = vld [vmem:[#allocation2 + $0x134] sm:$0xf]
        %v2065 = vld [vmem:[#allocation2 + $0x138] sm:$0xf]
        %v2066 = vld [vmem:[#allocation2 + $0x13c] sm:$0xf]
        %v2083 = vunpack.c.l.b16 %v2051
        %v2084 = vunpack.c.l.b16 %v2052
        %v2085 = vunpack.c.l.b16 %v2053
        %v2086 = vunpack.c.l.b16 %v2054
        %v2087 = vunpack.c.l.b16 %v2055
        %v2088 = vunpack.c.l.b16 %v2056
        %v2089 = vunpack.c.l.b16 %v2057
        %v2090 = vunpack.c.l.b16 %v2058
        %v2091 = vunpack.c.l.b16 %v2059
        %v2092 = vunpack.c.l.b16 %v2060
        %v2093 = vunpack.c.l.b16 %v2061
        %v2094 = vunpack.c.l.b16 %v2062
        %v2095 = vunpack.c.l.b16 %v2063
        %v2096 = vunpack.c.l.b16 %v2064
        %v2097 = vunpack.c.l.b16 %v2065
        %v2098 = vunpack.c.l.b16 %v2066
        %v2099 = vpack.c.b16 %v2084, %v2083
        %v2100 = vpack.c.b16 %v2086, %v2085
        %v2101 = vpack.c.b16 %v2088, %v2087
        %v2102 = vpack.c.b16 %v2090, %v2089
        %v2103 = vpack.c.b16 %v2092, %v2091
        %v2104 = vpack.c.b16 %v2094, %v2093
        %v2105 = vpack.c.b16 %v2096, %v2095
        %v2106 = vpack.c.b16 %v2098, %v2097
        %2115 = vmatprep.subr.bf16.mxu0 0
        %2116 = vmatpush1.bf16.msra.mxu0 %v2106
        %2117 = vmatprep.subr.bf16.mxu0 0
        %2118 = vmatpush1.bf16.msra.mxu0 %v2105
        %2119 = vmatprep.subr.bf16.mxu0 0
        %2120 = vmatpush1.bf16.msra.mxu0 %v2104
        %2121 = vmatprep.subr.bf16.mxu0 0
        %2122 = vmatpush1.bf16.msra.mxu0 %v2103
        %2123 = vmatprep.subr.bf16.mxu0 0
        %2124 = vmatpush1.bf16.msra.mxu0 %v2102
        %2125 = vmatprep.subr.bf16.mxu0 0
        %2126 = vmatpush1.bf16.msra.mxu0 %v2101
        %2127 = vmatprep.subr.bf16.mxu0 0
        %2128 = vmatpush1.bf16.msra.mxu0 %v2100
        %2129 = vmatprep.subr.bf16.mxu0 0
        %2130 = vmatpush1.bf16.msra.mxu0 %v2099
        %2131 = vmatprep.subr.bf16.mxu0 0
        %2132 = vmatpush2.bf16.msra.mxu0 0
        %2133 = vmatprep.subr.bf16.mxu0 0
        %2134 = vmatpush2.bf16.msra.mxu0 0
        %2135 = vmatprep.subr.bf16.mxu0 0
        %2136 = vmatpush2.bf16.msra.mxu0 0
        %2137 = vmatprep.subr.bf16.mxu0 0
        %2138 = vmatpush2.bf16.msra.mxu0 0
        %2139 = vmatprep.subr.bf16.mxu0 0
        %2140 = vmatpush2.bf16.msra.mxu0 0
        %2141 = vmatprep.subr.bf16.mxu0 0
        %2142 = vmatpush2.bf16.msra.mxu0 0
        %2143 = vmatprep.subr.bf16.mxu0 0
        %2144 = vmatpush2.bf16.msra.mxu0 0
        %2145 = vmatprep.subr.bf16.mxu0 0
        %2146 = vmatpush2.bf16.msra.mxu0 0
        %2147 = vmatprep.mubr.bf16.mxu0 0
        %2148 = vmatmul.mubr.bf16.gmra.mxu0 %v928
        %v2149 = vpop.f32.mrf.mxu0
        %v2150 = vadd.f32 0.0, %v2149
        %v2151 = vpop.f32.mrf.mxu0
        %v2152 = vpop.f32.mrf.mxu0
        %v2153 = vadd.f32 0.0, %v2152
        %v2154 = vpop.f32.mrf.mxu0
        %2155 = vmatprep.mubr.bf16.mxu0 0
        %2156 = vmatmul.mubr.bf16.gmra.mxu0 %v929
        %v2157 = vpop.f32.mrf.mxu0
        %v2158 = vadd.f32 0.0, %v2157
        %v2159 = vpop.f32.mrf.mxu0
        %v2160 = vpop.f32.mrf.mxu0
        %v2161 = vadd.f32 0.0, %v2160
        %v2162 = vpop.f32.mrf.mxu0
        %2163 = vmatprep.mubr.bf16.mxu0 0
        %2164 = vmatmul.mubr.bf16.gmra.mxu0 %v930
        %v2165 = vpop.f32.mrf.mxu0
        %v2166 = vadd.f32 0.0, %v2165
        %v2167 = vpop.f32.mrf.mxu0
        %v2168 = vpop.f32.mrf.mxu0
        %v2169 = vadd.f32 0.0, %v2168
        %v2170 = vpop.f32.mrf.mxu0
        %2171 = vmatprep.mubr.bf16.mxu0 0
        %2172 = vmatmul.mubr.bf16.gmra.mxu0 %v931
        %v2173 = vpop.f32.mrf.mxu0
        %v2174 = vadd.f32 0.0, %v2173
        %v2175 = vpop.f32.mrf.mxu0
        %v2176 = vpop.f32.mrf.mxu0
        %v2177 = vadd.f32 0.0, %v2176
        %v2178 = vpop.f32.mrf.mxu0
        %2179 = vdwg.mxu0
        %v2180 = vadd.f32 %v2043, %v2150
        %v2181 = vadd.f32 %v2044, %v2153
        %v2182 = vadd.f32 %v2045, %v2158
        %v2183 = vadd.f32 %v2046, %v2161
        %v2184 = vadd.f32 %v2047, %v2166
        %v2185 = vadd.f32 %v2048, %v2169
        %v2186 = vadd.f32 %v2049, %v2174
        %v2187 = vadd.f32 %v2050, %v2177
        %vm2188 = vsmask.f32 7424
        %v2189 = vrot.slane %v954, 1
        %v2190 = vor.u32 %v951, %v2189
        %v2191 = vrot.slane %v962, 1
        %v2192 = vsel %vm2188, %v2190, %v2191
        %v2193 = vor.u32 %v959, %v2191
        %v2194 = vrot.slane %v971, 1
        %v2195 = vsel %vm2188, %v2193, %v2194
        %v2196 = vor.u32 %v968, %v2194
        %v2197 = vrot.slane %v944, 1
        %v2198 = vsel %vm2188, %v2196, %v2197
        %v2199 = vor.u32 %v941, %v2197
        %vm2205 = vcmask 1047552
        %vm2206 = vmand %vm2205, %vm2188
        %v2207 = vsel %vm2206, %v2199, %v2189
        %2208 = vset.pattern.permute.xlu0 5
        %2209 = vperm.xlu0 %2208, %v932
        %v2210 = vpop.permute.xlu0 %2209
        %v2213 = vunpack.c.l.s4 839922192
        %v2214 = vunpack.c.0.s8 %v2213
        %v2215 = vlaneseq
        %v2216 = vshrl.u32 %v2215, 7
        %v2217 = vsub.s32 %v2214, %v2216
        %v2218 = vrot.slane %v2210, %v2217
        %2219 = vset.pattern.permute.xlu0 5
        %2220 = vperm.xlu0 %2219, %v933
        %v2221 = vpop.permute.xlu0 %2220
        %v2224 = vunpack.c.l.s4 839922192
        %v2225 = vunpack.c.0.s8 %v2224
        %v2226 = vlaneseq
        %v2227 = vshrl.u32 %v2226, 7
        %v2228 = vsub.s32 %v2225, %v2227
        %v2229 = vrot.slane %v2221, %v2228
        %2230 = vset.pattern.permute.xlu0 5
        %2231 = vperm.xlu0 %2230, %v934
        %v2232 = vpop.permute.xlu0 %2231
        %v2235 = vunpack.c.l.s4 839922192
        %v2236 = vunpack.c.0.s8 %v2235
        %v2237 = vlaneseq
        %v2238 = vshrl.u32 %v2237, 7
        %v2239 = vsub.s32 %v2236, %v2238
        %v2240 = vrot.slane %v2232, %v2239
        %2241 = vset.pattern.permute.xlu0 5
        %2242 = vperm.xlu0 %2241, %v935
        %v2243 = vpop.permute.xlu0 %2242
        %v2246 = vunpack.c.l.s4 839922192
        %v2247 = vunpack.c.0.s8 %v2246
        %v2248 = vlaneseq
        %v2249 = vshrl.u32 %v2248, 7
        %v2250 = vsub.s32 %v2247, %v2249
        %v2251 = vrot.slane %v2243, %v2250
        %2252 = vset.pattern.permute.xlu0 5
        %2253 = vperm.xlu0 %2252, %v936
        %v2254 = vpop.permute.xlu0 %2253
        %v2257 = vunpack.c.l.s4 839922192
        %v2258 = vunpack.c.0.s8 %v2257
        %v2259 = vlaneseq
        %v2260 = vshrl.u32 %v2259, 7
        %v2261 = vsub.s32 %v2258, %v2260
        %v2262 = vrot.slane %v2254, %v2261
        %2263 = vset.pattern.permute.xlu0 5
        %2264 = vperm.xlu0 %2263, %v937
        %v2265 = vpop.permute.xlu0 %2264
        %v2268 = vunpack.c.l.s4 839922192
        %v2269 = vunpack.c.0.s8 %v2268
        %v2270 = vlaneseq
        %v2271 = vshrl.u32 %v2270, 7
        %v2272 = vsub.s32 %v2269, %v2271
        %v2273 = vrot.slane %v2265, %v2272
        %2274 = vset.pattern.permute.xlu0 5
        %2275 = vperm.xlu0 %2274, %v938
        %v2276 = vpop.permute.xlu0 %2275
        %v2279 = vunpack.c.l.s4 839922192
        %v2280 = vunpack.c.0.s8 %v2279
        %v2281 = vlaneseq
        %v2282 = vshrl.u32 %v2281, 7
        %v2283 = vsub.s32 %v2280, %v2282
        %v2284 = vrot.slane %v2276, %v2283
        %2285 = vset.pattern.permute.xlu0 5
        %2286 = vperm.xlu0 %2285, %v939
        %v2287 = vpop.permute.xlu0 %2286
        %v2290 = vunpack.c.l.s4 839922192
        %v2291 = vunpack.c.0.s8 %v2290
        %v2292 = vlaneseq
        %v2293 = vshrl.u32 %v2292, 7
        %v2294 = vsub.s32 %v2291, %v2293
        %v2295 = vrot.slane %v2287, %v2294
        %v2304 = vunpack.c.l.b16 %v2218
        %v2305 = vunpack.c.l.b16 %v2229
        %v2306 = vunpack.c.l.b16 %v2240
        %v2307 = vunpack.c.l.b16 %v2251
        %v2308 = vunpack.c.l.b16 %v2262
        %v2309 = vunpack.c.l.b16 %v2273
        %v2310 = vunpack.c.l.b16 %v2284
        %v2311 = vunpack.c.l.b16 %v2295
        %v2312 = vpack.c.b16 %v2305, %v2304
        %v2313 = vpack.c.b16 %v2307, %v2306
        %v2314 = vpack.c.b16 %v2309, %v2308
        %v2315 = vpack.c.b16 %v2311, %v2310
        %v2320 = vmul.bf16 %v2192, %v2312
        %v2321 = vmul.bf16 %v2195, %v2313
        %v2322 = vmul.bf16 %v2198, %v2314
        %v2323 = vmul.bf16 %v2207, %v2315
        %v2324 = vld [vmem:[#allocation2 + $0x140] sm:$0xf]
        %v2325 = vld [vmem:[#allocation2 + $0x144] sm:$0xf]
        %v2326 = vld [vmem:[#allocation2 + $0x148] sm:$0xf]
        %v2327 = vld [vmem:[#allocation2 + $0x14c] sm:$0xf]
        %v2328 = vld [vmem:[#allocation2 + $0x150] sm:$0xf]
        %v2329 = vld [vmem:[#allocation2 + $0x154] sm:$0xf]
        %v2330 = vld [vmem:[#allocation2 + $0x158] sm:$0xf]
        %v2331 = vld [vmem:[#allocation2 + $0x15c] sm:$0xf]
        %v2332 = vld [vmem:[#allocation2 + $0x160] sm:$0xf]
        %v2333 = vld [vmem:[#allocation2 + $0x164] sm:$0xf]
        %v2334 = vld [vmem:[#allocation2 + $0x168] sm:$0xf]
        %v2335 = vld [vmem:[#allocation2 + $0x16c] sm:$0xf]
        %v2336 = vld [vmem:[#allocation2 + $0x170] sm:$0xf]
        %v2337 = vld [vmem:[#allocation2 + $0x174] sm:$0xf]
        %v2338 = vld [vmem:[#allocation2 + $0x178] sm:$0xf]
        %v2339 = vld [vmem:[#allocation2 + $0x17c] sm:$0xf]
        %v2356 = vunpack.c.l.b16 %v2324
        %v2357 = vunpack.c.l.b16 %v2325
        %v2358 = vunpack.c.l.b16 %v2326
        %v2359 = vunpack.c.l.b16 %v2327
        %v2360 = vunpack.c.l.b16 %v2328
        %v2361 = vunpack.c.l.b16 %v2329
        %v2362 = vunpack.c.l.b16 %v2330
        %v2363 = vunpack.c.l.b16 %v2331
        %v2364 = vunpack.c.l.b16 %v2332
        %v2365 = vunpack.c.l.b16 %v2333
        %v2366 = vunpack.c.l.b16 %v2334
        %v2367 = vunpack.c.l.b16 %v2335
        %v2368 = vunpack.c.l.b16 %v2336
        %v2369 = vunpack.c.l.b16 %v2337
        %v2370 = vunpack.c.l.b16 %v2338
        %v2371 = vunpack.c.l.b16 %v2339
        %v2372 = vpack.c.b16 %v2357, %v2356
        %v2373 = vpack.c.b16 %v2359, %v2358
        %v2374 = vpack.c.b16 %v2361, %v2360
        %v2375 = vpack.c.b16 %v2363, %v2362
        %v2376 = vpack.c.b16 %v2365, %v2364
        %v2377 = vpack.c.b16 %v2367, %v2366
        %v2378 = vpack.c.b16 %v2369, %v2368
        %v2379 = vpack.c.b16 %v2371, %v2370
        %2388 = vmatprep.subr.bf16.mxu0 0
        %2389 = vmatpush1.bf16.msra.mxu0 %v2379
        %2390 = vmatprep.subr.bf16.mxu0 0
        %2391 = vmatpush1.bf16.msra.mxu0 %v2378
        %2392 = vmatprep.subr.bf16.mxu0 0
        %2393 = vmatpush1.bf16.msra.mxu0 %v2377
        %2394 = vmatprep.subr.bf16.mxu0 0
        %2395 = vmatpush1.bf16.msra.mxu0 %v2376
        %2396 = vmatprep.subr.bf16.mxu0 0
        %2397 = vmatpush1.bf16.msra.mxu0 %v2375
        %2398 = vmatprep.subr.bf16.mxu0 0
        %2399 = vmatpush1.bf16.msra.mxu0 %v2374
        %2400 = vmatprep.subr.bf16.mxu0 0
        %2401 = vmatpush1.bf16.msra.mxu0 %v2373
        %2402 = vmatprep.subr.bf16.mxu0 0
        %2403 = vmatpush1.bf16.msra.mxu0 %v2372
        %2404 = vmatprep.subr.bf16.mxu0 0
        %2405 = vmatpush2.bf16.msra.mxu0 0
        %2406 = vmatprep.subr.bf16.mxu0 0
        %2407 = vmatpush2.bf16.msra.mxu0 0
        %2408 = vmatprep.subr.bf16.mxu0 0
        %2409 = vmatpush2.bf16.msra.mxu0 0
        %2410 = vmatprep.subr.bf16.mxu0 0
        %2411 = vmatpush2.bf16.msra.mxu0 0
        %2412 = vmatprep.subr.bf16.mxu0 0
        %2413 = vmatpush2.bf16.msra.mxu0 0
        %2414 = vmatprep.subr.bf16.mxu0 0
        %2415 = vmatpush2.bf16.msra.mxu0 0
        %2416 = vmatprep.subr.bf16.mxu0 0
        %2417 = vmatpush2.bf16.msra.mxu0 0
        %2418 = vmatprep.subr.bf16.mxu0 0
        %2419 = vmatpush2.bf16.msra.mxu0 0
        %2420 = vmatprep.mubr.bf16.mxu0 0
        %2421 = vmatmul.mubr.bf16.gmra.mxu0 %v2320
        %v2422 = vpop.f32.mrf.mxu0
        %v2423 = vadd.f32 0.0, %v2422
        %v2424 = vpop.f32.mrf.mxu0
        %v2425 = vpop.f32.mrf.mxu0
        %v2426 = vadd.f32 0.0, %v2425
        %v2427 = vpop.f32.mrf.mxu0
        %2428 = vmatprep.mubr.bf16.mxu0 0
        %2429 = vmatmul.mubr.bf16.gmra.mxu0 %v2321
        %v2430 = vpop.f32.mrf.mxu0
        %v2431 = vadd.f32 0.0, %v2430
        %v2432 = vpop.f32.mrf.mxu0
        %v2433 = vpop.f32.mrf.mxu0
        %v2434 = vadd.f32 0.0, %v2433
        %v2435 = vpop.f32.mrf.mxu0
        %2436 = vmatprep.mubr.bf16.mxu0 0
        %2437 = vmatmul.mubr.bf16.gmra.mxu0 %v2322
        %v2438 = vpop.f32.mrf.mxu0
        %v2439 = vadd.f32 0.0, %v2438
        %v2440 = vpop.f32.mrf.mxu0
        %v2441 = vpop.f32.mrf.mxu0
        %v2442 = vadd.f32 0.0, %v2441
        %v2443 = vpop.f32.mrf.mxu0
        %2444 = vmatprep.mubr.bf16.mxu0 0
        %2445 = vmatmul.mubr.bf16.gmra.mxu0 %v2323
        %v2446 = vpop.f32.mrf.mxu0
        %v2447 = vadd.f32 0.0, %v2446
        %v2448 = vpop.f32.mrf.mxu0
        %v2449 = vpop.f32.mrf.mxu0
        %v2450 = vadd.f32 0.0, %v2449
        %v2451 = vpop.f32.mrf.mxu0
        %2452 = vdwg.mxu0
        %v2453 = vadd.f32 %v2180, %v2423
        %v2454 = vadd.f32 %v2181, %v2426
        %v2455 = vadd.f32 %v2182, %v2431
        %v2456 = vadd.f32 %v2183, %v2434
        %v2457 = vadd.f32 %v2184, %v2439
        %v2458 = vadd.f32 %v2185, %v2442
        %v2459 = vadd.f32 %v2186, %v2447
        %v2460 = vadd.f32 %v2187, %v2450
        %2461 = vset.pattern.permute.xlu0 6
        %2462 = vperm.xlu0 %2461, %v932
        %v2463 = vpop.permute.xlu0 %2462
        %v2466 = vunpack.c.l.s4 839922192
        %v2467 = vunpack.c.0.s8 %v2466
        %v2468 = vlaneseq
        %v2469 = vshrl.u32 %v2468, 7
        %v2470 = vsub.s32 %v2467, %v2469
        %v2471 = vrot.slane %v2463, %v2470
        %2472 = vset.pattern.permute.xlu0 6
        %2473 = vperm.xlu0 %2472, %v933
        %v2474 = vpop.permute.xlu0 %2473
        %v2477 = vunpack.c.l.s4 839922192
        %v2478 = vunpack.c.0.s8 %v2477
        %v2479 = vlaneseq
        %v2480 = vshrl.u32 %v2479, 7
        %v2481 = vsub.s32 %v2478, %v2480
        %v2482 = vrot.slane %v2474, %v2481
        %2483 = vset.pattern.permute.xlu0 6
        %2484 = vperm.xlu0 %2483, %v934
        %v2485 = vpop.permute.xlu0 %2484
        %v2488 = vunpack.c.l.s4 839922192
        %v2489 = vunpack.c.0.s8 %v2488
        %v2490 = vlaneseq
        %v2491 = vshrl.u32 %v2490, 7
        %v2492 = vsub.s32 %v2489, %v2491
        %v2493 = vrot.slane %v2485, %v2492
        %2494 = vset.pattern.permute.xlu0 6
        %2495 = vperm.xlu0 %2494, %v935
        %v2496 = vpop.permute.xlu0 %2495
        %v2499 = vunpack.c.l.s4 839922192
        %v2500 = vunpack.c.0.s8 %v2499
        %v2501 = vlaneseq
        %v2502 = vshrl.u32 %v2501, 7
        %v2503 = vsub.s32 %v2500, %v2502
        %v2504 = vrot.slane %v2496, %v2503
        %2505 = vset.pattern.permute.xlu0 6
        %2506 = vperm.xlu0 %2505, %v936
        %v2507 = vpop.permute.xlu0 %2506
        %v2510 = vunpack.c.l.s4 839922192
        %v2511 = vunpack.c.0.s8 %v2510
        %v2512 = vlaneseq
        %v2513 = vshrl.u32 %v2512, 7
        %v2514 = vsub.s32 %v2511, %v2513
        %v2515 = vrot.slane %v2507, %v2514
        %2516 = vset.pattern.permute.xlu0 6
        %2517 = vperm.xlu0 %2516, %v937
        %v2518 = vpop.permute.xlu0 %2517
        %v2521 = vunpack.c.l.s4 839922192
        %v2522 = vunpack.c.0.s8 %v2521
        %v2523 = vlaneseq
        %v2524 = vshrl.u32 %v2523, 7
        %v2525 = vsub.s32 %v2522, %v2524
        %v2526 = vrot.slane %v2518, %v2525
        %2527 = vset.pattern.permute.xlu0 6
        %2528 = vperm.xlu0 %2527, %v938
        %v2529 = vpop.permute.xlu0 %2528
        %v2532 = vunpack.c.l.s4 839922192
        %v2533 = vunpack.c.0.s8 %v2532
        %v2534 = vlaneseq
        %v2535 = vshrl.u32 %v2534, 7
        %v2536 = vsub.s32 %v2533, %v2535
        %v2537 = vrot.slane %v2529, %v2536
        %2538 = vset.pattern.permute.xlu0 6
        %2539 = vperm.xlu0 %2538, %v939
        %v2540 = vpop.permute.xlu0 %2539
        %v2543 = vunpack.c.l.s4 839922192
        %v2544 = vunpack.c.0.s8 %v2543
        %v2545 = vlaneseq
        %v2546 = vshrl.u32 %v2545, 7
        %v2547 = vsub.s32 %v2544, %v2546
        %v2548 = vrot.slane %v2540, %v2547
        %v2557 = vunpack.c.l.b16 %v2471
        %v2558 = vunpack.c.l.b16 %v2482
        %v2559 = vunpack.c.l.b16 %v2493
        %v2560 = vunpack.c.l.b16 %v2504
        %v2561 = vunpack.c.l.b16 %v2515
        %v2562 = vunpack.c.l.b16 %v2526
        %v2563 = vunpack.c.l.b16 %v2537
        %v2564 = vunpack.c.l.b16 %v2548
        %v2565 = vpack.c.b16 %v2558, %v2557
        %v2566 = vpack.c.b16 %v2560, %v2559
        %v2567 = vpack.c.b16 %v2562, %v2561
        %v2568 = vpack.c.b16 %v2564, %v2563
        %v2573 = vmul.bf16 %v966, %v2565
        %v2574 = vmul.bf16 %v975, %v2566
        %v2575 = vmul.bf16 %v976, %v2567
        %v2576 = vmul.bf16 %v983, %v2568
        %v2577 = vld [vmem:[#allocation2 + $0x180] sm:$0xf]
        %v2578 = vld [vmem:[#allocation2 + $0x184] sm:$0xf]
        %v2579 = vld [vmem:[#allocation2 + $0x188] sm:$0xf]
        %v2580 = vld [vmem:[#allocation2 + $0x18c] sm:$0xf]
        %v2581 = vld [vmem:[#allocation2 + $0x190] sm:$0xf]
        %v2582 = vld [vmem:[#allocation2 + $0x194] sm:$0xf]
        %v2583 = vld [vmem:[#allocation2 + $0x198] sm:$0xf]
        %v2584 = vld [vmem:[#allocation2 + $0x19c] sm:$0xf]
        %v2585 = vld [vmem:[#allocation2 + $0x1a0] sm:$0xf]
        %v2586 = vld [vmem:[#allocation2 + $0x1a4] sm:$0xf]
        %v2587 = vld [vmem:[#allocation2 + $0x1a8] sm:$0xf]
        %v2588 = vld [vmem:[#allocation2 + $0x1ac] sm:$0xf]
        %v2589 = vld [vmem:[#allocation2 + $0x1b0] sm:$0xf]
        %v2590 = vld [vmem:[#allocation2 + $0x1b4] sm:$0xf]
        %v2591 = vld [vmem:[#allocation2 + $0x1b8] sm:$0xf]
        %v2592 = vld [vmem:[#allocation2 + $0x1bc] sm:$0xf]
        %v2609 = vunpack.c.l.b16 %v2577
        %v2610 = vunpack.c.l.b16 %v2578
        %v2611 = vunpack.c.l.b16 %v2579
        %v2612 = vunpack.c.l.b16 %v2580
        %v2613 = vunpack.c.l.b16 %v2581
        %v2614 = vunpack.c.l.b16 %v2582
        %v2615 = vunpack.c.l.b16 %v2583
        %v2616 = vunpack.c.l.b16 %v2584
        %v2617 = vunpack.c.l.b16 %v2585
        %v2618 = vunpack.c.l.b16 %v2586
        %v2619 = vunpack.c.l.b16 %v2587
        %v2620 = vunpack.c.l.b16 %v2588
        %v2621 = vunpack.c.l.b16 %v2589
        %v2622 = vunpack.c.l.b16 %v2590
        %v2623 = vunpack.c.l.b16 %v2591
        %v2624 = vunpack.c.l.b16 %v2592
        %v2625 = vpack.c.b16 %v2610, %v2609
        %v2626 = vpack.c.b16 %v2612, %v2611
        %v2627 = vpack.c.b16 %v2614, %v2613
        %v2628 = vpack.c.b16 %v2616, %v2615
        %v2629 = vpack.c.b16 %v2618, %v2617
        %v2630 = vpack.c.b16 %v2620, %v2619
        %v2631 = vpack.c.b16 %v2622, %v2621
        %v2632 = vpack.c.b16 %v2624, %v2623
        %2641 = vmatprep.subr.bf16.mxu0 0
        %2642 = vmatpush1.bf16.msra.mxu0 %v2632
        %2643 = vmatprep.subr.bf16.mxu0 0
        %2644 = vmatpush1.bf16.msra.mxu0 %v2631
        %2645 = vmatprep.subr.bf16.mxu0 0
        %2646 = vmatpush1.bf16.msra.mxu0 %v2630
        %2647 = vmatprep.subr.bf16.mxu0 0
        %2648 = vmatpush1.bf16.msra.mxu0 %v2629
        %2649 = vmatprep.subr.bf16.mxu0 0
        %2650 = vmatpush1.bf16.msra.mxu0 %v2628
        %2651 = vmatprep.subr.bf16.mxu0 0
        %2652 = vmatpush1.bf16.msra.mxu0 %v2627
        %2653 = vmatprep.subr.bf16.mxu0 0
        %2654 = vmatpush1.bf16.msra.mxu0 %v2626
        %2655 = vmatprep.subr.bf16.mxu0 0
        %2656 = vmatpush1.bf16.msra.mxu0 %v2625
        %2657 = vmatprep.subr.bf16.mxu0 0
        %2658 = vmatpush2.bf16.msra.mxu0 0
        %2659 = vmatprep.subr.bf16.mxu0 0
        %2660 = vmatpush2.bf16.msra.mxu0 0
        %2661 = vmatprep.subr.bf16.mxu0 0
        %2662 = vmatpush2.bf16.msra.mxu0 0
        %2663 = vmatprep.subr.bf16.mxu0 0
        %2664 = vmatpush2.bf16.msra.mxu0 0
        %2665 = vmatprep.subr.bf16.mxu0 0
        %2666 = vmatpush2.bf16.msra.mxu0 0
        %2667 = vmatprep.subr.bf16.mxu0 0
        %2668 = vmatpush2.bf16.msra.mxu0 0
        %2669 = vmatprep.subr.bf16.mxu0 0
        %2670 = vmatpush2.bf16.msra.mxu0 0
        %2671 = vmatprep.subr.bf16.mxu0 0
        %2672 = vmatpush2.bf16.msra.mxu0 0
        %2673 = vmatprep.mubr.bf16.mxu0 0
        %2674 = vmatmul.mubr.bf16.gmra.mxu0 %v2573
        %v2675 = vpop.f32.mrf.mxu0
        %v2676 = vadd.f32 0.0, %v2675
        %v2677 = vpop.f32.mrf.mxu0
        %v2678 = vpop.f32.mrf.mxu0
        %v2679 = vadd.f32 0.0, %v2678
        %v2680 = vpop.f32.mrf.mxu0
        %2681 = vmatprep.mubr.bf16.mxu0 0
        %2682 = vmatmul.mubr.bf16.gmra.mxu0 %v2574
        %v2683 = vpop.f32.mrf.mxu0
        %v2684 = vadd.f32 0.0, %v2683
        %v2685 = vpop.f32.mrf.mxu0
        %v2686 = vpop.f32.mrf.mxu0
        %v2687 = vadd.f32 0.0, %v2686
        %v2688 = vpop.f32.mrf.mxu0
        %2689 = vmatprep.mubr.bf16.mxu0 0
        %2690 = vmatmul.mubr.bf16.gmra.mxu0 %v2575
        %v2691 = vpop.f32.mrf.mxu0
        %v2692 = vadd.f32 0.0, %v2691
        %v2693 = vpop.f32.mrf.mxu0
        %v2694 = vpop.f32.mrf.mxu0
        %v2695 = vadd.f32 0.0, %v2694
        %v2696 = vpop.f32.mrf.mxu0
        %2697 = vmatprep.mubr.bf16.mxu0 0
        %2698 = vmatmul.mubr.bf16.gmra.mxu0 %v2576
        %v2699 = vpop.f32.mrf.mxu0
        %v2700 = vadd.f32 0.0, %v2699
        %v2701 = vpop.f32.mrf.mxu0
        %v2702 = vpop.f32.mrf.mxu0
        %v2703 = vadd.f32 0.0, %v2702
        %v2704 = vpop.f32.mrf.mxu0
        %2705 = vdwg.mxu0
        %v2706 = vadd.f32 %v2453, %v2676
        %v2707 = vadd.f32 %v2454, %v2679
        %v2708 = vadd.f32 %v2455, %v2684
        %v2709 = vadd.f32 %v2456, %v2687
        %v2710 = vadd.f32 %v2457, %v2692
        %v2711 = vadd.f32 %v2458, %v2695
        %v2712 = vadd.f32 %v2459, %v2700
        %v2713 = vadd.f32 %v2460, %v2703
        %2714 = vset.pattern.permute.xlu0 7
        %2715 = vperm.xlu0 %2714, %v932
        %v2716 = vpop.permute.xlu0 %2715
        %v2719 = vunpack.c.l.s4 839922192
        %v2720 = vunpack.c.0.s8 %v2719
        %v2721 = vlaneseq
        %v2722 = vshrl.u32 %v2721, 7
        %v2723 = vsub.s32 %v2720, %v2722
        %v2724 = vrot.slane %v2716, %v2723
        %2725 = vset.pattern.permute.xlu0 7
        %2726 = vperm.xlu0 %2725, %v933
        %v2727 = vpop.permute.xlu0 %2726
        %v2730 = vunpack.c.l.s4 839922192
        %v2731 = vunpack.c.0.s8 %v2730
        %v2732 = vlaneseq
        %v2733 = vshrl.u32 %v2732, 7
        %v2734 = vsub.s32 %v2731, %v2733
        %v2735 = vrot.slane %v2727, %v2734
        %2736 = vset.pattern.permute.xlu0 7
        %2737 = vperm.xlu0 %2736, %v934
        %v2738 = vpop.permute.xlu0 %2737
        %v2741 = vunpack.c.l.s4 839922192
        %v2742 = vunpack.c.0.s8 %v2741
        %v2743 = vlaneseq
        %v2744 = vshrl.u32 %v2743, 7
        %v2745 = vsub.s32 %v2742, %v2744
        %v2746 = vrot.slane %v2738, %v2745
        %2747 = vset.pattern.permute.xlu0 7
        %2748 = vperm.xlu0 %2747, %v935
        %v2749 = vpop.permute.xlu0 %2748
        %v2752 = vunpack.c.l.s4 839922192
        %v2753 = vunpack.c.0.s8 %v2752
        %v2754 = vlaneseq
        %v2755 = vshrl.u32 %v2754, 7
        %v2756 = vsub.s32 %v2753, %v2755
        %v2757 = vrot.slane %v2749, %v2756
        %2758 = vset.pattern.permute.xlu0 7
        %2759 = vperm.xlu0 %2758, %v936
        %v2760 = vpop.permute.xlu0 %2759
        %v2763 = vunpack.c.l.s4 839922192
        %v2764 = vunpack.c.0.s8 %v2763
        %v2765 = vlaneseq
        %v2766 = vshrl.u32 %v2765, 7
        %v2767 = vsub.s32 %v2764, %v2766
        %v2768 = vrot.slane %v2760, %v2767
        %2769 = vset.pattern.permute.xlu0 7
        %2770 = vperm.xlu0 %2769, %v937
        %v2771 = vpop.permute.xlu0 %2770
        %v2774 = vunpack.c.l.s4 839922192
        %v2775 = vunpack.c.0.s8 %v2774
        %v2776 = vlaneseq
        %v2777 = vshrl.u32 %v2776, 7
        %v2778 = vsub.s32 %v2775, %v2777
        %v2779 = vrot.slane %v2771, %v2778
        %2780 = vset.pattern.permute.xlu0 7
        %2781 = vperm.xlu0 %2780, %v938
        %v2782 = vpop.permute.xlu0 %2781
        %v2785 = vunpack.c.l.s4 839922192
        %v2786 = vunpack.c.0.s8 %v2785
        %v2787 = vlaneseq
        %v2788 = vshrl.u32 %v2787, 7
        %v2789 = vsub.s32 %v2786, %v2788
        %v2790 = vrot.slane %v2782, %v2789
        %2791 = vset.pattern.permute.xlu0 7
        %2792 = vperm.xlu0 %2791, %v939
        %v2793 = vpop.permute.xlu0 %2792
        %v2796 = vunpack.c.l.s4 839922192
        %v2797 = vunpack.c.0.s8 %v2796
        %v2798 = vlaneseq
        %v2799 = vshrl.u32 %v2798, 7
        %v2800 = vsub.s32 %v2797, %v2799
        %v2801 = vrot.slane %v2793, %v2800
        %v2810 = vunpack.c.l.b16 %v2724
        %v2811 = vunpack.c.l.b16 %v2735
        %v2812 = vunpack.c.l.b16 %v2746
        %v2813 = vunpack.c.l.b16 %v2757
        %v2814 = vunpack.c.l.b16 %v2768
        %v2815 = vunpack.c.l.b16 %v2779
        %v2816 = vunpack.c.l.b16 %v2790
        %v2817 = vunpack.c.l.b16 %v2801
        %v2818 = vpack.c.b16 %v2811, %v2810
        %v2819 = vpack.c.b16 %v2813, %v2812
        %v2820 = vpack.c.b16 %v2815, %v2814
        %v2821 = vpack.c.b16 %v2817, %v2816
        %v2826 = vmul.bf16 %v1132, %v2818
        %v2827 = vmul.bf16 %v1134, %v2819
        %v2828 = vmul.bf16 %v1135, %v2820
        %v2829 = vmul.bf16 %v1142, %v2821
        %v2830 = vld [vmem:[#allocation2 + $0x1c0] sm:$0xf]
        %v2831 = vld [vmem:[#allocation2 + $0x1c4] sm:$0xf]
        %v2832 = vld [vmem:[#allocation2 + $0x1c8] sm:$0xf]
        %v2833 = vld [vmem:[#allocation2 + $0x1cc] sm:$0xf]
        %v2834 = vld [vmem:[#allocation2 + $0x1d0] sm:$0xf]
        %v2835 = vld [vmem:[#allocation2 + $0x1d4] sm:$0xf]
        %v2836 = vld [vmem:[#allocation2 + $0x1d8] sm:$0xf]
        %v2837 = vld [vmem:[#allocation2 + $0x1dc] sm:$0xf]
        %v2838 = vld [vmem:[#allocation2 + $0x1e0] sm:$0xf]
        %v2839 = vld [vmem:[#allocation2 + $0x1e4] sm:$0xf]
        %v2840 = vld [vmem:[#allocation2 + $0x1e8] sm:$0xf]
        %v2841 = vld [vmem:[#allocation2 + $0x1ec] sm:$0xf]
        %v2842 = vld [vmem:[#allocation2 + $0x1f0] sm:$0xf]
        %v2843 = vld [vmem:[#allocation2 + $0x1f4] sm:$0xf]
        %v2844 = vld [vmem:[#allocation2 + $0x1f8] sm:$0xf]
        %v2845 = vld [vmem:[#allocation2 + $0x1fc] sm:$0xf]
        %v2862 = vunpack.c.l.b16 %v2830
        %v2863 = vunpack.c.l.b16 %v2831
        %v2864 = vunpack.c.l.b16 %v2832
        %v2865 = vunpack.c.l.b16 %v2833
        %v2866 = vunpack.c.l.b16 %v2834
        %v2867 = vunpack.c.l.b16 %v2835
        %v2868 = vunpack.c.l.b16 %v2836
        %v2869 = vunpack.c.l.b16 %v2837
        %v2870 = vunpack.c.l.b16 %v2838
        %v2871 = vunpack.c.l.b16 %v2839
        %v2872 = vunpack.c.l.b16 %v2840
        %v2873 = vunpack.c.l.b16 %v2841
        %v2874 = vunpack.c.l.b16 %v2842
        %v2875 = vunpack.c.l.b16 %v2843
        %v2876 = vunpack.c.l.b16 %v2844
        %v2877 = vunpack.c.l.b16 %v2845
        %v2878 = vpack.c.b16 %v2863, %v2862
        %v2879 = vpack.c.b16 %v2865, %v2864
        %v2880 = vpack.c.b16 %v2867, %v2866
        %v2881 = vpack.c.b16 %v2869, %v2868
        %v2882 = vpack.c.b16 %v2871, %v2870
        %v2883 = vpack.c.b16 %v2873, %v2872
        %v2884 = vpack.c.b16 %v2875, %v2874
        %v2885 = vpack.c.b16 %v2877, %v2876
        %2894 = vmatprep.subr.bf16.mxu0 0
        %2895 = vmatpush1.bf16.msra.mxu0 %v2885
        %2896 = vmatprep.subr.bf16.mxu0 0
        %2897 = vmatpush1.bf16.msra.mxu0 %v2884
        %2898 = vmatprep.subr.bf16.mxu0 0
        %2899 = vmatpush1.bf16.msra.mxu0 %v2883
        %2900 = vmatprep.subr.bf16.mxu0 0
        %2901 = vmatpush1.bf16.msra.mxu0 %v2882
        %2902 = vmatprep.subr.bf16.mxu0 0
        %2903 = vmatpush1.bf16.msra.mxu0 %v2881
        %2904 = vmatprep.subr.bf16.mxu0 0
        %2905 = vmatpush1.bf16.msra.mxu0 %v2880
        %2906 = vmatprep.subr.bf16.mxu0 0
        %2907 = vmatpush1.bf16.msra.mxu0 %v2879
        %2908 = vmatprep.subr.bf16.mxu0 0
        %2909 = vmatpush1.bf16.msra.mxu0 %v2878
        %2910 = vmatprep.subr.bf16.mxu0 0
        %2911 = vmatpush2.bf16.msra.mxu0 0
        %2912 = vmatprep.subr.bf16.mxu0 0
        %2913 = vmatpush2.bf16.msra.mxu0 0
        %2914 = vmatprep.subr.bf16.mxu0 0
        %2915 = vmatpush2.bf16.msra.mxu0 0
        %2916 = vmatprep.subr.bf16.mxu0 0
        %2917 = vmatpush2.bf16.msra.mxu0 0
        %2918 = vmatprep.subr.bf16.mxu0 0
        %2919 = vmatpush2.bf16.msra.mxu0 0
        %2920 = vmatprep.subr.bf16.mxu0 0
        %2921 = vmatpush2.bf16.msra.mxu0 0
        %2922 = vmatprep.subr.bf16.mxu0 0
        %2923 = vmatpush2.bf16.msra.mxu0 0
        %2924 = vmatprep.subr.bf16.mxu0 0
        %2925 = vmatpush2.bf16.msra.mxu0 0
        %2926 = vmatprep.mubr.bf16.mxu0 0
        %2927 = vmatmul.mubr.bf16.gmra.mxu0 %v2826
        %v2928 = vpop.f32.mrf.mxu0
        %v2929 = vadd.f32 0.0, %v2928
        %v2930 = vpop.f32.mrf.mxu0
        %v2931 = vpop.f32.mrf.mxu0
        %v2932 = vadd.f32 0.0, %v2931
        %v2933 = vpop.f32.mrf.mxu0
        %2934 = vmatprep.mubr.bf16.mxu0 0
        %2935 = vmatmul.mubr.bf16.gmra.mxu0 %v2827
        %v2936 = vpop.f32.mrf.mxu0
        %v2937 = vadd.f32 0.0, %v2936
        %v2938 = vpop.f32.mrf.mxu0
        %v2939 = vpop.f32.mrf.mxu0
        %v2940 = vadd.f32 0.0, %v2939
        %v2941 = vpop.f32.mrf.mxu0
        %2942 = vmatprep.mubr.bf16.mxu0 0
        %2943 = vmatmul.mubr.bf16.gmra.mxu0 %v2828
        %v2944 = vpop.f32.mrf.mxu0
        %v2945 = vadd.f32 0.0, %v2944
        %v2946 = vpop.f32.mrf.mxu0
        %v2947 = vpop.f32.mrf.mxu0
        %v2948 = vadd.f32 0.0, %v2947
        %v2949 = vpop.f32.mrf.mxu0
        %2950 = vmatprep.mubr.bf16.mxu0 0
        %2951 = vmatmul.mubr.bf16.gmra.mxu0 %v2829
        %v2952 = vpop.f32.mrf.mxu0
        %v2953 = vadd.f32 0.0, %v2952
        %v2954 = vpop.f32.mrf.mxu0
        %v2955 = vpop.f32.mrf.mxu0
        %v2956 = vadd.f32 0.0, %v2955
        %v2957 = vpop.f32.mrf.mxu0
        %2958 = vdwg.mxu0
        %v2959 = vadd.f32 %v2706, %v2929
        %v2960 = vadd.f32 %v2707, %v2932
        %v2961 = vadd.f32 %v2708, %v2937
        %v2962 = vadd.f32 %v2709, %v2940
        %v2963 = vadd.f32 %v2710, %v2945
        %v2964 = vadd.f32 %v2711, %v2948
        %v2965 = vadd.f32 %v2712, %v2953
        %v2966 = vadd.f32 %v2713, %v2956
        %2967 = vset.pattern.permute.xlu0 8
        %2968 = vperm.xlu0 %2967, %v932
        %v2969 = vpop.permute.xlu0 %2968
        %v2972 = vunpack.c.l.s4 839922192
        %v2973 = vunpack.c.0.s8 %v2972
        %v2974 = vlaneseq
        %v2975 = vshrl.u32 %v2974, 7
        %v2976 = vsub.s32 %v2973, %v2975
        %v2977 = vrot.slane %v2969, %v2976
        %2978 = vset.pattern.permute.xlu0 8
        %2979 = vperm.xlu0 %2978, %v933
        %v2980 = vpop.permute.xlu0 %2979
        %v2983 = vunpack.c.l.s4 839922192
        %v2984 = vunpack.c.0.s8 %v2983
        %v2985 = vlaneseq
        %v2986 = vshrl.u32 %v2985, 7
        %v2987 = vsub.s32 %v2984, %v2986
        %v2988 = vrot.slane %v2980, %v2987
        %2989 = vset.pattern.permute.xlu0 8
        %2990 = vperm.xlu0 %2989, %v934
        %v2991 = vpop.permute.xlu0 %2990
        %v2994 = vunpack.c.l.s4 839922192
        %v2995 = vunpack.c.0.s8 %v2994
        %v2996 = vlaneseq
        %v2997 = vshrl.u32 %v2996, 7
        %v2998 = vsub.s32 %v2995, %v2997
        %v2999 = vrot.slane %v2991, %v2998
        %3000 = vset.pattern.permute.xlu0 8
        %3001 = vperm.xlu0 %3000, %v935
        %v3002 = vpop.permute.xlu0 %3001
        %v3005 = vunpack.c.l.s4 839922192
        %v3006 = vunpack.c.0.s8 %v3005
        %v3007 = vlaneseq
        %v3008 = vshrl.u32 %v3007, 7
        %v3009 = vsub.s32 %v3006, %v3008
        %v3010 = vrot.slane %v3002, %v3009
        %3011 = vset.pattern.permute.xlu0 8
        %3012 = vperm.xlu0 %3011, %v936
        %v3013 = vpop.permute.xlu0 %3012
        %v3016 = vunpack.c.l.s4 839922192
        %v3017 = vunpack.c.0.s8 %v3016
        %v3018 = vlaneseq
        %v3019 = vshrl.u32 %v3018, 7
        %v3020 = vsub.s32 %v3017, %v3019
        %v3021 = vrot.slane %v3013, %v3020
        %3022 = vset.pattern.permute.xlu0 8
        %3023 = vperm.xlu0 %3022, %v937
        %v3024 = vpop.permute.xlu0 %3023
        %v3027 = vunpack.c.l.s4 839922192
        %v3028 = vunpack.c.0.s8 %v3027
        %v3029 = vlaneseq
        %v3030 = vshrl.u32 %v3029, 7
        %v3031 = vsub.s32 %v3028, %v3030
        %v3032 = vrot.slane %v3024, %v3031
        %3033 = vset.pattern.permute.xlu0 8
        %3034 = vperm.xlu0 %3033, %v938
        %v3035 = vpop.permute.xlu0 %3034
        %v3038 = vunpack.c.l.s4 839922192
        %v3039 = vunpack.c.0.s8 %v3038
        %v3040 = vlaneseq
        %v3041 = vshrl.u32 %v3040, 7
        %v3042 = vsub.s32 %v3039, %v3041
        %v3043 = vrot.slane %v3035, %v3042
        %3044 = vset.pattern.permute.xlu0 8
        %3045 = vperm.xlu0 %3044, %v939
        %v3046 = vpop.permute.xlu0 %3045
        %v3049 = vunpack.c.l.s4 839922192
        %v3050 = vunpack.c.0.s8 %v3049
        %v3051 = vlaneseq
        %v3052 = vshrl.u32 %v3051, 7
        %v3053 = vsub.s32 %v3050, %v3052
        %v3054 = vrot.slane %v3046, %v3053
        %v3063 = vunpack.c.l.b16 %v2977
        %v3064 = vunpack.c.l.b16 %v2988
        %v3065 = vunpack.c.l.b16 %v2999
        %v3066 = vunpack.c.l.b16 %v3010
        %v3067 = vunpack.c.l.b16 %v3021
        %v3068 = vunpack.c.l.b16 %v3032
        %v3069 = vunpack.c.l.b16 %v3043
        %v3070 = vunpack.c.l.b16 %v3054
        %v3071 = vpack.c.b16 %v3064, %v3063
        %v3072 = vpack.c.b16 %v3066, %v3065
        %v3073 = vpack.c.b16 %v3068, %v3067
        %v3074 = vpack.c.b16 %v3070, %v3069
        %v3079 = vmul.bf16 %v1513, %v3071
        %v3080 = vmul.bf16 %v1517, %v3072
        %v3081 = vmul.bf16 %v1518, %v3073
        %v3082 = vmul.bf16 %v1524, %v3074
        %v3083 = vld [vmem:[#allocation2 + $0x200] sm:$0xf]
        %v3084 = vld [vmem:[#allocation2 + $0x204] sm:$0xf]
        %v3085 = vld [vmem:[#allocation2 + $0x208] sm:$0xf]
        %v3086 = vld [vmem:[#allocation2 + $0x20c] sm:$0xf]
        %v3087 = vld [vmem:[#allocation2 + $0x210] sm:$0xf]
        %v3088 = vld [vmem:[#allocation2 + $0x214] sm:$0xf]
        %v3089 = vld [vmem:[#allocation2 + $0x218] sm:$0xf]
        %v3090 = vld [vmem:[#allocation2 + $0x21c] sm:$0xf]
        %v3091 = vld [vmem:[#allocation2 + $0x220] sm:$0xf]
        %v3092 = vld [vmem:[#allocation2 + $0x224] sm:$0xf]
        %v3093 = vld [vmem:[#allocation2 + $0x228] sm:$0xf]
        %v3094 = vld [vmem:[#allocation2 + $0x22c] sm:$0xf]
        %v3095 = vld [vmem:[#allocation2 + $0x230] sm:$0xf]
        %v3096 = vld [vmem:[#allocation2 + $0x234] sm:$0xf]
        %v3097 = vld [vmem:[#allocation2 + $0x238] sm:$0xf]
        %v3098 = vld [vmem:[#allocation2 + $0x23c] sm:$0xf]
        %v3115 = vunpack.c.l.b16 %v3083
        %v3116 = vunpack.c.l.b16 %v3084
        %v3117 = vunpack.c.l.b16 %v3085
        %v3118 = vunpack.c.l.b16 %v3086
        %v3119 = vunpack.c.l.b16 %v3087
        %v3120 = vunpack.c.l.b16 %v3088
        %v3121 = vunpack.c.l.b16 %v3089
        %v3122 = vunpack.c.l.b16 %v3090
        %v3123 = vunpack.c.l.b16 %v3091
        %v3124 = vunpack.c.l.b16 %v3092
        %v3125 = vunpack.c.l.b16 %v3093
        %v3126 = vunpack.c.l.b16 %v3094
        %v3127 = vunpack.c.l.b16 %v3095
        %v3128 = vunpack.c.l.b16 %v3096
        %v3129 = vunpack.c.l.b16 %v3097
        %v3130 = vunpack.c.l.b16 %v3098
        %v3131 = vpack.c.b16 %v3116, %v3115
        %v3132 = vpack.c.b16 %v3118, %v3117
        %v3133 = vpack.c.b16 %v3120, %v3119
        %v3134 = vpack.c.b16 %v3122, %v3121
        %v3135 = vpack.c.b16 %v3124, %v3123
        %v3136 = vpack.c.b16 %v3126, %v3125
        %v3137 = vpack.c.b16 %v3128, %v3127
        %v3138 = vpack.c.b16 %v3130, %v3129
        %3147 = vmatprep.subr.bf16.mxu0 0
        %3148 = vmatpush1.bf16.msra.mxu0 %v3138
        %3149 = vmatprep.subr.bf16.mxu0 0
        %3150 = vmatpush1.bf16.msra.mxu0 %v3137
        %3151 = vmatprep.subr.bf16.mxu0 0
        %3152 = vmatpush1.bf16.msra.mxu0 %v3136
        %3153 = vmatprep.subr.bf16.mxu0 0
        %3154 = vmatpush1.bf16.msra.mxu0 %v3135
        %3155 = vmatprep.subr.bf16.mxu0 0
        %3156 = vmatpush1.bf16.msra.mxu0 %v3134
        %3157 = vmatprep.subr.bf16.mxu0 0
        %3158 = vmatpush1.bf16.msra.mxu0 %v3133
        %3159 = vmatprep.subr.bf16.mxu0 0
        %3160 = vmatpush1.bf16.msra.mxu0 %v3132
        %3161 = vmatprep.subr.bf16.mxu0 0
        %3162 = vmatpush1.bf16.msra.mxu0 %v3131
        %3163 = vmatprep.subr.bf16.mxu0 0
        %3164 = vmatpush2.bf16.msra.mxu0 0
        %3165 = vmatprep.subr.bf16.mxu0 0
        %3166 = vmatpush2.bf16.msra.mxu0 0
        %3167 = vmatprep.subr.bf16.mxu0 0
        %3168 = vmatpush2.bf16.msra.mxu0 0
        %3169 = vmatprep.subr.bf16.mxu0 0
        %3170 = vmatpush2.bf16.msra.mxu0 0
        %3171 = vmatprep.subr.bf16.mxu0 0
        %3172 = vmatpush2.bf16.msra.mxu0 0
        %3173 = vmatprep.subr.bf16.mxu0 0
        %3174 = vmatpush2.bf16.msra.mxu0 0
        %3175 = vmatprep.subr.bf16.mxu0 0
        %3176 = vmatpush2.bf16.msra.mxu0 0
        %3177 = vmatprep.subr.bf16.mxu0 0
        %3178 = vmatpush2.bf16.msra.mxu0 0
        %3179 = vmatprep.mubr.bf16.mxu0 0
        %3180 = vmatmul.mubr.bf16.gmra.mxu0 %v3079
        %v3181 = vpop.f32.mrf.mxu0
        %v3182 = vadd.f32 0.0, %v3181
        %v3183 = vpop.f32.mrf.mxu0
        %v3184 = vpop.f32.mrf.mxu0
        %v3185 = vadd.f32 0.0, %v3184
        %v3186 = vpop.f32.mrf.mxu0
        %3187 = vmatprep.mubr.bf16.mxu0 0
        %3188 = vmatmul.mubr.bf16.gmra.mxu0 %v3080
        %v3189 = vpop.f32.mrf.mxu0
        %v3190 = vadd.f32 0.0, %v3189
        %v3191 = vpop.f32.mrf.mxu0
        %v3192 = vpop.f32.mrf.mxu0
        %v3193 = vadd.f32 0.0, %v3192
        %v3194 = vpop.f32.mrf.mxu0
        %3195 = vmatprep.mubr.bf16.mxu0 0
        %3196 = vmatmul.mubr.bf16.gmra.mxu0 %v3081
        %v3197 = vpop.f32.mrf.mxu0
        %v3198 = vadd.f32 0.0, %v3197
        %v3199 = vpop.f32.mrf.mxu0
        %v3200 = vpop.f32.mrf.mxu0
        %v3201 = vadd.f32 0.0, %v3200
        %v3202 = vpop.f32.mrf.mxu0
        %3203 = vmatprep.mubr.bf16.mxu0 0
        %3204 = vmatmul.mubr.bf16.gmra.mxu0 %v3082
        %v3205 = vpop.f32.mrf.mxu0
        %v3206 = vadd.f32 0.0, %v3205
        %v3207 = vpop.f32.mrf.mxu0
        %v3208 = vpop.f32.mrf.mxu0
        %v3209 = vadd.f32 0.0, %v3208
        %v3210 = vpop.f32.mrf.mxu0
        %3211 = vdwg.mxu0
        %v3212 = vadd.f32 %v2959, %v3182
        %v3213 = vadd.f32 %v2960, %v3185
        %v3214 = vadd.f32 %v2961, %v3190
        %v3215 = vadd.f32 %v2962, %v3193
        %v3216 = vadd.f32 %v2963, %v3198
        %v3217 = vadd.f32 %v2964, %v3201
        %v3218 = vadd.f32 %v2965, %v3206
        %v3219 = vadd.f32 %v2966, %v3209
        %v3220 = vld [vmem:[%s6] sm:$0x1]
        %v3221 = vld [vmem:[%s7] sm:$0x1]
        %v3222 = vadd.f32 %v3212, %v3213
        %v3223 = vadd.f32 %v3222, %v3214
        %v3224 = vadd.f32 %v3223, %v3215
        %v3225 = vadd.f32 %v3224, %v3216
        %v3226 = vadd.f32 %v3225, %v3217
        %v3227 = vadd.f32 %v3226, %v3218
        %v3228 = vadd.f32 %v3227, %v3219
        %v3229 = vrot.slane %v3228, 4
        %v3230 = vadd.f32 %v3228, %v3229
        %v3231 = vrot.slane %v3230, 2
        %v3232 = vadd.f32 %v3230, %v3231
        %v3233 = vrot.slane %v3232, 1
        %v3234 = vadd.f32 %v3232, %v3233
        %v3235 = vmul.f32 %v3212, %v3212
        %v3236 = vmul.f32 %v3213, %v3213
        %v3237 = vmul.f32 %v3214, %v3214
        %v3238 = vmul.f32 %v3215, %v3215
        %v3239 = vmul.f32 %v3216, %v3216
        %v3240 = vmul.f32 %v3217, %v3217
        %v3241 = vmul.f32 %v3218, %v3218
        %v3242 = vmul.f32 %v3219, %v3219
        %v3243 = vadd.f32 %v3235, %v3236
        %v3244 = vadd.f32 %v3243, %v3237
        %v3245 = vadd.f32 %v3244, %v3238
        %v3246 = vadd.f32 %v3245, %v3239
        %v3247 = vadd.f32 %v3246, %v3240
        %v3248 = vadd.f32 %v3247, %v3241
        %v3249 = vadd.f32 %v3248, %v3242
        %v3250 = vrot.slane %v3249, 4
        %v3251 = vadd.f32 %v3249, %v3250
        %v3252 = vrot.slane %v3251, 2
        %v3253 = vadd.f32 %v3251, %v3252
        %v3254 = vrot.slane %v3253, 1
        %v3255 = vadd.f32 %v3253, %v3254
        %v3256 = vsel %vm726, %v3234, %v3255
        %3257 = vmatprep.subr.mxu0 0.0
        %3258 = vmatpush1.msra.mxu0 %v687
        %3259 = vmatprep.subr.mxu0 0.0
        %3260 = vmatpush1.msra.mxu0 %v686
        %3261 = vmatprep.subr.mxu0 0.0
        %3262 = vmatpush1.msra.mxu0 %v685
        %3263 = vmatprep.subr.mxu0 0.0
        %3264 = vmatpush1.msra.mxu0 %v684
        %3265 = vmatprep.subr.mxu0 0.0
        %3266 = vmatpush1.msra.mxu0 %v683
        %3267 = vmatprep.subr.mxu0 0.0
        %3268 = vmatpush1.msra.mxu0 %v682
        %3269 = vmatprep.subr.mxu0 0.0
        %3270 = vmatpush1.msra.mxu0 %v681
        %3271 = vmatprep.subr.mxu0 0.0
        %3272 = vmatpush1.msra.mxu0 %v680
        %3273 = vmatprep.subr.mxu0 0.0
        %3274 = vmatpush1.msra.mxu0 %v679
        %3275 = vmatprep.subr.mxu0 0.0
        %3276 = vmatpush1.msra.mxu0 %v678
        %3277 = vmatprep.subr.mxu0 0.0
        %3278 = vmatpush1.msra.mxu0 %v677
        %3279 = vmatprep.subr.mxu0 0.0
        %3280 = vmatpush1.msra.mxu0 %v676
        %3281 = vmatprep.subr.mxu0 0.0
        %3282 = vmatpush1.msra.mxu0 %v675
        %3283 = vmatprep.subr.mxu0 0.0
        %3284 = vmatpush1.msra.mxu0 %v674
        %3285 = vmatprep.subr.mxu0 0.0
        %3286 = vmatpush1.msra.mxu0 %v673
        %3287 = vmatprep.subr.mxu0 0.0
        %3288 = vmatpush1.msra.mxu0 %v672
        %3289 = vmatprep.subr.mxu0 0.0
        %3290 = vmatpush2.msra.mxu0 0.0
        %3291 = vmatprep.subr.mxu0 0.0
        %3292 = vmatpush2.msra.mxu0 0.0
        %3293 = vmatprep.subr.mxu0 0.0
        %3294 = vmatpush2.msra.mxu0 0.0
        %3295 = vmatprep.subr.mxu0 0.0
        %3296 = vmatpush2.msra.mxu0 0.0
        %3297 = vmatprep.subr.mxu0 0.0
        %3298 = vmatpush2.msra.mxu0 0.0
        %3299 = vmatprep.subr.mxu0 0.0
        %3300 = vmatpush2.msra.mxu0 0.0
        %3301 = vmatprep.subr.mxu0 0.0
        %3302 = vmatpush2.msra.mxu0 0.0
        %3303 = vmatprep.subr.mxu0 0.0
        %3304 = vmatpush2.msra.mxu0 0.0
        %3305 = vmatprep.subr.mxu0 0.0
        %3306 = vmatpush2.msra.mxu0 0.0
        %3307 = vmatprep.subr.mxu0 0.0
        %3308 = vmatpush2.msra.mxu0 0.0
        %3309 = vmatprep.subr.mxu0 0.0
        %3310 = vmatpush2.msra.mxu0 0.0
        %3311 = vmatprep.subr.mxu0 0.0
        %3312 = vmatpush2.msra.mxu0 0.0
        %3313 = vmatprep.subr.mxu0 0.0
        %3314 = vmatpush2.msra.mxu0 0.0
        %3315 = vmatprep.subr.mxu0 0.0
        %3316 = vmatpush2.msra.mxu0 0.0
        %3317 = vmatprep.subr.mxu0 0.0
        %3318 = vmatpush2.msra.mxu0 0.0
        %3319 = vmatprep.subr.mxu0 0.0
        %3320 = vmatpush2.msra.mxu0 0.0
        %3321 = vmatprep.mubr.f32.mxu0 0.0
        %3322 = vmatmul.mubr.f32.gmra.mxu0 %v3256
        %v3323 = vpop.f32.mrf.mxu0
        %v3324 = vadd.f32 0.0, %v3323
        %v3325 = vpop.f32.mrf.mxu0
        %3326 = vdwg.mxu0
        %v3327 = vmul.f32 %v3324, 0.015625
        %v3328 = vmul.f32 %v3327, %v3327
        %v3330 = vrot.slane %v3328, 7
        %v3332 = vsub.f32 %v3327, %v3330
        %v3333 = vmax.f32 %v3332, 0.0
        %v3334 = vadd.f32 %v3333, 1e-05
        %v3335 = vrsqrt.pop %v3334
        %v3336 = vsel %vm726, %v3327, %v3335
        %v3338 = vsel %vm808, %v3336, 0
        %3340 = vmatprep.subr.mxu0 0.0
        %3341 = vmatpush1.msra.mxu0 0.0
        %3342 = vmatprep.subr.mxu0 0.0
        %3343 = vmatpush1.msra.mxu0 0.0
        %3344 = vmatprep.subr.mxu0 0.0
        %3345 = vmatpush1.msra.mxu0 0.0
        %3346 = vmatprep.subr.mxu0 0.0
        %3347 = vmatpush1.msra.mxu0 0.0
        %3348 = vmatprep.subr.mxu0 0.0
        %3349 = vmatpush1.msra.mxu0 0.0
        %3350 = vmatprep.subr.mxu0 0.0
        %3351 = vmatpush1.msra.mxu0 0.0
        %3352 = vmatprep.subr.mxu0 0.0
        %3353 = vmatpush1.msra.mxu0 0.0
        %3354 = vmatprep.subr.mxu0 0.0
        %3355 = vmatpush1.msra.mxu0 0.0
        %3356 = vmatprep.subr.mxu0 0.0
        %3357 = vmatpush1.msra.mxu0 0.0
        %3358 = vmatprep.subr.mxu0 0.0
        %3359 = vmatpush1.msra.mxu0 0.0
        %3360 = vmatprep.subr.mxu0 0.0
        %3361 = vmatpush1.msra.mxu0 0.0
        %3362 = vmatprep.subr.mxu0 0.0
        %3363 = vmatpush1.msra.mxu0 0.0
        %3364 = vmatprep.subr.mxu0 0.0
        %3365 = vmatpush1.msra.mxu0 %v691
        %3366 = vmatprep.subr.mxu0 0.0
        %3367 = vmatpush1.msra.mxu0 %v690
        %3368 = vmatprep.subr.mxu0 0.0
        %3369 = vmatpush1.msra.mxu0 %v689
        %3370 = vmatprep.subr.mxu0 0.0
        %3371 = vmatpush1.msra.mxu0 %v688
        %3372 = vmatprep.subr.mxu0 0.0
        %3373 = vmatpush2.msra.mxu0 0.0
        %3374 = vmatprep.subr.mxu0 0.0
        %3375 = vmatpush2.msra.mxu0 0.0
        %3376 = vmatprep.subr.mxu0 0.0
        %3377 = vmatpush2.msra.mxu0 0.0
        %3378 = vmatprep.subr.mxu0 0.0
        %3379 = vmatpush2.msra.mxu0 0.0
        %3380 = vmatprep.subr.mxu0 0.0
        %3381 = vmatpush2.msra.mxu0 0.0
        %3382 = vmatprep.subr.mxu0 0.0
        %3383 = vmatpush2.msra.mxu0 0.0
        %3384 = vmatprep.subr.mxu0 0.0
        %3385 = vmatpush2.msra.mxu0 0.0
        %3386 = vmatprep.subr.mxu0 0.0
        %3387 = vmatpush2.msra.mxu0 0.0
        %3388 = vmatprep.subr.mxu0 0.0
        %3389 = vmatpush2.msra.mxu0 0.0
        %3390 = vmatprep.subr.mxu0 0.0
        %3391 = vmatpush2.msra.mxu0 0.0
        %3392 = vmatprep.subr.mxu0 0.0
        %3393 = vmatpush2.msra.mxu0 0.0
        %3394 = vmatprep.subr.mxu0 0.0
        %3395 = vmatpush2.msra.mxu0 0.0
        %3396 = vmatprep.subr.mxu0 0.0
        %3397 = vmatpush2.msra.mxu0 0.0
        %3398 = vmatprep.subr.mxu0 0.0
        %3399 = vmatpush2.msra.mxu0 0.0
        %3400 = vmatprep.subr.mxu0 0.0
        %3401 = vmatpush2.msra.mxu0 0.0
        %3402 = vmatprep.subr.mxu0 0.0
        %3403 = vmatpush2.msra.mxu0 0.0
        %3404 = vmatprep.mubr.f32.mxu0 0.0
        %3405 = vmatmul.mubr.f32.gmra.mxu0 %v3338
        %v3406 = vpop.f32.mrf.mxu0
        %v3407 = vadd.f32 0.0, %v3406
        %v3408 = vpop.f32.mrf.mxu0
        %3409 = vdwg.mxu0
        %v3411 = vlaneseq
        %v3412 = vshrl.u32 %v3411, 7
        %v3413 = vsub.s32 0, %v3412
        %v3414 = vrot.slane %v3220, %v3413
        %v3416 = vmul.f32 %v3407, %v3414
        %v3418 = vrot.slane %v3416, 1
        %v3420 = vmul.f32 %v3407, %v3418
        %v3421 = vsub.f32 %v3221, %v3420
        %v3422 = vlaneseq
        %v3423 = vshrl.u32 %v3422, 7
        %v3424 = vsub.s32 1, %v3423
        %v3425 = vrot.slane %v3416, %v3424
        %v3426 = vmul.f32 %v3212, %v3425
        %v3427 = vmul.f32 %v3213, %v3425
        %v3428 = vmul.f32 %v3214, %v3425
        %v3429 = vmul.f32 %v3215, %v3425
        %v3430 = vmul.f32 %v3216, %v3425
        %v3431 = vmul.f32 %v3217, %v3425
        %v3432 = vmul.f32 %v3218, %v3425
        %v3433 = vmul.f32 %v3219, %v3425
        %v3435 = vlaneseq
        %v3436 = vshrl.u32 %v3435, 7
        %v3437 = vsub.s32 0, %v3436
        %v3438 = vrot.slane %v3421, %v3437
        %v3440 = vadd.f32 %v3426, %v3438
        %v3441 = vadd.f32 %v3427, %v3438
        %v3442 = vadd.f32 %v3428, %v3438
        %v3443 = vadd.f32 %v3429, %v3438
        %v3444 = vadd.f32 %v3430, %v3438
        %v3445 = vadd.f32 %v3431, %v3438
        %v3446 = vadd.f32 %v3432, %v3438
        %v3447 = vadd.f32 %v3433, %v3438
        %v3448 = vmax.f32 %v3440, 0.0
        %v3449 = vmax.f32 %v3441, 0.0
        %v3450 = vmax.f32 %v3442, 0.0
        %v3451 = vmax.f32 %v3443, 0.0
        %v3452 = vmax.f32 %v3444, 0.0
        %v3453 = vmax.f32 %v3445, 0.0
        %v3454 = vmax.f32 %v3446, 0.0
        %v3455 = vmax.f32 %v3447, 0.0
        %v3456 = vpack.c.bf16 %v3449, %v3448
        %v3457 = vpack.c.bf16 %v3451, %v3450
        %v3458 = vpack.c.bf16 %v3453, %v3452
        %v3459 = vpack.c.bf16 %v3455, %v3454
        %v3460 = vld [vmem:[%s3] sm:$0xf]
        %v3461 = vld [vmem:[%s3 + $0x4] sm:$0xf]
        %v3462 = vld [vmem:[%s3 + $0x8] sm:$0xf]
        %v3463 = vld [vmem:[%s3 + $0xc] sm:$0xf]
        %v3464 = vld [vmem:[%s3 + $0x10] sm:$0xf]
        %v3465 = vld [vmem:[%s3 + $0x14] sm:$0xf]
        %v3466 = vld [vmem:[%s3 + $0x18] sm:$0xf]
        %v3467 = vld [vmem:[%s3 + $0x1c] sm:$0xf]
        %v3468 = vld [vmem:[%s3 + $0x20] sm:$0xf]
        %v3469 = vld [vmem:[%s3 + $0x24] sm:$0xf]
        %v3470 = vld [vmem:[%s3 + $0x28] sm:$0xf]
        %v3471 = vld [vmem:[%s3 + $0x2c] sm:$0xf]
        %v3472 = vld [vmem:[%s3 + $0x30] sm:$0xf]
        %v3473 = vld [vmem:[%s3 + $0x34] sm:$0xf]
        %v3474 = vld [vmem:[%s3 + $0x38] sm:$0xf]
        %v3475 = vld [vmem:[%s3 + $0x3c] sm:$0xf]
        %v3492 = vunpack.c.l.b16 %v3460
        %v3493 = vunpack.c.l.b16 %v3461
        %v3494 = vunpack.c.l.b16 %v3462
        %v3495 = vunpack.c.l.b16 %v3463
        %v3496 = vunpack.c.l.b16 %v3464
        %v3497 = vunpack.c.l.b16 %v3465
        %v3498 = vunpack.c.l.b16 %v3466
        %v3499 = vunpack.c.l.b16 %v3467
        %v3500 = vunpack.c.l.b16 %v3468
        %v3501 = vunpack.c.l.b16 %v3469
        %v3502 = vunpack.c.l.b16 %v3470
        %v3503 = vunpack.c.l.b16 %v3471
        %v3504 = vunpack.c.l.b16 %v3472
        %v3505 = vunpack.c.l.b16 %v3473
        %v3506 = vunpack.c.l.b16 %v3474
        %v3507 = vunpack.c.l.b16 %v3475
        %v3508 = vpack.c.b16 %v3493, %v3492
        %v3509 = vpack.c.b16 %v3495, %v3494
        %v3510 = vpack.c.b16 %v3497, %v3496
        %v3511 = vpack.c.b16 %v3499, %v3498
        %v3512 = vpack.c.b16 %v3501, %v3500
        %v3513 = vpack.c.b16 %v3503, %v3502
        %v3514 = vpack.c.b16 %v3505, %v3504
        %v3515 = vpack.c.b16 %v3507, %v3506
        %3524 = vmatprep.subr.bf16.mxu0 0
        %3525 = vmatpush1.bf16.msra.mxu0 %v3515
        %3526 = vmatprep.subr.bf16.mxu0 0
        %3527 = vmatpush1.bf16.msra.mxu0 %v3514
        %3528 = vmatprep.subr.bf16.mxu0 0
        %3529 = vmatpush1.bf16.msra.mxu0 %v3513
        %3530 = vmatprep.subr.bf16.mxu0 0
        %3531 = vmatpush1.bf16.msra.mxu0 %v3512
        %3532 = vmatprep.subr.bf16.mxu0 0
        %3533 = vmatpush1.bf16.msra.mxu0 %v3511
        %3534 = vmatprep.subr.bf16.mxu0 0
        %3535 = vmatpush1.bf16.msra.mxu0 %v3510
        %3536 = vmatprep.subr.bf16.mxu0 0
        %3537 = vmatpush1.bf16.msra.mxu0 %v3509
        %3538 = vmatprep.subr.bf16.mxu0 0
        %3539 = vmatpush1.bf16.msra.mxu0 %v3508
        %3540 = vmatprep.subr.bf16.mxu0 0
        %3541 = vmatpush2.bf16.msra.mxu0 0
        %3542 = vmatprep.subr.bf16.mxu0 0
        %3543 = vmatpush2.bf16.msra.mxu0 0
        %3544 = vmatprep.subr.bf16.mxu0 0
        %3545 = vmatpush2.bf16.msra.mxu0 0
        %3546 = vmatprep.subr.bf16.mxu0 0
        %3547 = vmatpush2.bf16.msra.mxu0 0
        %3548 = vmatprep.subr.bf16.mxu0 0
        %3549 = vmatpush2.bf16.msra.mxu0 0
        %3550 = vmatprep.subr.bf16.mxu0 0
        %3551 = vmatpush2.bf16.msra.mxu0 0
        %3552 = vmatprep.subr.bf16.mxu0 0
        %3553 = vmatpush2.bf16.msra.mxu0 0
        %3554 = vmatprep.subr.bf16.mxu0 0
        %3555 = vmatpush2.bf16.msra.mxu0 0
        %3556 = vmatprep.mubr.bf16.mxu0 0
        %3557 = vmatmul.mubr.bf16.gmra.mxu0 %v3456
        %v3558 = vpop.f32.mrf.mxu0
        %v3559 = vadd.f32 0.0, %v3558
        %v3560 = vpop.f32.mrf.mxu0
        %v3561 = vpop.f32.mrf.mxu0
        %v3562 = vadd.f32 0.0, %v3561
        %v3563 = vpop.f32.mrf.mxu0
        %3564 = vmatprep.mubr.bf16.mxu0 0
        %3565 = vmatmul.mubr.bf16.gmra.mxu0 %v3457
        %v3566 = vpop.f32.mrf.mxu0
        %v3567 = vadd.f32 0.0, %v3566
        %v3568 = vpop.f32.mrf.mxu0
        %v3569 = vpop.f32.mrf.mxu0
        %v3570 = vadd.f32 0.0, %v3569
        %v3571 = vpop.f32.mrf.mxu0
        %3572 = vmatprep.mubr.bf16.mxu0 0
        %3573 = vmatmul.mubr.bf16.gmra.mxu0 %v3458
        %v3574 = vpop.f32.mrf.mxu0
        %v3575 = vadd.f32 0.0, %v3574
        %v3576 = vpop.f32.mrf.mxu0
        %v3577 = vpop.f32.mrf.mxu0
        %v3578 = vadd.f32 0.0, %v3577
        %v3579 = vpop.f32.mrf.mxu0
        %3580 = vmatprep.mubr.bf16.mxu0 0
        %3581 = vmatmul.mubr.bf16.gmra.mxu0 %v3459
        %v3582 = vpop.f32.mrf.mxu0
        %v3583 = vadd.f32 0.0, %v3582
        %v3584 = vpop.f32.mrf.mxu0
        %v3585 = vpop.f32.mrf.mxu0
        %v3586 = vadd.f32 0.0, %v3585
        %v3587 = vpop.f32.mrf.mxu0
        %3588 = vdwg.mxu0
        %v3589 = vld [vmem:[%s8] sm:$0x1]
        %v3590 = vld [vmem:[%s9] sm:$0x1]
        %v3591 = vld [vmem:[%s12] sm:$0xff]
        %v3592 = vld [vmem:[%s12 + $0x8] sm:$0xff]
        %v3593 = vld [vmem:[%s12 + $0x10] sm:$0xff]
        %v3594 = vld [vmem:[%s12 + $0x18] sm:$0xff]
        %v3595 = vld [vmem:[%s12 + $0x20] sm:$0xff]
        %v3596 = vld [vmem:[%s12 + $0x28] sm:$0xff]
        %v3597 = vld [vmem:[%s12 + $0x30] sm:$0xff]
        %v3598 = vld [vmem:[%s12 + $0x38] sm:$0xff]
        %v3599 = vld [vmem:[%s12 + $0x40] sm:$0xff]
        %v3600 = vld [vmem:[%s12 + $0x48] sm:$0xff]
        %v3601 = vld [vmem:[%s12 + $0x50] sm:$0xff]
        %v3602 = vld [vmem:[%s12 + $0x58] sm:$0xff]
        %v3603 = vld [vmem:[%s12 + $0x60] sm:$0xff]
        %v3604 = vld [vmem:[%s12 + $0x68] sm:$0xff]
        %v3605 = vld [vmem:[%s12 + $0x70] sm:$0xff]
        %v3606 = vld [vmem:[%s12 + $0x78] sm:$0xff]
        %v3607 = vld [vmem:[%s13] sm:$0xff]
        %v3608 = vld [vmem:[%s13 + $0x8] sm:$0xff]
        %v3609 = vld [vmem:[%s13 + $0x10] sm:$0xff]
        %v3610 = vld [vmem:[%s13 + $0x18] sm:$0xff]
        %v3611 = vadd.f32 %v3559, %v3562
        %v3612 = vadd.f32 %v3611, %v3567
        %v3613 = vadd.f32 %v3612, %v3570
        %v3614 = vadd.f32 %v3613, %v3575
        %v3615 = vadd.f32 %v3614, %v3578
        %v3616 = vadd.f32 %v3615, %v3583
        %v3617 = vadd.f32 %v3616, %v3586
        %v3618 = vrot.slane %v3617, 4
        %v3619 = vadd.f32 %v3617, %v3618
        %v3620 = vrot.slane %v3619, 2
        %v3621 = vadd.f32 %v3619, %v3620
        %v3622 = vrot.slane %v3621, 1
        %v3623 = vadd.f32 %v3621, %v3622
        %v3624 = vmul.f32 %v3559, %v3559
        %v3625 = vmul.f32 %v3562, %v3562
        %v3626 = vmul.f32 %v3567, %v3567
        %v3627 = vmul.f32 %v3570, %v3570
        %v3628 = vmul.f32 %v3575, %v3575
        %v3629 = vmul.f32 %v3578, %v3578
        %v3630 = vmul.f32 %v3583, %v3583
        %v3631 = vmul.f32 %v3586, %v3586
        %v3632 = vadd.f32 %v3624, %v3625
        %v3633 = vadd.f32 %v3632, %v3626
        %v3634 = vadd.f32 %v3633, %v3627
        %v3635 = vadd.f32 %v3634, %v3628
        %v3636 = vadd.f32 %v3635, %v3629
        %v3637 = vadd.f32 %v3636, %v3630
        %v3638 = vadd.f32 %v3637, %v3631
        %v3639 = vrot.slane %v3638, 4
        %v3640 = vadd.f32 %v3638, %v3639
        %v3641 = vrot.slane %v3640, 2
        %v3642 = vadd.f32 %v3640, %v3641
        %v3643 = vrot.slane %v3642, 1
        %v3644 = vadd.f32 %v3642, %v3643
        %v3645 = vsel %vm726, %v3623, %v3644
        %3646 = vmatprep.subr.mxu0 0.0
        %3647 = vmatpush1.msra.mxu0 %v3606
        %3648 = vmatprep.subr.mxu0 0.0
        %3649 = vmatpush1.msra.mxu0 %v3605
        %3650 = vmatprep.subr.mxu0 0.0
        %3651 = vmatpush1.msra.mxu0 %v3604
        %3652 = vmatprep.subr.mxu0 0.0
        %3653 = vmatpush1.msra.mxu0 %v3603
        %3654 = vmatprep.subr.mxu0 0.0
        %3655 = vmatpush1.msra.mxu0 %v3602
        %3656 = vmatprep.subr.mxu0 0.0
        %3657 = vmatpush1.msra.mxu0 %v3601
        %3658 = vmatprep.subr.mxu0 0.0
        %3659 = vmatpush1.msra.mxu0 %v3600
        %3660 = vmatprep.subr.mxu0 0.0
        %3661 = vmatpush1.msra.mxu0 %v3599
        %3662 = vmatprep.subr.mxu0 0.0
        %3663 = vmatpush1.msra.mxu0 %v3598
        %3664 = vmatprep.subr.mxu0 0.0
        %3665 = vmatpush1.msra.mxu0 %v3597
        %3666 = vmatprep.subr.mxu0 0.0
        %3667 = vmatpush1.msra.mxu0 %v3596
        %3668 = vmatprep.subr.mxu0 0.0
        %3669 = vmatpush1.msra.mxu0 %v3595
        %3670 = vmatprep.subr.mxu0 0.0
        %3671 = vmatpush1.msra.mxu0 %v3594
        %3672 = vmatprep.subr.mxu0 0.0
        %3673 = vmatpush1.msra.mxu0 %v3593
        %3674 = vmatprep.subr.mxu0 0.0
        %3675 = vmatpush1.msra.mxu0 %v3592
        %3676 = vmatprep.subr.mxu0 0.0
        %3677 = vmatpush1.msra.mxu0 %v3591
        %3678 = vmatprep.subr.mxu0 0.0
        %3679 = vmatpush2.msra.mxu0 0.0
        %3680 = vmatprep.subr.mxu0 0.0
        %3681 = vmatpush2.msra.mxu0 0.0
        %3682 = vmatprep.subr.mxu0 0.0
        %3683 = vmatpush2.msra.mxu0 0.0
        %3684 = vmatprep.subr.mxu0 0.0
        %3685 = vmatpush2.msra.mxu0 0.0
        %3686 = vmatprep.subr.mxu0 0.0
        %3687 = vmatpush2.msra.mxu0 0.0
        %3688 = vmatprep.subr.mxu0 0.0
        %3689 = vmatpush2.msra.mxu0 0.0
        %3690 = vmatprep.subr.mxu0 0.0
        %3691 = vmatpush2.msra.mxu0 0.0
        %3692 = vmatprep.subr.mxu0 0.0
        %3693 = vmatpush2.msra.mxu0 0.0
        %3694 = vmatprep.subr.mxu0 0.0
        %3695 = vmatpush2.msra.mxu0 0.0
        %3696 = vmatprep.subr.mxu0 0.0
        %3697 = vmatpush2.msra.mxu0 0.0
        %3698 = vmatprep.subr.mxu0 0.0
        %3699 = vmatpush2.msra.mxu0 0.0
        %3700 = vmatprep.subr.mxu0 0.0
        %3701 = vmatpush2.msra.mxu0 0.0
        %3702 = vmatprep.subr.mxu0 0.0
        %3703 = vmatpush2.msra.mxu0 0.0
        %3704 = vmatprep.subr.mxu0 0.0
        %3705 = vmatpush2.msra.mxu0 0.0
        %3706 = vmatprep.subr.mxu0 0.0
        %3707 = vmatpush2.msra.mxu0 0.0
        %3708 = vmatprep.subr.mxu0 0.0
        %3709 = vmatpush2.msra.mxu0 0.0
        %3710 = vmatprep.mubr.f32.mxu0 0.0
        %3711 = vmatmul.mubr.f32.gmra.mxu0 %v3645
        %v3712 = vpop.f32.mrf.mxu0
        %v3713 = vadd.f32 0.0, %v3712
        %v3714 = vpop.f32.mrf.mxu0
        %3715 = vdwg.mxu0
        %v3716 = vmul.f32 %v3713, 0.00390625
        %v3717 = vmul.f32 %v3716, %v3716
        %v3719 = vrot.slane %v3717, 7
        %v3721 = vsub.f32 %v3716, %v3719
        %v3722 = vmax.f32 %v3721, 0.0
        %v3723 = vadd.f32 %v3722, 1e-05
        %v3724 = vrsqrt.pop %v3723
        %v3725 = vsel %vm726, %v3716, %v3724
        %v3727 = vsel %vm808, %v3725, 0
        %3729 = vmatprep.subr.mxu0 0.0
        %3730 = vmatpush1.msra.mxu0 0.0
        %3731 = vmatprep.subr.mxu0 0.0
        %3732 = vmatpush1.msra.mxu0 0.0
        %3733 = vmatprep.subr.mxu0 0.0
        %3734 = vmatpush1.msra.mxu0 0.0
        %3735 = vmatprep.subr.mxu0 0.0
        %3736 = vmatpush1.msra.mxu0 0.0
        %3737 = vmatprep.subr.mxu0 0.0
        %3738 = vmatpush1.msra.mxu0 0.0
        %3739 = vmatprep.subr.mxu0 0.0
        %3740 = vmatpush1.msra.mxu0 0.0
        %3741 = vmatprep.subr.mxu0 0.0
        %3742 = vmatpush1.msra.mxu0 0.0
        %3743 = vmatprep.subr.mxu0 0.0
        %3744 = vmatpush1.msra.mxu0 0.0
        %3745 = vmatprep.subr.mxu0 0.0
        %3746 = vmatpush1.msra.mxu0 0.0
        %3747 = vmatprep.subr.mxu0 0.0
        %3748 = vmatpush1.msra.mxu0 0.0
        %3749 = vmatprep.subr.mxu0 0.0
        %3750 = vmatpush1.msra.mxu0 0.0
        %3751 = vmatprep.subr.mxu0 0.0
        %3752 = vmatpush1.msra.mxu0 0.0
        %3753 = vmatprep.subr.mxu0 0.0
        %3754 = vmatpush1.msra.mxu0 %v3610
        %3755 = vmatprep.subr.mxu0 0.0
        %3756 = vmatpush1.msra.mxu0 %v3609
        %3757 = vmatprep.subr.mxu0 0.0
        %3758 = vmatpush1.msra.mxu0 %v3608
        %3759 = vmatprep.subr.mxu0 0.0
        %3760 = vmatpush1.msra.mxu0 %v3607
        %3761 = vmatprep.subr.mxu0 0.0
        %3762 = vmatpush2.msra.mxu0 0.0
        %3763 = vmatprep.subr.mxu0 0.0
        %3764 = vmatpush2.msra.mxu0 0.0
        %3765 = vmatprep.subr.mxu0 0.0
        %3766 = vmatpush2.msra.mxu0 0.0
        %3767 = vmatprep.subr.mxu0 0.0
        %3768 = vmatpush2.msra.mxu0 0.0
        %3769 = vmatprep.subr.mxu0 0.0
        %3770 = vmatpush2.msra.mxu0 0.0
        %3771 = vmatprep.subr.mxu0 0.0
        %3772 = vmatpush2.msra.mxu0 0.0
        %3773 = vmatprep.subr.mxu0 0.0
        %3774 = vmatpush2.msra.mxu0 0.0
        %3775 = vmatprep.subr.mxu0 0.0
        %3776 = vmatpush2.msra.mxu0 0.0
        %3777 = vmatprep.subr.mxu0 0.0
        %3778 = vmatpush2.msra.mxu0 0.0
        %3779 = vmatprep.subr.mxu0 0.0
        %3780 = vmatpush2.msra.mxu0 0.0
        %3781 = vmatprep.subr.mxu0 0.0
        %3782 = vmatpush2.msra.mxu0 0.0
        %3783 = vmatprep.subr.mxu0 0.0
        %3784 = vmatpush2.msra.mxu0 0.0
        %3785 = vmatprep.subr.mxu0 0.0
        %3786 = vmatpush2.msra.mxu0 0.0
        %3787 = vmatprep.subr.mxu0 0.0
        %3788 = vmatpush2.msra.mxu0 0.0
        %3789 = vmatprep.subr.mxu0 0.0
        %3790 = vmatpush2.msra.mxu0 0.0
        %3791 = vmatprep.subr.mxu0 0.0
        %3792 = vmatpush2.msra.mxu0 0.0
        %3793 = vmatprep.mubr.f32.mxu0 0.0
        %3794 = vmatmul.mubr.f32.gmra.mxu0 %v3727
        %v3795 = vpop.f32.mrf.mxu0
        %v3796 = vadd.f32 0.0, %v3795
        %v3797 = vpop.f32.mrf.mxu0
        %3798 = vdwg.mxu0
        %v3800 = vlaneseq
        %v3801 = vshrl.u32 %v3800, 7
        %v3802 = vsub.s32 0, %v3801
        %v3803 = vrot.slane %v3589, %v3802
        %v3805 = vmul.f32 %v3796, %v3803
        %v3807 = vrot.slane %v3805, 1
        %v3809 = vmul.f32 %v3796, %v3807
        %v3810 = vsub.f32 %v3590, %v3809
        %v3811 = vlaneseq
        %v3812 = vshrl.u32 %v3811, 7
        %v3813 = vsub.s32 1, %v3812
        %v3814 = vrot.slane %v3805, %v3813
        %v3815 = vmul.f32 %v3559, %v3814
        %v3816 = vmul.f32 %v3562, %v3814
        %v3817 = vmul.f32 %v3567, %v3814
        %v3818 = vmul.f32 %v3570, %v3814
        %v3819 = vmul.f32 %v3575, %v3814
        %v3820 = vmul.f32 %v3578, %v3814
        %v3821 = vmul.f32 %v3583, %v3814
        %v3822 = vmul.f32 %v3586, %v3814
        %v3824 = vlaneseq
        %v3825 = vshrl.u32 %v3824, 7
        %v3826 = vsub.s32 0, %v3825
        %v3827 = vrot.slane %v3810, %v3826
        %v3829 = vadd.f32 %v3815, %v3827
        %v3830 = vadd.f32 %v3816, %v3827
        %v3831 = vadd.f32 %v3817, %v3827
        %v3832 = vadd.f32 %v3818, %v3827
        %v3833 = vadd.f32 %v3819, %v3827
        %v3834 = vadd.f32 %v3820, %v3827
        %v3835 = vadd.f32 %v3821, %v3827
        %v3836 = vadd.f32 %v3822, %v3827
        %v3837 = vunpack.c.l.bf16 %v509
        %v3838 = vunpack.c.l.bf16 %v510
        %v3839 = vunpack.c.l.bf16 %v511
        %v3840 = vunpack.c.l.bf16 %v512
        %v3841 = vunpack.c.l.bf16 %v513
        %v3842 = vunpack.c.l.bf16 %v514
        %v3843 = vunpack.c.l.bf16 %v515
        %v3844 = vunpack.c.l.bf16 %v516
        %v3845 = vadd.f32 %v3829, %v3837
        %v3846 = vadd.f32 %v3830, %v3838
        %v3847 = vadd.f32 %v3831, %v3839
        %v3848 = vadd.f32 %v3832, %v3840
        %v3849 = vadd.f32 %v3833, %v3841
        %v3850 = vadd.f32 %v3834, %v3842
        %v3851 = vadd.f32 %v3835, %v3843
        %v3852 = vadd.f32 %v3836, %v3844
        %v3853 = vmax.f32 %v3845, 0.0
        %v3854 = vmax.f32 %v3846, 0.0
        %v3855 = vmax.f32 %v3847, 0.0
        %v3856 = vmax.f32 %v3848, 0.0
        %v3857 = vmax.f32 %v3849, 0.0
        %v3858 = vmax.f32 %v3850, 0.0
        %v3859 = vmax.f32 %v3851, 0.0
        %v3860 = vmax.f32 %v3852, 0.0
        %v3861 = vpack.c.bf16 %v3854, %v3853
        %v3862 = vpack.c.bf16 %v3856, %v3855
        %v3863 = vpack.c.bf16 %v3858, %v3857
        %v3864 = vpack.c.bf16 %v3860, %v3859
        %v3869 = vunpack.c.l.b16 %v3861
        %v3870 = vunpack.c.h.b16 %v3861
        %v3871 = vunpack.c.l.b16 %v3862
        %v3872 = vunpack.c.h.b16 %v3862
        %v3873 = vunpack.c.l.b16 %v3863
        %v3874 = vunpack.c.h.b16 %v3863
        %v3875 = vunpack.c.l.b16 %v3864
        %v3876 = vunpack.c.h.b16 %v3864
        %v3877 = vpack.c.b16 %v3869, %v3869
        %v3878 = vpack.c.b16 %v3870, %v3870
        %v3879 = vpack.c.b16 %v3871, %v3871
        %v3880 = vpack.c.b16 %v3872, %v3872
        %v3881 = vpack.c.b16 %v3873, %v3873
        %v3882 = vpack.c.b16 %v3874, %v3874
        %v3883 = vpack.c.b16 %v3875, %v3875
        %v3884 = vpack.c.b16 %v3876, %v3876
        %3893 = vst [vmem:[%s502] sm:$0xf] %v3877
        %3894 = vst [vmem:[%s502 + $0x4] sm:$0xf] %v3878
        %3895 = vst [vmem:[%s502 + $0x8] sm:$0xf] %v3879
        %3896 = vst [vmem:[%s502 + $0xc] sm:$0xf] %v3880
        %3897 = vst [vmem:[%s502 + $0x10] sm:$0xf] %v3881
        %3898 = vst [vmem:[%s502 + $0x14] sm:$0xf] %v3882
        %3899 = vst [vmem:[%s502 + $0x18] sm:$0xf] %v3883
        %3900 = vst [vmem:[%s502 + $0x1c] sm:$0xf] %v3884
        %s3901 = sand.u32 %s358, 1
        %s3902 = scalar_lea.sflag [#allocation4], %s3901
        %s3903 = sand.u32 %s358, 1
        %s3904 = smul.addr %s3903, 32
        %s3905 = scalar_lea.vmem [#allocation5], %s3904
        // Predicated region
        $region85: #{tpu_custom_call.1} parent=79 // pred_check
          %p3906 = pneg %p368
        $region86: #{tpu_custom_call.1} parent=79 // pred_check_branch
          %3908 = sbr.rel (%p3906) target = $region88
        $region87: #{tpu_custom_call.1} parent=79 // pred_region
          %s3910 = ssub.s32 512, 512
          %3911 = vsyncadd %s3902, %s3910
          %s3912 = smul.addr %s30, 8
          %s3913 = smul.addr %s3912, 64
          %s3914 = scalar_lea.hbm %s15, %s3913
          %s3915 = sshll.u32 %s3905, 4
          %s3916 = int_to_ptr.vmem [resolvable:$true] %s3915
          %3921 = dma.vmem_to_hbm [thread:$0]  %s3916, 512, %s3914, %s3902, 64, 64, 4
        $region88: #{tpu_custom_call.1} parent=79 // pred_fallthru
          _
      $region80: #{tpu_custom_call.1} parent=5 // pred_fallthru
        _
      %p3922 = scmp.le.s32.totalorder 2, %s25
      // Predicated region
      $region89: #{tpu_custom_call.1} parent=5 // pred_check
        %p3923 = pneg %p3922
      $region90: #{tpu_custom_call.1} parent=5 // pred_check_branch
        %3925 = sbr.rel (%p3923) target = $region92
      $region91: #{tpu_custom_call.1} parent=5 // pred_region
        %s3926 = ssub.s32 %s25, 2
        // Predicated region
        $region93: #{tpu_custom_call.1} parent=91 // pred_check
          %p3927 = pneg %p374
        $region94: #{tpu_custom_call.1} parent=91 // pred_check_branch
          %3929 = sbr.rel (%p3927) target = $region96
        $region95: #{tpu_custom_call.1} parent=91 // pred_region
          %s3930 = sand.u32 %s359, 1
          %s3931 = scalar_lea.sflag [#allocation4], %s3930
          %s3932 = sand.u32 %s359, 1
          %s3933 = smul.addr %s3932, 32
          %s3934 = scalar_lea.vmem [#allocation5], %s3933
          %3935 = dma.done %s3931, 512
        $region96: #{tpu_custom_call.1} parent=91 // pred_fallthru
          _
      $region92: #{tpu_custom_call.1} parent=5 // pred_fallthru
        _
    $region6: #{tpu_custom_call.1} parent=1 // loop_footer
      %s29 = sadd.s32 1, %s25
    $region7: #{tpu_custom_call.1} parent=1 // loop_footer_branch
      %24 = sbr.rel target = $region3
    $region8: #{tpu_custom_call.1} parent=1 // loop_exit
      _
    %3936 = vsyncpa [#allocation3], 1
    %s3937 = scalar_lea.sflag [#allocation3], 1
    %3938 = vsyncpa %s3937, 1
    %3939 = vsyncpa [#allocation4], 1
    %s3940 = scalar_lea.sflag [#allocation4], 1
    %3941 = vsyncpa %s3940, 1

// kernel: tpu_custom_call.1
$region0: #{tpu_custom_call.1}
  #allocation0 [shape = 'u32[]', space=smem, size = 0x4, offset = 0x4, fixed_abs, tag = 'smem constant byte address 0x4 - core index']
  #allocation1 [shape = 'u32[144,128]{1,0:T(1,128)}', space=vmem, size = 0x12000, scoped, tag = 'internal scratch']
  %s0 = inlined_call_operand.vmem [shape: bf16[2,64,128], index: 0, kind: input, shape index: {}]
  %s1 = inlined_call_operand.vmem [shape: bf16[128,128], index: 1, kind: input, shape index: {}]
  %s2 = inlined_call_operand.hbm [shape: bf16[1152,128], index: 2, kind: input, shape index: {}]
  %s3 = inlined_call_operand.vmem [shape: bf16[128,128], index: 3, kind: input, shape index: {}]
  %s4 = inlined_call_operand.vmem [shape: f32[1,128], index: 4, kind: input, shape index: {}]
  %s5 = inlined_call_operand.vmem [shape: f32[1,128], index: 5, kind: input, shape index: {}]
  %s6 = inlined_call_operand.vmem [shape: f32[1,128], index: 6, kind: input, shape index: {}]
  %s7 = inlined_call_operand.vmem [shape: f32[1,128], index: 7, kind: input, shape index: {}]
  %s8 = inlined_call_operand.vmem [shape: f32[1,128], index: 8, kind: input, shape index: {}]
  %s9 = inlined_call_operand.vmem [shape: f32[1,128], index: 9, kind: input, shape index: {}]
  %s10 = inlined_call_operand.vmem [shape: f32[128,32], index: 10, kind: input, shape index: {}]
  %s11 = inlined_call_operand.vmem [shape: f32[32,128], index: 11, kind: input, shape index: {}]
  %s12 = inlined_call_operand.vmem [shape: f32[128,32], index: 12, kind: input, shape index: {}]
  %s13 = inlined_call_operand.vmem [shape: f32[32,128], index: 13, kind: input, shape index: {}]
  %s14 = inlined_call_operand.vmem [shape: bf16[64,9], index: 14, kind: input, shape index: {}]
  %s15 = inlined_call_operand.hbm [shape: bf16[2,64,128], index: 15, kind: output, shape index: {}]
  %s16 = sld [smem:[#allocation0]]
  $region97: #{tpu_custom_call.1} parent=0
    _
  %s18 = ssub.s32 1, %s16
  %s19 = scalar_select 0, %s18, %s16
  $region1: #{tpu_custom_call.1} parent=0
    #allocation2 [shape = 'u8[294912]{0}', space=vmem, size = 0x48000, scoped, tag = 'input window, operand 2, single buffered']
    #allocation3 [shape = 's32[2]{0}', space=sflag, size = 0x8, scoped, tag = 'scoped memory for tpu_custom_call.1']
    #allocation4 [shape = 's32[2]{0}', space=sflag, size = 0x8, scoped, tag = 'scoped memory for tpu_custom_call.1']
    #allocation5 [shape = 'u8[32768]{0}', space=vmem, size = 0x8000, scoped, tag = 'output window, operand 0']
    %20 = vsyncpa [#allocation3], 0
    %21 = vsyncpa [#allocation4], 0
    %s22 = scalar_lea.sflag [#allocation4], 1
    %23 = vsyncpa %s22, 0
    loop: start=0, step=1, limit=4
    $region2: #{tpu_custom_call.1} parent=1 // loop_pre_header
      _
    $region3: #{tpu_custom_call.1} parent=1 // loop_header
      %s25 = sphi 0, %s29
      %p26 = scmp.ge.s32.totalorder %s25, 4
      %s35 = sphi 0, %s37
      %s38 = sphi 0, %s35
      %s39 = sphi 0, %s38
      %s55 = sphi 0, %s39
      %s59 = sphi 0, %s59
      %s61 = sphi 0, %s59
      %s62 = sphi 0, %s61
      %s76 = sphi 0, %s62
      %s80 = sphi 0, %s80
      %s82 = sphi 0, %s80
      %s83 = sphi 0, %s82
      %s97 = sphi 0, %s83
      %s101 = sphi 0, %s101
      %s103 = sphi 0, %s101
      %s104 = sphi 0, %s103
      %s118 = sphi 0, %s104
      %s122 = sphi 0, %s122
      %s124 = sphi 0, %s122
      %s125 = sphi 0, %s124
      %s139 = sphi 0, %s125
      %s143 = sphi 0, %s143
      %s145 = sphi 0, %s143
      %s146 = sphi 0, %s145
      %s160 = sphi 0, %s146
      %s164 = sphi 0, %s164
      %s166 = sphi 0, %s164
      %s167 = sphi 0, %s166
      %s181 = sphi 0, %s167
      %s185 = sphi 0, %s185
      %s187 = sphi 0, %s185
      %s188 = sphi 0, %s187
      %s202 = sphi 0, %s188
      %s206 = sphi 0, %s206
      %s208 = sphi 0, %s206
      %s209 = sphi 0, %s208
      %s223 = sphi 0, %s209
      %s227 = sphi 0, %s227
      %s229 = sphi 0, %s227
      %s230 = sphi 0, %s229
      %s244 = sphi 0, %s230
      %s248 = sphi 0, %s248
      %s250 = sphi 0, %s248
      %s251 = sphi 0, %s250
      %s265 = sphi 0, %s251
      %s269 = sphi 0, %s269
      %s271 = sphi 0, %s269
      %s272 = sphi 0, %s271
      %s286 = sphi 0, %s272
      %s290 = sphi 0, %s290
      %s292 = sphi 0, %s290
      %s293 = sphi 0, %s292
      %s307 = sphi 0, %s293
      %s311 = sphi 0, %s311
      %s313 = sphi 0, %s311
      %s314 = sphi 0, %s313
      %s328 = sphi 0, %s314
      %s332 = sphi 0, %s332
      %s334 = sphi 0, %s332
      %s335 = sphi 0, %s334
      %s349 = sphi 0, %s335
      %s355 = sphi 0, %s357
      %s358 = sphi 0, %s355
      %s359 = sphi 0, %s358
      %s375 = sphi 0, %s359
    $region4: #{tpu_custom_call.1} parent=1 // loop_header_branch
      %28 = sbr.rel (%p26) target = $region8
    $region5: #{tpu_custom_call.1} parent=1 // loop_body
      %s30 = ssub.s32 %s25, 1
      %s31 = ssub.s32 %s25, 2
      %s32 = sadd.s32 %s25, 1
      %s33 = ssub.s32 %s25, %s32
      %p34 = scmp.eq.s32.totalorder %s33, 0
      %s36 = sadd.s32 %s35, 1
      %s37 = scalar_select %p34, %s35, %s36
      %p40 = pneg %p34
      %p41 = scmp.eq.s32.totalorder %s25, 1
      %p42 = por %p40, %p41
      %p43 = scmp.ne.s32.totalorder %s35, %s38
      %p44 = scmp.eq.s32.totalorder %s25, 0
      %p45 = por %p43, %p44
      %p46 = scmp.ne.s32.totalorder %s35, %s38
      %p47 = scmp.eq.s32.totalorder %s30, 1
      %p48 = por %p46, %p47
      %p49 = scmp.ne.s32.totalorder %s38, %s39
      %p50 = scmp.eq.s32.totalorder %s30, 0
      %p51 = por %p49, %p50
      %p52 = scmp.ne.s32.totalorder %s38, %s39
      %p53 = scmp.eq.s32.totalorder %s31, 1
      %p54 = por %p52, %p53
      %p56 = scmp.ne.s32.totalorder %s39, %s55
      %p57 = scmp.eq.s32.totalorder %s31, 0
      %p58 = por %p56, %p57
      %s60 = sadd.s32 %s59, 1
      %p63 = scmp.eq.s32.totalorder %s25, 1
      %p64 = scmp.ne.s32.totalorder %s59, %s61
      %p65 = scmp.eq.s32.totalorder %s25, 0
      %p66 = por %p64, %p65
      %p67 = scmp.ne.s32.totalorder %s59, %s61
      %p68 = scmp.eq.s32.totalorder %s30, 1
      %p69 = por %p67, %p68
      %p70 = scmp.ne.s32.totalorder %s61, %s62
      %p71 = scmp.eq.s32.totalorder %s30, 0
      %p72 = por %p70, %p71
      %p73 = scmp.ne.s32.totalorder %s61, %s62
      %p74 = scmp.eq.s32.totalorder %s31, 1
      %p75 = por %p73, %p74
      %p77 = scmp.ne.s32.totalorder %s62, %s76
      %p78 = scmp.eq.s32.totalorder %s31, 0
      %p79 = por %p77, %p78
      %s81 = sadd.s32 %s80, 1
      %p84 = scmp.eq.s32.totalorder %s25, 1
      %p85 = scmp.ne.s32.totalorder %s80, %s82
      %p86 = scmp.eq.s32.totalorder %s25, 0
      %p87 = por %p85, %p86
      %p88 = scmp.ne.s32.totalorder %s80, %s82
      %p89 = scmp.eq.s32.totalorder %s30, 1
      %p90 = por %p88, %p89
      %p91 = scmp.ne.s32.totalorder %s82, %s83
      %p92 = scmp.eq.s32.totalorder %s30, 0
      %p93 = por %p91, %p92
      %p94 = scmp.ne.s32.totalorder %s82, %s83
      %p95 = scmp.eq.s32.totalorder %s31, 1
      %p96 = por %p94, %p95
      %p98 = scmp.ne.s32.totalorder %s83, %s97
      %p99 = scmp.eq.s32.totalorder %s31, 0
      %p100 = por %p98, %p99
      %s102 = sadd.s32 %s101, 1
      %p105 = scmp.eq.s32.totalorder %s25, 1
      %p106 = scmp.ne.s32.totalorder %s101, %s103
      %p107 = scmp.eq.s32.totalorder %s25, 0
      %p108 = por %p106, %p107
      %p109 = scmp.ne.s32.totalorder %s101, %s103
      %p110 = scmp.eq.s32.totalorder %s30, 1
      %p111 = por %p109, %p110
      %p112 = scmp.ne.s32.totalorder %s103, %s104
      %p113 = scmp.eq.s32.totalorder %s30, 0
      %p114 = por %p112, %p113
      %p115 = scmp.ne.s32.totalorder %s103, %s104
      %p116 = scmp.eq.s32.totalorder %s31, 1
      %p117 = por %p115, %p116
      %p119 = scmp.ne.s32.totalorder %s104, %s118
      %p120 = scmp.eq.s32.totalorder %s31, 0
      %p121 = por %p119, %p120
      %s123 = sadd.s32 %s122, 1
      %p126 = scmp.eq.s32.totalorder %s25, 1
      %p127 = scmp.ne.s32.totalorder %s122, %s124
      %p128 = scmp.eq.s32.totalorder %s25, 0
      %p129 = por %p127, %p128
      %p130 = scmp.ne.s32.totalorder %s122, %s124
      %p131 = scmp.eq.s32.totalorder %s30, 1
      %p132 = por %p130, %p131
      %p133 = scmp.ne.s32.totalorder %s124, %s125
      %p134 = scmp.eq.s32.totalorder %s30, 0
      %p135 = por %p133, %p134
      %p136 = scmp.ne.s32.totalorder %s124, %s125
      %p137 = scmp.eq.s32.totalorder %s31, 1
      %p138 = por %p136, %p137
      %p140 = scmp.ne.s32.totalorder %s125, %s139
      %p141 = scmp.eq.s32.totalorder %s31, 0
      %p142 = por %p140, %p141
      %s144 = sadd.s32 %s143, 1
      %p147 = scmp.eq.s32.totalorder %s25, 1
      %p148 = scmp.ne.s32.totalorder %s143, %s145
      %p149 = scmp.eq.s32.totalorder %s25, 0
      %p150 = por %p148, %p149
      %p151 = scmp.ne.s32.totalorder %s143, %s145
      %p152 = scmp.eq.s32.totalorder %s30, 1
      %p153 = por %p151, %p152
      %p154 = scmp.ne.s32.totalorder %s145, %s146
      %p155 = scmp.eq.s32.totalorder %s30, 0
      %p156 = por %p154, %p155
      %p157 = scmp.ne.s32.totalorder %s145, %s146
      %p158 = scmp.eq.s32.totalorder %s31, 1
      %p159 = por %p157, %p158
      %p161 = scmp.ne.s32.totalorder %s146, %s160
      %p162 = scmp.eq.s32.totalorder %s31, 0
      %p163 = por %p161, %p162
      %s165 = sadd.s32 %s164, 1
      %p168 = scmp.eq.s32.totalorder %s25, 1
      %p169 = scmp.ne.s32.totalorder %s164, %s166
      %p170 = scmp.eq.s32.totalorder %s25, 0
      %p171 = por %p169, %p170
      %p172 = scmp.ne.s32.totalorder %s164, %s166
      %p173 = scmp.eq.s32.totalorder %s30, 1
      %p174 = por %p172, %p173
      %p175 = scmp.ne.s32.totalorder %s166, %s167
      %p176 = scmp.eq.s32.totalorder %s30, 0
      %p177 = por %p175, %p176
      %p178 = scmp.ne.s32.totalorder %s166, %s167
      %p179 = scmp.eq.s32.totalorder %s31, 1
      %p180 = por %p178, %p179
      %p182 = scmp.ne.s32.totalorder %s167, %s181
      %p183 = scmp.eq.s32.totalorder %s31, 0
      %p184 = por %p182, %p183
      %s186 = sadd.s32 %s185, 1
      %p189 = scmp.eq.s32.totalorder %s25, 1
      %p190 = scmp.ne.s32.totalorder %s185, %s187
      %p191 = scmp.eq.s32.totalorder %s25, 0
      %p192 = por %p190, %p191
      %p193 = scmp.ne.s32.totalorder %s185, %s187
      %p194 = scmp.eq.s32.totalorder %s30, 1
      %p195 = por %p193, %p194
      %p196 = scmp.ne.s32.totalorder %s187, %s188
      %p197 = scmp.eq.s32.totalorder %s30, 0
      %p198 = por %p196, %p197
      %p199 = scmp.ne.s32.totalorder %s187, %s188
      %p200 = scmp.eq.s32.totalorder %s31, 1
      %p201 = por %p199, %p200
      %p203 = scmp.ne.s32.totalorder %s188, %s202
      %p204 = scmp.eq.s32.totalorder %s31, 0
      %p205 = por %p203, %p204
      %s207 = sadd.s32 %s206, 1
      %p210 = scmp.eq.s32.totalorder %s25, 1
      %p211 = scmp.ne.s32.totalorder %s206, %s208
      %p212 = scmp.eq.s32.totalorder %s25, 0
      %p213 = por %p211, %p212
      %p214 = scmp.ne.s32.totalorder %s206, %s208
      %p215 = scmp.eq.s32.totalorder %s30, 1
      %p216 = por %p214, %p215
      %p217 = scmp.ne.s32.totalorder %s208, %s209
      %p218 = scmp.eq.s32.totalorder %s30, 0
      %p219 = por %p217, %p218
      %p220 = scmp.ne.s32.totalorder %s208, %s209
      %p221 = scmp.eq.s32.totalorder %s31, 1
      %p222 = por %p220, %p221
      %p224 = scmp.ne.s32.totalorder %s209, %s223
      %p225 = scmp.eq.s32.totalorder %s31, 0
      %p226 = por %p224, %p225
      %s228 = sadd.s32 %s227, 1
      %p231 = scmp.eq.s32.totalorder %s25, 1
      %p232 = scmp.ne.s32.totalorder %s227, %s229
      %p233 = scmp.eq.s32.totalorder %s25, 0
      %p234 = por %p232, %p233
      %p235 = scmp.ne.s32.totalorder %s227, %s229
      %p236 = scmp.eq.s32.totalorder %s30, 1
      %p237 = por %p235, %p236
      %p238 = scmp.ne.s32.totalorder %s229, %s230
      %p239 = scmp.eq.s32.totalorder %s30, 0
      %p240 = por %p238, %p239
      %p241 = scmp.ne.s32.totalorder %s229, %s230
      %p242 = scmp.eq.s32.totalorder %s31, 1
      %p243 = por %p241, %p242
      %p245 = scmp.ne.s32.totalorder %s230, %s244
      %p246 = scmp.eq.s32.totalorder %s31, 0
      %p247 = por %p245, %p246
      %s249 = sadd.s32 %s248, 1
      %p252 = scmp.eq.s32.totalorder %s25, 1
      %p253 = scmp.ne.s32.totalorder %s248, %s250
      %p254 = scmp.eq.s32.totalorder %s25, 0
      %p255 = por %p253, %p254
      %p256 = scmp.ne.s32.totalorder %s248, %s250
      %p257 = scmp.eq.s32.totalorder %s30, 1
      %p258 = por %p256, %p257
      %p259 = scmp.ne.s32.totalorder %s250, %s251
      %p260 = scmp.eq.s32.totalorder %s30, 0
      %p261 = por %p259, %p260
      %p262 = scmp.ne.s32.totalorder %s250, %s251
      %p263 = scmp.eq.s32.totalorder %s31, 1
      %p264 = por %p262, %p263
      %p266 = scmp.ne.s32.totalorder %s251, %s265
      %p267 = scmp.eq.s32.totalorder %s31, 0
      %p268 = por %p266, %p267
      %s270 = sadd.s32 %s269, 1
      %p273 = scmp.eq.s32.totalorder %s25, 1
      %p274 = scmp.ne.s32.totalorder %s269, %s271
      %p275 = scmp.eq.s32.totalorder %s25, 0
      %p276 = por %p274, %p275
      %p277 = scmp.ne.s32.totalorder %s269, %s271
      %p278 = scmp.eq.s32.totalorder %s30, 1
      %p279 = por %p277, %p278
      %p280 = scmp.ne.s32.totalorder %s271, %s272
      %p281 = scmp.eq.s32.totalorder %s30, 0
      %p282 = por %p280, %p281
      %p283 = scmp.ne.s32.totalorder %s271, %s272
      %p284 = scmp.eq.s32.totalorder %s31, 1
      %p285 = por %p283, %p284
      %p287 = scmp.ne.s32.totalorder %s272, %s286
      %p288 = scmp.eq.s32.totalorder %s31, 0
      %p289 = por %p287, %p288
      %s291 = sadd.s32 %s290, 1
      %p294 = scmp.eq.s32.totalorder %s25, 1
      %p295 = scmp.ne.s32.totalorder %s290, %s292
      %p296 = scmp.eq.s32.totalorder %s25, 0
      %p297 = por %p295, %p296
      %p298 = scmp.ne.s32.totalorder %s290, %s292
      %p299 = scmp.eq.s32.totalorder %s30, 1
      %p300 = por %p298, %p299
      %p301 = scmp.ne.s32.totalorder %s292, %s293
      %p302 = scmp.eq.s32.totalorder %s30, 0
      %p303 = por %p301, %p302
      %p304 = scmp.ne.s32.totalorder %s292, %s293
      %p305 = scmp.eq.s32.totalorder %s31, 1
      %p306 = por %p304, %p305
      %p308 = scmp.ne.s32.totalorder %s293, %s307
      %p309 = scmp.eq.s32.totalorder %s31, 0
      %p310 = por %p308, %p309
      %s312 = sadd.s32 %s311, 1
      %p315 = scmp.eq.s32.totalorder %s25, 1
      %p316 = scmp.ne.s32.totalorder %s311, %s313
      %p317 = scmp.eq.s32.totalorder %s25, 0
      %p318 = por %p316, %p317
      %p319 = scmp.ne.s32.totalorder %s311, %s313
      %p320 = scmp.eq.s32.totalorder %s30, 1
      %p321 = por %p319, %p320
      %p322 = scmp.ne.s32.totalorder %s313, %s314
      %p323 = scmp.eq.s32.totalorder %s30, 0
      %p324 = por %p322, %p323
      %p325 = scmp.ne.s32.totalorder %s313, %s314
      %p326 = scmp.eq.s32.totalorder %s31, 1
      %p327 = por %p325, %p326
      %p329 = scmp.ne.s32.totalorder %s314, %s328
      %p330 = scmp.eq.s32.totalorder %s31, 0
      %p331 = por %p329, %p330
      %s333 = sadd.s32 %s332, 1
      %p336 = scmp.eq.s32.totalorder %s25, 1
      %p337 = scmp.ne.s32.totalorder %s332, %s334
      %p338 = scmp.eq.s32.totalorder %s25, 0
      %p339 = por %p337, %p338
      %p340 = scmp.ne.s32.totalorder %s332, %s334
      %p341 = scmp.eq.s32.totalorder %s30, 1
      %p342 = por %p340, %p341
      %p343 = scmp.ne.s32.totalorder %s334, %s335
      %p344 = scmp.eq.s32.totalorder %s30, 0
      %p345 = por %p343, %p344
      %p346 = scmp.ne.s32.totalorder %s334, %s335
      %p347 = scmp.eq.s32.totalorder %s31, 1
      %p348 = por %p346, %p347
      %p350 = scmp.ne.s32.totalorder %s335, %s349
      %p351 = scmp.eq.s32.totalorder %s31, 0
      %p352 = por %p350, %p351
      %s353 = ssub.s32 %s25, %s32
      %p354 = scmp.eq.s32.totalorder %s353, 0
      %s356 = sadd.s32 %s355, 1
      %s357 = scalar_select %p354, %s355, %s356
      %p360 = pneg %p354
      %p361 = scmp.eq.s32.totalorder %s25, 1
      %p362 = por %p360, %p361
      %p363 = scmp.ne.s32.totalorder %s355, %s358
      %p364 = scmp.eq.s32.totalorder %s25, 0
      %p365 = por %p363, %p364
      %p366 = scmp.ne.s32.totalorder %s355, %s358
      %p367 = scmp.eq.s32.totalorder %s30, 1
      %p368 = por %p366, %p367
      %p369 = scmp.ne.s32.totalorder %s358, %s359
      %p370 = scmp.eq.s32.totalorder %s30, 0
      %p371 = por %p369, %p370
      %p372 = scmp.ne.s32.totalorder %s358, %s359
      %p373 = scmp.eq.s32.totalorder %s31, 1
      %p374 = por %p372, %p373
      %p376 = scmp.ne.s32.totalorder %s359, %s375
      %p377 = scmp.eq.s32.totalorder %s31, 0
      %p378 = por %p376, %p377
      %p379 = scmp.le.s32.totalorder 1, %s25
      %p380 = scmp.lt.s32.totalorder %s25, 3
      %p381 = pnand %p379, %p380
      %p382 = pneg %p381
      // Predicated region
      $region9: #{tpu_custom_call.1} parent=5 // pred_check
        _
      $region10: #{tpu_custom_call.1} parent=5 // pred_check_branch
        %384 = sbr.rel (%p381) target = $region12
      $region11: #{tpu_custom_call.1} parent=5 // pred_region
        %s385 = ssub.s32 %s25, 1
        // Predicated region
        $region13: #{tpu_custom_call.1} parent=11 // pred_check
          %p386 = pneg %p72
        $region14: #{tpu_custom_call.1} parent=11 // pred_check_branch
          %388 = sbr.rel (%p386) target = $region16
        $region15: #{tpu_custom_call.1} parent=11 // pred_region
          _
        $region16: #{tpu_custom_call.1} parent=11 // pred_fallthru
          _
        // Predicated region
        $region17: #{tpu_custom_call.1} parent=11 // pred_check
          %p389 = pneg %p93
        $region18: #{tpu_custom_call.1} parent=11 // pred_check_branch
          %391 = sbr.rel (%p389) target = $region20
        $region19: #{tpu_custom_call.1} parent=11 // pred_region
          %s393 = ssub.s32 9216, 9216
          %394 = vsyncadd [#allocation3], %s393
          %s395 = sshll.u32 [#allocation2], 4
          %s396 = int_to_ptr.vmem [resolvable:$true] %s395
          %401 = dma.hbm_to_vmem [thread:$0]  %s2, 9216, %s396, [#allocation3], 64, 64, 4
        $region20: #{tpu_custom_call.1} parent=11 // pred_fallthru
          _
        // Predicated region
        $region21: #{tpu_custom_call.1} parent=11 // pred_check
          %p402 = pneg %p114
        $region22: #{tpu_custom_call.1} parent=11 // pred_check_branch
          %404 = sbr.rel (%p402) target = $region24
        $region23: #{tpu_custom_call.1} parent=11 // pred_region
          _
        $region24: #{tpu_custom_call.1} parent=11 // pred_fallthru
          _
        // Predicated region
        $region25: #{tpu_custom_call.1} parent=11 // pred_check
          %p405 = pneg %p135
        $region26: #{tpu_custom_call.1} parent=11 // pred_check_branch
          %407 = sbr.rel (%p405) target = $region28
        $region27: #{tpu_custom_call.1} parent=11 // pred_region
          _
        $region28: #{tpu_custom_call.1} parent=11 // pred_fallthru
          _
        // Predicated region
        $region29: #{tpu_custom_call.1} parent=11 // pred_check
          %p408 = pneg %p156
        $region30: #{tpu_custom_call.1} parent=11 // pred_check_branch
          %410 = sbr.rel (%p408) target = $region32
        $region31: #{tpu_custom_call.1} parent=11 // pred_region
          _
        $region32: #{tpu_custom_call.1} parent=11 // pred_fallthru
          _
        // Predicated region
        $region33: #{tpu_custom_call.1} parent=11 // pred_check
          %p411 = pneg %p177
        $region34: #{tpu_custom_call.1} parent=11 // pred_check_branch
          %413 = sbr.rel (%p411) target = $region36
        $region35: #{tpu_custom_call.1} parent=11 // pred_region
          _
        $region36: #{tpu_custom_call.1} parent=11 // pred_fallthru
          _
        // Predicated region
        $region37: #{tpu_custom_call.1} parent=11 // pred_check
          %p414 = pneg %p198
        $region38: #{tpu_custom_call.1} parent=11 // pred_check_branch
          %416 = sbr.rel (%p414) target = $region40
        $region39: #{tpu_custom_call.1} parent=11 // pred_region
          _
        $region40: #{tpu_custom_call.1} parent=11 // pred_fallthru
          _
        // Predicated region
        $region41: #{tpu_custom_call.1} parent=11 // pred_check
          %p417 = pneg %p219
        $region42: #{tpu_custom_call.1} parent=11 // pred_check_branch
          %419 = sbr.rel (%p417) target = $region44
        $region43: #{tpu_custom_call.1} parent=11 // pred_region
          _
        $region44: #{tpu_custom_call.1} parent=11 // pred_fallthru
          _
        // Predicated region
        $region45: #{tpu_custom_call.1} parent=11 // pred_check
          %p420 = pneg %p240
        $region46: #{tpu_custom_call.1} parent=11 // pred_check_branch
          %422 = sbr.rel (%p420) target = $region48
        $region47: #{tpu_custom_call.1} parent=11 // pred_region
          _
        $region48: #{tpu_custom_call.1} parent=11 // pred_fallthru
          _
        // Predicated region
        $region49: #{tpu_custom_call.1} parent=11 // pred_check
          %p423 = pneg %p261
        $region50: #{tpu_custom_call.1} parent=11 // pred_check_branch
          %425 = sbr.rel (%p423) target = $region52
        $region51: #{tpu_custom_call.1} parent=11 // pred_region
          _
        $region52: #{tpu_custom_call.1} parent=11 // pred_fallthru
          _
        // Predicated region
        $region53: #{tpu_custom_call.1} parent=11 // pred_check
          %p426 = pneg %p282
        $region54: #{tpu_custom_call.1} parent=11 // pred_check_branch
          %428 = sbr.rel (%p426) target = $region56
        $region55: #{tpu_custom_call.1} parent=11 // pred_region
          _
        $region56: #{tpu_custom_call.1} parent=11 // pred_fallthru
          _
        // Predicated region
        $region57: #{tpu_custom_call.1} parent=11 // pred_check
          %p429 = pneg %p303
        $region58: #{tpu_custom_call.1} parent=11 // pred_check_branch
          %431 = sbr.rel (%p429) target = $region60
        $region59: #{tpu_custom_call.1} parent=11 // pred_region
          _
        $region60: #{tpu_custom_call.1} parent=11 // pred_fallthru
          _
        // Predicated region
        $region61: #{tpu_custom_call.1} parent=11 // pred_check
          %p432 = pneg %p324
        $region62: #{tpu_custom_call.1} parent=11 // pred_check_branch
          %434 = sbr.rel (%p432) target = $region64
        $region63: #{tpu_custom_call.1} parent=11 // pred_region
          _
        $region64: #{tpu_custom_call.1} parent=11 // pred_fallthru
          _
        // Predicated region
        $region65: #{tpu_custom_call.1} parent=11 // pred_check
          %p435 = pneg %p345
        $region66: #{tpu_custom_call.1} parent=11 // pred_check_branch
          %437 = sbr.rel (%p435) target = $region68
        $region67: #{tpu_custom_call.1} parent=11 // pred_region
          _
        $region68: #{tpu_custom_call.1} parent=11 // pred_fallthru
          _
      $region12: #{tpu_custom_call.1} parent=5 // pred_fallthru
        _
      %p438 = scmp.lt.s32.totalorder %s25, 2
      // Predicated region
      $region69: #{tpu_custom_call.1} parent=5 // pred_check
        %p439 = pneg %p438
      $region70: #{tpu_custom_call.1} parent=5 // pred_check_branch
        %441 = sbr.rel (%p439) target = $region72
      $region71: #{tpu_custom_call.1} parent=5 // pred_region
        // Predicated region
        $region73: #{tpu_custom_call.1} parent=71 // pred_check
          %p442 = pneg %p45
        $region74: #{tpu_custom_call.1} parent=71 // pred_check_branch
          %444 = sbr.rel (%p442) target = $region76
        $region75: #{tpu_custom_call.1} parent=71 // pred_region
          %p445 = scmp.lt.s32.totalorder %s25, 1
          %s446 = scalar_select %p445, %s25, 1
          %s447 = smul.addr %s446, 8
          %s448 = smul.addr %s447, 4
          %s449 = scalar_lea.vmem %s0, %s448
        $region76: #{tpu_custom_call.1} parent=71 // pred_fallthru
          _
      $region72: #{tpu_custom_call.1} parent=5 // pred_fallthru
        _
      %p450 = scmp.le.s32.totalorder 1, %s25
      %p451 = scmp.lt.s32.totalorder %s25, 3
      %p452 = pnand %p450, %p451
      %p453 = pneg %p452
      // Predicated region
      $region77: #{tpu_custom_call.1} parent=5 // pred_check
        _
      $region78: #{tpu_custom_call.1} parent=5 // pred_check_branch
        %455 = sbr.rel (%p452) target = $region80
      $region79: #{tpu_custom_call.1} parent=5 // pred_region
        %s456 = ssub.s32 %s25, 1
        // Predicated region
        $region81: #{tpu_custom_call.1} parent=79 // pred_check
          %p457 = pneg %p93
        $region82: #{tpu_custom_call.1} parent=79 // pred_check_branch
          %459 = sbr.rel (%p457) target = $region84
        $region83: #{tpu_custom_call.1} parent=79 // pred_region
          %460 = dma.done [#allocation3], 9216
        $region84: #{tpu_custom_call.1} parent=79 // pred_fallthru
          _
        %p461 = scmp.lt.s32.totalorder %s30, 1
        %s462 = scalar_select %p461, %s30, 1
        %s463 = smul.addr %s462, 8
        %s464 = smul.addr %s463, 4
        %s465 = scalar_lea.vmem %s0, %s464
        %p466 = pneg %p51
        %p467 = pneg %p48
        %p468 = pneg %p72
        %p469 = pneg %p69
        %p470 = pneg %p93
        %p471 = pneg %p90
        %p472 = pneg %p114
        %p473 = pneg %p111
        %p474 = pneg %p135
        %p475 = pneg %p132
        %p476 = pneg %p156
        %p477 = pneg %p153
        %p478 = pneg %p177
        %p479 = pneg %p174
        %p480 = pneg %p198
        %p481 = pneg %p195
        %p482 = pneg %p219
        %p483 = pneg %p216
        %p484 = pneg %p240
        %p485 = pneg %p237
        %p486 = pneg %p261
        %p487 = pneg %p258
        %p488 = pneg %p282
        %p489 = pneg %p279
        %p490 = pneg %p303
        %p491 = pneg %p300
        %p492 = pneg %p324
        %p493 = pneg %p321
        %p494 = pneg %p345
        %p495 = pneg %p342
        %p496 = pneg %p371
        %p497 = pneg %p368
        %s498 = sand.u32 %s358, 1
        %s499 = scalar_lea.sflag [#allocation4], %s498
        %s500 = sand.u32 %s358, 1
        %s501 = smul.addr %s500, 32
        %s502 = scalar_lea.vmem [#allocation5], %s501
        %p503 = scmp.lt.s32.totalorder %s30, 1
        %s504 = scalar_select %p503, %s30, 1
        %s505 = smul.addr %s504, 8
        %s506 = smul.addr %s505, 4
        %s507 = scalar_lea.vmem %s0, %s506
        %v509 = vld [vmem:[%s507] sm:$0xf]
        %v510 = vld [vmem:[%s507 + $0x4] sm:$0xf]
        %v511 = vld [vmem:[%s507 + $0x8] sm:$0xf]
        %v512 = vld [vmem:[%s507 + $0xc] sm:$0xf]
        %v513 = vld [vmem:[%s507 + $0x10] sm:$0xf]
        %v514 = vld [vmem:[%s507 + $0x14] sm:$0xf]
        %v515 = vld [vmem:[%s507 + $0x18] sm:$0xf]
        %v516 = vld [vmem:[%s507 + $0x1c] sm:$0xf]
        %v517 = vld [vmem:[%s1] sm:$0xf]
        %v518 = vld [vmem:[%s1 + $0x4] sm:$0xf]
        %v519 = vld [vmem:[%s1 + $0x8] sm:$0xf]
        %v520 = vld [vmem:[%s1 + $0xc] sm:$0xf]
        %v521 = vld [vmem:[%s1 + $0x10] sm:$0xf]
        %v522 = vld [vmem:[%s1 + $0x14] sm:$0xf]
        %v523 = vld [vmem:[%s1 + $0x18] sm:$0xf]
        %v524 = vld [vmem:[%s1 + $0x1c] sm:$0xf]
        %v525 = vld [vmem:[%s1 + $0x20] sm:$0xf]
        %v526 = vld [vmem:[%s1 + $0x24] sm:$0xf]
        %v527 = vld [vmem:[%s1 + $0x28] sm:$0xf]
        %v528 = vld [vmem:[%s1 + $0x2c] sm:$0xf]
        %v529 = vld [vmem:[%s1 + $0x30] sm:$0xf]
        %v530 = vld [vmem:[%s1 + $0x34] sm:$0xf]
        %v531 = vld [vmem:[%s1 + $0x38] sm:$0xf]
        %v532 = vld [vmem:[%s1 + $0x3c] sm:$0xf]
        %v541 = vunpack.c.l.b16 %v509
        %v542 = vunpack.c.l.b16 %v510
        %v543 = vunpack.c.l.b16 %v511
        %v544 = vunpack.c.l.b16 %v512
        %v545 = vunpack.c.l.b16 %v513
        %v546 = vunpack.c.l.b16 %v514
        %v547 = vunpack.c.l.b16 %v515
        %v548 = vunpack.c.l.b16 %v516
        %v549 = vpack.c.b16 %v542, %v541
        %v550 = vpack.c.b16 %v544, %v543
        %v551 = vpack.c.b16 %v546, %v545
        %v552 = vpack.c.b16 %v548, %v547
        %v573 = vunpack.c.l.b16 %v517
        %v574 = vunpack.c.l.b16 %v518
        %v575 = vunpack.c.l.b16 %v519
        %v576 = vunpack.c.l.b16 %v520
        %v577 = vunpack.c.l.b16 %v521
        %v578 = vunpack.c.l.b16 %v522
        %v579 = vunpack.c.l.b16 %v523
        %v580 = vunpack.c.l.b16 %v524
        %v581 = vunpack.c.l.b16 %v525
        %v582 = vunpack.c.l.b16 %v526
        %v583 = vunpack.c.l.b16 %v527
        %v584 = vunpack.c.l.b16 %v528
        %v585 = vunpack.c.l.b16 %v529
        %v586 = vunpack.c.l.b16 %v530
        %v587 = vunpack.c.l.b16 %v531
        %v588 = vunpack.c.l.b16 %v532
        %v589 = vpack.c.b16 %v574, %v573
        %v590 = vpack.c.b16 %v576, %v575
        %v591 = vpack.c.b16 %v578, %v577
        %v592 = vpack.c.b16 %v580, %v579
        %v593 = vpack.c.b16 %v582, %v581
        %v594 = vpack.c.b16 %v584, %v583
        %v595 = vpack.c.b16 %v586, %v585
        %v596 = vpack.c.b16 %v588, %v587
        %605 = vmatprep.subr.bf16.mxu0 0
        %606 = vmatpush1.bf16.msra.mxu0 %v596
        %607 = vmatprep.subr.bf16.mxu0 0
        %608 = vmatpush1.bf16.msra.mxu0 %v595
        %609 = vmatprep.subr.bf16.mxu0 0
        %610 = vmatpush1.bf16.msra.mxu0 %v594
        %611 = vmatprep.subr.bf16.mxu0 0
        %612 = vmatpush1.bf16.msra.mxu0 %v593
        %613 = vmatprep.subr.bf16.mxu0 0
        %614 = vmatpush1.bf16.msra.mxu0 %v592
        %615 = vmatprep.subr.bf16.mxu0 0
        %616 = vmatpush1.bf16.msra.mxu0 %v591
        %617 = vmatprep.subr.bf16.mxu0 0
        %618 = vmatpush1.bf16.msra.mxu0 %v590
        %619 = vmatprep.subr.bf16.mxu0 0
        %620 = vmatpush1.bf16.msra.mxu0 %v589
        %621 = vmatprep.subr.bf16.mxu0 0
        %622 = vmatpush2.bf16.msra.mxu0 0
        %623 = vmatprep.subr.bf16.mxu0 0
        %624 = vmatpush2.bf16.msra.mxu0 0
        %625 = vmatprep.subr.bf16.mxu0 0
        %626 = vmatpush2.bf16.msra.mxu0 0
        %627 = vmatprep.subr.bf16.mxu0 0
        %628 = vmatpush2.bf16.msra.mxu0 0
        %629 = vmatprep.subr.bf16.mxu0 0
        %630 = vmatpush2.bf16.msra.mxu0 0
        %631 = vmatprep.subr.bf16.mxu0 0
        %632 = vmatpush2.bf16.msra.mxu0 0
        %633 = vmatprep.subr.bf16.mxu0 0
        %634 = vmatpush2.bf16.msra.mxu0 0
        %635 = vmatprep.subr.bf16.mxu0 0
        %636 = vmatpush2.bf16.msra.mxu0 0
        %637 = vmatprep.mubr.bf16.mxu0 0
        %638 = vmatmul.mubr.bf16.gmra.mxu0 %v549
        %v639 = vpop.f32.mrf.mxu0
        %v640 = vadd.f32 0.0, %v639
        %v641 = vpop.f32.mrf.mxu0
        %v642 = vpop.f32.mrf.mxu0
        %v643 = vadd.f32 0.0, %v642
        %v644 = vpop.f32.mrf.mxu0
        %645 = vmatprep.mubr.bf16.mxu0 0
        %646 = vmatmul.mubr.bf16.gmra.mxu0 %v550
        %v647 = vpop.f32.mrf.mxu0
        %v648 = vadd.f32 0.0, %v647
        %v649 = vpop.f32.mrf.mxu0
        %v650 = vpop.f32.mrf.mxu0
        %v651 = vadd.f32 0.0, %v650
        %v652 = vpop.f32.mrf.mxu0
        %653 = vmatprep.mubr.bf16.mxu0 0
        %654 = vmatmul.mubr.bf16.gmra.mxu0 %v551
        %v655 = vpop.f32.mrf.mxu0
        %v656 = vadd.f32 0.0, %v655
        %v657 = vpop.f32.mrf.mxu0
        %v658 = vpop.f32.mrf.mxu0
        %v659 = vadd.f32 0.0, %v658
        %v660 = vpop.f32.mrf.mxu0
        %661 = vmatprep.mubr.bf16.mxu0 0
        %662 = vmatmul.mubr.bf16.gmra.mxu0 %v552
        %v663 = vpop.f32.mrf.mxu0
        %v664 = vadd.f32 0.0, %v663
        %v665 = vpop.f32.mrf.mxu0
        %v666 = vpop.f32.mrf.mxu0
        %v667 = vadd.f32 0.0, %v666
        %v668 = vpop.f32.mrf.mxu0
        %669 = vdwg.mxu0
        %v670 = vld [vmem:[%s4] sm:$0x1]
        %v671 = vld [vmem:[%s5] sm:$0x1]
        %v672 = vld [vmem:[%s10] sm:$0xff]
        %v673 = vld [vmem:[%s10 + $0x8] sm:$0xff]
        %v674 = vld [vmem:[%s10 + $0x10] sm:$0xff]
        %v675 = vld [vmem:[%s10 + $0x18] sm:$0xff]
        %v676 = vld [vmem:[%s10 + $0x20] sm:$0xff]
        %v677 = vld [vmem:[%s10 + $0x28] sm:$0xff]
        %v678 = vld [vmem:[%s10 + $0x30] sm:$0xff]
        %v679 = vld [vmem:[%s10 + $0x38] sm:$0xff]
        %v680 = vld [vmem:[%s10 + $0x40] sm:$0xff]
        %v681 = vld [vmem:[%s10 + $0x48] sm:$0xff]
        %v682 = vld [vmem:[%s10 + $0x50] sm:$0xff]
        %v683 = vld [vmem:[%s10 + $0x58] sm:$0xff]
        %v684 = vld [vmem:[%s10 + $0x60] sm:$0xff]
        %v685 = vld [vmem:[%s10 + $0x68] sm:$0xff]
        %v686 = vld [vmem:[%s10 + $0x70] sm:$0xff]
        %v687 = vld [vmem:[%s10 + $0x78] sm:$0xff]
        %v688 = vld [vmem:[%s11] sm:$0xff]
        %v689 = vld [vmem:[%s11 + $0x8] sm:$0xff]
        %v690 = vld [vmem:[%s11 + $0x10] sm:$0xff]
        %v691 = vld [vmem:[%s11 + $0x18] sm:$0xff]
        %v692 = vadd.f32 %v640, %v643
        %v693 = vadd.f32 %v692, %v648
        %v694 = vadd.f32 %v693, %v651
        %v695 = vadd.f32 %v694, %v656
        %v696 = vadd.f32 %v695, %v659
        %v697 = vadd.f32 %v696, %v664
        %v698 = vadd.f32 %v697, %v667
        %v699 = vrot.slane %v698, 4
        %v700 = vadd.f32 %v698, %v699
        %v701 = vrot.slane %v700, 2
        %v702 = vadd.f32 %v700, %v701
        %v703 = vrot.slane %v702, 1
        %v704 = vadd.f32 %v702, %v703
        %v705 = vmul.f32 %v640, %v640
        %v706 = vmul.f32 %v643, %v643
        %v707 = vmul.f32 %v648, %v648
        %v708 = vmul.f32 %v651, %v651
        %v709 = vmul.f32 %v656, %v656
        %v710 = vmul.f32 %v659, %v659
        %v711 = vmul.f32 %v664, %v664
        %v712 = vmul.f32 %v667, %v667
        %v713 = vadd.f32 %v705, %v706
        %v714 = vadd.f32 %v713, %v707
        %v715 = vadd.f32 %v714, %v708
        %v716 = vadd.f32 %v715, %v709
        %v717 = vadd.f32 %v716, %v710
        %v718 = vadd.f32 %v717, %v711
        %v719 = vadd.f32 %v718, %v712
        %v720 = vrot.slane %v719, 4
        %v721 = vadd.f32 %v719, %v720
        %v722 = vrot.slane %v721, 2
        %v723 = vadd.f32 %v721, %v722
        %v724 = vrot.slane %v723, 1
        %v725 = vadd.f32 %v723, %v724
        %vm726 = vcmask 1040384
        %v727 = vsel %vm726, %v704, %v725
        %728 = vmatprep.subr.mxu0 0.0
        %729 = vmatpush1.msra.mxu0 %v687
        %730 = vmatprep.subr.mxu0 0.0
        %731 = vmatpush1.msra.mxu0 %v686
        %732 = vmatprep.subr.mxu0 0.0
        %733 = vmatpush1.msra.mxu0 %v685
        %734 = vmatprep.subr.mxu0 0.0
        %735 = vmatpush1.msra.mxu0 %v684
        %736 = vmatprep.subr.mxu0 0.0
        %737 = vmatpush1.msra.mxu0 %v683
        %738 = vmatprep.subr.mxu0 0.0
        %739 = vmatpush1.msra.mxu0 %v682
        %740 = vmatprep.subr.mxu0 0.0
        %741 = vmatpush1.msra.mxu0 %v681
        %742 = vmatprep.subr.mxu0 0.0
        %743 = vmatpush1.msra.mxu0 %v680
        %744 = vmatprep.subr.mxu0 0.0
        %745 = vmatpush1.msra.mxu0 %v679
        %746 = vmatprep.subr.mxu0 0.0
        %747 = vmatpush1.msra.mxu0 %v678
        %748 = vmatprep.subr.mxu0 0.0
        %749 = vmatpush1.msra.mxu0 %v677
        %750 = vmatprep.subr.mxu0 0.0
        %751 = vmatpush1.msra.mxu0 %v676
        %752 = vmatprep.subr.mxu0 0.0
        %753 = vmatpush1.msra.mxu0 %v675
        %754 = vmatprep.subr.mxu0 0.0
        %755 = vmatpush1.msra.mxu0 %v674
        %756 = vmatprep.subr.mxu0 0.0
        %757 = vmatpush1.msra.mxu0 %v673
        %758 = vmatprep.subr.mxu0 0.0
        %759 = vmatpush1.msra.mxu0 %v672
        %760 = vmatprep.subr.mxu0 0.0
        %761 = vmatpush2.msra.mxu0 0.0
        %762 = vmatprep.subr.mxu0 0.0
        %763 = vmatpush2.msra.mxu0 0.0
        %764 = vmatprep.subr.mxu0 0.0
        %765 = vmatpush2.msra.mxu0 0.0
        %766 = vmatprep.subr.mxu0 0.0
        %767 = vmatpush2.msra.mxu0 0.0
        %768 = vmatprep.subr.mxu0 0.0
        %769 = vmatpush2.msra.mxu0 0.0
        %770 = vmatprep.subr.mxu0 0.0
        %771 = vmatpush2.msra.mxu0 0.0
        %772 = vmatprep.subr.mxu0 0.0
        %773 = vmatpush2.msra.mxu0 0.0
        %774 = vmatprep.subr.mxu0 0.0
        %775 = vmatpush2.msra.mxu0 0.0
        %776 = vmatprep.subr.mxu0 0.0
        %777 = vmatpush2.msra.mxu0 0.0
        %778 = vmatprep.subr.mxu0 0.0
        %779 = vmatpush2.msra.mxu0 0.0
        %780 = vmatprep.subr.mxu0 0.0
        %781 = vmatpush2.msra.mxu0 0.0
        %782 = vmatprep.subr.mxu0 0.0
        %783 = vmatpush2.msra.mxu0 0.0
        %784 = vmatprep.subr.mxu0 0.0
        %785 = vmatpush2.msra.mxu0 0.0
        %786 = vmatprep.subr.mxu0 0.0
        %787 = vmatpush2.msra.mxu0 0.0
        %788 = vmatprep.subr.mxu0 0.0
        %789 = vmatpush2.msra.mxu0 0.0
        %790 = vmatprep.subr.mxu0 0.0
        %791 = vmatpush2.msra.mxu0 0.0
        %792 = vmatprep.mubr.f32.mxu0 0.0
        %793 = vmatmul.mubr.f32.gmra.mxu0 %v727
        %v794 = vpop.f32.mrf.mxu0
        %v795 = vadd.f32 0.0, %v794
        %v796 = vpop.f32.mrf.mxu0
        %797 = vdwg.mxu0
        %v798 = vmul.f32 %v795, 0.015625
        %v799 = vmul.f32 %v798, %v798
        %v801 = vrot.slane %v799, 7
        %v803 = vsub.f32 %v798, %v801
        %v804 = vmax.f32 %v803, 0.0
        %v805 = vadd.f32 %v804, 1e-05
        %v806 = vrsqrt.pop %v805
        %v807 = vsel %vm726, %v798, %v806
        %vm808 = vcmask 261120
        %v810 = vsel %vm808, %v807, 0
        %812 = vmatprep.subr.mxu0 0.0
        %813 = vmatpush1.msra.mxu0 0.0
        %814 = vmatprep.subr.mxu0 0.0
        %815 = vmatpush1.msra.mxu0 0.0
        %816 = vmatprep.subr.mxu0 0.0
        %817 = vmatpush1.msra.mxu0 0.0
        %818 = vmatprep.subr.mxu0 0.0
        %819 = vmatpush1.msra.mxu0 0.0
        %820 = vmatprep.subr.mxu0 0.0
        %821 = vmatpush1.msra.mxu0 0.0
        %822 = vmatprep.subr.mxu0 0.0
        %823 = vmatpush1.msra.mxu0 0.0
        %824 = vmatprep.subr.mxu0 0.0
        %825 = vmatpush1.msra.mxu0 0.0
        %826 = vmatprep.subr.mxu0 0.0
        %827 = vmatpush1.msra.mxu0 0.0
        %828 = vmatprep.subr.mxu0 0.0
        %829 = vmatpush1.msra.mxu0 0.0
        %830 = vmatprep.subr.mxu0 0.0
        %831 = vmatpush1.msra.mxu0 0.0
        %832 = vmatprep.subr.mxu0 0.0
        %833 = vmatpush1.msra.mxu0 0.0
        %834 = vmatprep.subr.mxu0 0.0
        %835 = vmatpush1.msra.mxu0 0.0
        %836 = vmatprep.subr.mxu0 0.0
        %837 = vmatpush1.msra.mxu0 %v691
        %838 = vmatprep.subr.mxu0 0.0
        %839 = vmatpush1.msra.mxu0 %v690
        %840 = vmatprep.subr.mxu0 0.0
        %841 = vmatpush1.msra.mxu0 %v689
        %842 = vmatprep.subr.mxu0 0.0
        %843 = vmatpush1.msra.mxu0 %v688
        %844 = vmatprep.subr.mxu0 0.0
        %845 = vmatpush2.msra.mxu0 0.0
        %846 = vmatprep.subr.mxu0 0.0
        %847 = vmatpush2.msra.mxu0 0.0
        %848 = vmatprep.subr.mxu0 0.0
        %849 = vmatpush2.msra.mxu0 0.0
        %850 = vmatprep.subr.mxu0 0.0
        %851 = vmatpush2.msra.mxu0 0.0
        %852 = vmatprep.subr.mxu0 0.0
        %853 = vmatpush2.msra.mxu0 0.0
        %854 = vmatprep.subr.mxu0 0.0
        %855 = vmatpush2.msra.mxu0 0.0
        %856 = vmatprep.subr.mxu0 0.0
        %857 = vmatpush2.msra.mxu0 0.0
        %858 = vmatprep.subr.mxu0 0.0
        %859 = vmatpush2.msra.mxu0 0.0
        %860 = vmatprep.subr.mxu0 0.0
        %861 = vmatpush2.msra.mxu0 0.0
        %862 = vmatprep.subr.mxu0 0.0
        %863 = vmatpush2.msra.mxu0 0.0
        %864 = vmatprep.subr.mxu0 0.0
        %865 = vmatpush2.msra.mxu0 0.0
        %866 = vmatprep.subr.mxu0 0.0
        %867 = vmatpush2.msra.mxu0 0.0
        %868 = vmatprep.subr.mxu0 0.0
        %869 = vmatpush2.msra.mxu0 0.0
        %870 = vmatprep.subr.mxu0 0.0
        %871 = vmatpush2.msra.mxu0 0.0
        %872 = vmatprep.subr.mxu0 0.0
        %873 = vmatpush2.msra.mxu0 0.0
        %874 = vmatprep.subr.mxu0 0.0
        %875 = vmatpush2.msra.mxu0 0.0
        %876 = vmatprep.mubr.f32.mxu0 0.0
        %877 = vmatmul.mubr.f32.gmra.mxu0 %v810
        %v878 = vpop.f32.mrf.mxu0
        %v879 = vadd.f32 0.0, %v878
        %v880 = vpop.f32.mrf.mxu0
        %881 = vdwg.mxu0
        %v883 = vlaneseq
        %v884 = vshrl.u32 %v883, 7
        %v885 = vsub.s32 0, %v884
        %v886 = vrot.slane %v670, %v885
        %v888 = vmul.f32 %v879, %v886
        %v890 = vrot.slane %v888, 1
        %v892 = vmul.f32 %v879, %v890
        %v893 = vsub.f32 %v671, %v892
        %v894 = vlaneseq
        %v895 = vshrl.u32 %v894, 7
        %v896 = vsub.s32 1, %v895
        %v897 = vrot.slane %v888, %v896
        %v898 = vmul.f32 %v640, %v897
        %v899 = vmul.f32 %v643, %v897
        %v900 = vmul.f32 %v648, %v897
        %v901 = vmul.f32 %v651, %v897
        %v902 = vmul.f32 %v656, %v897
        %v903 = vmul.f32 %v659, %v897
        %v904 = vmul.f32 %v664, %v897
        %v905 = vmul.f32 %v667, %v897
        %v907 = vlaneseq
        %v908 = vshrl.u32 %v907, 7
        %v909 = vsub.s32 0, %v908
        %v910 = vrot.slane %v893, %v909
        %v912 = vadd.f32 %v898, %v910
        %v913 = vadd.f32 %v899, %v910
        %v914 = vadd.f32 %v900, %v910
        %v915 = vadd.f32 %v901, %v910
        %v916 = vadd.f32 %v902, %v910
        %v917 = vadd.f32 %v903, %v910
        %v918 = vadd.f32 %v904, %v910
        %v919 = vadd.f32 %v905, %v910
        %v920 = vmax.f32 %v912, 0.0
        %v921 = vmax.f32 %v913, 0.0
        %v922 = vmax.f32 %v914, 0.0
        %v923 = vmax.f32 %v915, 0.0
        %v924 = vmax.f32 %v916, 0.0
        %v925 = vmax.f32 %v917, 0.0
        %v926 = vmax.f32 %v918, 0.0
        %v927 = vmax.f32 %v919, 0.0
        %v928 = vpack.c.bf16 %v921, %v920
        %v929 = vpack.c.bf16 %v923, %v922
        %v930 = vpack.c.bf16 %v925, %v924
        %v931 = vpack.c.bf16 %v927, %v926
        %v932 = vld [vmem:[%s14] sm:$0xf]
        %v933 = vld [vmem:[%s14 + $0x4] sm:$0xf]
        %v934 = vld [vmem:[%s14 + $0x8] sm:$0xf]
        %v935 = vld [vmem:[%s14 + $0xc] sm:$0xf]
        %v936 = vld [vmem:[%s14 + $0x10] sm:$0xf]
        %v937 = vld [vmem:[%s14 + $0x14] sm:$0xf]
        %v938 = vld [vmem:[%s14 + $0x18] sm:$0xf]
        %v939 = vld [vmem:[%s14 + $0x1c] sm:$0xf]
        %v941 = vshrl.u32 %v931, 16
        %v943 = vrot.slane %v941, 3
        %v944 = vshll.u32 %v931, 16
        %v946 = vrot.slane %v944, 4
        %v947 = vor.u32 %v943, %v946
        %vm949 = vsmask.f32 4352
        %v951 = vshrl.u32 %v928, 16
        %v953 = vrot.slane %v951, 3
        %v954 = vshll.u32 %v928, 16
        %v956 = vrot.slane %v954, 4
        %v957 = vor.u32 %v953, %v956
        %v959 = vshrl.u32 %v929, 16
        %v961 = vrot.slane %v959, 3
        %v962 = vshll.u32 %v929, 16
        %v964 = vrot.slane %v962, 4
        %v965 = vor.u32 %v961, %v964
        %v966 = vsel %vm949, %v957, %v965
        %v968 = vshrl.u32 %v930, 16
        %v970 = vrot.slane %v968, 3
        %v971 = vshll.u32 %v930, 16
        %v973 = vrot.slane %v971, 4
        %v974 = vor.u32 %v970, %v973
        %v975 = vsel %vm949, %v965, %v974
        %v976 = vsel %vm949, %v974, %v947
        %vm981 = vcmask 1044480
        %vm982 = vmand %vm981, %vm949
        %v983 = vsel %vm982, %v947, %v957
        %985 = vset.pattern.permute.xlu0 0
        %986 = vperm.xlu0 %985, %v932
        %v987 = vpop.permute.xlu0 %986
        %v990 = vunpack.c.l.s4 839922192
        %v991 = vunpack.c.0.s8 %v990
        %v992 = vlaneseq
        %v993 = vshrl.u32 %v992, 7
        %v994 = vsub.s32 %v991, %v993
        %v995 = vrot.slane %v987, %v994
        %997 = vset.pattern.permute.xlu0 0
        %998 = vperm.xlu0 %997, %v933
        %v999 = vpop.permute.xlu0 %998
        %v1002 = vunpack.c.l.s4 839922192
        %v1003 = vunpack.c.0.s8 %v1002
        %v1004 = vlaneseq
        %v1005 = vshrl.u32 %v1004, 7
        %v1006 = vsub.s32 %v1003, %v1005
        %v1007 = vrot.slane %v999, %v1006
        %1009 = vset.pattern.permute.xlu0 0
        %1010 = vperm.xlu0 %1009, %v934
        %v1011 = vpop.permute.xlu0 %1010
        %v1014 = vunpack.c.l.s4 839922192
        %v1015 = vunpack.c.0.s8 %v1014
        %v1016 = vlaneseq
        %v1017 = vshrl.u32 %v1016, 7
        %v1018 = vsub.s32 %v1015, %v1017
        %v1019 = vrot.slane %v1011, %v1018
        %1021 = vset.pattern.permute.xlu0 0
        %1022 = vperm.xlu0 %1021, %v935
        %v1023 = vpop.permute.xlu0 %1022
        %v1026 = vunpack.c.l.s4 839922192
        %v1027 = vunpack.c.0.s8 %v1026
        %v1028 = vlaneseq
        %v1029 = vshrl.u32 %v1028, 7
        %v1030 = vsub.s32 %v1027, %v1029
        %v1031 = vrot.slane %v1023, %v1030
        %1033 = vset.pattern.permute.xlu0 0
        %1034 = vperm.xlu0 %1033, %v936
        %v1035 = vpop.permute.xlu0 %1034
        %v1038 = vunpack.c.l.s4 839922192
        %v1039 = vunpack.c.0.s8 %v1038
        %v1040 = vlaneseq
        %v1041 = vshrl.u32 %v1040, 7
        %v1042 = vsub.s32 %v1039, %v1041
        %v1043 = vrot.slane %v1035, %v1042
        %1045 = vset.pattern.permute.xlu0 0
        %1046 = vperm.xlu0 %1045, %v937
        %v1047 = vpop.permute.xlu0 %1046
        %v1050 = vunpack.c.l.s4 839922192
        %v1051 = vunpack.c.0.s8 %v1050
        %v1052 = vlaneseq
        %v1053 = vshrl.u32 %v1052, 7
        %v1054 = vsub.s32 %v1051, %v1053
        %v1055 = vrot.slane %v1047, %v1054
        %1057 = vset.pattern.permute.xlu0 0
        %1058 = vperm.xlu0 %1057, %v938
        %v1059 = vpop.permute.xlu0 %1058
        %v1062 = vunpack.c.l.s4 839922192
        %v1063 = vunpack.c.0.s8 %v1062
        %v1064 = vlaneseq
        %v1065 = vshrl.u32 %v1064, 7
        %v1066 = vsub.s32 %v1063, %v1065
        %v1067 = vrot.slane %v1059, %v1066
        %1069 = vset.pattern.permute.xlu0 0
        %1070 = vperm.xlu0 %1069, %v939
        %v1071 = vpop.permute.xlu0 %1070
        %v1074 = vunpack.c.l.s4 839922192
        %v1075 = vunpack.c.0.s8 %v1074
        %v1076 = vlaneseq
        %v1077 = vshrl.u32 %v1076, 7
        %v1078 = vsub.s32 %v1075, %v1077
        %v1079 = vrot.slane %v1071, %v1078
        %v1088 = vunpack.c.l.b16 %v995
        %v1089 = vunpack.c.l.b16 %v1007
        %v1090 = vunpack.c.l.b16 %v1019
        %v1091 = vunpack.c.l.b16 %v1031
        %v1092 = vunpack.c.l.b16 %v1043
        %v1093 = vunpack.c.l.b16 %v1055
        %v1094 = vunpack.c.l.b16 %v1067
        %v1095 = vunpack.c.l.b16 %v1079
        %v1096 = vpack.c.b16 %v1089, %v1088
        %v1097 = vpack.c.b16 %v1091, %v1090
        %v1098 = vpack.c.b16 %v1093, %v1092
        %v1099 = vpack.c.b16 %v1095, %v1094
        %v1104 = vmul.bf16 %v983, %v1096
        %v1105 = vmul.bf16 %v966, %v1097
        %v1106 = vmul.bf16 %v975, %v1098
        %v1107 = vmul.bf16 %v976, %v1099
        %v1108 = vld [vmem:[#allocation2] sm:$0xf]
        %v1109 = vld [vmem:[#allocation2 + $0x4] sm:$0xf]
        %v1110 = vld [vmem:[#allocation2 + $0x8] sm:$0xf]
        %v1111 = vld [vmem:[#allocation2 + $0xc] sm:$0xf]
        %v1112 = vld [vmem:[#allocation2 + $0x10] sm:$0xf]
        %v1113 = vld [vmem:[#allocation2 + $0x14] sm:$0xf]
        %v1114 = vld [vmem:[#allocation2 + $0x18] sm:$0xf]
        %v1115 = vld [vmem:[#allocation2 + $0x1c] sm:$0xf]
        %v1116 = vld [vmem:[#allocation2 + $0x20] sm:$0xf]
        %v1117 = vld [vmem:[#allocation2 + $0x24] sm:$0xf]
        %v1118 = vld [vmem:[#allocation2 + $0x28] sm:$0xf]
        %v1119 = vld [vmem:[#allocation2 + $0x2c] sm:$0xf]
        %v1120 = vld [vmem:[#allocation2 + $0x30] sm:$0xf]
        %v1121 = vld [vmem:[#allocation2 + $0x34] sm:$0xf]
        %v1122 = vld [vmem:[#allocation2 + $0x38] sm:$0xf]
        %v1123 = vld [vmem:[#allocation2 + $0x3c] sm:$0xf]
        %v1125 = vrot.slane %v931, 4
        %vm1129 = vcmask 1043456
        %v1130 = vrot.slane %v928, 4
        %v1131 = vrot.slane %v929, 4
        %v1132 = vsel %vm1129, %v1130, %v1131
        %v1133 = vrot.slane %v930, 4
        %v1134 = vsel %vm1129, %v1131, %v1133
        %v1135 = vsel %vm1129, %v1133, %v1125
        %vm1139 = vcmask 1043456
        %v1142 = vsel %vm1139, %v1125, %v1130
        %1144 = vset.pattern.permute.xlu0 1
        %1145 = vperm.xlu0 %1144, %v932
        %v1146 = vpop.permute.xlu0 %1145
        %v1149 = vunpack.c.l.s4 839922192
        %v1150 = vunpack.c.0.s8 %v1149
        %v1151 = vlaneseq
        %v1152 = vshrl.u32 %v1151, 7
        %v1153 = vsub.s32 %v1150, %v1152
        %v1154 = vrot.slane %v1146, %v1153
        %1155 = vset.pattern.permute.xlu0 1
        %1156 = vperm.xlu0 %1155, %v933
        %v1157 = vpop.permute.xlu0 %1156
        %v1160 = vunpack.c.l.s4 839922192
        %v1161 = vunpack.c.0.s8 %v1160
        %v1162 = vlaneseq
        %v1163 = vshrl.u32 %v1162, 7
        %v1164 = vsub.s32 %v1161, %v1163
        %v1165 = vrot.slane %v1157, %v1164
        %1166 = vset.pattern.permute.xlu0 1
        %1167 = vperm.xlu0 %1166, %v934
        %v1168 = vpop.permute.xlu0 %1167
        %v1171 = vunpack.c.l.s4 839922192
        %v1172 = vunpack.c.0.s8 %v1171
        %v1173 = vlaneseq
        %v1174 = vshrl.u32 %v1173, 7
        %v1175 = vsub.s32 %v1172, %v1174
        %v1176 = vrot.slane %v1168, %v1175
        %1177 = vset.pattern.permute.xlu0 1
        %1178 = vperm.xlu0 %1177, %v935
        %v1179 = vpop.permute.xlu0 %1178
        %v1182 = vunpack.c.l.s4 839922192
        %v1183 = vunpack.c.0.s8 %v1182
        %v1184 = vlaneseq
        %v1185 = vshrl.u32 %v1184, 7
        %v1186 = vsub.s32 %v1183, %v1185
        %v1187 = vrot.slane %v1179, %v1186
        %1188 = vset.pattern.permute.xlu0 1
        %1189 = vperm.xlu0 %1188, %v936
        %v1190 = vpop.permute.xlu0 %1189
        %v1193 = vunpack.c.l.s4 839922192
        %v1194 = vunpack.c.0.s8 %v1193
        %v1195 = vlaneseq
        %v1196 = vshrl.u32 %v1195, 7
        %v1197 = vsub.s32 %v1194, %v1196
        %v1198 = vrot.slane %v1190, %v1197
        %1199 = vset.pattern.permute.xlu0 1
        %1200 = vperm.xlu0 %1199, %v937
        %v1201 = vpop.permute.xlu0 %1200
        %v1204 = vunpack.c.l.s4 839922192
        %v1205 = vunpack.c.0.s8 %v1204
        %v1206 = vlaneseq
        %v1207 = vshrl.u32 %v1206, 7
        %v1208 = vsub.s32 %v1205, %v1207
        %v1209 = vrot.slane %v1201, %v1208
        %1210 = vset.pattern.permute.xlu0 1
        %1211 = vperm.xlu0 %1210, %v938
        %v1212 = vpop.permute.xlu0 %1211
        %v1215 = vunpack.c.l.s4 839922192
        %v1216 = vunpack.c.0.s8 %v1215
        %v1217 = vlaneseq
        %v1218 = vshrl.u32 %v1217, 7
        %v1219 = vsub.s32 %v1216, %v1218
        %v1220 = vrot.slane %v1212, %v1219
        %1221 = vset.pattern.permute.xlu0 1
        %1222 = vperm.xlu0 %1221, %v939
        %v1223 = vpop.permute.xlu0 %1222
        %v1226 = vunpack.c.l.s4 839922192
        %v1227 = vunpack.c.0.s8 %v1226
        %v1228 = vlaneseq
        %v1229 = vshrl.u32 %v1228, 7
        %v1230 = vsub.s32 %v1227, %v1229
        %v1231 = vrot.slane %v1223, %v1230
        %v1240 = vunpack.c.l.b16 %v1154
        %v1241 = vunpack.c.l.b16 %v1165
        %v1242 = vunpack.c.l.b16 %v1176
        %v1243 = vunpack.c.l.b16 %v1187
        %v1244 = vunpack.c.l.b16 %v1198
        %v1245 = vunpack.c.l.b16 %v1209
        %v1246 = vunpack.c.l.b16 %v1220
        %v1247 = vunpack.c.l.b16 %v1231
        %v1248 = vpack.c.b16 %v1241, %v1240
        %v1249 = vpack.c.b16 %v1243, %v1242
        %v1250 = vpack.c.b16 %v1245, %v1244
        %v1251 = vpack.c.b16 %v1247, %v1246
        %v1256 = vmul.bf16 %v1142, %v1248
        %v1257 = vmul.bf16 %v1132, %v1249
        %v1258 = vmul.bf16 %v1134, %v1250
        %v1259 = vmul.bf16 %v1135, %v1251
        %v1260 = vld [vmem:[#allocation2 + $0x40] sm:$0xf]
        %v1261 = vld [vmem:[#allocation2 + $0x44] sm:$0xf]
        %v1262 = vld [vmem:[#allocation2 + $0x48] sm:$0xf]
        %v1263 = vld [vmem:[#allocation2 + $0x4c] sm:$0xf]
        %v1264 = vld [vmem:[#allocation2 + $0x50] sm:$0xf]
        %v1265 = vld [vmem:[#allocation2 + $0x54] sm:$0xf]
        %v1266 = vld [vmem:[#allocation2 + $0x58] sm:$0xf]
        %v1267 = vld [vmem:[#allocation2 + $0x5c] sm:$0xf]
        %v1268 = vld [vmem:[#allocation2 + $0x60] sm:$0xf]
        %v1269 = vld [vmem:[#allocation2 + $0x64] sm:$0xf]
        %v1270 = vld [vmem:[#allocation2 + $0x68] sm:$0xf]
        %v1271 = vld [vmem:[#allocation2 + $0x6c] sm:$0xf]
        %v1272 = vld [vmem:[#allocation2 + $0x70] sm:$0xf]
        %v1273 = vld [vmem:[#allocation2 + $0x74] sm:$0xf]
        %v1274 = vld [vmem:[#allocation2 + $0x78] sm:$0xf]
        %v1275 = vld [vmem:[#allocation2 + $0x7c] sm:$0xf]
        %v1292 = vunpack.c.l.b16 %v1260
        %v1293 = vunpack.c.l.b16 %v1261
        %v1294 = vunpack.c.l.b16 %v1262
        %v1295 = vunpack.c.l.b16 %v1263
        %v1296 = vunpack.c.l.b16 %v1264
        %v1297 = vunpack.c.l.b16 %v1265
        %v1298 = vunpack.c.l.b16 %v1266
        %v1299 = vunpack.c.l.b16 %v1267
        %v1300 = vunpack.c.l.b16 %v1268
        %v1301 = vunpack.c.l.b16 %v1269
        %v1302 = vunpack.c.l.b16 %v1270
        %v1303 = vunpack.c.l.b16 %v1271
        %v1304 = vunpack.c.l.b16 %v1272
        %v1305 = vunpack.c.l.b16 %v1273
        %v1306 = vunpack.c.l.b16 %v1274
        %v1307 = vunpack.c.l.b16 %v1275
        %v1308 = vpack.c.b16 %v1293, %v1292
        %v1309 = vpack.c.b16 %v1295, %v1294
        %v1310 = vpack.c.b16 %v1297, %v1296
        %v1311 = vpack.c.b16 %v1299, %v1298
        %v1312 = vpack.c.b16 %v1301, %v1300
        %v1313 = vpack.c.b16 %v1303, %v1302
        %v1314 = vpack.c.b16 %v1305, %v1304
        %v1315 = vpack.c.b16 %v1307, %v1306
        %1324 = vmatprep.subr.bf16.mxu0 0
        %1325 = vmatpush1.bf16.msra.mxu0 %v1315
        %1326 = vmatprep.subr.bf16.mxu0 0
        %1327 = vmatpush1.bf16.msra.mxu0 %v1314
        %1328 = vmatprep.subr.bf16.mxu0 0
        %1329 = vmatpush1.bf16.msra.mxu0 %v1313
        %1330 = vmatprep.subr.bf16.mxu0 0
        %1331 = vmatpush1.bf16.msra.mxu0 %v1312
        %1332 = vmatprep.subr.bf16.mxu0 0
        %1333 = vmatpush1.bf16.msra.mxu0 %v1311
        %1334 = vmatprep.subr.bf16.mxu0 0
        %1335 = vmatpush1.bf16.msra.mxu0 %v1310
        %1336 = vmatprep.subr.bf16.mxu0 0
        %1337 = vmatpush1.bf16.msra.mxu0 %v1309
        %1338 = vmatprep.subr.bf16.mxu0 0
        %1339 = vmatpush1.bf16.msra.mxu0 %v1308
        %1340 = vmatprep.subr.bf16.mxu0 0
        %1341 = vmatpush2.bf16.msra.mxu0 0
        %1342 = vmatprep.subr.bf16.mxu0 0
        %1343 = vmatpush2.bf16.msra.mxu0 0
        %1344 = vmatprep.subr.bf16.mxu0 0
        %1345 = vmatpush2.bf16.msra.mxu0 0
        %1346 = vmatprep.subr.bf16.mxu0 0
        %1347 = vmatpush2.bf16.msra.mxu0 0
        %1348 = vmatprep.subr.bf16.mxu0 0
        %1349 = vmatpush2.bf16.msra.mxu0 0
        %1350 = vmatprep.subr.bf16.mxu0 0
        %1351 = vmatpush2.bf16.msra.mxu0 0
        %1352 = vmatprep.subr.bf16.mxu0 0
        %1353 = vmatpush2.bf16.msra.mxu0 0
        %1354 = vmatprep.subr.bf16.mxu0 0
        %1355 = vmatpush2.bf16.msra.mxu0 0
        %1356 = vmatprep.mubr.bf16.mxu0 0
        %1357 = vmatmul.mubr.bf16.gmra.mxu0 %v1256
        %v1358 = vpop.f32.mrf.mxu0
        %v1359 = vadd.f32 0.0, %v1358
        %v1360 = vpop.f32.mrf.mxu0
        %v1361 = vpop.f32.mrf.mxu0
        %v1362 = vadd.f32 0.0, %v1361
        %v1363 = vpop.f32.mrf.mxu0
        %1364 = vmatprep.mubr.bf16.mxu0 0
        %1365 = vmatmul.mubr.bf16.gmra.mxu0 %v1257
        %v1366 = vpop.f32.mrf.mxu0
        %v1367 = vadd.f32 0.0, %v1366
        %v1368 = vpop.f32.mrf.mxu0
        %v1369 = vpop.f32.mrf.mxu0
        %v1370 = vadd.f32 0.0, %v1369
        %v1371 = vpop.f32.mrf.mxu0
        %1372 = vmatprep.mubr.bf16.mxu0 0
        %1373 = vmatmul.mubr.bf16.gmra.mxu0 %v1258
        %v1374 = vpop.f32.mrf.mxu0
        %v1375 = vadd.f32 0.0, %v1374
        %v1376 = vpop.f32.mrf.mxu0
        %v1377 = vpop.f32.mrf.mxu0
        %v1378 = vadd.f32 0.0, %v1377
        %v1379 = vpop.f32.mrf.mxu0
        %1380 = vmatprep.mubr.bf16.mxu0 0
        %1381 = vmatmul.mubr.bf16.gmra.mxu0 %v1259
        %v1382 = vpop.f32.mrf.mxu0
        %v1383 = vadd.f32 0.0, %v1382
        %v1384 = vpop.f32.mrf.mxu0
        %v1385 = vpop.f32.mrf.mxu0
        %v1386 = vadd.f32 0.0, %v1385
        %v1387 = vpop.f32.mrf.mxu0
        %1388 = vdwg.mxu0
        %v1405 = vunpack.c.l.b16 %v1108
        %v1406 = vunpack.c.l.b16 %v1109
        %v1407 = vunpack.c.l.b16 %v1110
        %v1408 = vunpack.c.l.b16 %v1111
        %v1409 = vunpack.c.l.b16 %v1112
        %v1410 = vunpack.c.l.b16 %v1113
        %v1411 = vunpack.c.l.b16 %v1114
        %v1412 = vunpack.c.l.b16 %v1115
        %v1413 = vunpack.c.l.b16 %v1116
        %v1414 = vunpack.c.l.b16 %v1117
        %v1415 = vunpack.c.l.b16 %v1118
        %v1416 = vunpack.c.l.b16 %v1119
        %v1417 = vunpack.c.l.b16 %v1120
        %v1418 = vunpack.c.l.b16 %v1121
        %v1419 = vunpack.c.l.b16 %v1122
        %v1420 = vunpack.c.l.b16 %v1123
        %v1421 = vpack.c.b16 %v1406, %v1405
        %v1422 = vpack.c.b16 %v1408, %v1407
        %v1423 = vpack.c.b16 %v1410, %v1409
        %v1424 = vpack.c.b16 %v1412, %v1411
        %v1425 = vpack.c.b16 %v1414, %v1413
        %v1426 = vpack.c.b16 %v1416, %v1415
        %v1427 = vpack.c.b16 %v1418, %v1417
        %v1428 = vpack.c.b16 %v1420, %v1419
        %1437 = vmatprep.subr.bf16.mxu0 0
        %1438 = vmatpush1.bf16.msra.mxu0 %v1428
        %1439 = vmatprep.subr.bf16.mxu0 0
        %1440 = vmatpush1.bf16.msra.mxu0 %v1427
        %1441 = vmatprep.subr.bf16.mxu0 0
        %1442 = vmatpush1.bf16.msra.mxu0 %v1426
        %1443 = vmatprep.subr.bf16.mxu0 0
        %1444 = vmatpush1.bf16.msra.mxu0 %v1425
        %1445 = vmatprep.subr.bf16.mxu0 0
        %1446 = vmatpush1.bf16.msra.mxu0 %v1424
        %1447 = vmatprep.subr.bf16.mxu0 0
        %1448 = vmatpush1.bf16.msra.mxu0 %v1423
        %1449 = vmatprep.subr.bf16.mxu0 0
        %1450 = vmatpush1.bf16.msra.mxu0 %v1422
        %1451 = vmatprep.subr.bf16.mxu0 0
        %1452 = vmatpush1.bf16.msra.mxu0 %v1421
        %1453 = vmatprep.subr.bf16.mxu0 0
        %1454 = vmatpush2.bf16.msra.mxu0 0
        %1455 = vmatprep.subr.bf16.mxu0 0
        %1456 = vmatpush2.bf16.msra.mxu0 0
        %1457 = vmatprep.subr.bf16.mxu0 0
        %1458 = vmatpush2.bf16.msra.mxu0 0
        %1459 = vmatprep.subr.bf16.mxu0 0
        %1460 = vmatpush2.bf16.msra.mxu0 0
        %1461 = vmatprep.subr.bf16.mxu0 0
        %1462 = vmatpush2.bf16.msra.mxu0 0
        %1463 = vmatprep.subr.bf16.mxu0 0
        %1464 = vmatpush2.bf16.msra.mxu0 0
        %1465 = vmatprep.subr.bf16.mxu0 0
        %1466 = vmatpush2.bf16.msra.mxu0 0
        %1467 = vmatprep.subr.bf16.mxu0 0
        %1468 = vmatpush2.bf16.msra.mxu0 0
        %1469 = vmatprep.mubr.bf16.mxu0 0
        %1470 = vmatmul.mubr.bf16.gmra.mxu0 %v1104
        %v1471 = vpop.f32.mrf.mxu0
        %v1472 = vadd.f32 %v1359, %v1471
        %v1473 = vpop.f32.mrf.mxu0
        %v1474 = vpop.f32.mrf.mxu0
        %v1475 = vadd.f32 %v1362, %v1474
        %v1476 = vpop.f32.mrf.mxu0
        %1477 = vmatprep.mubr.bf16.mxu0 0
        %1478 = vmatmul.mubr.bf16.gmra.mxu0 %v1105
        %v1479 = vpop.f32.mrf.mxu0
        %v1480 = vadd.f32 %v1367, %v1479
        %v1481 = vpop.f32.mrf.mxu0
        %v1482 = vpop.f32.mrf.mxu0
        %v1483 = vadd.f32 %v1370, %v1482
        %v1484 = vpop.f32.mrf.mxu0
        %1485 = vmatprep.mubr.bf16.mxu0 0
        %1486 = vmatmul.mubr.bf16.gmra.mxu0 %v1106
        %v1487 = vpop.f32.mrf.mxu0
        %v1488 = vadd.f32 %v1375, %v1487
        %v1489 = vpop.f32.mrf.mxu0
        %v1490 = vpop.f32.mrf.mxu0
        %v1491 = vadd.f32 %v1378, %v1490
        %v1492 = vpop.f32.mrf.mxu0
        %1493 = vmatprep.mubr.bf16.mxu0 0
        %1494 = vmatmul.mubr.bf16.gmra.mxu0 %v1107
        %v1495 = vpop.f32.mrf.mxu0
        %v1496 = vadd.f32 %v1383, %v1495
        %v1497 = vpop.f32.mrf.mxu0
        %v1498 = vpop.f32.mrf.mxu0
        %v1499 = vadd.f32 %v1386, %v1498
        %v1500 = vpop.f32.mrf.mxu0
        %1501 = vdwg.mxu0
        %v1502 = vrot.slane %v941, 4
        %v1503 = vrot.slane %v944, 5
        %v1504 = vor.u32 %v1502, %v1503
        %vm1506 = vsmask.f32 3328
        %v1507 = vrot.slane %v951, 4
        %v1508 = vrot.slane %v954, 5
        %v1509 = vor.u32 %v1507, %v1508
        %v1510 = vrot.slane %v959, 4
        %v1511 = vrot.slane %v962, 5
        %v1512 = vor.u32 %v1510, %v1511
        %v1513 = vsel %vm1506, %v1509, %v1512
        %v1514 = vrot.slane %v968, 4
        %v1515 = vrot.slane %v971, 5
        %v1516 = vor.u32 %v1514, %v1515
        %v1517 = vsel %vm1506, %v1512, %v1516
        %v1518 = vsel %vm1506, %v1516, %v1504
        %vm1523 = vmand %vm1129, %vm1506
        %v1524 = vsel %vm1523, %v1504, %v1509
        %1525 = vset.pattern.permute.xlu0 2
        %1526 = vperm.xlu0 %1525, %v932
        %v1527 = vpop.permute.xlu0 %1526
        %v1530 = vunpack.c.l.s4 839922192
        %v1531 = vunpack.c.0.s8 %v1530
        %v1532 = vlaneseq
        %v1533 = vshrl.u32 %v1532, 7
        %v1534 = vsub.s32 %v1531, %v1533
        %v1535 = vrot.slane %v1527, %v1534
        %1536 = vset.pattern.permute.xlu0 2
        %1537 = vperm.xlu0 %1536, %v933
        %v1538 = vpop.permute.xlu0 %1537
        %v1541 = vunpack.c.l.s4 839922192
        %v1542 = vunpack.c.0.s8 %v1541
        %v1543 = vlaneseq
        %v1544 = vshrl.u32 %v1543, 7
        %v1545 = vsub.s32 %v1542, %v1544
        %v1546 = vrot.slane %v1538, %v1545
        %1547 = vset.pattern.permute.xlu0 2
        %1548 = vperm.xlu0 %1547, %v934
        %v1549 = vpop.permute.xlu0 %1548
        %v1552 = vunpack.c.l.s4 839922192
        %v1553 = vunpack.c.0.s8 %v1552
        %v1554 = vlaneseq
        %v1555 = vshrl.u32 %v1554, 7
        %v1556 = vsub.s32 %v1553, %v1555
        %v1557 = vrot.slane %v1549, %v1556
        %1558 = vset.pattern.permute.xlu0 2
        %1559 = vperm.xlu0 %1558, %v935
        %v1560 = vpop.permute.xlu0 %1559
        %v1563 = vunpack.c.l.s4 839922192
        %v1564 = vunpack.c.0.s8 %v1563
        %v1565 = vlaneseq
        %v1566 = vshrl.u32 %v1565, 7
        %v1567 = vsub.s32 %v1564, %v1566
        %v1568 = vrot.slane %v1560, %v1567
        %1569 = vset.pattern.permute.xlu0 2
        %1570 = vperm.xlu0 %1569, %v936
        %v1571 = vpop.permute.xlu0 %1570
        %v1574 = vunpack.c.l.s4 839922192
        %v1575 = vunpack.c.0.s8 %v1574
        %v1576 = vlaneseq
        %v1577 = vshrl.u32 %v1576, 7
        %v1578 = vsub.s32 %v1575, %v1577
        %v1579 = vrot.slane %v1571, %v1578
        %1580 = vset.pattern.permute.xlu0 2
        %1581 = vperm.xlu0 %1580, %v937
        %v1582 = vpop.permute.xlu0 %1581
        %v1585 = vunpack.c.l.s4 839922192
        %v1586 = vunpack.c.0.s8 %v1585
        %v1587 = vlaneseq
        %v1588 = vshrl.u32 %v1587, 7
        %v1589 = vsub.s32 %v1586, %v1588
        %v1590 = vrot.slane %v1582, %v1589
        %1591 = vset.pattern.permute.xlu0 2
        %1592 = vperm.xlu0 %1591, %v938
        %v1593 = vpop.permute.xlu0 %1592
        %v1596 = vunpack.c.l.s4 839922192
        %v1597 = vunpack.c.0.s8 %v1596
        %v1598 = vlaneseq
        %v1599 = vshrl.u32 %v1598, 7
        %v1600 = vsub.s32 %v1597, %v1599
        %v1601 = vrot.slane %v1593, %v1600
        %1602 = vset.pattern.permute.xlu0 2
        %1603 = vperm.xlu0 %1602, %v939
        %v1604 = vpop.permute.xlu0 %1603
        %v1607 = vunpack.c.l.s4 839922192
        %v1608 = vunpack.c.0.s8 %v1607
        %v1609 = vlaneseq
        %v1610 = vshrl.u32 %v1609, 7
        %v1611 = vsub.s32 %v1608, %v1610
        %v1612 = vrot.slane %v1604, %v1611
        %v1621 = vunpack.c.l.b16 %v1535
        %v1622 = vunpack.c.l.b16 %v1546
        %v1623 = vunpack.c.l.b16 %v1557
        %v1624 = vunpack.c.l.b16 %v1568
        %v1625 = vunpack.c.l.b16 %v1579
        %v1626 = vunpack.c.l.b16 %v1590
        %v1627 = vunpack.c.l.b16 %v1601
        %v1628 = vunpack.c.l.b16 %v1612
        %v1629 = vpack.c.b16 %v1622, %v1621
        %v1630 = vpack.c.b16 %v1624, %v1623
        %v1631 = vpack.c.b16 %v1626, %v1625
        %v1632 = vpack.c.b16 %v1628, %v1627
        %v1637 = vmul.bf16 %v1524, %v1629
        %v1638 = vmul.bf16 %v1513, %v1630
        %v1639 = vmul.bf16 %v1517, %v1631
        %v1640 = vmul.bf16 %v1518, %v1632
        %v1641 = vld [vmem:[#allocation2 + $0x80] sm:$0xf]
        %v1642 = vld [vmem:[#allocation2 + $0x84] sm:$0xf]
        %v1643 = vld [vmem:[#allocation2 + $0x88] sm:$0xf]
        %v1644 = vld [vmem:[#allocation2 + $0x8c] sm:$0xf]
        %v1645 = vld [vmem:[#allocation2 + $0x90] sm:$0xf]
        %v1646 = vld [vmem:[#allocation2 + $0x94] sm:$0xf]
        %v1647 = vld [vmem:[#allocation2 + $0x98] sm:$0xf]
        %v1648 = vld [vmem:[#allocation2 + $0x9c] sm:$0xf]
        %v1649 = vld [vmem:[#allocation2 + $0xa0] sm:$0xf]
        %v1650 = vld [vmem:[#allocation2 + $0xa4] sm:$0xf]
        %v1651 = vld [vmem:[#allocation2 + $0xa8] sm:$0xf]
        %v1652 = vld [vmem:[#allocation2 + $0xac] sm:$0xf]
        %v1653 = vld [vmem:[#allocation2 + $0xb0] sm:$0xf]
        %v1654 = vld [vmem:[#allocation2 + $0xb4] sm:$0xf]
        %v1655 = vld [vmem:[#allocation2 + $0xb8] sm:$0xf]
        %v1656 = vld [vmem:[#allocation2 + $0xbc] sm:$0xf]
        %v1673 = vunpack.c.l.b16 %v1641
        %v1674 = vunpack.c.l.b16 %v1642
        %v1675 = vunpack.c.l.b16 %v1643
        %v1676 = vunpack.c.l.b16 %v1644
        %v1677 = vunpack.c.l.b16 %v1645
        %v1678 = vunpack.c.l.b16 %v1646
        %v1679 = vunpack.c.l.b16 %v1647
        %v1680 = vunpack.c.l.b16 %v1648
        %v1681 = vunpack.c.l.b16 %v1649
        %v1682 = vunpack.c.l.b16 %v1650
        %v1683 = vunpack.c.l.b16 %v1651
        %v1684 = vunpack.c.l.b16 %v1652
        %v1685 = vunpack.c.l.b16 %v1653
        %v1686 = vunpack.c.l.b16 %v1654
        %v1687 = vunpack.c.l.b16 %v1655
        %v1688 = vunpack.c.l.b16 %v1656
        %v1689 = vpack.c.b16 %v1674, %v1673
        %v1690 = vpack.c.b16 %v1676, %v1675
        %v1691 = vpack.c.b16 %v1678, %v1677
        %v1692 = vpack.c.b16 %v1680, %v1679
        %v1693 = vpack.c.b16 %v1682, %v1681
        %v1694 = vpack.c.b16 %v1684, %v1683
        %v1695 = vpack.c.b16 %v1686, %v1685
        %v1696 = vpack.c.b16 %v1688, %v1687
        %1705 = vmatprep.subr.bf16.mxu0 0
        %1706 = vmatpush1.bf16.msra.mxu0 %v1696
        %1707 = vmatprep.subr.bf16.mxu0 0
        %1708 = vmatpush1.bf16.msra.mxu0 %v1695
        %1709 = vmatprep.subr.bf16.mxu0 0
        %1710 = vmatpush1.bf16.msra.mxu0 %v1694
        %1711 = vmatprep.subr.bf16.mxu0 0
        %1712 = vmatpush1.bf16.msra.mxu0 %v1693
        %1713 = vmatprep.subr.bf16.mxu0 0
        %1714 = vmatpush1.bf16.msra.mxu0 %v1692
        %1715 = vmatprep.subr.bf16.mxu0 0
        %1716 = vmatpush1.bf16.msra.mxu0 %v1691
        %1717 = vmatprep.subr.bf16.mxu0 0
        %1718 = vmatpush1.bf16.msra.mxu0 %v1690
        %1719 = vmatprep.subr.bf16.mxu0 0
        %1720 = vmatpush1.bf16.msra.mxu0 %v1689
        %1721 = vmatprep.subr.bf16.mxu0 0
        %1722 = vmatpush2.bf16.msra.mxu0 0
        %1723 = vmatprep.subr.bf16.mxu0 0
        %1724 = vmatpush2.bf16.msra.mxu0 0
        %1725 = vmatprep.subr.bf16.mxu0 0
        %1726 = vmatpush2.bf16.msra.mxu0 0
        %1727 = vmatprep.subr.bf16.mxu0 0
        %1728 = vmatpush2.bf16.msra.mxu0 0
        %1729 = vmatprep.subr.bf16.mxu0 0
        %1730 = vmatpush2.bf16.msra.mxu0 0
        %1731 = vmatprep.subr.bf16.mxu0 0
        %1732 = vmatpush2.bf16.msra.mxu0 0
        %1733 = vmatprep.subr.bf16.mxu0 0
        %1734 = vmatpush2.bf16.msra.mxu0 0
        %1735 = vmatprep.subr.bf16.mxu0 0
        %1736 = vmatpush2.bf16.msra.mxu0 0
        %1737 = vmatprep.mubr.bf16.mxu0 0
        %1738 = vmatmul.mubr.bf16.gmra.mxu0 %v1637
        %v1739 = vpop.f32.mrf.mxu0
        %v1740 = vadd.f32 0.0, %v1739
        %v1741 = vpop.f32.mrf.mxu0
        %v1742 = vpop.f32.mrf.mxu0
        %v1743 = vadd.f32 0.0, %v1742
        %v1744 = vpop.f32.mrf.mxu0
        %1745 = vmatprep.mubr.bf16.mxu0 0
        %1746 = vmatmul.mubr.bf16.gmra.mxu0 %v1638
        %v1747 = vpop.f32.mrf.mxu0
        %v1748 = vadd.f32 0.0, %v1747
        %v1749 = vpop.f32.mrf.mxu0
        %v1750 = vpop.f32.mrf.mxu0
        %v1751 = vadd.f32 0.0, %v1750
        %v1752 = vpop.f32.mrf.mxu0
        %1753 = vmatprep.mubr.bf16.mxu0 0
        %1754 = vmatmul.mubr.bf16.gmra.mxu0 %v1639
        %v1755 = vpop.f32.mrf.mxu0
        %v1756 = vadd.f32 0.0, %v1755
        %v1757 = vpop.f32.mrf.mxu0
        %v1758 = vpop.f32.mrf.mxu0
        %v1759 = vadd.f32 0.0, %v1758
        %v1760 = vpop.f32.mrf.mxu0
        %1761 = vmatprep.mubr.bf16.mxu0 0
        %1762 = vmatmul.mubr.bf16.gmra.mxu0 %v1640
        %v1763 = vpop.f32.mrf.mxu0
        %v1764 = vadd.f32 0.0, %v1763
        %v1765 = vpop.f32.mrf.mxu0
        %v1766 = vpop.f32.mrf.mxu0
        %v1767 = vadd.f32 0.0, %v1766
        %v1768 = vpop.f32.mrf.mxu0
        %1769 = vdwg.mxu0
        %v1770 = vadd.f32 %v1472, %v1740
        %v1771 = vadd.f32 %v1475, %v1743
        %v1772 = vadd.f32 %v1480, %v1748
        %v1773 = vadd.f32 %v1483, %v1751
        %v1774 = vadd.f32 %v1488, %v1756
        %v1775 = vadd.f32 %v1491, %v1759
        %v1776 = vadd.f32 %v1496, %v1764
        %v1777 = vadd.f32 %v1499, %v1767
        %v1778 = vrot.slane %v941, 7
        %vm1780 = vsmask.f32 256
        %v1781 = vrot.slane %v951, 7
        %v1782 = vor.u32 %v1781, %v954
        %v1783 = vrot.slane %v959, 7
        %v1784 = vor.u32 %v1783, %v962
        %v1785 = vsel %vm1780, %v1781, %v1784
        %v1786 = vrot.slane %v968, 7
        %v1787 = vor.u32 %v1786, %v971
        %v1788 = vsel %vm1780, %v1783, %v1787
        %v1789 = vor.u32 %v1778, %v944
        %v1790 = vsel %vm1780, %v1786, %v1789
        %vm1795 = vcmask 1040384
        %vm1796 = vmand %vm1795, %vm1780
        %v1797 = vsel %vm1796, %v1778, %v1782
        %1798 = vset.pattern.permute.xlu0 3
        %1799 = vperm.xlu0 %1798, %v932
        %v1800 = vpop.permute.xlu0 %1799
        %v1803 = vunpack.c.l.s4 839922192
        %v1804 = vunpack.c.0.s8 %v1803
        %v1805 = vlaneseq
        %v1806 = vshrl.u32 %v1805, 7
        %v1807 = vsub.s32 %v1804, %v1806
        %v1808 = vrot.slane %v1800, %v1807
        %1809 = vset.pattern.permute.xlu0 3
        %1810 = vperm.xlu0 %1809, %v933
        %v1811 = vpop.permute.xlu0 %1810
        %v1814 = vunpack.c.l.s4 839922192
        %v1815 = vunpack.c.0.s8 %v1814
        %v1816 = vlaneseq
        %v1817 = vshrl.u32 %v1816, 7
        %v1818 = vsub.s32 %v1815, %v1817
        %v1819 = vrot.slane %v1811, %v1818
        %1820 = vset.pattern.permute.xlu0 3
        %1821 = vperm.xlu0 %1820, %v934
        %v1822 = vpop.permute.xlu0 %1821
        %v1825 = vunpack.c.l.s4 839922192
        %v1826 = vunpack.c.0.s8 %v1825
        %v1827 = vlaneseq
        %v1828 = vshrl.u32 %v1827, 7
        %v1829 = vsub.s32 %v1826, %v1828
        %v1830 = vrot.slane %v1822, %v1829
        %1831 = vset.pattern.permute.xlu0 3
        %1832 = vperm.xlu0 %1831, %v935
        %v1833 = vpop.permute.xlu0 %1832
        %v1836 = vunpack.c.l.s4 839922192
        %v1837 = vunpack.c.0.s8 %v1836
        %v1838 = vlaneseq
        %v1839 = vshrl.u32 %v1838, 7
        %v1840 = vsub.s32 %v1837, %v1839
        %v1841 = vrot.slane %v1833, %v1840
        %1842 = vset.pattern.permute.xlu0 3
        %1843 = vperm.xlu0 %1842, %v936
        %v1844 = vpop.permute.xlu0 %1843
        %v1847 = vunpack.c.l.s4 839922192
        %v1848 = vunpack.c.0.s8 %v1847
        %v1849 = vlaneseq
        %v1850 = vshrl.u32 %v1849, 7
        %v1851 = vsub.s32 %v1848, %v1850
        %v1852 = vrot.slane %v1844, %v1851
        %1853 = vset.pattern.permute.xlu0 3
        %1854 = vperm.xlu0 %1853, %v937
        %v1855 = vpop.permute.xlu0 %1854
        %v1858 = vunpack.c.l.s4 839922192
        %v1859 = vunpack.c.0.s8 %v1858
        %v1860 = vlaneseq
        %v1861 = vshrl.u32 %v1860, 7
        %v1862 = vsub.s32 %v1859, %v1861
        %v1863 = vrot.slane %v1855, %v1862
        %1864 = vset.pattern.permute.xlu0 3
        %1865 = vperm.xlu0 %1864, %v938
        %v1866 = vpop.permute.xlu0 %1865
        %v1869 = vunpack.c.l.s4 839922192
        %v1870 = vunpack.c.0.s8 %v1869
        %v1871 = vlaneseq
        %v1872 = vshrl.u32 %v1871, 7
        %v1873 = vsub.s32 %v1870, %v1872
        %v1874 = vrot.slane %v1866, %v1873
        %1875 = vset.pattern.permute.xlu0 3
        %1876 = vperm.xlu0 %1875, %v939
        %v1877 = vpop.permute.xlu0 %1876
        %v1880 = vunpack.c.l.s4 839922192
        %v1881 = vunpack.c.0.s8 %v1880
        %v1882 = vlaneseq
        %v1883 = vshrl.u32 %v1882, 7
        %v1884 = vsub.s32 %v1881, %v1883
        %v1885 = vrot.slane %v1877, %v1884
        %v1894 = vunpack.c.l.b16 %v1808
        %v1895 = vunpack.c.l.b16 %v1819
        %v1896 = vunpack.c.l.b16 %v1830
        %v1897 = vunpack.c.l.b16 %v1841
        %v1898 = vunpack.c.l.b16 %v1852
        %v1899 = vunpack.c.l.b16 %v1863
        %v1900 = vunpack.c.l.b16 %v1874
        %v1901 = vunpack.c.l.b16 %v1885
        %v1902 = vpack.c.b16 %v1895, %v1894
        %v1903 = vpack.c.b16 %v1897, %v1896
        %v1904 = vpack.c.b16 %v1899, %v1898
        %v1905 = vpack.c.b16 %v1901, %v1900
        %v1910 = vmul.bf16 %v1797, %v1902
        %v1911 = vmul.bf16 %v1785, %v1903
        %v1912 = vmul.bf16 %v1788, %v1904
        %v1913 = vmul.bf16 %v1790, %v1905
        %v1914 = vld [vmem:[#allocation2 + $0xc0] sm:$0xf]
        %v1915 = vld [vmem:[#allocation2 + $0xc4] sm:$0xf]
        %v1916 = vld [vmem:[#allocation2 + $0xc8] sm:$0xf]
        %v1917 = vld [vmem:[#allocation2 + $0xcc] sm:$0xf]
        %v1918 = vld [vmem:[#allocation2 + $0xd0] sm:$0xf]
        %v1919 = vld [vmem:[#allocation2 + $0xd4] sm:$0xf]
        %v1920 = vld [vmem:[#allocation2 + $0xd8] sm:$0xf]
        %v1921 = vld [vmem:[#allocation2 + $0xdc] sm:$0xf]
        %v1922 = vld [vmem:[#allocation2 + $0xe0] sm:$0xf]
        %v1923 = vld [vmem:[#allocation2 + $0xe4] sm:$0xf]
        %v1924 = vld [vmem:[#allocation2 + $0xe8] sm:$0xf]
        %v1925 = vld [vmem:[#allocation2 + $0xec] sm:$0xf]
        %v1926 = vld [vmem:[#allocation2 + $0xf0] sm:$0xf]
        %v1927 = vld [vmem:[#allocation2 + $0xf4] sm:$0xf]
        %v1928 = vld [vmem:[#allocation2 + $0xf8] sm:$0xf]
        %v1929 = vld [vmem:[#allocation2 + $0xfc] sm:$0xf]
        %v1946 = vunpack.c.l.b16 %v1914
        %v1947 = vunpack.c.l.b16 %v1915
        %v1948 = vunpack.c.l.b16 %v1916
        %v1949 = vunpack.c.l.b16 %v1917
        %v1950 = vunpack.c.l.b16 %v1918
        %v1951 = vunpack.c.l.b16 %v1919
        %v1952 = vunpack.c.l.b16 %v1920
        %v1953 = vunpack.c.l.b16 %v1921
        %v1954 = vunpack.c.l.b16 %v1922
        %v1955 = vunpack.c.l.b16 %v1923
        %v1956 = vunpack.c.l.b16 %v1924
        %v1957 = vunpack.c.l.b16 %v1925
        %v1958 = vunpack.c.l.b16 %v1926
        %v1959 = vunpack.c.l.b16 %v1927
        %v1960 = vunpack.c.l.b16 %v1928
        %v1961 = vunpack.c.l.b16 %v1929
        %v1962 = vpack.c.b16 %v1947, %v1946
        %v1963 = vpack.c.b16 %v1949, %v1948
        %v1964 = vpack.c.b16 %v1951, %v1950
        %v1965 = vpack.c.b16 %v1953, %v1952
        %v1966 = vpack.c.b16 %v1955, %v1954
        %v1967 = vpack.c.b16 %v1957, %v1956
        %v1968 = vpack.c.b16 %v1959, %v1958
        %v1969 = vpack.c.b16 %v1961, %v1960
        %1978 = vmatprep.subr.bf16.mxu0 0
        %1979 = vmatpush1.bf16.msra.mxu0 %v1969
        %1980 = vmatprep.subr.bf16.mxu0 0
        %1981 = vmatpush1.bf16.msra.mxu0 %v1968
        %1982 = vmatprep.subr.bf16.mxu0 0
        %1983 = vmatpush1.bf16.msra.mxu0 %v1967
        %1984 = vmatprep.subr.bf16.mxu0 0
        %1985 = vmatpush1.bf16.msra.mxu0 %v1966
        %1986 = vmatprep.subr.bf16.mxu0 0
        %1987 = vmatpush1.bf16.msra.mxu0 %v1965
        %1988 = vmatprep.subr.bf16.mxu0 0
        %1989 = vmatpush1.bf16.msra.mxu0 %v1964
        %1990 = vmatprep.subr.bf16.mxu0 0
        %1991 = vmatpush1.bf16.msra.mxu0 %v1963
        %1992 = vmatprep.subr.bf16.mxu0 0
        %1993 = vmatpush1.bf16.msra.mxu0 %v1962
        %1994 = vmatprep.subr.bf16.mxu0 0
        %1995 = vmatpush2.bf16.msra.mxu0 0
        %1996 = vmatprep.subr.bf16.mxu0 0
        %1997 = vmatpush2.bf16.msra.mxu0 0
        %1998 = vmatprep.subr.bf16.mxu0 0
        %1999 = vmatpush2.bf16.msra.mxu0 0
        %2000 = vmatprep.subr.bf16.mxu0 0
        %2001 = vmatpush2.bf16.msra.mxu0 0
        %2002 = vmatprep.subr.bf16.mxu0 0
        %2003 = vmatpush2.bf16.msra.mxu0 0
        %2004 = vmatprep.subr.bf16.mxu0 0
        %2005 = vmatpush2.bf16.msra.mxu0 0
        %2006 = vmatprep.subr.bf16.mxu0 0
        %2007 = vmatpush2.bf16.msra.mxu0 0
        %2008 = vmatprep.subr.bf16.mxu0 0
        %2009 = vmatpush2.bf16.msra.mxu0 0
        %2010 = vmatprep.mubr.bf16.mxu0 0
        %2011 = vmatmul.mubr.bf16.gmra.mxu0 %v1910
        %v2012 = vpop.f32.mrf.mxu0
        %v2013 = vadd.f32 0.0, %v2012
        %v2014 = vpop.f32.mrf.mxu0
        %v2015 = vpop.f32.mrf.mxu0
        %v2016 = vadd.f32 0.0, %v2015
        %v2017 = vpop.f32.mrf.mxu0
        %2018 = vmatprep.mubr.bf16.mxu0 0
        %2019 = vmatmul.mubr.bf16.gmra.mxu0 %v1911
        %v2020 = vpop.f32.mrf.mxu0
        %v2021 = vadd.f32 0.0, %v2020
        %v2022 = vpop.f32.mrf.mxu0
        %v2023 = vpop.f32.mrf.mxu0
        %v2024 = vadd.f32 0.0, %v2023
        %v2025 = vpop.f32.mrf.mxu0
        %2026 = vmatprep.mubr.bf16.mxu0 0
        %2027 = vmatmul.mubr.bf16.gmra.mxu0 %v1912
        %v2028 = vpop.f32.mrf.mxu0
        %v2029 = vadd.f32 0.0, %v2028
        %v2030 = vpop.f32.mrf.mxu0
        %v2031 = vpop.f32.mrf.mxu0
        %v2032 = vadd.f32 0.0, %v2031
        %v2033 = vpop.f32.mrf.mxu0
        %2034 = vmatprep.mubr.bf16.mxu0 0
        %2035 = vmatmul.mubr.bf16.gmra.mxu0 %v1913
        %v2036 = vpop.f32.mrf.mxu0
        %v2037 = vadd.f32 0.0, %v2036
        %v2038 = vpop.f32.mrf.mxu0
        %v2039 = vpop.f32.mrf.mxu0
        %v2040 = vadd.f32 0.0, %v2039
        %v2041 = vpop.f32.mrf.mxu0
        %2042 = vdwg.mxu0
        %v2043 = vadd.f32 %v1770, %v2013
        %v2044 = vadd.f32 %v1771, %v2016
        %v2045 = vadd.f32 %v1772, %v2021
        %v2046 = vadd.f32 %v1773, %v2024
        %v2047 = vadd.f32 %v1774, %v2029
        %v2048 = vadd.f32 %v1775, %v2032
        %v2049 = vadd.f32 %v1776, %v2037
        %v2050 = vadd.f32 %v1777, %v2040
        %v2051 = vld [vmem:[#allocation2 + $0x100] sm:$0xf]
        %v2052 = vld [vmem:[#allocation2 + $0x104] sm:$0xf]
        %v2053 = vld [vmem:[#allocation2 + $0x108] sm:$0xf]
        %v2054 = vld [vmem:[#allocation2 + $0x10c] sm:$0xf]
        %v2055 = vld [vmem:[#allocation2 + $0x110] sm:$0xf]
        %v2056 = vld [vmem:[#allocation2 + $0x114] sm:$0xf]
        %v2057 = vld [vmem:[#allocation2 + $0x118] sm:$0xf]
        %v2058 = vld [vmem:[#allocation2 + $0x11c] sm:$0xf]
        %v2059 = vld [vmem:[#allocation2 + $0x120] sm:$0xf]
        %v2060 = vld [vmem:[#allocation2 + $0x124] sm:$0xf]
        %v2061 = vld [vmem:[#allocation2 + $0x128] sm:$0xf]
        %v2062 = vld [vmem:[#allocation2 + $0x12c] sm:$0xf]
        %v2063 = vld [vmem:[#allocation2 + $0x130] sm:$0xf]
        %v2064 = vld [vmem:[#allocation2 + $0x134] sm:$0xf]
        %v2065 = vld [vmem:[#allocation2 + $0x138] sm:$0xf]
        %v2066 = vld [vmem:[#allocation2 + $0x13c] sm:$0xf]
        %v2083 = vunpack.c.l.b16 %v2051
        %v2084 = vunpack.c.l.b16 %v2052
        %v2085 = vunpack.c.l.b16 %v2053
        %v2086 = vunpack.c.l.b16 %v2054
        %v2087 = vunpack.c.l.b16 %v2055
        %v2088 = vunpack.c.l.b16 %v2056
        %v2089 = vunpack.c.l.b16 %v2057
        %v2090 = vunpack.c.l.b16 %v2058
        %v2091 = vunpack.c.l.b16 %v2059
        %v2092 = vunpack.c.l.b16 %v2060
        %v2093 = vunpack.c.l.b16 %v2061
        %v2094 = vunpack.c.l.b16 %v2062
        %v2095 = vunpack.c.l.b16 %v2063
        %v2096 = vunpack.c.l.b16 %v2064
        %v2097 = vunpack.c.l.b16 %v2065
        %v2098 = vunpack.c.l.b16 %v2066
        %v2099 = vpack.c.b16 %v2084, %v2083
        %v2100 = vpack.c.b16 %v2086, %v2085
        %v2101 = vpack.c.b16 %v2088, %v2087
        %v2102 = vpack.c.b16 %v2090, %v2089
        %v2103 = vpack.c.b16 %v2092, %v2091
        %v2104 = vpack.c.b16 %v2094, %v2093
        %v2105 = vpack.c.b16 %v2096, %v2095
        %v2106 = vpack.c.b16 %v2098, %v2097
        %2115 = vmatprep.subr.bf16.mxu0 0
        %2116 = vmatpush1.bf16.msra.mxu0 %v2106
        %2117 = vmatprep.subr.bf16.mxu0 0
        %2118 = vmatpush1.bf16.msra.mxu0 %v2105
        %2119 = vmatprep.subr.bf16.mxu0 0
        %2120 = vmatpush1.bf16.msra.mxu0 %v2104
        %2121 = vmatprep.subr.bf16.mxu0 0
        %2122 = vmatpush1.bf16.msra.mxu0 %v2103
        %2123 = vmatprep.subr.bf16.mxu0 0
        %2124 = vmatpush1.bf16.msra.mxu0 %v2102
        %2125 = vmatprep.subr.bf16.mxu0 0
        %2126 = vmatpush1.bf16.msra.mxu0 %v2101
        %2127 = vmatprep.subr.bf16.mxu0 0
        %2128 = vmatpush1.bf16.msra.mxu0 %v2100
        %2129 = vmatprep.subr.bf16.mxu0 0
        %2130 = vmatpush1.bf16.msra.mxu0 %v2099
        %2131 = vmatprep.subr.bf16.mxu0 0
        %2132 = vmatpush2.bf16.msra.mxu0 0
        %2133 = vmatprep.subr.bf16.mxu0 0
        %2134 = vmatpush2.bf16.msra.mxu0 0
        %2135 = vmatprep.subr.bf16.mxu0 0
        %2136 = vmatpush2.bf16.msra.mxu0 0
        %2137 = vmatprep.subr.bf16.mxu0 0
        %2138 = vmatpush2.bf16.msra.mxu0 0
        %2139 = vmatprep.subr.bf16.mxu0 0
        %2140 = vmatpush2.bf16.msra.mxu0 0
        %2141 = vmatprep.subr.bf16.mxu0 0
        %2142 = vmatpush2.bf16.msra.mxu0 0
        %2143 = vmatprep.subr.bf16.mxu0 0
        %2144 = vmatpush2.bf16.msra.mxu0 0
        %2145 = vmatprep.subr.bf16.mxu0 0
        %2146 = vmatpush2.bf16.msra.mxu0 0
        %2147 = vmatprep.mubr.bf16.mxu0 0
        %2148 = vmatmul.mubr.bf16.gmra.mxu0 %v928
        %v2149 = vpop.f32.mrf.mxu0
        %v2150 = vadd.f32 0.0, %v2149
        %v2151 = vpop.f32.mrf.mxu0
        %v2152 = vpop.f32.mrf.mxu0
        %v2153 = vadd.f32 0.0, %v2152
        %v2154 = vpop.f32.mrf.mxu0
        %2155 = vmatprep.mubr.bf16.mxu0 0
        %2156 = vmatmul.mubr.bf16.gmra.mxu0 %v929
        %v2157 = vpop.f32.mrf.mxu0
        %v2158 = vadd.f32 0.0, %v2157
        %v2159 = vpop.f32.mrf.mxu0
        %v2160 = vpop.f32.mrf.mxu0
        %v2161 = vadd.f32 0.0, %v2160
        %v2162 = vpop.f32.mrf.mxu0
        %2163 = vmatprep.mubr.bf16.mxu0 0
        %2164 = vmatmul.mubr.bf16.gmra.mxu0 %v930
        %v2165 = vpop.f32.mrf.mxu0
        %v2166 = vadd.f32 0.0, %v2165
        %v2167 = vpop.f32.mrf.mxu0
        %v2168 = vpop.f32.mrf.mxu0
        %v2169 = vadd.f32 0.0, %v2168
        %v2170 = vpop.f32.mrf.mxu0
        %2171 = vmatprep.mubr.bf16.mxu0 0
        %2172 = vmatmul.mubr.bf16.gmra.mxu0 %v931
        %v2173 = vpop.f32.mrf.mxu0
        %v2174 = vadd.f32 0.0, %v2173
        %v2175 = vpop.f32.mrf.mxu0
        %v2176 = vpop.f32.mrf.mxu0
        %v2177 = vadd.f32 0.0, %v2176
        %v2178 = vpop.f32.mrf.mxu0
        %2179 = vdwg.mxu0
        %v2180 = vadd.f32 %v2043, %v2150
        %v2181 = vadd.f32 %v2044, %v2153
        %v2182 = vadd.f32 %v2045, %v2158
        %v2183 = vadd.f32 %v2046, %v2161
        %v2184 = vadd.f32 %v2047, %v2166
        %v2185 = vadd.f32 %v2048, %v2169
        %v2186 = vadd.f32 %v2049, %v2174
        %v2187 = vadd.f32 %v2050, %v2177
        %vm2188 = vsmask.f32 7424
        %v2189 = vrot.slane %v954, 1
        %v2190 = vor.u32 %v951, %v2189
        %v2191 = vrot.slane %v962, 1
        %v2192 = vsel %vm2188, %v2190, %v2191
        %v2193 = vor.u32 %v959, %v2191
        %v2194 = vrot.slane %v971, 1
        %v2195 = vsel %vm2188, %v2193, %v2194
        %v2196 = vor.u32 %v968, %v2194
        %v2197 = vrot.slane %v944, 1
        %v2198 = vsel %vm2188, %v2196, %v2197
        %v2199 = vor.u32 %v941, %v2197
        %vm2205 = vcmask 1047552
        %vm2206 = vmand %vm2205, %vm2188
        %v2207 = vsel %vm2206, %v2199, %v2189
        %2208 = vset.pattern.permute.xlu0 5
        %2209 = vperm.xlu0 %2208, %v932
        %v2210 = vpop.permute.xlu0 %2209
        %v2213 = vunpack.c.l.s4 839922192
        %v2214 = vunpack.c.0.s8 %v2213
        %v2215 = vlaneseq
        %v2216 = vshrl.u32 %v2215, 7
        %v2217 = vsub.s32 %v2214, %v2216
        %v2218 = vrot.slane %v2210, %v2217
        %2219 = vset.pattern.permute.xlu0 5
        %2220 = vperm.xlu0 %2219, %v933
        %v2221 = vpop.permute.xlu0 %2220
        %v2224 = vunpack.c.l.s4 839922192
        %v2225 = vunpack.c.0.s8 %v2224
        %v2226 = vlaneseq
        %v2227 = vshrl.u32 %v2226, 7
        %v2228 = vsub.s32 %v2225, %v2227
        %v2229 = vrot.slane %v2221, %v2228
        %2230 = vset.pattern.permute.xlu0 5
        %2231 = vperm.xlu0 %2230, %v934
        %v2232 = vpop.permute.xlu0 %2231
        %v2235 = vunpack.c.l.s4 839922192
        %v2236 = vunpack.c.0.s8 %v2235
        %v2237 = vlaneseq
        %v2238 = vshrl.u32 %v2237, 7
        %v2239 = vsub.s32 %v2236, %v2238
        %v2240 = vrot.slane %v2232, %v2239
        %2241 = vset.pattern.permute.xlu0 5
        %2242 = vperm.xlu0 %2241, %v935
        %v2243 = vpop.permute.xlu0 %2242
        %v2246 = vunpack.c.l.s4 839922192
        %v2247 = vunpack.c.0.s8 %v2246
        %v2248 = vlaneseq
        %v2249 = vshrl.u32 %v2248, 7
        %v2250 = vsub.s32 %v2247, %v2249
        %v2251 = vrot.slane %v2243, %v2250
        %2252 = vset.pattern.permute.xlu0 5
        %2253 = vperm.xlu0 %2252, %v936
        %v2254 = vpop.permute.xlu0 %2253
        %v2257 = vunpack.c.l.s4 839922192
        %v2258 = vunpack.c.0.s8 %v2257
        %v2259 = vlaneseq
        %v2260 = vshrl.u32 %v2259, 7
        %v2261 = vsub.s32 %v2258, %v2260
        %v2262 = vrot.slane %v2254, %v2261
        %2263 = vset.pattern.permute.xlu0 5
        %2264 = vperm.xlu0 %2263, %v937
        %v2265 = vpop.permute.xlu0 %2264
        %v2268 = vunpack.c.l.s4 839922192
        %v2269 = vunpack.c.0.s8 %v2268
        %v2270 = vlaneseq
        %v2271 = vshrl.u32 %v2270, 7
        %v2272 = vsub.s32 %v2269, %v2271
        %v2273 = vrot.slane %v2265, %v2272
        %2274 = vset.pattern.permute.xlu0 5
        %2275 = vperm.xlu0 %2274, %v938
        %v2276 = vpop.permute.xlu0 %2275
        %v2279 = vunpack.c.l.s4 839922192
        %v2280 = vunpack.c.0.s8 %v2279
        %v2281 = vlaneseq
        %v2282 = vshrl.u32 %v2281, 7
        %v2283 = vsub.s32 %v2280, %v2282
        %v2284 = vrot.slane %v2276, %v2283
        %2285 = vset.pattern.permute.xlu0 5
        %2286 = vperm.xlu0 %2285, %v939
        %v2287 = vpop.permute.xlu0 %2286
        %v2290 = vunpack.c.l.s4 839922192
        %v2291 = vunpack.c.0.s8 %v2290
        %v2292 = vlaneseq
        %v2293 = vshrl.u32 %v2292, 7
        %v2294 = vsub.s32 %v2291, %v2293
        %v2295 = vrot.slane %v2287, %v2294
        %v2304 = vunpack.c.l.b16 %v2218
        %v2305 = vunpack.c.l.b16 %v2229
        %v2306 = vunpack.c.l.b16 %v2240
        %v2307 = vunpack.c.l.b16 %v2251
        %v2308 = vunpack.c.l.b16 %v2262
        %v2309 = vunpack.c.l.b16 %v2273
        %v2310 = vunpack.c.l.b16 %v2284
        %v2311 = vunpack.c.l.b16 %v2295
        %v2312 = vpack.c.b16 %v2305, %v2304
        %v2313 = vpack.c.b16 %v2307, %v2306
        %v2314 = vpack.c.b16 %v2309, %v2308
        %v2315 = vpack.c.b16 %v2311, %v2310
        %v2320 = vmul.bf16 %v2192, %v2312
        %v2321 = vmul.bf16 %v2195, %v2313
        %v2322 = vmul.bf16 %v2198, %v2314
        %v2323 = vmul.bf16 %v2207, %v2315
        %v2324 = vld [vmem:[#allocation2 + $0x140] sm:$0xf]
        %v2325 = vld [vmem:[#allocation2 + $0x144] sm:$0xf]
        %v2326 = vld [vmem:[#allocation2 + $0x148] sm:$0xf]
        %v2327 = vld [vmem:[#allocation2 + $0x14c] sm:$0xf]
        %v2328 = vld [vmem:[#allocation2 + $0x150] sm:$0xf]
        %v2329 = vld [vmem:[#allocation2 + $0x154] sm:$0xf]
        %v2330 = vld [vmem:[#allocation2 + $0x158] sm:$0xf]
        %v2331 = vld [vmem:[#allocation2 + $0x15c] sm:$0xf]
        %v2332 = vld [vmem:[#allocation2 + $0x160] sm:$0xf]
        %v2333 = vld [vmem:[#allocation2 + $0x164] sm:$0xf]
        %v2334 = vld [vmem:[#allocation2 + $0x168] sm:$0xf]
        %v2335 = vld [vmem:[#allocation2 + $0x16c] sm:$0xf]
        %v2336 = vld [vmem:[#allocation2 + $0x170] sm:$0xf]
        %v2337 = vld [vmem:[#allocation2 + $0x174] sm:$0xf]
        %v2338 = vld [vmem:[#allocation2 + $0x178] sm:$0xf]
        %v2339 = vld [vmem:[#allocation2 + $0x17c] sm:$0xf]
        %v2356 = vunpack.c.l.b16 %v2324
        %v2357 = vunpack.c.l.b16 %v2325
        %v2358 = vunpack.c.l.b16 %v2326
        %v2359 = vunpack.c.l.b16 %v2327
        %v2360 = vunpack.c.l.b16 %v2328
        %v2361 = vunpack.c.l.b16 %v2329
        %v2362 = vunpack.c.l.b16 %v2330
        %v2363 = vunpack.c.l.b16 %v2331
        %v2364 = vunpack.c.l.b16 %v2332
        %v2365 = vunpack.c.l.b16 %v2333
        %v2366 = vunpack.c.l.b16 %v2334
        %v2367 = vunpack.c.l.b16 %v2335
        %v2368 = vunpack.c.l.b16 %v2336
        %v2369 = vunpack.c.l.b16 %v2337
        %v2370 = vunpack.c.l.b16 %v2338
        %v2371 = vunpack.c.l.b16 %v2339
        %v2372 = vpack.c.b16 %v2357, %v2356
        %v2373 = vpack.c.b16 %v2359, %v2358
        %v2374 = vpack.c.b16 %v2361, %v2360
        %v2375 = vpack.c.b16 %v2363, %v2362
        %v2376 = vpack.c.b16 %v2365, %v2364
        %v2377 = vpack.c.b16 %v2367, %v2366
        %v2378 = vpack.c.b16 %v2369, %v2368
        %v2379 = vpack.c.b16 %v2371, %v2370
        %2388 = vmatprep.subr.bf16.mxu0 0
        %2389 = vmatpush1.bf16.msra.mxu0 %v2379
        %2390 = vmatprep.subr.bf16.mxu0 0
        %2391 = vmatpush1.bf16.msra.mxu0 %v2378
        %2392 = vmatprep.subr.bf16.mxu0 0
        %2393 = vmatpush1.bf16.msra.mxu0 %v2377
        %2394 = vmatprep.subr.bf16.mxu0 0
        %2395 = vmatpush1.bf16.msra.mxu0 %v2376
        %2396 = vmatprep.subr.bf16.mxu0 0
        %2397 = vmatpush1.bf16.msra.mxu0 %v2375
        %2398 = vmatprep.subr.bf16.mxu0 0
        %2399 = vmatpush1.bf16.msra.mxu0 %v2374
        %2400 = vmatprep.subr.bf16.mxu0 0
        %2401 = vmatpush1.bf16.msra.mxu0 %v2373
        %2402 = vmatprep.subr.bf16.mxu0 0
        %2403 = vmatpush1.bf16.msra.mxu0 %v2372
        %2404 = vmatprep.subr.bf16.mxu0 0
        %2405 = vmatpush2.bf16.msra.mxu0 0
        %2406 = vmatprep.subr.bf16.mxu0 0
        %2407 = vmatpush2.bf16.msra.mxu0 0
        %2408 = vmatprep.subr.bf16.mxu0 0
        %2409 = vmatpush2.bf16.msra.mxu0 0
        %2410 = vmatprep.subr.bf16.mxu0 0
        %2411 = vmatpush2.bf16.msra.mxu0 0
        %2412 = vmatprep.subr.bf16.mxu0 0
        %2413 = vmatpush2.bf16.msra.mxu0 0
        %2414 = vmatprep.subr.bf16.mxu0 0
        %2415 = vmatpush2.bf16.msra.mxu0 0
        %2416 = vmatprep.subr.bf16.mxu0 0
        %2417 = vmatpush2.bf16.msra.mxu0 0
        %2418 = vmatprep.subr.bf16.mxu0 0
        %2419 = vmatpush2.bf16.msra.mxu0 0
        %2420 = vmatprep.mubr.bf16.mxu0 0
        %2421 = vmatmul.mubr.bf16.gmra.mxu0 %v2320
        %v2422 = vpop.f32.mrf.mxu0
        %v2423 = vadd.f32 0.0, %v2422
        %v2424 = vpop.f32.mrf.mxu0
        %v2425 = vpop.f32.mrf.mxu0
        %v2426 = vadd.f32 0.0, %v2425
        %v2427 = vpop.f32.mrf.mxu0
        %2428 = vmatprep.mubr.bf16.mxu0 0
        %2429 = vmatmul.mubr.bf16.gmra.mxu0 %v2321
        %v2430 = vpop.f32.mrf.mxu0
        %v2431 = vadd.f32 0.0, %v2430
        %v2432 = vpop.f32.mrf.mxu0
        %v2433 = vpop.f32.mrf.mxu0
        %v2434 = vadd.f32 0.0, %v2433
        %v2435 = vpop.f32.mrf.mxu0
        %2436 = vmatprep.mubr.bf16.mxu0 0
        %2437 = vmatmul.mubr.bf16.gmra.mxu0 %v2322
        %v2438 = vpop.f32.mrf.mxu0
        %v2439 = vadd.f32 0.0, %v2438
        %v2440 = vpop.f32.mrf.mxu0
        %v2441 = vpop.f32.mrf.mxu0
        %v2442 = vadd.f32 0.0, %v2441
        %v2443 = vpop.f32.mrf.mxu0
        %2444 = vmatprep.mubr.bf16.mxu0 0
        %2445 = vmatmul.mubr.bf16.gmra.mxu0 %v2323
        %v2446 = vpop.f32.mrf.mxu0
        %v2447 = vadd.f32 0.0, %v2446
        %v2448 = vpop.f32.mrf.mxu0
        %v2449 = vpop.f32.mrf.mxu0
        %v2450 = vadd.f32 0.0, %v2449
        %v2451 = vpop.f32.mrf.mxu0
        %2452 = vdwg.mxu0
        %v2453 = vadd.f32 %v2180, %v2423
        %v2454 = vadd.f32 %v2181, %v2426
        %v2455 = vadd.f32 %v2182, %v2431
        %v2456 = vadd.f32 %v2183, %v2434
        %v2457 = vadd.f32 %v2184, %v2439
        %v2458 = vadd.f32 %v2185, %v2442
        %v2459 = vadd.f32 %v2186, %v2447
        %v2460 = vadd.f32 %v2187, %v2450
        %2461 = vset.pattern.permute.xlu0 6
        %2462 = vperm.xlu0 %2461, %v932
        %v2463 = vpop.permute.xlu0 %2462
        %v2466 = vunpack.c.l.s4 839922192
        %v2467 = vunpack.c.0.s8 %v2466
        %v2468 = vlaneseq
        %v2469 = vshrl.u32 %v2468, 7
        %v2470 = vsub.s32 %v2467, %v2469
        %v2471 = vrot.slane %v2463, %v2470
        %2472 = vset.pattern.permute.xlu0 6
        %2473 = vperm.xlu0 %2472, %v933
        %v2474 = vpop.permute.xlu0 %2473
        %v2477 = vunpack.c.l.s4 839922192
        %v2478 = vunpack.c.0.s8 %v2477
        %v2479 = vlaneseq
        %v2480 = vshrl.u32 %v2479, 7
        %v2481 = vsub.s32 %v2478, %v2480
        %v2482 = vrot.slane %v2474, %v2481
        %2483 = vset.pattern.permute.xlu0 6
        %2484 = vperm.xlu0 %2483, %v934
        %v2485 = vpop.permute.xlu0 %2484
        %v2488 = vunpack.c.l.s4 839922192
        %v2489 = vunpack.c.0.s8 %v2488
        %v2490 = vlaneseq
        %v2491 = vshrl.u32 %v2490, 7
        %v2492 = vsub.s32 %v2489, %v2491
        %v2493 = vrot.slane %v2485, %v2492
        %2494 = vset.pattern.permute.xlu0 6
        %2495 = vperm.xlu0 %2494, %v935
        %v2496 = vpop.permute.xlu0 %2495
        %v2499 = vunpack.c.l.s4 839922192
        %v2500 = vunpack.c.0.s8 %v2499
        %v2501 = vlaneseq
        %v2502 = vshrl.u32 %v2501, 7
        %v2503 = vsub.s32 %v2500, %v2502
        %v2504 = vrot.slane %v2496, %v2503
        %2505 = vset.pattern.permute.xlu0 6
        %2506 = vperm.xlu0 %2505, %v936
        %v2507 = vpop.permute.xlu0 %2506
        %v2510 = vunpack.c.l.s4 839922192
        %v2511 = vunpack.c.0.s8 %v2510
        %v2512 = vlaneseq
        %v2513 = vshrl.u32 %v2512, 7
        %v2514 = vsub.s32 %v2511, %v2513
        %v2515 = vrot.slane %v2507, %v2514
        %2516 = vset.pattern.permute.xlu0 6
        %2517 = vperm.xlu0 %2516, %v937
        %v2518 = vpop.permute.xlu0 %2517
        %v2521 = vunpack.c.l.s4 839922192
        %v2522 = vunpack.c.0.s8 %v2521
        %v2523 = vlaneseq
        %v2524 = vshrl.u32 %v2523, 7
        %v2525 = vsub.s32 %v2522, %v2524
        %v2526 = vrot.slane %v2518, %v2525
        %2527 = vset.pattern.permute.xlu0 6
        %2528 = vperm.xlu0 %2527, %v938
        %v2529 = vpop.permute.xlu0 %2528
        %v2532 = vunpack.c.l.s4 839922192
        %v2533 = vunpack.c.0.s8 %v2532
        %v2534 = vlaneseq
        %v2535 = vshrl.u32 %v2534, 7
        %v2536 = vsub.s32 %v2533, %v2535
        %v2537 = vrot.slane %v2529, %v2536
        %2538 = vset.pattern.permute.xlu0 6
        %2539 = vperm.xlu0 %2538, %v939
        %v2540 = vpop.permute.xlu0 %2539
        %v2543 = vunpack.c.l.s4 839922192
        %v2544 = vunpack.c.0.s8 %v2543
        %v2545 = vlaneseq
        %v2546 = vshrl.u32 %v2545, 7
        %v2547 = vsub.s32 %v2544, %v2546
        %v2548 = vrot.slane %v2540, %v2547
        %v2557 = vunpack.c.l.b16 %v2471
        %v2558 = vunpack.c.l.b16 %v2482
        %v2559 = vunpack.c.l.b16 %v2493
        %v2560 = vunpack.c.l.b16 %v2504
        %v2561 = vunpack.c.l.b16 %v2515
        %v2562 = vunpack.c.l.b16 %v2526
        %v2563 = vunpack.c.l.b16 %v2537
        %v2564 = vunpack.c.l.b16 %v2548
        %v2565 = vpack.c.b16 %v2558, %v2557
        %v2566 = vpack.c.b16 %v2560, %v2559
        %v2567 = vpack.c.b16 %v2562, %v2561
        %v2568 = vpack.c.b16 %v2564, %v2563
        %v2573 = vmul.bf16 %v966, %v2565
        %v2574 = vmul.bf16 %v975, %v2566
        %v2575 = vmul.bf16 %v976, %v2567
        %v2576 = vmul.bf16 %v983, %v2568
        %v2577 = vld [vmem:[#allocation2 + $0x180] sm:$0xf]
        %v2578 = vld [vmem:[#allocation2 + $0x184] sm:$0xf]
        %v2579 = vld [vmem:[#allocation2 + $0x188] sm:$0xf]
        %v2580 = vld [vmem:[#allocation2 + $0x18c] sm:$0xf]
        %v2581 = vld [vmem:[#allocation2 + $0x190] sm:$0xf]
        %v2582 = vld [vmem:[#allocation2 + $0x194] sm:$0xf]
        %v2583 = vld [vmem:[#allocation2 + $0x198] sm:$0xf]
        %v2584 = vld [vmem:[#allocation2 + $0x19c] sm:$0xf]
        %v2585 = vld [vmem:[#allocation2 + $0x1a0] sm:$0xf]
        %v2586 = vld [vmem:[#allocation2 + $0x1a4] sm:$0xf]
        %v2587 = vld [vmem:[#allocation2 + $0x1a8] sm:$0xf]
        %v2588 = vld [vmem:[#allocation2 + $0x1ac] sm:$0xf]
        %v2589 = vld [vmem:[#allocation2 + $0x1b0] sm:$0xf]
        %v2590 = vld [vmem:[#allocation2 + $0x1b4] sm:$0xf]
        %v2591 = vld [vmem:[#allocation2 + $0x1b8] sm:$0xf]
        %v2592 = vld [vmem:[#allocation2 + $0x1bc] sm:$0xf]
        %v2609 = vunpack.c.l.b16 %v2577
        %v2610 = vunpack.c.l.b16 %v2578
        %v2611 = vunpack.c.l.b16 %v2579
        %v2612 = vunpack.c.l.b16 %v2580
        %v2613 = vunpack.c.l.b16 %v2581
        %v2614 = vunpack.c.l.b16 %v2582
        %v2615 = vunpack.c.l.b16 %v2583
        %v2616 = vunpack.c.l.b16 %v2584
        %v2617 = vunpack.c.l.b16 %v2585
        %v2618 = vunpack.c.l.b16 %v2586
        %v2619 = vunpack.c.l.b16 %v2587
        %v2620 = vunpack.c.l.b16 %v2588
        %v2621 = vunpack.c.l.b16 %v2589
        %v2622 = vunpack.c.l.b16 %v2590
        %v2623 = vunpack.c.l.b16 %v2591
        %v2624 = vunpack.c.l.b16 %v2592
        %v2625 = vpack.c.b16 %v2610, %v2609
        %v2626 = vpack.c.b16 %v2612, %v2611
        %v2627 = vpack.c.b16 %v2614, %v2613
        %v2628 = vpack.c.b16 %v2616, %v2615
        %v2629 = vpack.c.b16 %v2618, %v2617
        %v2630 = vpack.c.b16 %v2620, %v2619
        %v2631 = vpack.c.b16 %v2622, %v2621
        %v2632 = vpack.c.b16 %v2624, %v2623
        %2641 = vmatprep.subr.bf16.mxu0 0
        %2642 = vmatpush1.bf16.msra.mxu0 %v2632
        %2643 = vmatprep.subr.bf16.mxu0 0
        %2644 = vmatpush1.bf16.msra.mxu0 %v2631
        %2645 = vmatprep.subr.bf16.mxu0 0
        %2646 = vmatpush1.bf16.msra.mxu0 %v2630
        %2647 = vmatprep.subr.bf16.mxu0 0
        %2648 = vmatpush1.bf16.msra.mxu0 %v2629
        %2649 = vmatprep.subr.bf16.mxu0 0
        %2650 = vmatpush1.bf16.msra.mxu0 %v2628
        %2651 = vmatprep.subr.bf16.mxu0 0
        %2652 = vmatpush1.bf16.msra.mxu0 %v2627
        %2653 = vmatprep.subr.bf16.mxu0 0
        %2654 = vmatpush1.bf16.msra.mxu0 %v2626
        %2655 = vmatprep.subr.bf16.mxu0 0
        %2656 = vmatpush1.bf16.msra.mxu0 %v2625
        %2657 = vmatprep.subr.bf16.mxu0 0
        %2658 = vmatpush2.bf16.msra.mxu0 0
        %2659 = vmatprep.subr.bf16.mxu0 0
        %2660 = vmatpush2.bf16.msra.mxu0 0
        %2661 = vmatprep.subr.bf16.mxu0 0
        %2662 = vmatpush2.bf16.msra.mxu0 0
        %2663 = vmatprep.subr.bf16.mxu0 0
        %2664 = vmatpush2.bf16.msra.mxu0 0
        %2665 = vmatprep.subr.bf16.mxu0 0
        %2666 = vmatpush2.bf16.msra.mxu0 0
        %2667 = vmatprep.subr.bf16.mxu0 0
        %2668 = vmatpush2.bf16.msra.mxu0 0
        %2669 = vmatprep.subr.bf16.mxu0 0
        %2670 = vmatpush2.bf16.msra.mxu0 0
        %2671 = vmatprep.subr.bf16.mxu0 0
        %2672 = vmatpush2.bf16.msra.mxu0 0
        %2673 = vmatprep.mubr.bf16.mxu0 0
        %2674 = vmatmul.mubr.bf16.gmra.mxu0 %v2573
        %v2675 = vpop.f32.mrf.mxu0
        %v2676 = vadd.f32 0.0, %v2675
        %v2677 = vpop.f32.mrf.mxu0
        %v2678 = vpop.f32.mrf.mxu0
        %v2679 = vadd.f32 0.0, %v2678
        %v2680 = vpop.f32.mrf.mxu0
        %2681 = vmatprep.mubr.bf16.mxu0 0
        %2682 = vmatmul.mubr.bf16.gmra.mxu0 %v2574
        %v2683 = vpop.f32.mrf.mxu0
        %v2684 = vadd.f32 0.0, %v2683
        %v2685 = vpop.f32.mrf.mxu0
        %v2686 = vpop.f32.mrf.mxu0
        %v2687 = vadd.f32 0.0, %v2686
        %v2688 = vpop.f32.mrf.mxu0
        %2689 = vmatprep.mubr.bf16.mxu0 0
        %2690 = vmatmul.mubr.bf16.gmra.mxu0 %v2575
        %v2691 = vpop.f32.mrf.mxu0
        %v2692 = vadd.f32 0.0, %v2691
        %v2693 = vpop.f32.mrf.mxu0
        %v2694 = vpop.f32.mrf.mxu0
        %v2695 = vadd.f32 0.0, %v2694
        %v2696 = vpop.f32.mrf.mxu0
        %2697 = vmatprep.mubr.bf16.mxu0 0
        %2698 = vmatmul.mubr.bf16.gmra.mxu0 %v2576
        %v2699 = vpop.f32.mrf.mxu0
        %v2700 = vadd.f32 0.0, %v2699
        %v2701 = vpop.f32.mrf.mxu0
        %v2702 = vpop.f32.mrf.mxu0
        %v2703 = vadd.f32 0.0, %v2702
        %v2704 = vpop.f32.mrf.mxu0
        %2705 = vdwg.mxu0
        %v2706 = vadd.f32 %v2453, %v2676
        %v2707 = vadd.f32 %v2454, %v2679
        %v2708 = vadd.f32 %v2455, %v2684
        %v2709 = vadd.f32 %v2456, %v2687
        %v2710 = vadd.f32 %v2457, %v2692
        %v2711 = vadd.f32 %v2458, %v2695
        %v2712 = vadd.f32 %v2459, %v2700
        %v2713 = vadd.f32 %v2460, %v2703
        %2714 = vset.pattern.permute.xlu0 7
        %2715 = vperm.xlu0 %2714, %v932
        %v2716 = vpop.permute.xlu0 %2715
        %v2719 = vunpack.c.l.s4 839922192
        %v2720 = vunpack.c.0.s8 %v2719
        %v2721 = vlaneseq
        %v2722 = vshrl.u32 %v2721, 7
        %v2723 = vsub.s32 %v2720, %v2722
        %v2724 = vrot.slane %v2716, %v2723
        %2725 = vset.pattern.permute.xlu0 7
        %2726 = vperm.xlu0 %2725, %v933
        %v2727 = vpop.permute.xlu0 %2726
        %v2730 = vunpack.c.l.s4 839922192
        %v2731 = vunpack.c.0.s8 %v2730
        %v2732 = vlaneseq
        %v2733 = vshrl.u32 %v2732, 7
        %v2734 = vsub.s32 %v2731, %v2733
        %v2735 = vrot.slane %v2727, %v2734
        %2736 = vset.pattern.permute.xlu0 7
        %2737 = vperm.xlu0 %2736, %v934
        %v2738 = vpop.permute.xlu0 %2737
        %v2741 = vunpack.c.l.s4 839922192
        %v2742 = vunpack.c.0.s8 %v2741
        %v2743 = vlaneseq
        %v2744 = vshrl.u32 %v2743, 7
        %v2745 = vsub.s32 %v2742, %v2744
        %v2746 = vrot.slane %v2738, %v2745
        %2747 = vset.pattern.permute.xlu0 7
        %2748 = vperm.xlu0 %2747, %v935
        %v2749 = vpop.permute.xlu0 %2748
        %v2752 = vunpack.c.l.s4 839922192
        %v2753 = vunpack.c.0.s8 %v2752
        %v2754 = vlaneseq
        %v2755 = vshrl.u32 %v2754, 7
        %v2756 = vsub.s32 %v2753, %v2755
        %v2757 = vrot.slane %v2749, %v2756
        %2758 = vset.pattern.permute.xlu0 7
        %2759 = vperm.xlu0 %2758, %v936
        %v2760 = vpop.permute.xlu0 %2759
        %v2763 = vunpack.c.l.s4 839922192
        %v2764 = vunpack.c.0.s8 %v2763
        %v2765 = vlaneseq
        %v2766 = vshrl.u32 %v2765, 7
        %v2767 = vsub.s32 %v2764, %v2766
        %v2768 = vrot.slane %v2760, %v2767
        %2769 = vset.pattern.permute.xlu0 7
        %2770 = vperm.xlu0 %2769, %v937
        %v2771 = vpop.permute.xlu0 %2770
        %v2774 = vunpack.c.l.s4 839922192
        %v2775 = vunpack.c.0.s8 %v2774
        %v2776 = vlaneseq
        %v2777 = vshrl.u32 %v2776, 7
        %v2778 = vsub.s32 %v2775, %v2777
        %v2779 = vrot.slane %v2771, %v2778
        %2780 = vset.pattern.permute.xlu0 7
        %2781 = vperm.xlu0 %2780, %v938
        %v2782 = vpop.permute.xlu0 %2781
        %v2785 = vunpack.c.l.s4 839922192
        %v2786 = vunpack.c.0.s8 %v2785
        %v2787 = vlaneseq
        %v2788 = vshrl.u32 %v2787, 7
        %v2789 = vsub.s32 %v2786, %v2788
        %v2790 = vrot.slane %v2782, %v2789
        %2791 = vset.pattern.permute.xlu0 7
        %2792 = vperm.xlu0 %2791, %v939
        %v2793 = vpop.permute.xlu0 %2792
        %v2796 = vunpack.c.l.s4 839922192
        %v2797 = vunpack.c.0.s8 %v2796
        %v2798 = vlaneseq
        %v2799 = vshrl.u32 %v2798, 7
        %v2800 = vsub.s32 %v2797, %v2799
        %v2801 = vrot.slane %v2793, %v2800
        %v2810 = vunpack.c.l.b16 %v2724
        %v2811 = vunpack.c.l.b16 %v2735
        %v2812 = vunpack.c.l.b16 %v2746
        %v2813 = vunpack.c.l.b16 %v2757
        %v2814 = vunpack.c.l.b16 %v2768
        %v2815 = vunpack.c.l.b16 %v2779
        %v2816 = vunpack.c.l.b16 %v2790
        %v2817 = vunpack.c.l.b16 %v2801
        %v2818 = vpack.c.b16 %v2811, %v2810
        %v2819 = vpack.c.b16 %v2813, %v2812
        %v2820 = vpack.c.b16 %v2815, %v2814
        %v2821 = vpack.c.b16 %v2817, %v2816
        %v2826 = vmul.bf16 %v1132, %v2818
        %v2827 = vmul.bf16 %v1134, %v2819
        %v2828 = vmul.bf16 %v1135, %v2820
        %v2829 = vmul.bf16 %v1142, %v2821
        %v2830 = vld [vmem:[#allocation2 + $0x1c0] sm:$0xf]
        %v2831 = vld [vmem:[#allocation2 + $0x1c4] sm:$0xf]
        %v2832 = vld [vmem:[#allocation2 + $0x1c8] sm:$0xf]
        %v2833 = vld [vmem:[#allocation2 + $0x1cc] sm:$0xf]
        %v2834 = vld [vmem:[#allocation2 + $0x1d0] sm:$0xf]
        %v2835 = vld [vmem:[#allocation2 + $0x1d4] sm:$0xf]
        %v2836 = vld [vmem:[#allocation2 + $0x1d8] sm:$0xf]
        %v2837 = vld [vmem:[#allocation2 + $0x1dc] sm:$0xf]
        %v2838 = vld [vmem:[#allocation2 + $0x1e0] sm:$0xf]
        %v2839 = vld [vmem:[#allocation2 + $0x1e4] sm:$0xf]
        %v2840 = vld [vmem:[#allocation2 + $0x1e8] sm:$0xf]
        %v2841 = vld [vmem:[#allocation2 + $0x1ec] sm:$0xf]
        %v2842 = vld [vmem:[#allocation2 + $0x1f0] sm:$0xf]
        %v2843 = vld [vmem:[#allocation2 + $0x1f4] sm:$0xf]
        %v2844 = vld [vmem:[#allocation2 + $0x1f8] sm:$0xf]
        %v2845 = vld [vmem:[#allocation2 + $0x1fc] sm:$0xf]
        %v2862 = vunpack.c.l.b16 %v2830
        %v2863 = vunpack.c.l.b16 %v2831
        %v2864 = vunpack.c.l.b16 %v2832
        %v2865 = vunpack.c.l.b16 %v2833
        %v2866 = vunpack.c.l.b16 %v2834
        %v2867 = vunpack.c.l.b16 %v2835
        %v2868 = vunpack.c.l.b16 %v2836
        %v2869 = vunpack.c.l.b16 %v2837
        %v2870 = vunpack.c.l.b16 %v2838
        %v2871 = vunpack.c.l.b16 %v2839
        %v2872 = vunpack.c.l.b16 %v2840
        %v2873 = vunpack.c.l.b16 %v2841
        %v2874 = vunpack.c.l.b16 %v2842
        %v2875 = vunpack.c.l.b16 %v2843
        %v2876 = vunpack.c.l.b16 %v2844
        %v2877 = vunpack.c.l.b16 %v2845
        %v2878 = vpack.c.b16 %v2863, %v2862
        %v2879 = vpack.c.b16 %v2865, %v2864
        %v2880 = vpack.c.b16 %v2867, %v2866
        %v2881 = vpack.c.b16 %v2869, %v2868
        %v2882 = vpack.c.b16 %v2871, %v2870
        %v2883 = vpack.c.b16 %v2873, %v2872
        %v2884 = vpack.c.b16 %v2875, %v2874
        %v2885 = vpack.c.b16 %v2877, %v2876
        %2894 = vmatprep.subr.bf16.mxu0 0
        %2895 = vmatpush1.bf16.msra.mxu0 %v2885
        %2896 = vmatprep.subr.bf16.mxu0 0
        %2897 = vmatpush1.bf16.msra.mxu0 %v2884
        %2898 = vmatprep.subr.bf16.mxu0 0
        %2899 = vmatpush1.bf16.msra.mxu0 %v2883
        %2900 = vmatprep.subr.bf16.mxu0 0
        %2901 = vmatpush1.bf16.msra.mxu0 %v2882
        %2902 = vmatprep.subr.bf16.mxu0 0
        %2903 = vmatpush1.bf16.msra.mxu0 %v2881
        %2904 = vmatprep.subr.bf16.mxu0 0
        %2905 = vmatpush1.bf16.msra.mxu0 %v2880
        %2906 = vmatprep.subr.bf16.mxu0 0
        %2907 = vmatpush1.bf16.msra.mxu0 %v2879
        %2908 = vmatprep.subr.bf16.mxu0 0
        %2909 = vmatpush1.bf16.msra.mxu0 %v2878
        %2910 = vmatprep.subr.bf16.mxu0 0
        %2911 = vmatpush2.bf16.msra.mxu0 0
        %2912 = vmatprep.subr.bf16.mxu0 0
        %2913 = vmatpush2.bf16.msra.mxu0 0
        %2914 = vmatprep.subr.bf16.mxu0 0
        %2915 = vmatpush2.bf16.msra.mxu0 0
        %2916 = vmatprep.subr.bf16.mxu0 0
        %2917 = vmatpush2.bf16.msra.mxu0 0
        %2918 = vmatprep.subr.bf16.mxu0 0
        %2919 = vmatpush2.bf16.msra.mxu0 0
        %2920 = vmatprep.subr.bf16.mxu0 0
        %2921 = vmatpush2.bf16.msra.mxu0 0
        %2922 = vmatprep.subr.bf16.mxu0 0
        %2923 = vmatpush2.bf16.msra.mxu0 0
        %2924 = vmatprep.subr.bf16.mxu0 0
        %2925 = vmatpush2.bf16.msra.mxu0 0
        %2926 = vmatprep.mubr.bf16.mxu0 0
        %2927 = vmatmul.mubr.bf16.gmra.mxu0 %v2826
        %v2928 = vpop.f32.mrf.mxu0
        %v2929 = vadd.f32 0.0, %v2928
        %v2930 = vpop.f32.mrf.mxu0
        %v2931 = vpop.f32.mrf.mxu0
        %v2932 = vadd.f32 0.0, %v2931
        %v2933 = vpop.f32.mrf.mxu0
        %2934 = vmatprep.mubr.bf16.mxu0 0
        %2935 = vmatmul.mubr.bf16.gmra.mxu0 %v2827
        %v2936 = vpop.f32.mrf.mxu0
        %v2937 = vadd.f32 0.0, %v2936
        %v2938 = vpop.f32.mrf.mxu0
        %v2939 = vpop.f32.mrf.mxu0
        %v2940 = vadd.f32 0.0, %v2939
        %v2941 = vpop.f32.mrf.mxu0
        %2942 = vmatprep.mubr.bf16.mxu0 0
        %2943 = vmatmul.mubr.bf16.gmra.mxu0 %v2828
        %v2944 = vpop.f32.mrf.mxu0
        %v2945 = vadd.f32 0.0, %v2944
        %v2946 = vpop.f32.mrf.mxu0
        %v2947 = vpop.f32.mrf.mxu0
        %v2948 = vadd.f32 0.0, %v2947
        %v2949 = vpop.f32.mrf.mxu0
        %2950 = vmatprep.mubr.bf16.mxu0 0
        %2951 = vmatmul.mubr.bf16.gmra.mxu0 %v2829
        %v2952 = vpop.f32.mrf.mxu0
        %v2953 = vadd.f32 0.0, %v2952
        %v2954 = vpop.f32.mrf.mxu0
        %v2955 = vpop.f32.mrf.mxu0
        %v2956 = vadd.f32 0.0, %v2955
        %v2957 = vpop.f32.mrf.mxu0
        %2958 = vdwg.mxu0
        %v2959 = vadd.f32 %v2706, %v2929
        %v2960 = vadd.f32 %v2707, %v2932
        %v2961 = vadd.f32 %v2708, %v2937
        %v2962 = vadd.f32 %v2709, %v2940
        %v2963 = vadd.f32 %v2710, %v2945
        %v2964 = vadd.f32 %v2711, %v2948
        %v2965 = vadd.f32 %v2712, %v2953
        %v2966 = vadd.f32 %v2713, %v2956
        %2967 = vset.pattern.permute.xlu0 8
        %2968 = vperm.xlu0 %2967, %v932
        %v2969 = vpop.permute.xlu0 %2968
        %v2972 = vunpack.c.l.s4 839922192
        %v2973 = vunpack.c.0.s8 %v2972
        %v2974 = vlaneseq
        %v2975 = vshrl.u32 %v2974, 7
        %v2976 = vsub.s32 %v2973, %v2975
        %v2977 = vrot.slane %v2969, %v2976
        %2978 = vset.pattern.permute.xlu0 8
        %2979 = vperm.xlu0 %2978, %v933
        %v2980 = vpop.permute.xlu0 %2979
        %v2983 = vunpack.c.l.s4 839922192
        %v2984 = vunpack.c.0.s8 %v2983
        %v2985 = vlaneseq
        %v2986 = vshrl.u32 %v2985, 7
        %v2987 = vsub.s32 %v2984, %v2986
        %v2988 = vrot.slane %v2980, %v2987
        %2989 = vset.pattern.permute.xlu0 8
        %2990 = vperm.xlu0 %2989, %v934
        %v2991 = vpop.permute.xlu0 %2990
        %v2994 = vunpack.c.l.s4 839922192
        %v2995 = vunpack.c.0.s8 %v2994
        %v2996 = vlaneseq
        %v2997 = vshrl.u32 %v2996, 7
        %v2998 = vsub.s32 %v2995, %v2997
        %v2999 = vrot.slane %v2991, %v2998
        %3000 = vset.pattern.permute.xlu0 8
        %3001 = vperm.xlu0 %3000, %v935
        %v3002 = vpop.permute.xlu0 %3001
        %v3005 = vunpack.c.l.s4 839922192
        %v3006 = vunpack.c.0.s8 %v3005
        %v3007 = vlaneseq
        %v3008 = vshrl.u32 %v3007, 7
        %v3009 = vsub.s32 %v3006, %v3008
        %v3010 = vrot.slane %v3002, %v3009
        %3011 = vset.pattern.permute.xlu0 8
        %3012 = vperm.xlu0 %3011, %v936
        %v3013 = vpop.permute.xlu0 %3012
        %v3016 = vunpack.c.l.s4 839922192
        %v3017 = vunpack.c.0.s8 %v3016
        %v3018 = vlaneseq
        %v3019 = vshrl.u32 %v3018, 7
        %v3020 = vsub.s32 %v3017, %v3019
        %v3021 = vrot.slane %v3013, %v3020
        %3022 = vset.pattern.permute.xlu0 8
        %3023 = vperm.xlu0 %3022, %v937
        %v3024 = vpop.permute.xlu0 %3023
        %v3027 = vunpack.c.l.s4 839922192
        %v3028 = vunpack.c.0.s8 %v3027
        %v3029 = vlaneseq
        %v3030 = vshrl.u32 %v3029, 7
        %v3031 = vsub.s32 %v3028, %v3030
        %v3032 = vrot.slane %v3024, %v3031
        %3033 = vset.pattern.permute.xlu0 8
        %3034 = vperm.xlu0 %3033, %v938
        %v3035 = vpop.permute.xlu0 %3034
        %v3038 = vunpack.c.l.s4 839922192
        %v3039 = vunpack.c.0.s8 %v3038
        %v3040 = vlaneseq
        %v3041 = vshrl.u32 %v3040, 7
        %v3042 = vsub.s32 %v3039, %v3041
        %v3043 = vrot.slane %v3035, %v3042
        %3044 = vset.pattern.permute.xlu0 8
        %3045 = vperm.xlu0 %3044, %v939
        %v3046 = vpop.permute.xlu0 %3045
        %v3049 = vunpack.c.l.s4 839922192
        %v3050 = vunpack.c.0.s8 %v3049
        %v3051 = vlaneseq
        %v3052 = vshrl.u32 %v3051, 7
        %v3053 = vsub.s32 %v3050, %v3052
        %v3054 = vrot.slane %v3046, %v3053
        %v3063 = vunpack.c.l.b16 %v2977
        %v3064 = vunpack.c.l.b16 %v2988
        %v3065 = vunpack.c.l.b16 %v2999
        %v3066 = vunpack.c.l.b16 %v3010
        %v3067 = vunpack.c.l.b16 %v3021
        %v3068 = vunpack.c.l.b16 %v3032
        %v3069 = vunpack.c.l.b16 %v3043
        %v3070 = vunpack.c.l.b16 %v3054
        %v3071 = vpack.c.b16 %v3064, %v3063
        %v3072 = vpack.c.b16 %v3066, %v3065
        %v3073 = vpack.c.b16 %v3068, %v3067
        %v3074 = vpack.c.b16 %v3070, %v3069
        %v3079 = vmul.bf16 %v1513, %v3071
        %v3080 = vmul.bf16 %v1517, %v3072
        %v3081 = vmul.bf16 %v1518, %v3073
        %v3082 = vmul.bf16 %v1524, %v3074
        %v3083 = vld [vmem:[#allocation2 + $0x200] sm:$0xf]
        %v3084 = vld [vmem:[#allocation2 + $0x204] sm:$0xf]
        %v3085 = vld [vmem:[#allocation2 + $0x208] sm:$0xf]
        %v3086 = vld [vmem:[#allocation2 + $0x20c] sm:$0xf]
        %v3087 = vld [vmem:[#allocation2 + $0x210] sm:$0xf]
        %v3088 = vld [vmem:[#allocation2 + $0x214] sm:$0xf]
        %v3089 = vld [vmem:[#allocation2 + $0x218] sm:$0xf]
        %v3090 = vld [vmem:[#allocation2 + $0x21c] sm:$0xf]
        %v3091 = vld [vmem:[#allocation2 + $0x220] sm:$0xf]
        %v3092 = vld [vmem:[#allocation2 + $0x224] sm:$0xf]
        %v3093 = vld [vmem:[#allocation2 + $0x228] sm:$0xf]
        %v3094 = vld [vmem:[#allocation2 + $0x22c] sm:$0xf]
        %v3095 = vld [vmem:[#allocation2 + $0x230] sm:$0xf]
        %v3096 = vld [vmem:[#allocation2 + $0x234] sm:$0xf]
        %v3097 = vld [vmem:[#allocation2 + $0x238] sm:$0xf]
        %v3098 = vld [vmem:[#allocation2 + $0x23c] sm:$0xf]
        %v3115 = vunpack.c.l.b16 %v3083
        %v3116 = vunpack.c.l.b16 %v3084
        %v3117 = vunpack.c.l.b16 %v3085
        %v3118 = vunpack.c.l.b16 %v3086
        %v3119 = vunpack.c.l.b16 %v3087
        %v3120 = vunpack.c.l.b16 %v3088
        %v3121 = vunpack.c.l.b16 %v3089
        %v3122 = vunpack.c.l.b16 %v3090
        %v3123 = vunpack.c.l.b16 %v3091
        %v3124 = vunpack.c.l.b16 %v3092
        %v3125 = vunpack.c.l.b16 %v3093
        %v3126 = vunpack.c.l.b16 %v3094
        %v3127 = vunpack.c.l.b16 %v3095
        %v3128 = vunpack.c.l.b16 %v3096
        %v3129 = vunpack.c.l.b16 %v3097
        %v3130 = vunpack.c.l.b16 %v3098
        %v3131 = vpack.c.b16 %v3116, %v3115
        %v3132 = vpack.c.b16 %v3118, %v3117
        %v3133 = vpack.c.b16 %v3120, %v3119
        %v3134 = vpack.c.b16 %v3122, %v3121
        %v3135 = vpack.c.b16 %v3124, %v3123
        %v3136 = vpack.c.b16 %v3126, %v3125
        %v3137 = vpack.c.b16 %v3128, %v3127
        %v3138 = vpack.c.b16 %v3130, %v3129
        %3147 = vmatprep.subr.bf16.mxu0 0
        %3148 = vmatpush1.bf16.msra.mxu0 %v3138
        %3149 = vmatprep.subr.bf16.mxu0 0
        %3150 = vmatpush1.bf16.msra.mxu0 %v3137
        %3151 = vmatprep.subr.bf16.mxu0 0
        %3152 = vmatpush1.bf16.msra.mxu0 %v3136
        %3153 = vmatprep.subr.bf16.mxu0 0
        %3154 = vmatpush1.bf16.msra.mxu0 %v3135
        %3155 = vmatprep.subr.bf16.mxu0 0
        %3156 = vmatpush1.bf16.msra.mxu0 %v3134
        %3157 = vmatprep.subr.bf16.mxu0 0
        %3158 = vmatpush1.bf16.msra.mxu0 %v3133
        %3159 = vmatprep.subr.bf16.mxu0 0
        %3160 = vmatpush1.bf16.msra.mxu0 %v3132
        %3161 = vmatprep.subr.bf16.mxu0 0
        %3162 = vmatpush1.bf16.msra.mxu0 %v3131
        %3163 = vmatprep.subr.bf16.mxu0 0
        %3164 = vmatpush2.bf16.msra.mxu0 0
        %3165 = vmatprep.subr.bf16.mxu0 0
        %3166 = vmatpush2.bf16.msra.mxu0 0
        %3167 = vmatprep.subr.bf16.mxu0 0
        %3168 = vmatpush2.bf16.msra.mxu0 0
        %3169 = vmatprep.subr.bf16.mxu0 0
        %3170 = vmatpush2.bf16.msra.mxu0 0
        %3171 = vmatprep.subr.bf16.mxu0 0
        %3172 = vmatpush2.bf16.msra.mxu0 0
        %3173 = vmatprep.subr.bf16.mxu0 0
        %3174 = vmatpush2.bf16.msra.mxu0 0
        %3175 = vmatprep.subr.bf16.mxu0 0
        %3176 = vmatpush2.bf16.msra.mxu0 0
        %3177 = vmatprep.subr.bf16.mxu0 0
        %3178 = vmatpush2.bf16.msra.mxu0 0
        %3179 = vmatprep.mubr.bf16.mxu0 0
        %3180 = vmatmul.mubr.bf16.gmra.mxu0 %v3079
        %v3181 = vpop.f32.mrf.mxu0
        %v3182 = vadd.f32 0.0, %v3181
        %v3183 = vpop.f32.mrf.mxu0
        %v3184 = vpop.f32.mrf.mxu0
        %v3185 = vadd.f32 0.0, %v3184
        %v3186 = vpop.f32.mrf.mxu0
        %3187 = vmatprep.mubr.bf16.mxu0 0
        %3188 = vmatmul.mubr.bf16.gmra.mxu0 %v3080
        %v3189 = vpop.f32.mrf.mxu0
        %v3190 = vadd.f32 0.0, %v3189
        %v3191 = vpop.f32.mrf.mxu0
        %v3192 = vpop.f32.mrf.mxu0
        %v3193 = vadd.f32 0.0, %v3192
        %v3194 = vpop.f32.mrf.mxu0
        %3195 = vmatprep.mubr.bf16.mxu0 0
        %3196 = vmatmul.mubr.bf16.gmra.mxu0 %v3081
        %v3197 = vpop.f32.mrf.mxu0
        %v3198 = vadd.f32 0.0, %v3197
        %v3199 = vpop.f32.mrf.mxu0
        %v3200 = vpop.f32.mrf.mxu0
        %v3201 = vadd.f32 0.0, %v3200
        %v3202 = vpop.f32.mrf.mxu0
        %3203 = vmatprep.mubr.bf16.mxu0 0
        %3204 = vmatmul.mubr.bf16.gmra.mxu0 %v3082
        %v3205 = vpop.f32.mrf.mxu0
        %v3206 = vadd.f32 0.0, %v3205
        %v3207 = vpop.f32.mrf.mxu0
        %v3208 = vpop.f32.mrf.mxu0
        %v3209 = vadd.f32 0.0, %v3208
        %v3210 = vpop.f32.mrf.mxu0
        %3211 = vdwg.mxu0
        %v3212 = vadd.f32 %v2959, %v3182
        %v3213 = vadd.f32 %v2960, %v3185
        %v3214 = vadd.f32 %v2961, %v3190
        %v3215 = vadd.f32 %v2962, %v3193
        %v3216 = vadd.f32 %v2963, %v3198
        %v3217 = vadd.f32 %v2964, %v3201
        %v3218 = vadd.f32 %v2965, %v3206
        %v3219 = vadd.f32 %v2966, %v3209
        %v3220 = vld [vmem:[%s6] sm:$0x1]
        %v3221 = vld [vmem:[%s7] sm:$0x1]
        %v3222 = vadd.f32 %v3212, %v3213
        %v3223 = vadd.f32 %v3222, %v3214
        %v3224 = vadd.f32 %v3223, %v3215
        %v3225 = vadd.f32 %v3224, %v3216
        %v3226 = vadd.f32 %v3225, %v3217
        %v3227 = vadd.f32 %v3226, %v3218
        %v3228 = vadd.f32 %v3227, %v3219
        %v3229 = vrot.slane %v3228, 4
        %v3230 = vadd.f32 %v3228, %v3229
        %v3231 = vrot.slane %v3230, 2
        %v3232 = vadd.f32 %v3230, %v3231
        %v3233 = vrot.slane %v3232, 1
        %v3234 = vadd.f32 %v3232, %v3233
        %v3235 = vmul.f32 %v3212, %v3212
        %v3236 = vmul.f32 %v3213, %v3213
        %v3237 = vmul.f32 %v3214, %v3214
        %v3238 = vmul.f32 %v3215, %v3215
        %v3239 = vmul.f32 %v3216, %v3216
        %v3240 = vmul.f32 %v3217, %v3217
        %v3241 = vmul.f32 %v3218, %v3218
        %v3242 = vmul.f32 %v3219, %v3219
        %v3243 = vadd.f32 %v3235, %v3236
        %v3244 = vadd.f32 %v3243, %v3237
        %v3245 = vadd.f32 %v3244, %v3238
        %v3246 = vadd.f32 %v3245, %v3239
        %v3247 = vadd.f32 %v3246, %v3240
        %v3248 = vadd.f32 %v3247, %v3241
        %v3249 = vadd.f32 %v3248, %v3242
        %v3250 = vrot.slane %v3249, 4
        %v3251 = vadd.f32 %v3249, %v3250
        %v3252 = vrot.slane %v3251, 2
        %v3253 = vadd.f32 %v3251, %v3252
        %v3254 = vrot.slane %v3253, 1
        %v3255 = vadd.f32 %v3253, %v3254
        %v3256 = vsel %vm726, %v3234, %v3255
        %3257 = vmatprep.subr.mxu0 0.0
        %3258 = vmatpush1.msra.mxu0 %v687
        %3259 = vmatprep.subr.mxu0 0.0
        %3260 = vmatpush1.msra.mxu0 %v686
        %3261 = vmatprep.subr.mxu0 0.0
        %3262 = vmatpush1.msra.mxu0 %v685
        %3263 = vmatprep.subr.mxu0 0.0
        %3264 = vmatpush1.msra.mxu0 %v684
        %3265 = vmatprep.subr.mxu0 0.0
        %3266 = vmatpush1.msra.mxu0 %v683
        %3267 = vmatprep.subr.mxu0 0.0
        %3268 = vmatpush1.msra.mxu0 %v682
        %3269 = vmatprep.subr.mxu0 0.0
        %3270 = vmatpush1.msra.mxu0 %v681
        %3271 = vmatprep.subr.mxu0 0.0
        %3272 = vmatpush1.msra.mxu0 %v680
        %3273 = vmatprep.subr.mxu0 0.0
        %3274 = vmatpush1.msra.mxu0 %v679
        %3275 = vmatprep.subr.mxu0 0.0
        %3276 = vmatpush1.msra.mxu0 %v678
        %3277 = vmatprep.subr.mxu0 0.0
        %3278 = vmatpush1.msra.mxu0 %v677
        %3279 = vmatprep.subr.mxu0 0.0
        %3280 = vmatpush1.msra.mxu0 %v676
        %3281 = vmatprep.subr.mxu0 0.0
        %3282 = vmatpush1.msra.mxu0 %v675
        %3283 = vmatprep.subr.mxu0 0.0
        %3284 = vmatpush1.msra.mxu0 %v674
        %3285 = vmatprep.subr.mxu0 0.0
        %3286 = vmatpush1.msra.mxu0 %v673
        %3287 = vmatprep.subr.mxu0 0.0
        %3288 = vmatpush1.msra.mxu0 %v672
        %3289 = vmatprep.subr.mxu0 0.0
        %3290 = vmatpush2.msra.mxu0 0.0
        %3291 = vmatprep.subr.mxu0 0.0
        %3292 = vmatpush2.msra.mxu0 0.0
        %3293 = vmatprep.subr.mxu0 0.0
        %3294 = vmatpush2.msra.mxu0 0.0
        %3295 = vmatprep.subr.mxu0 0.0
        %3296 = vmatpush2.msra.mxu0 0.0
        %3297 = vmatprep.subr.mxu0 0.0
        %3298 = vmatpush2.msra.mxu0 0.0
        %3299 = vmatprep.subr.mxu0 0.0
        %3300 = vmatpush2.msra.mxu0 0.0
        %3301 = vmatprep.subr.mxu0 0.0
        %3302 = vmatpush2.msra.mxu0 0.0
        %3303 = vmatprep.subr.mxu0 0.0
        %3304 = vmatpush2.msra.mxu0 0.0
        %3305 = vmatprep.subr.mxu0 0.0
        %3306 = vmatpush2.msra.mxu0 0.0
        %3307 = vmatprep.subr.mxu0 0.0
        %3308 = vmatpush2.msra.mxu0 0.0
        %3309 = vmatprep.subr.mxu0 0.0
        %3310 = vmatpush2.msra.mxu0 0.0
        %3311 = vmatprep.subr.mxu0 0.0
        %3312 = vmatpush2.msra.mxu0 0.0
        %3313 = vmatprep.subr.mxu0 0.0
        %3314 = vmatpush2.msra.mxu0 0.0
        %3315 = vmatprep.subr.mxu0 0.0
        %3316 = vmatpush2.msra.mxu0 0.0
        %3317 = vmatprep.subr.mxu0 0.0
        %3318 = vmatpush2.msra.mxu0 0.0
        %3319 = vmatprep.subr.mxu0 0.0
        %3320 = vmatpush2.msra.mxu0 0.0
        %3321 = vmatprep.mubr.f32.mxu0 0.0
        %3322 = vmatmul.mubr.f32.gmra.mxu0 %v3256
        %v3323 = vpop.f32.mrf.mxu0
        %v3324 = vadd.f32 0.0, %v3323
        %v3325 = vpop.f32.mrf.mxu0
        %3326 = vdwg.mxu0
        %v3327 = vmul.f32 %v3324, 0.015625
        %v3328 = vmul.f32 %v3327, %v3327
        %v3330 = vrot.slane %v3328, 7
        %v3332 = vsub.f32 %v3327, %v3330
        %v3333 = vmax.f32 %v3332, 0.0
        %v3334 = vadd.f32 %v3333, 1e-05
        %v3335 = vrsqrt.pop %v3334
        %v3336 = vsel %vm726, %v3327, %v3335
        %v3338 = vsel %vm808, %v3336, 0
        %3340 = vmatprep.subr.mxu0 0.0
        %3341 = vmatpush1.msra.mxu0 0.0
        %3342 = vmatprep.subr.mxu0 0.0
        %3343 = vmatpush1.msra.mxu0 0.0
        %3344 = vmatprep.subr.mxu0 0.0
        %3345 = vmatpush1.msra.mxu0 0.0
        %3346 = vmatprep.subr.mxu0 0.0
        %3347 = vmatpush1.msra.mxu0 0.0
        %3348 = vmatprep.subr.mxu0 0.0
        %3349 = vmatpush1.msra.mxu0 0.0
        %3350 = vmatprep.subr.mxu0 0.0
        %3351 = vmatpush1.msra.mxu0 0.0
        %3352 = vmatprep.subr.mxu0 0.0
        %3353 = vmatpush1.msra.mxu0 0.0
        %3354 = vmatprep.subr.mxu0 0.0
        %3355 = vmatpush1.msra.mxu0 0.0
        %3356 = vmatprep.subr.mxu0 0.0
        %3357 = vmatpush1.msra.mxu0 0.0
        %3358 = vmatprep.subr.mxu0 0.0
        %3359 = vmatpush1.msra.mxu0 0.0
        %3360 = vmatprep.subr.mxu0 0.0
        %3361 = vmatpush1.msra.mxu0 0.0
        %3362 = vmatprep.subr.mxu0 0.0
        %3363 = vmatpush1.msra.mxu0 0.0
        %3364 = vmatprep.subr.mxu0 0.0
        %3365 = vmatpush1.msra.mxu0 %v691
        %3366 = vmatprep.subr.mxu0 0.0
        %3367 = vmatpush1.msra.mxu0 %v690
        %3368 = vmatprep.subr.mxu0 0.0
        %3369 = vmatpush1.msra.mxu0 %v689
        %3370 = vmatprep.subr.mxu0 0.0
        %3371 = vmatpush1.msra.mxu0 %v688
        %3372 = vmatprep.subr.mxu0 0.0
        %3373 = vmatpush2.msra.mxu0 0.0
        %3374 = vmatprep.subr.mxu0 0.0
        %3375 = vmatpush2.msra.mxu0 0.0
        %3376 = vmatprep.subr.mxu0 0.0
        %3377 = vmatpush2.msra.mxu0 0.0
        %3378 = vmatprep.subr.mxu0 0.0
        %3379 = vmatpush2.msra.mxu0 0.0
        %3380 = vmatprep.subr.mxu0 0.0
        %3381 = vmatpush2.msra.mxu0 0.0
        %3382 = vmatprep.subr.mxu0 0.0
        %3383 = vmatpush2.msra.mxu0 0.0
        %3384 = vmatprep.subr.mxu0 0.0
        %3385 = vmatpush2.msra.mxu0 0.0
        %3386 = vmatprep.subr.mxu0 0.0
        %3387 = vmatpush2.msra.mxu0 0.0
        %3388 = vmatprep.subr.mxu0 0.0
        %3389 = vmatpush2.msra.mxu0 0.0
        %3390 = vmatprep.subr.mxu0 0.0
        %3391 = vmatpush2.msra.mxu0 0.0
        %3392 = vmatprep.subr.mxu0 0.0
        %3393 = vmatpush2.msra.mxu0 0.0
        %3394 = vmatprep.subr.mxu0 0.0
        %3395 = vmatpush2.msra.mxu0 0.0
        %3396 = vmatprep.subr.mxu0 0.0
        %3397 = vmatpush2.msra.mxu0 0.0
        %3398 = vmatprep.subr.mxu0 0.0
        %3399 = vmatpush2.msra.mxu0 0.0
        %3400 = vmatprep.subr.mxu0 0.0
        %3401 = vmatpush2.msra.mxu0 0.0
        %3402 = vmatprep.subr.mxu0 0.0
        %3403 = vmatpush2.msra.mxu0 0.0
        %3404 = vmatprep.mubr.f32.mxu0 0.0
        %3405 = vmatmul.mubr.f32.gmra.mxu0 %v3338
        %v3406 = vpop.f32.mrf.mxu0
        %v3407 = vadd.f32 0.0, %v3406
        %v3408 = vpop.f32.mrf.mxu0
        %3409 = vdwg.mxu0
        %v3411 = vlaneseq
        %v3412 = vshrl.u32 %v3411, 7
        %v3413 = vsub.s32 0, %v3412
        %v3414 = vrot.slane %v3220, %v3413
        %v3416 = vmul.f32 %v3407, %v3414
        %v3418 = vrot.slane %v3416, 1
        %v3420 = vmul.f32 %v3407, %v3418
        %v3421 = vsub.f32 %v3221, %v3420
        %v3422 = vlaneseq
        %v3423 = vshrl.u32 %v3422, 7
        %v3424 = vsub.s32 1, %v3423
        %v3425 = vrot.slane %v3416, %v3424
        %v3426 = vmul.f32 %v3212, %v3425
        %v3427 = vmul.f32 %v3213, %v3425
        %v3428 = vmul.f32 %v3214, %v3425
        %v3429 = vmul.f32 %v3215, %v3425
        %v3430 = vmul.f32 %v3216, %v3425
        %v3431 = vmul.f32 %v3217, %v3425
        %v3432 = vmul.f32 %v3218, %v3425
        %v3433 = vmul.f32 %v3219, %v3425
        %v3435 = vlaneseq
        %v3436 = vshrl.u32 %v3435, 7
        %v3437 = vsub.s32 0, %v3436
        %v3438 = vrot.slane %v3421, %v3437
        %v3440 = vadd.f32 %v3426, %v3438
        %v3441 = vadd.f32 %v3427, %v3438
        %v3442 = vadd.f32 %v3428, %v3438
        %v3443 = vadd.f32 %v3429, %v3438
        %v3444 = vadd.f32 %v3430, %v3438
        %v3445 = vadd.f32 %v3431, %v3438
        %v3446 = vadd.f32 %v3432, %v3438
        %v3447 = vadd.f32 %v3433, %v3438
        %v3448 = vmax.f32 %v3440, 0.0
        %v3449 = vmax.f32 %v3441, 0.0
        %v3450 = vmax.f32 %v3442, 0.0
        %v3451 = vmax.f32 %v3443, 0.0
        %v3452 = vmax.f32 %v3444, 0.0
        %v3453 = vmax.f32 %v3445, 0.0
        %v3454 = vmax.f32 %v3446, 0.0
        %v3455 = vmax.f32 %v3447, 0.0
        %v3456 = vpack.c.bf16 %v3449, %v3448
        %v3457 = vpack.c.bf16 %v3451, %v3450
        %v3458 = vpack.c.bf16 %v3453, %v3452
        %v3459 = vpack.c.bf16 %v3455, %v3454
        %v3460 = vld [vmem:[%s3] sm:$0xf]
        %v3461 = vld [vmem:[%s3 + $0x4] sm:$0xf]
        %v3462 = vld [vmem:[%s3 + $0x8] sm:$0xf]
        %v3463 = vld [vmem:[%s3 + $0xc] sm:$0xf]
        %v3464 = vld [vmem:[%s3 + $0x10] sm:$0xf]
        %v3465 = vld [vmem:[%s3 + $0x14] sm:$0xf]
        %v3466 = vld [vmem:[%s3 + $0x18] sm:$0xf]
        %v3467 = vld [vmem:[%s3 + $0x1c] sm:$0xf]
        %v3468 = vld [vmem:[%s3 + $0x20] sm:$0xf]
        %v3469 = vld [vmem:[%s3 + $0x24] sm:$0xf]
        %v3470 = vld [vmem:[%s3 + $0x28] sm:$0xf]
        %v3471 = vld [vmem:[%s3 + $0x2c] sm:$0xf]
        %v3472 = vld [vmem:[%s3 + $0x30] sm:$0xf]
        %v3473 = vld [vmem:[%s3 + $0x34] sm:$0xf]
        %v3474 = vld [vmem:[%s3 + $0x38] sm:$0xf]
        %v3475 = vld [vmem:[%s3 + $0x3c] sm:$0xf]
        %v3492 = vunpack.c.l.b16 %v3460
        %v3493 = vunpack.c.l.b16 %v3461
        %v3494 = vunpack.c.l.b16 %v3462
        %v3495 = vunpack.c.l.b16 %v3463
        %v3496 = vunpack.c.l.b16 %v3464
        %v3497 = vunpack.c.l.b16 %v3465
        %v3498 = vunpack.c.l.b16 %v3466
        %v3499 = vunpack.c.l.b16 %v3467
        %v3500 = vunpack.c.l.b16 %v3468
        %v3501 = vunpack.c.l.b16 %v3469
        %v3502 = vunpack.c.l.b16 %v3470
        %v3503 = vunpack.c.l.b16 %v3471
        %v3504 = vunpack.c.l.b16 %v3472
        %v3505 = vunpack.c.l.b16 %v3473
        %v3506 = vunpack.c.l.b16 %v3474
        %v3507 = vunpack.c.l.b16 %v3475
        %v3508 = vpack.c.b16 %v3493, %v3492
        %v3509 = vpack.c.b16 %v3495, %v3494
        %v3510 = vpack.c.b16 %v3497, %v3496
        %v3511 = vpack.c.b16 %v3499, %v3498
        %v3512 = vpack.c.b16 %v3501, %v3500
        %v3513 = vpack.c.b16 %v3503, %v3502
        %v3514 = vpack.c.b16 %v3505, %v3504
        %v3515 = vpack.c.b16 %v3507, %v3506
        %3524 = vmatprep.subr.bf16.mxu0 0
        %3525 = vmatpush1.bf16.msra.mxu0 %v3515
        %3526 = vmatprep.subr.bf16.mxu0 0
        %3527 = vmatpush1.bf16.msra.mxu0 %v3514
        %3528 = vmatprep.subr.bf16.mxu0 0
        %3529 = vmatpush1.bf16.msra.mxu0 %v3513
        %3530 = vmatprep.subr.bf16.mxu0 0
        %3531 = vmatpush1.bf16.msra.mxu0 %v3512
        %3532 = vmatprep.subr.bf16.mxu0 0
        %3533 = vmatpush1.bf16.msra.mxu0 %v3511
        %3534 = vmatprep.subr.bf16.mxu0 0
        %3535 = vmatpush1.bf16.msra.mxu0 %v3510
        %3536 = vmatprep.subr.bf16.mxu0 0
        %3537 = vmatpush1.bf16.msra.mxu0 %v3509
        %3538 = vmatprep.subr.bf16.mxu0 0
        %3539 = vmatpush1.bf16.msra.mxu0 %v3508
        %3540 = vmatprep.subr.bf16.mxu0 0
        %3541 = vmatpush2.bf16.msra.mxu0 0
        %3542 = vmatprep.subr.bf16.mxu0 0
        %3543 = vmatpush2.bf16.msra.mxu0 0
        %3544 = vmatprep.subr.bf16.mxu0 0
        %3545 = vmatpush2.bf16.msra.mxu0 0
        %3546 = vmatprep.subr.bf16.mxu0 0
        %3547 = vmatpush2.bf16.msra.mxu0 0
        %3548 = vmatprep.subr.bf16.mxu0 0
        %3549 = vmatpush2.bf16.msra.mxu0 0
        %3550 = vmatprep.subr.bf16.mxu0 0
        %3551 = vmatpush2.bf16.msra.mxu0 0
        %3552 = vmatprep.subr.bf16.mxu0 0
        %3553 = vmatpush2.bf16.msra.mxu0 0
        %3554 = vmatprep.subr.bf16.mxu0 0
        %3555 = vmatpush2.bf16.msra.mxu0 0
        %3556 = vmatprep.mubr.bf16.mxu0 0
        %3557 = vmatmul.mubr.bf16.gmra.mxu0 %v3456
        %v3558 = vpop.f32.mrf.mxu0
        %v3559 = vadd.f32 0.0, %v3558
        %v3560 = vpop.f32.mrf.mxu0
        %v3561 = vpop.f32.mrf.mxu0
        %v3562 = vadd.f32 0.0, %v3561
        %v3563 = vpop.f32.mrf.mxu0
        %3564 = vmatprep.mubr.bf16.mxu0 0
        %3565 = vmatmul.mubr.bf16.gmra.mxu0 %v3457
        %v3566 = vpop.f32.mrf.mxu0
        %v3567 = vadd.f32 0.0, %v3566
        %v3568 = vpop.f32.mrf.mxu0
        %v3569 = vpop.f32.mrf.mxu0
        %v3570 = vadd.f32 0.0, %v3569
        %v3571 = vpop.f32.mrf.mxu0
        %3572 = vmatprep.mubr.bf16.mxu0 0
        %3573 = vmatmul.mubr.bf16.gmra.mxu0 %v3458
        %v3574 = vpop.f32.mrf.mxu0
        %v3575 = vadd.f32 0.0, %v3574
        %v3576 = vpop.f32.mrf.mxu0
        %v3577 = vpop.f32.mrf.mxu0
        %v3578 = vadd.f32 0.0, %v3577
        %v3579 = vpop.f32.mrf.mxu0
        %3580 = vmatprep.mubr.bf16.mxu0 0
        %3581 = vmatmul.mubr.bf16.gmra.mxu0 %v3459
        %v3582 = vpop.f32.mrf.mxu0
        %v3583 = vadd.f32 0.0, %v3582
        %v3584 = vpop.f32.mrf.mxu0
        %v3585 = vpop.f32.mrf.mxu0
        %v3586 = vadd.f32 0.0, %v3585
        %v3587 = vpop.f32.mrf.mxu0
        %3588 = vdwg.mxu0
        %v3589 = vld [vmem:[%s8] sm:$0x1]
        %v3590 = vld [vmem:[%s9] sm:$0x1]
        %v3591 = vld [vmem:[%s12] sm:$0xff]
        %v3592 = vld [vmem:[%s12 + $0x8] sm:$0xff]
        %v3593 = vld [vmem:[%s12 + $0x10] sm:$0xff]
        %v3594 = vld [vmem:[%s12 + $0x18] sm:$0xff]
        %v3595 = vld [vmem:[%s12 + $0x20] sm:$0xff]
        %v3596 = vld [vmem:[%s12 + $0x28] sm:$0xff]
        %v3597 = vld [vmem:[%s12 + $0x30] sm:$0xff]
        %v3598 = vld [vmem:[%s12 + $0x38] sm:$0xff]
        %v3599 = vld [vmem:[%s12 + $0x40] sm:$0xff]
        %v3600 = vld [vmem:[%s12 + $0x48] sm:$0xff]
        %v3601 = vld [vmem:[%s12 + $0x50] sm:$0xff]
        %v3602 = vld [vmem:[%s12 + $0x58] sm:$0xff]
        %v3603 = vld [vmem:[%s12 + $0x60] sm:$0xff]
        %v3604 = vld [vmem:[%s12 + $0x68] sm:$0xff]
        %v3605 = vld [vmem:[%s12 + $0x70] sm:$0xff]
        %v3606 = vld [vmem:[%s12 + $0x78] sm:$0xff]
        %v3607 = vld [vmem:[%s13] sm:$0xff]
        %v3608 = vld [vmem:[%s13 + $0x8] sm:$0xff]
        %v3609 = vld [vmem:[%s13 + $0x10] sm:$0xff]
        %v3610 = vld [vmem:[%s13 + $0x18] sm:$0xff]
        %v3611 = vadd.f32 %v3559, %v3562
        %v3612 = vadd.f32 %v3611, %v3567
        %v3613 = vadd.f32 %v3612, %v3570
        %v3614 = vadd.f32 %v3613, %v3575
        %v3615 = vadd.f32 %v3614, %v3578
        %v3616 = vadd.f32 %v3615, %v3583
        %v3617 = vadd.f32 %v3616, %v3586
        %v3618 = vrot.slane %v3617, 4
        %v3619 = vadd.f32 %v3617, %v3618
        %v3620 = vrot.slane %v3619, 2
        %v3621 = vadd.f32 %v3619, %v3620
        %v3622 = vrot.slane %v3621, 1
        %v3623 = vadd.f32 %v3621, %v3622
        %v3624 = vmul.f32 %v3559, %v3559
        %v3625 = vmul.f32 %v3562, %v3562
        %v3626 = vmul.f32 %v3567, %v3567
        %v3627 = vmul.f32 %v3570, %v3570
        %v3628 = vmul.f32 %v3575, %v3575
        %v3629 = vmul.f32 %v3578, %v3578
        %v3630 = vmul.f32 %v3583, %v3583
        %v3631 = vmul.f32 %v3586, %v3586
        %v3632 = vadd.f32 %v3624, %v3625
        %v3633 = vadd.f32 %v3632, %v3626
        %v3634 = vadd.f32 %v3633, %v3627
        %v3635 = vadd.f32 %v3634, %v3628
        %v3636 = vadd.f32 %v3635, %v3629
        %v3637 = vadd.f32 %v3636, %v3630
        %v3638 = vadd.f32 %v3637, %v3631
        %v3639 = vrot.slane %v3638, 4
        %v3640 = vadd.f32 %v3638, %v3639
        %v3641 = vrot.slane %v3640, 2
        %v3642 = vadd.f32 %v3640, %v3641
        %v3643 = vrot.slane %v3642, 1
        %v3644 = vadd.f32 %v3642, %v3643
        %v3645 = vsel %vm726, %v3623, %v3644
        %3646 = vmatprep.subr.mxu0 0.0
        %3647 = vmatpush1.msra.mxu0 %v3606
        %3648 = vmatprep.subr.mxu0 0.0
        %3649 = vmatpush1.msra.mxu0 %v3605
        %3650 = vmatprep.subr.mxu0 0.0
        %3651 = vmatpush1.msra.mxu0 %v3604
        %3652 = vmatprep.subr.mxu0 0.0
        %3653 = vmatpush1.msra.mxu0 %v3603
        %3654 = vmatprep.subr.mxu0 0.0
        %3655 = vmatpush1.msra.mxu0 %v3602
        %3656 = vmatprep.subr.mxu0 0.0
        %3657 = vmatpush1.msra.mxu0 %v3601
        %3658 = vmatprep.subr.mxu0 0.0
        %3659 = vmatpush1.msra.mxu0 %v3600
        %3660 = vmatprep.subr.mxu0 0.0
        %3661 = vmatpush1.msra.mxu0 %v3599
        %3662 = vmatprep.subr.mxu0 0.0
        %3663 = vmatpush1.msra.mxu0 %v3598
        %3664 = vmatprep.subr.mxu0 0.0
        %3665 = vmatpush1.msra.mxu0 %v3597
        %3666 = vmatprep.subr.mxu0 0.0
        %3667 = vmatpush1.msra.mxu0 %v3596
        %3668 = vmatprep.subr.mxu0 0.0
        %3669 = vmatpush1.msra.mxu0 %v3595
        %3670 = vmatprep.subr.mxu0 0.0
        %3671 = vmatpush1.msra.mxu0 %v3594
        %3672 = vmatprep.subr.mxu0 0.0
        %3673 = vmatpush1.msra.mxu0 %v3593
        %3674 = vmatprep.subr.mxu0 0.0
        %3675 = vmatpush1.msra.mxu0 %v3592
        %3676 = vmatprep.subr.mxu0 0.0
        %3677 = vmatpush1.msra.mxu0 %v3591
        %3678 = vmatprep.subr.mxu0 0.0
        %3679 = vmatpush2.msra.mxu0 0.0
        %3680 = vmatprep.subr.mxu0 0.0
        %3681 = vmatpush2.msra.mxu0 0.0
        %3682 = vmatprep.subr.mxu0 0.0
        %3683 = vmatpush2.msra.mxu0 0.0
        %3684 = vmatprep.subr.mxu0 0.0
        %3685 = vmatpush2.msra.mxu0 0.0
        %3686 = vmatprep.subr.mxu0 0.0
        %3687 = vmatpush2.msra.mxu0 0.0
        %3688 = vmatprep.subr.mxu0 0.0
        %3689 = vmatpush2.msra.mxu0 0.0
        %3690 = vmatprep.subr.mxu0 0.0
        %3691 = vmatpush2.msra.mxu0 0.0
        %3692 = vmatprep.subr.mxu0 0.0
        %3693 = vmatpush2.msra.mxu0 0.0
        %3694 = vmatprep.subr.mxu0 0.0
        %3695 = vmatpush2.msra.mxu0 0.0
        %3696 = vmatprep.subr.mxu0 0.0
        %3697 = vmatpush2.msra.mxu0 0.0
        %3698 = vmatprep.subr.mxu0 0.0
        %3699 = vmatpush2.msra.mxu0 0.0
        %3700 = vmatprep.subr.mxu0 0.0
        %3701 = vmatpush2.msra.mxu0 0.0
        %3702 = vmatprep.subr.mxu0 0.0
        %3703 = vmatpush2.msra.mxu0 0.0
        %3704 = vmatprep.subr.mxu0 0.0
        %3705 = vmatpush2.msra.mxu0 0.0
        %3706 = vmatprep.subr.mxu0 0.0
        %3707 = vmatpush2.msra.mxu0 0.0
        %3708 = vmatprep.subr.mxu0 0.0
        %3709 = vmatpush2.msra.mxu0 0.0
        %3710 = vmatprep.mubr.f32.mxu0 0.0
        %3711 = vmatmul.mubr.f32.gmra.mxu0 %v3645
        %v3712 = vpop.f32.mrf.mxu0
        %v3713 = vadd.f32 0.0, %v3712
        %v3714 = vpop.f32.mrf.mxu0
        %3715 = vdwg.mxu0
        %v3716 = vmul.f32 %v3713, 0.00390625
        %v3717 = vmul.f32 %v3716, %v3716
        %v3719 = vrot.slane %v3717, 7
        %v3721 = vsub.f32 %v3716, %v3719
        %v3722 = vmax.f32 %v3721, 0.0
        %v3723 = vadd.f32 %v3722, 1e-05
        %v3724 = vrsqrt.pop %v3723
        %v3725 = vsel %vm726, %v3716, %v3724
        %v3727 = vsel %vm808, %v3725, 0
        %3729 = vmatprep.subr.mxu0 0.0
        %3730 = vmatpush1.msra.mxu0 0.0
        %3731 = vmatprep.subr.mxu0 0.0
        %3732 = vmatpush1.msra.mxu0 0.0
        %3733 = vmatprep.subr.mxu0 0.0
        %3734 = vmatpush1.msra.mxu0 0.0
        %3735 = vmatprep.subr.mxu0 0.0
        %3736 = vmatpush1.msra.mxu0 0.0
        %3737 = vmatprep.subr.mxu0 0.0
        %3738 = vmatpush1.msra.mxu0 0.0
        %3739 = vmatprep.subr.mxu0 0.0
        %3740 = vmatpush1.msra.mxu0 0.0
        %3741 = vmatprep.subr.mxu0 0.0
        %3742 = vmatpush1.msra.mxu0 0.0
        %3743 = vmatprep.subr.mxu0 0.0
        %3744 = vmatpush1.msra.mxu0 0.0
        %3745 = vmatprep.subr.mxu0 0.0
        %3746 = vmatpush1.msra.mxu0 0.0
        %3747 = vmatprep.subr.mxu0 0.0
        %3748 = vmatpush1.msra.mxu0 0.0
        %3749 = vmatprep.subr.mxu0 0.0
        %3750 = vmatpush1.msra.mxu0 0.0
        %3751 = vmatprep.subr.mxu0 0.0
        %3752 = vmatpush1.msra.mxu0 0.0
        %3753 = vmatprep.subr.mxu0 0.0
        %3754 = vmatpush1.msra.mxu0 %v3610
        %3755 = vmatprep.subr.mxu0 0.0
        %3756 = vmatpush1.msra.mxu0 %v3609
        %3757 = vmatprep.subr.mxu0 0.0
        %3758 = vmatpush1.msra.mxu0 %v3608
        %3759 = vmatprep.subr.mxu0 0.0
        %3760 = vmatpush1.msra.mxu0 %v3607
        %3761 = vmatprep.subr.mxu0 0.0
        %3762 = vmatpush2.msra.mxu0 0.0
        %3763 = vmatprep.subr.mxu0 0.0
        %3764 = vmatpush2.msra.mxu0 0.0
        %3765 = vmatprep.subr.mxu0 0.0
        %3766 = vmatpush2.msra.mxu0 0.0
        %3767 = vmatprep.subr.mxu0 0.0
        %3768 = vmatpush2.msra.mxu0 0.0
        %3769 = vmatprep.subr.mxu0 0.0
        %3770 = vmatpush2.msra.mxu0 0.0
        %3771 = vmatprep.subr.mxu0 0.0
        %3772 = vmatpush2.msra.mxu0 0.0
        %3773 = vmatprep.subr.mxu0 0.0
        %3774 = vmatpush2.msra.mxu0 0.0
        %3775 = vmatprep.subr.mxu0 0.0
        %3776 = vmatpush2.msra.mxu0 0.0
        %3777 = vmatprep.subr.mxu0 0.0
        %3778 = vmatpush2.msra.mxu0 0.0
        %3779 = vmatprep.subr.mxu0 0.0
        %3780 = vmatpush2.msra.mxu0 0.0
        %3781 = vmatprep.subr.mxu0 0.0
        %3782 = vmatpush2.msra.mxu0 0.0
        %3783 = vmatprep.subr.mxu0 0.0
        %3784 = vmatpush2.msra.mxu0 0.0
        %3785 = vmatprep.subr.mxu0 0.0
        %3786 = vmatpush2.msra.mxu0 0.0
        %3787 = vmatprep.subr.mxu0 0.0
        %3788 = vmatpush2.msra.mxu0 0.0
        %3789 = vmatprep.subr.mxu0 0.0
        %3790 = vmatpush2.msra.mxu0 0.0
        %3791 = vmatprep.subr.mxu0 0.0
        %3792 = vmatpush2.msra.mxu0 0.0
        %3793 = vmatprep.mubr.f32.mxu0 0.0
        %3794 = vmatmul.mubr.f32.gmra.mxu0 %v3727
        %v3795 = vpop.f32.mrf.mxu0
        %v3796 = vadd.f32 0.0, %v3795
        %v3797 = vpop.f32.mrf.mxu0
        %3798 = vdwg.mxu0
        %v3800 = vlaneseq
        %v3801 = vshrl.u32 %v3800, 7
        %v3802 = vsub.s32 0, %v3801
        %v3803 = vrot.slane %v3589, %v3802
        %v3805 = vmul.f32 %v3796, %v3803
        %v3807 = vrot.slane %v3805, 1
        %v3809 = vmul.f32 %v3796, %v3807
        %v3810 = vsub.f32 %v3590, %v3809
        %v3811 = vlaneseq
        %v3812 = vshrl.u32 %v3811, 7
        %v3813 = vsub.s32 1, %v3812
        %v3814 = vrot.slane %v3805, %v3813
        %v3815 = vmul.f32 %v3559, %v3814
        %v3816 = vmul.f32 %v3562, %v3814
        %v3817 = vmul.f32 %v3567, %v3814
        %v3818 = vmul.f32 %v3570, %v3814
        %v3819 = vmul.f32 %v3575, %v3814
        %v3820 = vmul.f32 %v3578, %v3814
        %v3821 = vmul.f32 %v3583, %v3814
        %v3822 = vmul.f32 %v3586, %v3814
        %v3824 = vlaneseq
        %v3825 = vshrl.u32 %v3824, 7
        %v3826 = vsub.s32 0, %v3825
        %v3827 = vrot.slane %v3810, %v3826
        %v3829 = vadd.f32 %v3815, %v3827
        %v3830 = vadd.f32 %v3816, %v3827
        %v3831 = vadd.f32 %v3817, %v3827
        %v3832 = vadd.f32 %v3818, %v3827
        %v3833 = vadd.f32 %v3819, %v3827
        %v3834 = vadd.f32 %v3820, %v3827
        %v3835 = vadd.f32 %v3821, %v3827
        %v3836 = vadd.f32 %v3822, %v3827
        %v3837 = vunpack.c.l.bf16 %v509
        %v3838 = vunpack.c.l.bf16 %v510
        %v3839 = vunpack.c.l.bf16 %v511
        %v3840 = vunpack.c.l.bf16 %v512
        %v3841 = vunpack.c.l.bf16 %v513
        %v3842 = vunpack.c.l.bf16 %v514
        %v3843 = vunpack.c.l.bf16 %v515
        %v3844 = vunpack.c.l.bf16 %v516
        %v3845 = vadd.f32 %v3829, %v3837
        %v3846 = vadd.f32 %v3830, %v3838
        %v3847 = vadd.f32 %v3831, %v3839
        %v3848 = vadd.f32 %v3832, %v3840
        %v3849 = vadd.f32 %v3833, %v3841
        %v3850 = vadd.f32 %v3834, %v3842
        %v3851 = vadd.f32 %v3835, %v3843
        %v3852 = vadd.f32 %v3836, %v3844
        %v3853 = vmax.f32 %v3845, 0.0
        %v3854 = vmax.f32 %v3846, 0.0
        %v3855 = vmax.f32 %v3847, 0.0
        %v3856 = vmax.f32 %v3848, 0.0
        %v3857 = vmax.f32 %v3849, 0.0
        %v3858 = vmax.f32 %v3850, 0.0
        %v3859 = vmax.f32 %v3851, 0.0
        %v3860 = vmax.f32 %v3852, 0.0
        %v3861 = vpack.c.bf16 %v3854, %v3853
        %v3862 = vpack.c.bf16 %v3856, %v3855
        %v3863 = vpack.c.bf16 %v3858, %v3857
        %v3864 = vpack.c.bf16 %v3860, %v3859
        %v3869 = vunpack.c.l.b16 %v3861
        %v3870 = vunpack.c.h.b16 %v3861
        %v3871 = vunpack.c.l.b16 %v3862
        %v3872 = vunpack.c.h.b16 %v3862
        %v3873 = vunpack.c.l.b16 %v3863
        %v3874 = vunpack.c.h.b16 %v3863
        %v3875 = vunpack.c.l.b16 %v3864
        %v3876 = vunpack.c.h.b16 %v3864
        %v3877 = vpack.c.b16 %v3869, %v3869
        %v3878 = vpack.c.b16 %v3870, %v3870
        %v3879 = vpack.c.b16 %v3871, %v3871
        %v3880 = vpack.c.b16 %v3872, %v3872
        %v3881 = vpack.c.b16 %v3873, %v3873
        %v3882 = vpack.c.b16 %v3874, %v3874
        %v3883 = vpack.c.b16 %v3875, %v3875
        %v3884 = vpack.c.b16 %v3876, %v3876
        %3893 = vst [vmem:[%s502] sm:$0xf] %v3877
        %3894 = vst [vmem:[%s502 + $0x4] sm:$0xf] %v3878
        %3895 = vst [vmem:[%s502 + $0x8] sm:$0xf] %v3879
        %3896 = vst [vmem:[%s502 + $0xc] sm:$0xf] %v3880
        %3897 = vst [vmem:[%s502 + $0x10] sm:$0xf] %v3881
        %3898 = vst [vmem:[%s502 + $0x14] sm:$0xf] %v3882
        %3899 = vst [vmem:[%s502 + $0x18] sm:$0xf] %v3883
        %3900 = vst [vmem:[%s502 + $0x1c] sm:$0xf] %v3884
        %s3901 = sand.u32 %s358, 1
        %s3902 = scalar_lea.sflag [#allocation4], %s3901
        %s3903 = sand.u32 %s358, 1
        %s3904 = smul.addr %s3903, 32
        %s3905 = scalar_lea.vmem [#allocation5], %s3904
        // Predicated region
        $region85: #{tpu_custom_call.1} parent=79 // pred_check
          %p3906 = pneg %p368
        $region86: #{tpu_custom_call.1} parent=79 // pred_check_branch
          %3908 = sbr.rel (%p3906) target = $region88
        $region87: #{tpu_custom_call.1} parent=79 // pred_region
          %s3910 = ssub.s32 512, 512
          %3911 = vsyncadd %s3902, %s3910
          %s3912 = smul.addr %s30, 8
          %s3913 = smul.addr %s3912, 64
          %s3914 = scalar_lea.hbm %s15, %s3913
          %s3915 = sshll.u32 %s3905, 4
          %s3916 = int_to_ptr.vmem [resolvable:$true] %s3915
          %3921 = dma.vmem_to_hbm [thread:$0]  %s3916, 512, %s3914, %s3902, 64, 64, 4
        $region88: #{tpu_custom_call.1} parent=79 // pred_fallthru
          _
      $region80: #{tpu_custom_call.1} parent=5 // pred_fallthru
        _
      %p3922 = scmp.le.s32.totalorder 2, %s25
      // Predicated region
      $region89: #{tpu_custom_call.1} parent=5 // pred_check
        %p3923 = pneg %p3922
      $region90: #{tpu_custom_call.1} parent=5 // pred_check_branch
        %3925 = sbr.rel (%p3923) target = $region92
      $region91: #{tpu_custom_call.1} parent=5 // pred_region
        %s3926 = ssub.s32 %s25, 2
        // Predicated region
        $region93: #{tpu_custom_call.1} parent=91 // pred_check
          %p3927 = pneg %p374
        $region94: #{tpu_custom_call.1} parent=91 // pred_check_branch
          %3929 = sbr.rel (%p3927) target = $region96
        $region95: #{tpu_custom_call.1} parent=91 // pred_region
          %s3930 = sand.u32 %s359, 1
          %s3931 = scalar_lea.sflag [#allocation4], %s3930
          %s3932 = sand.u32 %s359, 1
          %s3933 = smul.addr %s3932, 32
          %s3934 = scalar_lea.vmem [#allocation5], %s3933
          %3935 = dma.done %s3931, 512
        $region96: #{tpu_custom_call.1} parent=91 // pred_fallthru
          _
      $region92: #{tpu_custom_call.1} parent=5 // pred_fallthru
        _
    $region6: #{tpu_custom_call.1} parent=1 // loop_footer
      %s29 = sadd.s32 1, %s25
    $region7: #{tpu_custom_call.1} parent=1 // loop_footer_branch
      %24 = sbr.rel target = $region3
    $region8: #{tpu_custom_call.1} parent=1 // loop_exit
      _
    %3936 = vsyncpa [#allocation3], 1
    %s3937 = scalar_lea.sflag [#allocation3], 1
    %3938 = vsyncpa %s3937, 1
    %3939 = vsyncpa [#allocation4], 1
    %s3940 = scalar_lea.sflag [#allocation4], 1
    %3941 = vsyncpa %s3940, 1

</llo_original>
